<compile_context>
chip_gen: v7x
topology: tpu7x:2x2x1
jax: 0.10.0
libtpu: 0.0.40
codegen_flags: <defaults>
</compile_context>

<pallas_src>
import jax
import jax.numpy as jnp
from jax.experimental import pallas as pl
from jax.experimental.pallas import tpu as pltpu


_PAD = 128          # lane padding around the position axis (needs PAD >= 2*W + 2)
_TAIL = 128         # lane slab appended to the spatial row for value/task outputs
_C2_IN = 49         # conv2 input channels  (16 + 16 + 16 features + 1 action)
_C2_OUT = 32        # conv2 output channels
_N_CHUNKS = 8       # non_spatial weight is streamed in this many channel groups
_NBUF = 4           # VMEM buffers for the chunked weight stream (prefetch depth 3)


def _vmem_spec():
    return pl.BlockSpec(memory_space=pltpu.MemorySpace.VMEM)


# ---------------------------------------------------------------------------
# Fused forward kernel
# ---------------------------------------------------------------------------

def _make_fused_kernel(H, W):
    HW = H * W

    def kernel(x_ref, act_ref, w1t_ref, bcat_ref, w2t_ref, b2_ref,
               wh_ref, bh_ref, bns_ref, wvt_ref, bvt_ref, wns_hbm,
               out_ref,
               xpad_ref, cat_ref, hflat_ref, wns_buf, dma_sem):
        C = x_ref.shape[0]
        n_hidden = bns_ref.shape[1]
        n_chunks, chunk_k, _ = wns_hbm.shape
        nbuf = wns_buf.shape[0]
        prefetch = nbuf - 1

        def start_chunk(g):
            pltpu.make_async_copy(wns_hbm.at[g], wns_buf.at[g % nbuf],
                                  dma_sem.at[g % nbuf]).start()

        def wait_chunk(g):
            pltpu.make_async_copy(wns_hbm.at[g], wns_buf.at[g % nbuf],
                                  dma_sem.at[g % nbuf]).wait()

        # Kick off the dominant HBM stream (bf16 non_spatial weight) right at
        # kernel entry, chunked so the stage-3 GEMV can interleave with it and
        # so all conv compute below overlaps the first chunks.
        for g in range(min(prefetch, n_chunks)):
            start_chunk(g)

        # Hoisted column-wrap masks, shared by the 5x5 and 3x3 tap loops.
        col = jax.lax.broadcasted_iota(jnp.int32, (1, HW), 1) % W
        wrap_ok = {d: (col + d >= 0) & (col + d < W) for d in (-2, -1, 1, 2)}

        # --- stage 1: select/collect/destroy 5x5 convs, 25 accumulated dots -
        # x lives in a zero-padded lane scratch: zero pad lanes handle
        # out-of-image rows, the wrap masks handle out-of-image columns.
        xpad_ref[...] = jnp.zeros(xpad_ref.shape, jnp.float32)
        xpad_ref[0:C, _PAD:_PAD + HW] = x_ref[...]

        acc1 = jnp.zeros((48, HW), jnp.float32)
        t = 0
        for dy in (-2, -1, 0, 1, 2):
            for dx in (-2, -1, 0, 1, 2):
                start = _PAD + dy * W + dx
                win = xpad_ref[:, start:start + HW]
                if dx != 0:
                    win = jnp.where(wrap_ok[dx], win, 0.0)
                acc1 = acc1 + jnp.dot(w1t_ref[t], win,
                                      preferred_element_type=jnp.float32)
                t += 1
        feat = jnp.maximum(acc1 + bcat_ref[...], 0.0)            # (48, HW)

        # --- stage 2: conv2 (3x3, pad 1) as 9 accumulated matmuls -----------
        # Only the pad lanes are zeroed; the interior is fully overwritten.
        cat_ref[:, 0:_PAD] = jnp.zeros((_C2_IN, _PAD), jnp.float32)
        cat_ref[:, _PAD + HW:] = jnp.zeros((_C2_IN, _PAD), jnp.float32)
        cat_ref[0:48, _PAD:_PAD + HW] = feat
        cat_ref[48:49, _PAD:_PAD + HW] = act_ref[...]

        acc2 = jnp.zeros((_C2_OUT, HW), jnp.float32)
        t = 0
        for dy in (-1, 0, 1):
            for dx in (-1, 0, 1):
                start = _PAD + dy * W + dx
                win = cat_ref[:, start:start + HW]
                if dx != 0:
                    win = jnp.where(wrap_ok[dx], win, 0.0)
                acc2 = acc2 + jnp.dot(w2t_ref[t], win,
                                      preferred_element_type=jnp.float32)
                t += 1
        h_t = jnp.maximum(acc2 + b2_ref[...], 0.0)               # (32, HW)

        # --- selected 1x1 spatial policy head, lane-dense softmax -----------
        logits = jnp.dot(wh_ref[...], h_t,
                         preferred_element_type=jnp.float32) + bh_ref[...]
        e = jnp.exp(logits - jnp.max(logits, axis=1, keepdims=True))
        # approx reciprocal: probs sum to 1 only to ~1e-3 (fine for sampling)
        sp = e * pl.reciprocal(jnp.sum(e, axis=1, keepdims=True), approx=True)
        out_ref[0:1, 0:HW] = sp

        # --- stage 3: non-spatial Linear, interleaved with the weight DMA ---
        # Flatten h channel-major into a lane-dense row matching the column
        # order of non_spatial_w (index = c*HW + p, the x.view(-1) order).
        for c in range(_C2_OUT):
            hflat_ref[0:1, c * HW:(c + 1) * HW] = h_t[c:c + 1, :]

        ns_acc = jnp.zeros((1, n_hidden), jnp.float32)
        for g in range(n_chunks):
            slot = g % nbuf
            wait_chunk(g)                       # chunk g now resident in VMEM
            nxt = g + prefetch
            if nxt < n_chunks:
                start_chunk(nxt)                # lands in the slot freed at g-1
            lhs = hflat_ref[0:1, g * chunk_k:(g + 1) * chunk_k]  # (1, chunk_k)
            ns_acc = ns_acc + jnp.dot(lhs.astype(jnp.bfloat16), wns_buf[slot],
                                      preferred_element_type=jnp.float32)
        ns = jnp.maximum(ns_acc + bns_ref[...], 0.0)             # (1, n_hidden)

        # value + task heads fused into one (n_hidden, 3) matmul, then split.
        vt = jnp.dot(ns, wvt_ref[...],
                     preferred_element_type=jnp.float32) + bvt_ref[...]
        tl = vt[:, 1:3]
        te = jnp.exp(tl - jnp.max(tl, axis=1, keepdims=True))
        tprob = te * pl.reciprocal(jnp.sum(te, axis=1, keepdims=True),
                                   approx=True)
        out_ref[0:1, HW:HW + _TAIL] = jnp.zeros((1, _TAIL), jnp.float32)
        out_ref[0:1, HW:HW + 1] = vt[:, 0:1]
        out_ref[0:1, HW + 1:HW + 3] = tprob

    return kernel


# ---------------------------------------------------------------------------
# One-time parameter re-layout
# ---------------------------------------------------------------------------

def prepare_params(params):
    """Re-lay the PyTorch-style parameters into the kernel's layouts (once)."""
    prep = {}
    wcat = jnp.concatenate([params['conv_select_w'],
                            params['conv_collect_w'],
                            params['conv_destroy_w']], axis=0)     # (48, C, 5, 5)
    co, ci, kh, kw = wcat.shape
    cp = ((ci + 7) // 8) * 8             # pad input channels to a sublane tile
    w1t = jnp.transpose(wcat, (2, 3, 0, 1)).reshape(kh * kw, co, ci)
    prep['w1t'] = jnp.pad(w1t, ((0, 0), (0, 0), (0, cp - ci)))     # (25, 48, cp)
    prep['bcat'] = jnp.concatenate([params['conv_select_b'],
                                    params['conv_collect_b'],
                                    params['conv_destroy_b']]).reshape(-1, 1)
    prep['w2t'] = jnp.transpose(params['conv2_w'],
                                (2, 3, 0, 1)).reshape(9, _C2_OUT, _C2_IN)
    prep['b2'] = params['conv2_b'].reshape(-1, 1)                  # (32, 1)
    for name in ('select_unit_policy', 'collect_policy', 'destroy_policy'):
        prep[name + '_w'] = params[name + '_w'].reshape(1, _C2_OUT)
        prep[name + '_b'] = params[name + '_b'].reshape(1, 1)
    n_hidden, k = params['non_spatial_w'].shape
    hw = k // _C2_OUT
    grp = _C2_OUT // _N_CHUNKS
    # Dominant HBM stream: channel-major column order (matches x.view(-1)),
    # bf16, split into _N_CHUNKS channel groups for the in-kernel chunked DMA.
    # TODO(synk): int8 (v5e/v6e) or fp8-e4m3 (v7x, no int MXU path) with
    # per-output scales would halve this stream again; kept bf16 to stay
    # chip-portable within the validated tolerances.
    prep['wns_r'] = jnp.transpose(
        params['non_spatial_w'].reshape(n_hidden, _C2_OUT, hw),
        (1, 2, 0)).reshape(_N_CHUNKS, grp * hw, n_hidden).astype(jnp.bfloat16)
    prep['bns'] = params['non_spatial_b'].reshape(1, -1)
    # value and task heads fused into one matmul
    prep['wvt'] = jnp.concatenate([params['value_w'].T,
                                   params['task_w'].T], axis=1)    # (256, 3)
    prep['bvt'] = jnp.concatenate([params['value_b'],
                                   params['task_b']]).reshape(1, -1)
    return prep


def init_params(key, screen_channels, screen_resolution):
    H, W = screen_resolution

    def p(k, shape, scale=0.05):
        return scale * jax.random.normal(k, shape, dtype=jnp.float32)

    ks = jax.random.split(key, 20)
    return {
        'conv_select_w': p(ks[0], (16, screen_channels, 5, 5)),
        'conv_select_b': p(ks[1], (16,)),
        'conv_collect_w': p(ks[2], (16, screen_channels, 5, 5)),
        'conv_collect_b': p(ks[3], (16,)),
        'conv_destroy_w': p(ks[4], (16, screen_channels, 5, 5)),
        'conv_destroy_b': p(ks[5], (16,)),
        'conv2_w': p(ks[6], (32, 49, 3, 3)),
        'conv2_b': p(ks[7], (32,)),
        'select_unit_policy_w': p(ks[8], (1, 32, 1, 1)),
        'select_unit_policy_b': p(ks[9], (1,)),
        'collect_policy_w': p(ks[10], (1, 32, 1, 1)),
        'collect_policy_b': p(ks[11], (1,)),
        'destroy_policy_w': p(ks[12], (1, 32, 1, 1)),
        'destroy_policy_b': p(ks[13], (1,)),
        'non_spatial_w': p(ks[14], (256, H * W * 32), scale=0.01),
        'non_spatial_b': p(ks[15], (256,)),
        'value_w': p(ks[16], (1, 256)),
        'value_b': p(ks[17], (1,)),
        'task_w': p(ks[18], (2, 256)),
        'task_b': p(ks[19], (2,)),
    }


# ---------------------------------------------------------------------------
# Forward pass
# ---------------------------------------------------------------------------

def grafting_net_forward(x, action_features, prep, task_type):
    # x: (1, C, H, W) NCHW; action_features: (1, 1, H, W); task_type: static int
    B, C, H, W = x.shape
    assert B == 1, "module's x.view(-1) non-spatial branch implies batch size 1"
    assert 2 * W + 2 <= _PAD
    HW = H * W
    n_hidden = prep['bns'].shape[1]
    n_chunks, chunk_k, _ = prep['wns_r'].shape
    cp = prep['w1t'].shape[2]

    # Inputs go to the kernel as (channels, positions) rows; both reshapes are
    # free re-layouts of the NCHW tensors (no per-step im2col fusion in XLA).
    x2 = x.reshape(C, HW)
    act_row = action_features.reshape(1, HW)

    head = {0: 'select_unit_policy', 1: 'collect_policy',
            2: 'destroy_policy'}[task_type]

    # TODO(synk): for a tight per-step loop, keep wns_r resident across calls
    # (or cross-call prefetch via a semaphore/VMEM output pair) instead of
    # re-streaming ~4 MB per step.
    out = pl.pallas_call(
        _make_fused_kernel(H, W),
        out_shape=jax.ShapeDtypeStruct((1, HW + _TAIL), jnp.float32),
        in_specs=[_vmem_spec() for _ in range(11)]
                 + [pl.BlockSpec(memory_space=pl.ANY)],          # wns_r in HBM
        out_specs=_vmem_spec(),
        scratch_shapes=[
            pltpu.VMEM((cp, HW + 2 * _PAD), jnp.float32),        # padded x map
            pltpu.VMEM((_C2_IN, HW + 2 * _PAD), jnp.float32),    # padded 49-ch map
            pltpu.VMEM((1, _C2_OUT * HW), jnp.float32),          # flattened h
            pltpu.VMEM((_NBUF, chunk_k, n_hidden), jnp.bfloat16),  # weight chunks
            pltpu.SemaphoreType.DMA((_NBUF,)),
        ],
    )(x2, act_row, prep['w1t'], prep['bcat'], prep['w2t'], prep['b2'],
      prep[head + '_w'], prep[head + '_b'], prep['bns'], prep['wvt'],
      prep['bvt'], prep['wns_r'])

    # TODO(synk): if the caller can batch (several env states / all heads), add
    # a leading "parallel" grid axis so v7x's second TensorCore is used and the
    # weight stream is amortized; x.view(-1) in the module pins batch=1 here.
    spatial_prob = out[:, 0:HW]
    value = out[0, HW:HW + 1]
    task_prob = out[0, HW + 1:HW + 3]
    return spatial_prob, value, task_prob


# ---------------------------------------------------------------------------
# Pure-JAX reference (for correctness checking)
# ---------------------------------------------------------------------------

def ref_forward(x, action_features, params, task_type):
    def conv(inp, w, b, pad):
        y = jax.lax.conv_general_dilated(
            inp, w, window_strides=(1, 1), padding=[(pad, pad), (pad, pad)],
            dimension_numbers=('NCHW', 'OIHW', 'NCHW'))
        return y + b[None, :, None, None]

    sel = jax.nn.relu(conv(x, params['conv_select_w'], params['conv_select_b'], 2))
    col = jax.nn.relu(conv(x, params['conv_collect_w'], params['conv_collect_b'], 2))
    des = jax.nn.relu(conv(x, params['conv_destroy_w'], params['conv_destroy_b'], 2))
    cat = jnp.concatenate([sel, col, des, action_features], axis=1)
    h = jax.nn.relu(conv(cat, params['conv2_w'], params['conv2_b'], 1))
    head = {0: 'select_unit_policy', 1: 'collect_policy',
            2: 'destroy_policy'}[task_type]
    branch = conv(h, params[head + '_w'], params[head + '_b'], 0)
    spatial_prob = jax.nn.softmax(branch.reshape(branch.shape[0], -1), axis=1)
    flat = h.reshape(-1)
    ns = jax.nn.relu(params['non_spatial_w'] @ flat + params['non_spatial_b'])
    value = params['value_w'] @ ns + params['value_b']
    task_prob = jax.nn.softmax(params['task_w'] @ ns + params['task_b'])
    return spatial_prob, value, task_prob


if __name__ == "__main__":
    screen_channels = 4
    screen_resolution = (16, 16)
    task_type = 0  # static, as in the PyTorch Python `if type == ...`

    key = jax.random.PRNGKey(0)
    kp, kx, ka = jax.random.split(key, 3)
    params = init_params(kp, screen_channels, screen_resolution)
    x = jax.random.normal(kx, (1, screen_channels, *screen_resolution),
                          dtype=jnp.float32)
    action_features = jax.random.normal(ka, (1, 1, *screen_resolution),
                                        dtype=jnp.float32)

    prep = prepare_params(params)        # one-time weight re-layout (not jitted)
    fwd = jax.jit(grafting_net_forward, static_argnums=3)

    sp, val, task = jax.block_until_ready(
        fwd(x, action_features, prep, task_type))

    sp_r, val_r, task_r = ref_forward(x, action_features, params, task_type)
    assert sp.shape == (1, 256) and val.shape == (1,) and task.shape == (2,)
    assert jnp.allclose(jnp.sum(sp), 1.0, atol=5e-3)
    assert jnp.allclose(jnp.sum(task), 1.0, atol=5e-3)
    assert jnp.allclose(sp, sp_r, rtol=2e-2, atol=2e-3)
    assert jnp.allclose(val, val_r, rtol=2e-2, atol=2e-2)
    assert jnp.allclose(task, task_r, rtol=2e-2, atol=2e-3)

    print("KERNEL_OK")
</pallas_src>

<mosaic_0001>
module attributes {stable_mosaic.version = 11 : i64} {
  func.func @kernel(%arg0: memref<4x256xf32, #tpu.memory_space<vmem>>, %arg1: memref<1x256xf32, #tpu.memory_space<vmem>>, %arg2: memref<25x48x8xf32, #tpu.memory_space<vmem>>, %arg3: memref<48x1xf32, #tpu.memory_space<vmem>>, %arg4: memref<9x32x49xf32, #tpu.memory_space<vmem>>, %arg5: memref<32x1xf32, #tpu.memory_space<vmem>>, %arg6: memref<1x32xf32, #tpu.memory_space<vmem>>, %arg7: memref<1x1xf32, #tpu.memory_space<vmem>>, %arg8: memref<1x256xf32, #tpu.memory_space<vmem>>, %arg9: memref<256x3xf32, #tpu.memory_space<vmem>>, %arg10: memref<1x3xf32, #tpu.memory_space<vmem>>, %arg11: memref<8x1024x256xbf16, #tpu.memory_space<any>>, %arg12: memref<1x384xf32, #tpu.memory_space<vmem>>, %arg13: memref<8x512xf32, #tpu.memory_space<vmem>>, %arg14: memref<49x512xf32, #tpu.memory_space<vmem>>, %arg15: memref<1x8192xf32, #tpu.memory_space<vmem>>, %arg16: memref<4x1024x256xbf16, #tpu.memory_space<vmem>>, %arg17: memref<4x!tpu.dma_semaphore, #tpu.memory_space<semaphore_mem>>) attributes {dimension_semantics = [], scalar_prefetch = 0 : i64, scratch_operands = 5 : i64, tpu.core_type = #tpu.core_type<tc>} {
    %c0_i32 = arith.constant 0 : i32
    %c0_i32_0 = arith.constant 0 : i32
    %c0_i32_1 = arith.constant 0 : i32
    %c0_i32_2 = arith.constant 0 : i32
    %c0_i32_3 = arith.constant 0 : i32
    %0 = tpu.memref_slice %arg11[%c0_i32, %c0_i32_2, %c0_i32_3] : memref<8x1024x256xbf16, #tpu.memory_space<any>> -> memref<1x1024x256xbf16, #tpu.memory_space<any>>
    %1 = tpu.memref_squeeze %0 : memref<1x1024x256xbf16, #tpu.memory_space<any>> -> memref<1024x256xbf16, #tpu.memory_space<any>>
    %c0_i32_4 = arith.constant 0 : i32
    %c0_i32_5 = arith.constant 0 : i32
    %2 = tpu.memref_slice %arg16[%c0_i32_0, %c0_i32_4, %c0_i32_5] : memref<4x1024x256xbf16, #tpu.memory_space<vmem>> -> memref<1x1024x256xbf16, #tpu.memory_space<vmem>>
    %3 = tpu.memref_squeeze %2 : memref<1x1024x256xbf16, #tpu.memory_space<vmem>> -> memref<1024x256xbf16, #tpu.memory_space<vmem>>
    %4 = tpu.memref_slice %arg17[%c0_i32_1] : memref<4x!tpu.dma_semaphore, #tpu.memory_space<semaphore_mem>> -> memref<1x!tpu.dma_semaphore, #tpu.memory_space<semaphore_mem>>
    %5 = tpu.memref_squeeze %4 : memref<1x!tpu.dma_semaphore, #tpu.memory_space<semaphore_mem>> -> memref<!tpu.dma_semaphore, #tpu.memory_space<semaphore_mem>>
    tpu.enqueue_dma source(%1 : memref<1024x256xbf16, #tpu.memory_space<any>>) target(%3 : memref<1024x256xbf16, #tpu.memory_space<vmem>>) target_semaphore(%5 : memref<!tpu.dma_semaphore, #tpu.memory_space<semaphore_mem>>)
    %c1_i32 = arith.constant 1 : i32
    %c1_i32_6 = arith.constant 1 : i32
    %c1_i32_7 = arith.constant 1 : i32
    %c0_i32_8 = arith.constant 0 : i32
    %c0_i32_9 = arith.constant 0 : i32
    %6 = tpu.memref_slice %arg11[%c1_i32, %c0_i32_8, %c0_i32_9] : memref<8x1024x256xbf16, #tpu.memory_space<any>> -> memref<1x1024x256xbf16, #tpu.memory_space<any>>
    %7 = tpu.memref_squeeze %6 : memref<1x1024x256xbf16, #tpu.memory_space<any>> -> memref<1024x256xbf16, #tpu.memory_space<any>>
    %c0_i32_10 = arith.constant 0 : i32
    %c0_i32_11 = arith.constant 0 : i32
    %8 = tpu.memref_slice %arg16[%c1_i32_6, %c0_i32_10, %c0_i32_11] : memref<4x1024x256xbf16, #tpu.memory_space<vmem>> -> memref<1x1024x256xbf16, #tpu.memory_space<vmem>>
    %9 = tpu.memref_squeeze %8 : memref<1x1024x256xbf16, #tpu.memory_space<vmem>> -> memref<1024x256xbf16, #tpu.memory_space<vmem>>
    %10 = tpu.memref_slice %arg17[%c1_i32_7] : memref<4x!tpu.dma_semaphore, #tpu.memory_space<semaphore_mem>> -> memref<1x!tpu.dma_semaphore, #tpu.memory_space<semaphore_mem>>
    %11 = tpu.memref_squeeze %10 : memref<1x!tpu.dma_semaphore, #tpu.memory_space<semaphore_mem>> -> memref<!tpu.dma_semaphore, #tpu.memory_space<semaphore_mem>>
    tpu.enqueue_dma source(%7 : memref<1024x256xbf16, #tpu.memory_space<any>>) target(%9 : memref<1024x256xbf16, #tpu.memory_space<vmem>>) target_semaphore(%11 : memref<!tpu.dma_semaphore, #tpu.memory_space<semaphore_mem>>)
    %c2_i32 = arith.constant 2 : i32
    %c2_i32_12 = arith.constant 2 : i32
    %c2_i32_13 = arith.constant 2 : i32
    %c0_i32_14 = arith.constant 0 : i32
    %c0_i32_15 = arith.constant 0 : i32
    %12 = tpu.memref_slice %arg11[%c2_i32, %c0_i32_14, %c0_i32_15] : memref<8x1024x256xbf16, #tpu.memory_space<any>> -> memref<1x1024x256xbf16, #tpu.memory_space<any>>
    %13 = tpu.memref_squeeze %12 : memref<1x1024x256xbf16, #tpu.memory_space<any>> -> memref<1024x256xbf16, #tpu.memory_space<any>>
    %c0_i32_16 = arith.constant 0 : i32
    %c0_i32_17 = arith.constant 0 : i32
    %14 = tpu.memref_slice %arg16[%c2_i32_12, %c0_i32_16, %c0_i32_17] : memref<4x1024x256xbf16, #tpu.memory_space<vmem>> -> memref<1x1024x256xbf16, #tpu.memory_space<vmem>>
    %15 = tpu.memref_squeeze %14 : memref<1x1024x256xbf16, #tpu.memory_space<vmem>> -> memref<1024x256xbf16, #tpu.memory_space<vmem>>
    %16 = tpu.memref_slice %arg17[%c2_i32_13] : memref<4x!tpu.dma_semaphore, #tpu.memory_space<semaphore_mem>> -> memref<1x!tpu.dma_semaphore, #tpu.memory_space<semaphore_mem>>
    %17 = tpu.memref_squeeze %16 : memref<1x!tpu.dma_semaphore, #tpu.memory_space<semaphore_mem>> -> memref<!tpu.dma_semaphore, #tpu.memory_space<semaphore_mem>>
    tpu.enqueue_dma source(%13 : memref<1024x256xbf16, #tpu.memory_space<any>>) target(%15 : memref<1024x256xbf16, #tpu.memory_space<vmem>>) target_semaphore(%17 : memref<!tpu.dma_semaphore, #tpu.memory_space<semaphore_mem>>)
    %18 = tpu.iota {dimensions = array<i32: 1>} : vector<1x256xi32>
    %c16_i32 = arith.constant 16 : i32
    %c0_i32_18 = arith.constant 0 : i32
    %19 = arith.cmpi eq, %c16_i32, %c0_i32_18 : i32
    %c1_i32_19 = arith.constant 1 : i32
    %20 = arith.select %19, %c1_i32_19, %c16_i32 : i32
    %21 = vector.broadcast %20 : i32 to vector<1x256xi32>
    %22 = arith.remsi %18, %21 : vector<1x256xi32>
    %c0_i32_20 = arith.constant 0 : i32
    %23 = vector.broadcast %c0_i32_20 : i32 to vector<1x256xi32>
    %24 = arith.cmpi ne, %22, %23 : vector<1x256xi32>
    %c0_i32_21 = arith.constant 0 : i32
    %25 = vector.broadcast %c0_i32_21 : i32 to vector<1x256xi32>
    %26 = arith.cmpi slt, %22, %25 : vector<1x256xi32>
    %c0_i32_22 = arith.constant 0 : i32
    %27 = arith.cmpi slt, %20, %c0_i32_22 : i32
    %28 = vector.broadcast %27 : i1 to vector<1x256xi1>
    %29 = vector.broadcast %28 : vector<1x256xi1> to vector<1x256xi1>
    %30 = arith.xori %26, %29 : vector<1x256xi1>
    %31 = arith.andi %30, %24 : vector<1x256xi1>
    %32 = vector.broadcast %20 : i32 to vector<1x256xi32>
    %33 = arith.addi %22, %32 : vector<1x256xi32>
    %34 = arith.select %31, %33, %22 : vector<1x256xi1>, vector<1x256xi32>
    %c-2_i32 = arith.constant -2 : i32
    %35 = vector.broadcast %c-2_i32 : i32 to vector<1x256xi32>
    %36 = arith.addi %34, %35 : vector<1x256xi32>
    %c0_i32_23 = arith.constant 0 : i32
    %37 = vector.broadcast %c0_i32_23 : i32 to vector<1x256xi32>
    %38 = arith.cmpi sge, %36, %37 : vector<1x256xi32>
    %c-2_i32_24 = arith.constant -2 : i32
    %39 = vector.broadcast %c-2_i32_24 : i32 to vector<1x256xi32>
    %40 = arith.addi %34, %39 : vector<1x256xi32>
    %c16_i32_25 = arith.constant 16 : i32
    %41 = vector.broadcast %c16_i32_25 : i32 to vector<1x256xi32>
    %42 = arith.cmpi slt, %40, %41 : vector<1x256xi32>
    %43 = arith.andi %38, %42 : vector<1x256xi1>
    %c-1_i32 = arith.constant -1 : i32
    %44 = vector.broadcast %c-1_i32 : i32 to vector<1x256xi32>
    %45 = arith.addi %34, %44 : vector<1x256xi32>
    %c0_i32_26 = arith.constant 0 : i32
    %46 = vector.broadcast %c0_i32_26 : i32 to vector<1x256xi32>
    %47 = arith.cmpi sge, %45, %46 : vector<1x256xi32>
    %c-1_i32_27 = arith.constant -1 : i32
    %48 = vector.broadcast %c-1_i32_27 : i32 to vector<1x256xi32>
    %49 = arith.addi %34, %48 : vector<1x256xi32>
    %c16_i32_28 = arith.constant 16 : i32
    %50 = vector.broadcast %c16_i32_28 : i32 to vector<1x256xi32>
    %51 = arith.cmpi slt, %49, %50 : vector<1x256xi32>
    %52 = arith.andi %47, %51 : vector<1x256xi1>
    %c1_i32_29 = arith.constant 1 : i32
    %53 = vector.broadcast %c1_i32_29 : i32 to vector<1x256xi32>
    %54 = arith.addi %34, %53 : vector<1x256xi32>
    %c0_i32_30 = arith.constant 0 : i32
    %55 = vector.broadcast %c0_i32_30 : i32 to vector<1x256xi32>
    %56 = arith.cmpi sge, %54, %55 : vector<1x256xi32>
    %c1_i32_31 = arith.constant 1 : i32
    %57 = vector.broadcast %c1_i32_31 : i32 to vector<1x256xi32>
    %58 = arith.addi %34, %57 : vector<1x256xi32>
    %c16_i32_32 = arith.constant 16 : i32
    %59 = vector.broadcast %c16_i32_32 : i32 to vector<1x256xi32>
    %60 = arith.cmpi slt, %58, %59 : vector<1x256xi32>
    %61 = arith.andi %56, %60 : vector<1x256xi1>
    %c2_i32_33 = arith.constant 2 : i32
    %62 = vector.broadcast %c2_i32_33 : i32 to vector<1x256xi32>
    %63 = arith.addi %34, %62 : vector<1x256xi32>
    %c0_i32_34 = arith.constant 0 : i32
    %64 = vector.broadcast %c0_i32_34 : i32 to vector<1x256xi32>
    %65 = arith.cmpi sge, %63, %64 : vector<1x256xi32>
    %c2_i32_35 = arith.constant 2 : i32
    %66 = vector.broadcast %c2_i32_35 : i32 to vector<1x256xi32>
    %67 = arith.addi %34, %66 : vector<1x256xi32>
    %c16_i32_36 = arith.constant 16 : i32
    %68 = vector.broadcast %c16_i32_36 : i32 to vector<1x256xi32>
    %69 = arith.cmpi slt, %67, %68 : vector<1x256xi32>
    %70 = arith.andi %65, %69 : vector<1x256xi1>
    %cst = arith.constant 0.000000e+00 : f32
    %71 = vector.broadcast %cst : f32 to vector<8x512xf32>
    %c0 = arith.constant 0 : index
    %c0_37 = arith.constant 0 : index
    %72 = vector.load %arg13[%c0, %c0_37] : memref<8x512xf32, #tpu.memory_space<vmem>>, vector<8x512xf32>
    tpu.vector_store %arg13[%c0, %c0_37], %71 {strides = array<i32>} : memref<8x512xf32, #tpu.memory_space<vmem>>, vector<8x512xf32>,
    %c0_38 = arith.constant 0 : index
    %c0_39 = arith.constant 0 : index
    %73 = vector.load %arg0[%c0_38, %c0_39] : memref<4x256xf32, #tpu.memory_space<vmem>>, vector<4x256xf32>
    %c0_40 = arith.constant 0 : index
    %c128 = arith.constant 128 : index
    %74 = vector.load %arg13[%c0_40, %c128] : memref<8x512xf32, #tpu.memory_space<vmem>>, vector<4x256xf32>
    tpu.vector_store %arg13[%c0_40, %c128], %73 {strides = array<i32>} : memref<8x512xf32, #tpu.memory_space<vmem>>, vector<4x256xf32>,
    %cst_41 = arith.constant 0.000000e+00 : f32
    %75 = vector.broadcast %cst_41 : f32 to vector<48x256xf32>
    %c0_42 = arith.constant 0 : index
    %c94 = arith.constant 94 : index
    %76 = vector.load %arg13[%c0_42, %c94] : memref<8x512xf32, #tpu.memory_space<vmem>>, vector<8x256xf32>
    %cst_43 = arith.constant 0.000000e+00 : f32
    %77 = vector.shape_cast %43 : vector<1x256xi1> to vector<1x256xi1>
    %78 = vector.broadcast %77 : vector<1x256xi1> to vector<8x256xi1>
    %79 = vector.broadcast %cst_43 : f32 to vector<8x256xf32>
    %80 = arith.select %78, %76, %79 : vector<8x256xi1>, vector<8x256xf32>
    %c0_44 = arith.constant 0 : index
    %c0_45 = arith.constant 0 : index
    %c0_46 = arith.constant 0 : index
    %81 = vector.load %arg2[%c0_44, %c0_45, %c0_46] : memref<25x48x8xf32, #tpu.memory_space<vmem>>, vector<1x48x8xf32>
    %82 = vector.shape_cast %81 : vector<1x48x8xf32> to vector<48x8xf32>
    %cst_47 = arith.constant dense<0.000000e+00> : vector<48x256xf32>
    %83 = tpu.matmul %82, %80, %cst_47 {dimension_numbers = #tpu.dot_dimension_numbers<[1], [0], [0], [1], [0, 0, 1, 1], [], []>} : vector<48x8xf32>, vector<8x256xf32>, vector<48x256xf32> -> vector<48x256xf32>
    %84 = arith.addf %75, %83 : vector<48x256xf32>
    %c0_48 = arith.constant 0 : index
    %c95 = arith.constant 95 : index
    %85 = vector.load %arg13[%c0_48, %c95] : memref<8x512xf32, #tpu.memory_space<vmem>>, vector<8x256xf32>
    %cst_49 = arith.constant 0.000000e+00 : f32
    %86 = vector.shape_cast %52 : vector<1x256xi1> to vector<1x256xi1>
    %87 = vector.broadcast %86 : vector<1x256xi1> to vector<8x256xi1>
    %88 = vector.broadcast %cst_49 : f32 to vector<8x256xf32>
    %89 = arith.select %87, %85, %88 : vector<8x256xi1>, vector<8x256xf32>
    %c1 = arith.constant 1 : index
    %c0_50 = arith.constant 0 : index
    %c0_51 = arith.constant 0 : index
    %90 = vector.load %arg2[%c1, %c0_50, %c0_51] : memref<25x48x8xf32, #tpu.memory_space<vmem>>, vector<1x48x8xf32>
    %91 = vector.shape_cast %90 : vector<1x48x8xf32> to vector<48x8xf32>
    %cst_52 = arith.constant dense<0.000000e+00> : vector<48x256xf32>
    %92 = tpu.matmul %91, %89, %cst_52 {dimension_numbers = #tpu.dot_dimension_numbers<[1], [0], [0], [1], [0, 0, 1, 1], [], []>} : vector<48x8xf32>, vector<8x256xf32>, vector<48x256xf32> -> vector<48x256xf32>
    %93 = arith.addf %84, %92 : vector<48x256xf32>
    %c0_53 = arith.constant 0 : index
    %c96 = arith.constant 96 : index
    %94 = vector.load %arg13[%c0_53, %c96] : memref<8x512xf32, #tpu.memory_space<vmem>>, vector<8x256xf32>
    %c2 = arith.constant 2 : index
    %c0_54 = arith.constant 0 : index
    %c0_55 = arith.constant 0 : index
    %95 = vector.load %arg2[%c2, %c0_54, %c0_55] : memref<25x48x8xf32, #tpu.memory_space<vmem>>, vector<1x48x8xf32>
    %96 = vector.shape_cast %95 : vector<1x48x8xf32> to vector<48x8xf32>
    %cst_56 = arith.constant dense<0.000000e+00> : vector<48x256xf32>
    %97 = tpu.matmul %96, %94, %cst_56 {dimension_numbers = #tpu.dot_dimension_numbers<[1], [0], [0], [1], [0, 0, 1, 1], [], []>} : vector<48x8xf32>, vector<8x256xf32>, vector<48x256xf32> -> vector<48x256xf32>
    %98 = arith.addf %93, %97 : vector<48x256xf32>
    %c0_57 = arith.constant 0 : index
    %c97 = arith.constant 97 : index
    %99 = vector.load %arg13[%c0_57, %c97] : memref<8x512xf32, #tpu.memory_space<vmem>>, vector<8x256xf32>
    %cst_58 = arith.constant 0.000000e+00 : f32
    %100 = vector.shape_cast %61 : vector<1x256xi1> to vector<1x256xi1>
    %101 = vector.broadcast %100 : vector<1x256xi1> to vector<8x256xi1>
    %102 = vector.broadcast %cst_58 : f32 to vector<8x256xf32>
    %103 = arith.select %101, %99, %102 : vector<8x256xi1>, vector<8x256xf32>
    %c3 = arith.constant 3 : index
    %c0_59 = arith.constant 0 : index
    %c0_60 = arith.constant 0 : index
    %104 = vector.load %arg2[%c3, %c0_59, %c0_60] : memref<25x48x8xf32, #tpu.memory_space<vmem>>, vector<1x48x8xf32>
    %105 = vector.shape_cast %104 : vector<1x48x8xf32> to vector<48x8xf32>
    %cst_61 = arith.constant dense<0.000000e+00> : vector<48x256xf32>
    %106 = tpu.matmul %105, %103, %cst_61 {dimension_numbers = #tpu.dot_dimension_numbers<[1], [0], [0], [1], [0, 0, 1, 1], [], []>} : vector<48x8xf32>, vector<8x256xf32>, vector<48x256xf32> -> vector<48x256xf32>
    %107 = arith.addf %98, %106 : vector<48x256xf32>
    %c0_62 = arith.constant 0 : index
    %c98 = arith.constant 98 : index
    %108 = vector.load %arg13[%c0_62, %c98] : memref<8x512xf32, #tpu.memory_space<vmem>>, vector<8x256xf32>
    %cst_63 = arith.constant 0.000000e+00 : f32
    %109 = vector.shape_cast %70 : vector<1x256xi1> to vector<1x256xi1>
    %110 = vector.broadcast %109 : vector<1x256xi1> to vector<8x256xi1>
    %111 = vector.broadcast %cst_63 : f32 to vector<8x256xf32>
    %112 = arith.select %110, %108, %111 : vector<8x256xi1>, vector<8x256xf32>
    %c4 = arith.constant 4 : index
    %c0_64 = arith.constant 0 : index
    %c0_65 = arith.constant 0 : index
    %113 = vector.load %arg2[%c4, %c0_64, %c0_65] : memref<25x48x8xf32, #tpu.memory_space<vmem>>, vector<1x48x8xf32>
    %114 = vector.shape_cast %113 : vector<1x48x8xf32> to vector<48x8xf32>
    %cst_66 = arith.constant dense<0.000000e+00> : vector<48x256xf32>
    %115 = tpu.matmul %114, %112, %cst_66 {dimension_numbers = #tpu.dot_dimension_numbers<[1], [0], [0], [1], [0, 0, 1, 1], [], []>} : vector<48x8xf32>, vector<8x256xf32>, vector<48x256xf32> -> vector<48x256xf32>
    %116 = arith.addf %107, %115 : vector<48x256xf32>
    %c0_67 = arith.constant 0 : index
    %c110 = arith.constant 110 : index
    %117 = vector.load %arg13[%c0_67, %c110] : memref<8x512xf32, #tpu.memory_space<vmem>>, vector<8x256xf32>
    %cst_68 = arith.constant 0.000000e+00 : f32
    %118 = vector.shape_cast %43 : vector<1x256xi1> to vector<1x256xi1>
    %119 = vector.broadcast %118 : vector<1x256xi1> to vector<8x256xi1>
    %120 = vector.broadcast %cst_68 : f32 to vector<8x256xf32>
    %121 = arith.select %119, %117, %120 : vector<8x256xi1>, vector<8x256xf32>
    %c5 = arith.constant 5 : index
    %c0_69 = arith.constant 0 : index
    %c0_70 = arith.constant 0 : index
    %122 = vector.load %arg2[%c5, %c0_69, %c0_70] : memref<25x48x8xf32, #tpu.memory_space<vmem>>, vector<1x48x8xf32>
    %123 = vector.shape_cast %122 : vector<1x48x8xf32> to vector<48x8xf32>
    %cst_71 = arith.constant dense<0.000000e+00> : vector<48x256xf32>
    %124 = tpu.matmul %123, %121, %cst_71 {dimension_numbers = #tpu.dot_dimension_numbers<[1], [0], [0], [1], [0, 0, 1, 1], [], []>} : vector<48x8xf32>, vector<8x256xf32>, vector<48x256xf32> -> vector<48x256xf32>
    %125 = arith.addf %116, %124 : vector<48x256xf32>
    %c0_72 = arith.constant 0 : index
    %c111 = arith.constant 111 : index
    %126 = vector.load %arg13[%c0_72, %c111] : memref<8x512xf32, #tpu.memory_space<vmem>>, vector<8x256xf32>
    %cst_73 = arith.constant 0.000000e+00 : f32
    %127 = vector.shape_cast %52 : vector<1x256xi1> to vector<1x256xi1>
    %128 = vector.broadcast %127 : vector<1x256xi1> to vector<8x256xi1>
    %129 = vector.broadcast %cst_73 : f32 to vector<8x256xf32>
    %130 = arith.select %128, %126, %129 : vector<8x256xi1>, vector<8x256xf32>
    %c6 = arith.constant 6 : index
    %c0_74 = arith.constant 0 : index
    %c0_75 = arith.constant 0 : index
    %131 = vector.load %arg2[%c6, %c0_74, %c0_75] : memref<25x48x8xf32, #tpu.memory_space<vmem>>, vector<1x48x8xf32>
    %132 = vector.shape_cast %131 : vector<1x48x8xf32> to vector<48x8xf32>
    %cst_76 = arith.constant dense<0.000000e+00> : vector<48x256xf32>
    %133 = tpu.matmul %132, %130, %cst_76 {dimension_numbers = #tpu.dot_dimension_numbers<[1], [0], [0], [1], [0, 0, 1, 1], [], []>} : vector<48x8xf32>, vector<8x256xf32>, vector<48x256xf32> -> vector<48x256xf32>
    %134 = arith.addf %125, %133 : vector<48x256xf32>
    %c0_77 = arith.constant 0 : index
    %c112 = arith.constant 112 : index
    %135 = vector.load %arg13[%c0_77, %c112] : memref<8x512xf32, #tpu.memory_space<vmem>>, vector<8x256xf32>
    %c7 = arith.constant 7 : index
    %c0_78 = arith.constant 0 : index
    %c0_79 = arith.constant 0 : index
    %136 = vector.load %arg2[%c7, %c0_78, %c0_79] : memref<25x48x8xf32, #tpu.memory_space<vmem>>, vector<1x48x8xf32>
    %137 = vector.shape_cast %136 : vector<1x48x8xf32> to vector<48x8xf32>
    %cst_80 = arith.constant dense<0.000000e+00> : vector<48x256xf32>
    %138 = tpu.matmul %137, %135, %cst_80 {dimension_numbers = #tpu.dot_dimension_numbers<[1], [0], [0], [1], [0, 0, 1, 1], [], []>} : vector<48x8xf32>, vector<8x256xf32>, vector<48x256xf32> -> vector<48x256xf32>
    %139 = arith.addf %134, %138 : vector<48x256xf32>
    %c0_81 = arith.constant 0 : index
    %c113 = arith.constant 113 : index
    %140 = vector.load %arg13[%c0_81, %c113] : memref<8x512xf32, #tpu.memory_space<vmem>>, vector<8x256xf32>
    %cst_82 = arith.constant 0.000000e+00 : f32
    %141 = vector.shape_cast %61 : vector<1x256xi1> to vector<1x256xi1>
    %142 = vector.broadcast %141 : vector<1x256xi1> to vector<8x256xi1>
    %143 = vector.broadcast %cst_82 : f32 to vector<8x256xf32>
    %144 = arith.select %142, %140, %143 : vector<8x256xi1>, vector<8x256xf32>
    %c8 = arith.constant 8 : index
    %c0_83 = arith.constant 0 : index
    %c0_84 = arith.constant 0 : index
    %145 = vector.load %arg2[%c8, %c0_83, %c0_84] : memref<25x48x8xf32, #tpu.memory_space<vmem>>, vector<1x48x8xf32>
    %146 = vector.shape_cast %145 : vector<1x48x8xf32> to vector<48x8xf32>
    %cst_85 = arith.constant dense<0.000000e+00> : vector<48x256xf32>
    %147 = tpu.matmul %146, %144, %cst_85 {dimension_numbers = #tpu.dot_dimension_numbers<[1], [0], [0], [1], [0, 0, 1, 1], [], []>} : vector<48x8xf32>, vector<8x256xf32>, vector<48x256xf32> -> vector<48x256xf32>
    %148 = arith.addf %139, %147 : vector<48x256xf32>
    %c0_86 = arith.constant 0 : index
    %c114 = arith.constant 114 : index
    %149 = vector.load %arg13[%c0_86, %c114] : memref<8x512xf32, #tpu.memory_space<vmem>>, vector<8x256xf32>
    %cst_87 = arith.constant 0.000000e+00 : f32
    %150 = vector.shape_cast %70 : vector<1x256xi1> to vector<1x256xi1>
    %151 = vector.broadcast %150 : vector<1x256xi1> to vector<8x256xi1>
    %152 = vector.broadcast %cst_87 : f32 to vector<8x256xf32>
    %153 = arith.select %151, %149, %152 : vector<8x256xi1>, vector<8x256xf32>
    %c9 = arith.constant 9 : index
    %c0_88 = arith.constant 0 : index
    %c0_89 = arith.constant 0 : index
    %154 = vector.load %arg2[%c9, %c0_88, %c0_89] : memref<25x48x8xf32, #tpu.memory_space<vmem>>, vector<1x48x8xf32>
    %155 = vector.shape_cast %154 : vector<1x48x8xf32> to vector<48x8xf32>
    %cst_90 = arith.constant dense<0.000000e+00> : vector<48x256xf32>
    %156 = tpu.matmul %155, %153, %cst_90 {dimension_numbers = #tpu.dot_dimension_numbers<[1], [0], [0], [1], [0, 0, 1, 1], [], []>} : vector<48x8xf32>, vector<8x256xf32>, vector<48x256xf32> -> vector<48x256xf32>
    %157 = arith.addf %148, %156 : vector<48x256xf32>
    %c0_91 = arith.constant 0 : index
    %c126 = arith.constant 126 : index
    %158 = vector.load %arg13[%c0_91, %c126] : memref<8x512xf32, #tpu.memory_space<vmem>>, vector<8x256xf32>
    %cst_92 = arith.constant 0.000000e+00 : f32
    %159 = vector.shape_cast %43 : vector<1x256xi1> to vector<1x256xi1>
    %160 = vector.broadcast %159 : vector<1x256xi1> to vector<8x256xi1>
    %161 = vector.broadcast %cst_92 : f32 to vector<8x256xf32>
    %162 = arith.select %160, %158, %161 : vector<8x256xi1>, vector<8x256xf32>
    %c10 = arith.constant 10 : index
    %c0_93 = arith.constant 0 : index
    %c0_94 = arith.constant 0 : index
    %163 = vector.load %arg2[%c10, %c0_93, %c0_94] : memref<25x48x8xf32, #tpu.memory_space<vmem>>, vector<1x48x8xf32>
    %164 = vector.shape_cast %163 : vector<1x48x8xf32> to vector<48x8xf32>
    %cst_95 = arith.constant dense<0.000000e+00> : vector<48x256xf32>
    %165 = tpu.matmul %164, %162, %cst_95 {dimension_numbers = #tpu.dot_dimension_numbers<[1], [0], [0], [1], [0, 0, 1, 1], [], []>} : vector<48x8xf32>, vector<8x256xf32>, vector<48x256xf32> -> vector<48x256xf32>
    %166 = arith.addf %157, %165 : vector<48x256xf32>
    %c0_96 = arith.constant 0 : index
    %c127 = arith.constant 127 : index
    %167 = vector.load %arg13[%c0_96, %c127] : memref<8x512xf32, #tpu.memory_space<vmem>>, vector<8x256xf32>
    %cst_97 = arith.constant 0.000000e+00 : f32
    %168 = vector.shape_cast %52 : vector<1x256xi1> to vector<1x256xi1>
    %169 = vector.broadcast %168 : vector<1x256xi1> to vector<8x256xi1>
    %170 = vector.broadcast %cst_97 : f32 to vector<8x256xf32>
    %171 = arith.select %169, %167, %170 : vector<8x256xi1>, vector<8x256xf32>
    %c11 = arith.constant 11 : index
    %c0_98 = arith.constant 0 : index
    %c0_99 = arith.constant 0 : index
    %172 = vector.load %arg2[%c11, %c0_98, %c0_99] : memref<25x48x8xf32, #tpu.memory_space<vmem>>, vector<1x48x8xf32>
    %173 = vector.shape_cast %172 : vector<1x48x8xf32> to vector<48x8xf32>
    %cst_100 = arith.constant dense<0.000000e+00> : vector<48x256xf32>
    %174 = tpu.matmul %173, %171, %cst_100 {dimension_numbers = #tpu.dot_dimension_numbers<[1], [0], [0], [1], [0, 0, 1, 1], [], []>} : vector<48x8xf32>, vector<8x256xf32>, vector<48x256xf32> -> vector<48x256xf32>
    %175 = arith.addf %166, %174 : vector<48x256xf32>
    %c0_101 = arith.constant 0 : index
    %c128_102 = arith.constant 128 : index
    %176 = vector.load %arg13[%c0_101, %c128_102] : memref<8x512xf32, #tpu.memory_space<vmem>>, vector<8x256xf32>
    %c12 = arith.constant 12 : index
    %c0_103 = arith.constant 0 : index
    %c0_104 = arith.constant 0 : index
    %177 = vector.load %arg2[%c12, %c0_103, %c0_104] : memref<25x48x8xf32, #tpu.memory_space<vmem>>, vector<1x48x8xf32>
    %178 = vector.shape_cast %177 : vector<1x48x8xf32> to vector<48x8xf32>
    %cst_105 = arith.constant dense<0.000000e+00> : vector<48x256xf32>
    %179 = tpu.matmul %178, %176, %cst_105 {dimension_numbers = #tpu.dot_dimension_numbers<[1], [0], [0], [1], [0, 0, 1, 1], [], []>} : vector<48x8xf32>, vector<8x256xf32>, vector<48x256xf32> -> vector<48x256xf32>
    %180 = arith.addf %175, %179 : vector<48x256xf32>
    %c0_106 = arith.constant 0 : index
    %c129 = arith.constant 129 : index
    %181 = vector.load %arg13[%c0_106, %c129] : memref<8x512xf32, #tpu.memory_space<vmem>>, vector<8x256xf32>
    %cst_107 = arith.constant 0.000000e+00 : f32
    %182 = vector.shape_cast %61 : vector<1x256xi1> to vector<1x256xi1>
    %183 = vector.broadcast %182 : vector<1x256xi1> to vector<8x256xi1>
    %184 = vector.broadcast %cst_107 : f32 to vector<8x256xf32>
    %185 = arith.select %183, %181, %184 : vector<8x256xi1>, vector<8x256xf32>
    %c13 = arith.constant 13 : index
    %c0_108 = arith.constant 0 : index
    %c0_109 = arith.constant 0 : index
    %186 = vector.load %arg2[%c13, %c0_108, %c0_109] : memref<25x48x8xf32, #tpu.memory_space<vmem>>, vector<1x48x8xf32>
    %187 = vector.shape_cast %186 : vector<1x48x8xf32> to vector<48x8xf32>
    %cst_110 = arith.constant dense<0.000000e+00> : vector<48x256xf32>
    %188 = tpu.matmul %187, %185, %cst_110 {dimension_numbers = #tpu.dot_dimension_numbers<[1], [0], [0], [1], [0, 0, 1, 1], [], []>} : vector<48x8xf32>, vector<8x256xf32>, vector<48x256xf32> -> vector<48x256xf32>
    %189 = arith.addf %180, %188 : vector<48x256xf32>
    %c0_111 = arith.constant 0 : index
    %c130 = arith.constant 130 : index
    %190 = vector.load %arg13[%c0_111, %c130] : memref<8x512xf32, #tpu.memory_space<vmem>>, vector<8x256xf32>
    %cst_112 = arith.constant 0.000000e+00 : f32
    %191 = vector.shape_cast %70 : vector<1x256xi1> to vector<1x256xi1>
    %192 = vector.broadcast %191 : vector<1x256xi1> to vector<8x256xi1>
    %193 = vector.broadcast %cst_112 : f32 to vector<8x256xf32>
    %194 = arith.select %192, %190, %193 : vector<8x256xi1>, vector<8x256xf32>
    %c14 = arith.constant 14 : index
    %c0_113 = arith.constant 0 : index
    %c0_114 = arith.constant 0 : index
    %195 = vector.load %arg2[%c14, %c0_113, %c0_114] : memref<25x48x8xf32, #tpu.memory_space<vmem>>, vector<1x48x8xf32>
    %196 = vector.shape_cast %195 : vector<1x48x8xf32> to vector<48x8xf32>
    %cst_115 = arith.constant dense<0.000000e+00> : vector<48x256xf32>
    %197 = tpu.matmul %196, %194, %cst_115 {dimension_numbers = #tpu.dot_dimension_numbers<[1], [0], [0], [1], [0, 0, 1, 1], [], []>} : vector<48x8xf32>, vector<8x256xf32>, vector<48x256xf32> -> vector<48x256xf32>
    %198 = arith.addf %189, %197 : vector<48x256xf32>
    %c0_116 = arith.constant 0 : index
    %c142 = arith.constant 142 : index
    %199 = vector.load %arg13[%c0_116, %c142] : memref<8x512xf32, #tpu.memory_space<vmem>>, vector<8x256xf32>
    %cst_117 = arith.constant 0.000000e+00 : f32
    %200 = vector.shape_cast %43 : vector<1x256xi1> to vector<1x256xi1>
    %201 = vector.broadcast %200 : vector<1x256xi1> to vector<8x256xi1>
    %202 = vector.broadcast %cst_117 : f32 to vector<8x256xf32>
    %203 = arith.select %201, %199, %202 : vector<8x256xi1>, vector<8x256xf32>
    %c15 = arith.constant 15 : index
    %c0_118 = arith.constant 0 : index
    %c0_119 = arith.constant 0 : index
    %204 = vector.load %arg2[%c15, %c0_118, %c0_119] : memref<25x48x8xf32, #tpu.memory_space<vmem>>, vector<1x48x8xf32>
    %205 = vector.shape_cast %204 : vector<1x48x8xf32> to vector<48x8xf32>
    %cst_120 = arith.constant dense<0.000000e+00> : vector<48x256xf32>
    %206 = tpu.matmul %205, %203, %cst_120 {dimension_numbers = #tpu.dot_dimension_numbers<[1], [0], [0], [1], [0, 0, 1, 1], [], []>} : vector<48x8xf32>, vector<8x256xf32>, vector<48x256xf32> -> vector<48x256xf32>
    %207 = arith.addf %198, %206 : vector<48x256xf32>
    %c0_121 = arith.constant 0 : index
    %c143 = arith.constant 143 : index
    %208 = vector.load %arg13[%c0_121, %c143] : memref<8x512xf32, #tpu.memory_space<vmem>>, vector<8x256xf32>
    %cst_122 = arith.constant 0.000000e+00 : f32
    %209 = vector.shape_cast %52 : vector<1x256xi1> to vector<1x256xi1>
    %210 = vector.broadcast %209 : vector<1x256xi1> to vector<8x256xi1>
    %211 = vector.broadcast %cst_122 : f32 to vector<8x256xf32>
    %212 = arith.select %210, %208, %211 : vector<8x256xi1>, vector<8x256xf32>
    %c16 = arith.constant 16 : index
    %c0_123 = arith.constant 0 : index
    %c0_124 = arith.constant 0 : index
    %213 = vector.load %arg2[%c16, %c0_123, %c0_124] : memref<25x48x8xf32, #tpu.memory_space<vmem>>, vector<1x48x8xf32>
    %214 = vector.shape_cast %213 : vector<1x48x8xf32> to vector<48x8xf32>
    %cst_125 = arith.constant dense<0.000000e+00> : vector<48x256xf32>
    %215 = tpu.matmul %214, %212, %cst_125 {dimension_numbers = #tpu.dot_dimension_numbers<[1], [0], [0], [1], [0, 0, 1, 1], [], []>} : vector<48x8xf32>, vector<8x256xf32>, vector<48x256xf32> -> vector<48x256xf32>
    %216 = arith.addf %207, %215 : vector<48x256xf32>
    %c0_126 = arith.constant 0 : index
    %c144 = arith.constant 144 : index
    %217 = vector.load %arg13[%c0_126, %c144] : memref<8x512xf32, #tpu.memory_space<vmem>>, vector<8x256xf32>
    %c17 = arith.constant 17 : index
    %c0_127 = arith.constant 0 : index
    %c0_128 = arith.constant 0 : index
    %218 = vector.load %arg2[%c17, %c0_127, %c0_128] : memref<25x48x8xf32, #tpu.memory_space<vmem>>, vector<1x48x8xf32>
    %219 = vector.shape_cast %218 : vector<1x48x8xf32> to vector<48x8xf32>
    %cst_129 = arith.constant dense<0.000000e+00> : vector<48x256xf32>
    %220 = tpu.matmul %219, %217, %cst_129 {dimension_numbers = #tpu.dot_dimension_numbers<[1], [0], [0], [1], [0, 0, 1, 1], [], []>} : vector<48x8xf32>, vector<8x256xf32>, vector<48x256xf32> -> vector<48x256xf32>
    %221 = arith.addf %216, %220 : vector<48x256xf32>
    %c0_130 = arith.constant 0 : index
    %c145 = arith.constant 145 : index
    %222 = vector.load %arg13[%c0_130, %c145] : memref<8x512xf32, #tpu.memory_space<vmem>>, vector<8x256xf32>
    %cst_131 = arith.constant 0.000000e+00 : f32
    %223 = vector.shape_cast %61 : vector<1x256xi1> to vector<1x256xi1>
    %224 = vector.broadcast %223 : vector<1x256xi1> to vector<8x256xi1>
    %225 = vector.broadcast %cst_131 : f32 to vector<8x256xf32>
    %226 = arith.select %224, %222, %225 : vector<8x256xi1>, vector<8x256xf32>
    %c18 = arith.constant 18 : index
    %c0_132 = arith.constant 0 : index
    %c0_133 = arith.constant 0 : index
    %227 = vector.load %arg2[%c18, %c0_132, %c0_133] : memref<25x48x8xf32, #tpu.memory_space<vmem>>, vector<1x48x8xf32>
    %228 = vector.shape_cast %227 : vector<1x48x8xf32> to vector<48x8xf32>
    %cst_134 = arith.constant dense<0.000000e+00> : vector<48x256xf32>
    %229 = tpu.matmul %228, %226, %cst_134 {dimension_numbers = #tpu.dot_dimension_numbers<[1], [0], [0], [1], [0, 0, 1, 1], [], []>} : vector<48x8xf32>, vector<8x256xf32>, vector<48x256xf32> -> vector<48x256xf32>
    %230 = arith.addf %221, %229 : vector<48x256xf32>
    %c0_135 = arith.constant 0 : index
    %c146 = arith.constant 146 : index
    %231 = vector.load %arg13[%c0_135, %c146] : memref<8x512xf32, #tpu.memory_space<vmem>>, vector<8x256xf32>
    %cst_136 = arith.constant 0.000000e+00 : f32
    %232 = vector.shape_cast %70 : vector<1x256xi1> to vector<1x256xi1>
    %233 = vector.broadcast %232 : vector<1x256xi1> to vector<8x256xi1>
    %234 = vector.broadcast %cst_136 : f32 to vector<8x256xf32>
    %235 = arith.select %233, %231, %234 : vector<8x256xi1>, vector<8x256xf32>
    %c19 = arith.constant 19 : index
    %c0_137 = arith.constant 0 : index
    %c0_138 = arith.constant 0 : index
    %236 = vector.load %arg2[%c19, %c0_137, %c0_138] : memref<25x48x8xf32, #tpu.memory_space<vmem>>, vector<1x48x8xf32>
    %237 = vector.shape_cast %236 : vector<1x48x8xf32> to vector<48x8xf32>
    %cst_139 = arith.constant dense<0.000000e+00> : vector<48x256xf32>
    %238 = tpu.matmul %237, %235, %cst_139 {dimension_numbers = #tpu.dot_dimension_numbers<[1], [0], [0], [1], [0, 0, 1, 1], [], []>} : vector<48x8xf32>, vector<8x256xf32>, vector<48x256xf32> -> vector<48x256xf32>
    %239 = arith.addf %230, %238 : vector<48x256xf32>
    %c0_140 = arith.constant 0 : index
    %c158 = arith.constant 158 : index
    %240 = vector.load %arg13[%c0_140, %c158] : memref<8x512xf32, #tpu.memory_space<vmem>>, vector<8x256xf32>
    %cst_141 = arith.constant 0.000000e+00 : f32
    %241 = vector.shape_cast %43 : vector<1x256xi1> to vector<1x256xi1>
    %242 = vector.broadcast %241 : vector<1x256xi1> to vector<8x256xi1>
    %243 = vector.broadcast %cst_141 : f32 to vector<8x256xf32>
    %244 = arith.select %242, %240, %243 : vector<8x256xi1>, vector<8x256xf32>
    %c20 = arith.constant 20 : index
    %c0_142 = arith.constant 0 : index
    %c0_143 = arith.constant 0 : index
    %245 = vector.load %arg2[%c20, %c0_142, %c0_143] : memref<25x48x8xf32, #tpu.memory_space<vmem>>, vector<1x48x8xf32>
    %246 = vector.shape_cast %245 : vector<1x48x8xf32> to vector<48x8xf32>
    %cst_144 = arith.constant dense<0.000000e+00> : vector<48x256xf32>
    %247 = tpu.matmul %246, %244, %cst_144 {dimension_numbers = #tpu.dot_dimension_numbers<[1], [0], [0], [1], [0, 0, 1, 1], [], []>} : vector<48x8xf32>, vector<8x256xf32>, vector<48x256xf32> -> vector<48x256xf32>
    %248 = arith.addf %239, %247 : vector<48x256xf32>
    %c0_145 = arith.constant 0 : index
    %c159 = arith.constant 159 : index
    %249 = vector.load %arg13[%c0_145, %c159] : memref<8x512xf32, #tpu.memory_space<vmem>>, vector<8x256xf32>
    %cst_146 = arith.constant 0.000000e+00 : f32
    %250 = vector.shape_cast %52 : vector<1x256xi1> to vector<1x256xi1>
    %251 = vector.broadcast %250 : vector<1x256xi1> to vector<8x256xi1>
    %252 = vector.broadcast %cst_146 : f32 to vector<8x256xf32>
    %253 = arith.select %251, %249, %252 : vector<8x256xi1>, vector<8x256xf32>
    %c21 = arith.constant 21 : index
    %c0_147 = arith.constant 0 : index
    %c0_148 = arith.constant 0 : index
    %254 = vector.load %arg2[%c21, %c0_147, %c0_148] : memref<25x48x8xf32, #tpu.memory_space<vmem>>, vector<1x48x8xf32>
    %255 = vector.shape_cast %254 : vector<1x48x8xf32> to vector<48x8xf32>
    %cst_149 = arith.constant dense<0.000000e+00> : vector<48x256xf32>
    %256 = tpu.matmul %255, %253, %cst_149 {dimension_numbers = #tpu.dot_dimension_numbers<[1], [0], [0], [1], [0, 0, 1, 1], [], []>} : vector<48x8xf32>, vector<8x256xf32>, vector<48x256xf32> -> vector<48x256xf32>
    %257 = arith.addf %248, %256 : vector<48x256xf32>
    %c0_150 = arith.constant 0 : index
    %c160 = arith.constant 160 : index
    %258 = vector.load %arg13[%c0_150, %c160] : memref<8x512xf32, #tpu.memory_space<vmem>>, vector<8x256xf32>
    %c22 = arith.constant 22 : index
    %c0_151 = arith.constant 0 : index
    %c0_152 = arith.constant 0 : index
    %259 = vector.load %arg2[%c22, %c0_151, %c0_152] : memref<25x48x8xf32, #tpu.memory_space<vmem>>, vector<1x48x8xf32>
    %260 = vector.shape_cast %259 : vector<1x48x8xf32> to vector<48x8xf32>
    %cst_153 = arith.constant dense<0.000000e+00> : vector<48x256xf32>
    %261 = tpu.matmul %260, %258, %cst_153 {dimension_numbers = #tpu.dot_dimension_numbers<[1], [0], [0], [1], [0, 0, 1, 1], [], []>} : vector<48x8xf32>, vector<8x256xf32>, vector<48x256xf32> -> vector<48x256xf32>
    %262 = arith.addf %257, %261 : vector<48x256xf32>
    %c0_154 = arith.constant 0 : index
    %c161 = arith.constant 161 : index
    %263 = vector.load %arg13[%c0_154, %c161] : memref<8x512xf32, #tpu.memory_space<vmem>>, vector<8x256xf32>
    %cst_155 = arith.constant 0.000000e+00 : f32
    %264 = vector.shape_cast %61 : vector<1x256xi1> to vector<1x256xi1>
    %265 = vector.broadcast %264 : vector<1x256xi1> to vector<8x256xi1>
    %266 = vector.broadcast %cst_155 : f32 to vector<8x256xf32>
    %267 = arith.select %265, %263, %266 : vector<8x256xi1>, vector<8x256xf32>
    %c23 = arith.constant 23 : index
    %c0_156 = arith.constant 0 : index
    %c0_157 = arith.constant 0 : index
    %268 = vector.load %arg2[%c23, %c0_156, %c0_157] : memref<25x48x8xf32, #tpu.memory_space<vmem>>, vector<1x48x8xf32>
    %269 = vector.shape_cast %268 : vector<1x48x8xf32> to vector<48x8xf32>
    %cst_158 = arith.constant dense<0.000000e+00> : vector<48x256xf32>
    %270 = tpu.matmul %269, %267, %cst_158 {dimension_numbers = #tpu.dot_dimension_numbers<[1], [0], [0], [1], [0, 0, 1, 1], [], []>} : vector<48x8xf32>, vector<8x256xf32>, vector<48x256xf32> -> vector<48x256xf32>
    %271 = arith.addf %262, %270 : vector<48x256xf32>
    %c0_159 = arith.constant 0 : index
    %c162 = arith.constant 162 : index
    %272 = vector.load %arg13[%c0_159, %c162] : memref<8x512xf32, #tpu.memory_space<vmem>>, vector<8x256xf32>
    %cst_160 = arith.constant 0.000000e+00 : f32
    %273 = vector.shape_cast %70 : vector<1x256xi1> to vector<1x256xi1>
    %274 = vector.broadcast %273 : vector<1x256xi1> to vector<8x256xi1>
    %275 = vector.broadcast %cst_160 : f32 to vector<8x256xf32>
    %276 = arith.select %274, %272, %275 : vector<8x256xi1>, vector<8x256xf32>
    %c24 = arith.constant 24 : index
    %c0_161 = arith.constant 0 : index
    %c0_162 = arith.constant 0 : index
    %277 = vector.load %arg2[%c24, %c0_161, %c0_162] : memref<25x48x8xf32, #tpu.memory_space<vmem>>, vector<1x48x8xf32>
    %278 = vector.shape_cast %277 : vector<1x48x8xf32> to vector<48x8xf32>
    %cst_163 = arith.constant dense<0.000000e+00> : vector<48x256xf32>
    %279 = tpu.matmul %278, %276, %cst_163 {dimension_numbers = #tpu.dot_dimension_numbers<[1], [0], [0], [1], [0, 0, 1, 1], [], []>} : vector<48x8xf32>, vector<8x256xf32>, vector<48x256xf32> -> vector<48x256xf32>
    %280 = arith.addf %271, %279 : vector<48x256xf32>
    %c0_164 = arith.constant 0 : index
    %c0_165 = arith.constant 0 : index
    %281 = vector.load %arg3[%c0_164, %c0_165] : memref<48x1xf32, #tpu.memory_space<vmem>>, vector<48x1xf32>
    %282 = vector.broadcast %281 : vector<48x1xf32> to vector<48x256xf32>
    %283 = arith.addf %280, %282 : vector<48x256xf32>
    %cst_166 = arith.constant 0.000000e+00 : f32
    %284 = vector.broadcast %cst_166 : f32 to vector<48x256xf32>
    %285 = arith.maximumf %283, %284 : vector<48x256xf32>
    %cst_167 = arith.constant 0.000000e+00 : f32
    %286 = vector.broadcast %cst_167 : f32 to vector<49x128xf32>
    %c0_168 = arith.constant 0 : index
    %c0_169 = arith.constant 0 : index
    %287 = vector.load %arg14[%c0_168, %c0_169] : memref<49x512xf32, #tpu.memory_space<vmem>>, vector<49x128xf32>
    tpu.vector_store %arg14[%c0_168, %c0_169], %286 {strides = array<i32>} : memref<49x512xf32, #tpu.memory_space<vmem>>, vector<49x128xf32>,
    %cst_170 = arith.constant 0.000000e+00 : f32
    %288 = vector.broadcast %cst_170 : f32 to vector<49x128xf32>
    %c0_171 = arith.constant 0 : index
    %c384 = arith.constant 384 : index
    %289 = vector.load %arg14[%c0_171, %c384] : memref<49x512xf32, #tpu.memory_space<vmem>>, vector<49x128xf32>
    tpu.vector_store %arg14[%c0_171, %c384], %288 {strides = array<i32>} : memref<49x512xf32, #tpu.memory_space<vmem>>, vector<49x128xf32>,
    %c0_172 = arith.constant 0 : index
    %c128_173 = arith.constant 128 : index
    %290 = vector.load %arg14[%c0_172, %c128_173] : memref<49x512xf32, #tpu.memory_space<vmem>>, vector<48x256xf32>
    tpu.vector_store %arg14[%c0_172, %c128_173], %285 {strides = array<i32>} : memref<49x512xf32, #tpu.memory_space<vmem>>, vector<48x256xf32>,
    %c0_174 = arith.constant 0 : index
    %c0_175 = arith.constant 0 : index
    %291 = vector.load %arg1[%c0_174, %c0_175] : memref<1x256xf32, #tpu.memory_space<vmem>>, vector<1x256xf32>
    %c48 = arith.constant 48 : index
    %c128_176 = arith.constant 128 : index
    %292 = vector.load %arg14[%c48, %c128_176] : memref<49x512xf32, #tpu.memory_space<vmem>>, vector<1x256xf32>
    tpu.vector_store %arg14[%c48, %c128_176], %291 {strides = array<i32>} : memref<49x512xf32, #tpu.memory_space<vmem>>, vector<1x256xf32>,
    %cst_177 = arith.constant 0.000000e+00 : f32
    %293 = vector.broadcast %cst_177 : f32 to vector<32x256xf32>
    %c0_178 = arith.constant 0 : index
    %c111_179 = arith.constant 111 : index
    %294 = vector.load %arg14[%c0_178, %c111_179] : memref<49x512xf32, #tpu.memory_space<vmem>>, vector<49x256xf32>
    %cst_180 = arith.constant 0.000000e+00 : f32
    %295 = vector.shape_cast %52 : vector<1x256xi1> to vector<1x256xi1>
    %296 = vector.broadcast %295 : vector<1x256xi1> to vector<49x256xi1>
    %297 = vector.broadcast %cst_180 : f32 to vector<49x256xf32>
    %298 = arith.select %296, %294, %297 : vector<49x256xi1>, vector<49x256xf32>
    %c0_181 = arith.constant 0 : index
    %c0_182 = arith.constant 0 : index
    %c0_183 = arith.constant 0 : index
    %299 = vector.load %arg4[%c0_181, %c0_182, %c0_183] : memref<9x32x49xf32, #tpu.memory_space<vmem>>, vector<1x32x49xf32>
    %300 = vector.shape_cast %299 : vector<1x32x49xf32> to vector<32x49xf32>
    %cst_184 = arith.constant dense<0.000000e+00> : vector<32x256xf32>
    %301 = tpu.matmul %300, %298, %cst_184 {dimension_numbers = #tpu.dot_dimension_numbers<[1], [0], [0], [1], [0, 0, 1, 1], [], []>} : vector<32x49xf32>, vector<49x256xf32>, vector<32x256xf32> -> vector<32x256xf32>
    %302 = arith.addf %293, %301 : vector<32x256xf32>
    %c0_185 = arith.constant 0 : index
    %c112_186 = arith.constant 112 : index
    %303 = vector.load %arg14[%c0_185, %c112_186] : memref<49x512xf32, #tpu.memory_space<vmem>>, vector<49x256xf32>
    %c1_187 = arith.constant 1 : index
    %c0_188 = arith.constant 0 : index
    %c0_189 = arith.constant 0 : index
    %304 = vector.load %arg4[%c1_187, %c0_188, %c0_189] : memref<9x32x49xf32, #tpu.memory_space<vmem>>, vector<1x32x49xf32>
    %305 = vector.shape_cast %304 : vector<1x32x49xf32> to vector<32x49xf32>
    %cst_190 = arith.constant dense<0.000000e+00> : vector<32x256xf32>
    %306 = tpu.matmul %305, %303, %cst_190 {dimension_numbers = #tpu.dot_dimension_numbers<[1], [0], [0], [1], [0, 0, 1, 1], [], []>} : vector<32x49xf32>, vector<49x256xf32>, vector<32x256xf32> -> vector<32x256xf32>
    %307 = arith.addf %302, %306 : vector<32x256xf32>
    %c0_191 = arith.constant 0 : index
    %c113_192 = arith.constant 113 : index
    %308 = vector.load %arg14[%c0_191, %c113_192] : memref<49x512xf32, #tpu.memory_space<vmem>>, vector<49x256xf32>
    %cst_193 = arith.constant 0.000000e+00 : f32
    %309 = vector.shape_cast %61 : vector<1x256xi1> to vector<1x256xi1>
    %310 = vector.broadcast %309 : vector<1x256xi1> to vector<49x256xi1>
    %311 = vector.broadcast %cst_193 : f32 to vector<49x256xf32>
    %312 = arith.select %310, %308, %311 : vector<49x256xi1>, vector<49x256xf32>
    %c2_194 = arith.constant 2 : index
    %c0_195 = arith.constant 0 : index
    %c0_196 = arith.constant 0 : index
    %313 = vector.load %arg4[%c2_194, %c0_195, %c0_196] : memref<9x32x49xf32, #tpu.memory_space<vmem>>, vector<1x32x49xf32>
    %314 = vector.shape_cast %313 : vector<1x32x49xf32> to vector<32x49xf32>
    %cst_197 = arith.constant dense<0.000000e+00> : vector<32x256xf32>
    %315 = tpu.matmul %314, %312, %cst_197 {dimension_numbers = #tpu.dot_dimension_numbers<[1], [0], [0], [1], [0, 0, 1, 1], [], []>} : vector<32x49xf32>, vector<49x256xf32>, vector<32x256xf32> -> vector<32x256xf32>
    %316 = arith.addf %307, %315 : vector<32x256xf32>
    %c0_198 = arith.constant 0 : index
    %c127_199 = arith.constant 127 : index
    %317 = vector.load %arg14[%c0_198, %c127_199] : memref<49x512xf32, #tpu.memory_space<vmem>>, vector<49x256xf32>
    %cst_200 = arith.constant 0.000000e+00 : f32
    %318 = vector.shape_cast %52 : vector<1x256xi1> to vector<1x256xi1>
    %319 = vector.broadcast %318 : vector<1x256xi1> to vector<49x256xi1>
    %320 = vector.broadcast %cst_200 : f32 to vector<49x256xf32>
    %321 = arith.select %319, %317, %320 : vector<49x256xi1>, vector<49x256xf32>
    %c3_201 = arith.constant 3 : index
    %c0_202 = arith.constant 0 : index
    %c0_203 = arith.constant 0 : index
    %322 = vector.load %arg4[%c3_201, %c0_202, %c0_203] : memref<9x32x49xf32, #tpu.memory_space<vmem>>, vector<1x32x49xf32>
    %323 = vector.shape_cast %322 : vector<1x32x49xf32> to vector<32x49xf32>
    %cst_204 = arith.constant dense<0.000000e+00> : vector<32x256xf32>
    %324 = tpu.matmul %323, %321, %cst_204 {dimension_numbers = #tpu.dot_dimension_numbers<[1], [0], [0], [1], [0, 0, 1, 1], [], []>} : vector<32x49xf32>, vector<49x256xf32>, vector<32x256xf32> -> vector<32x256xf32>
    %325 = arith.addf %316, %324 : vector<32x256xf32>
    %c0_205 = arith.constant 0 : index
    %c128_206 = arith.constant 128 : index
    %326 = vector.load %arg14[%c0_205, %c128_206] : memref<49x512xf32, #tpu.memory_space<vmem>>, vector<49x256xf32>
    %c4_207 = arith.constant 4 : index
    %c0_208 = arith.constant 0 : index
    %c0_209 = arith.constant 0 : index
    %327 = vector.load %arg4[%c4_207, %c0_208, %c0_209] : memref<9x32x49xf32, #tpu.memory_space<vmem>>, vector<1x32x49xf32>
    %328 = vector.shape_cast %327 : vector<1x32x49xf32> to vector<32x49xf32>
    %cst_210 = arith.constant dense<0.000000e+00> : vector<32x256xf32>
    %329 = tpu.matmul %328, %326, %cst_210 {dimension_numbers = #tpu.dot_dimension_numbers<[1], [0], [0], [1], [0, 0, 1, 1], [], []>} : vector<32x49xf32>, vector<49x256xf32>, vector<32x256xf32> -> vector<32x256xf32>
    %330 = arith.addf %325, %329 : vector<32x256xf32>
    %c0_211 = arith.constant 0 : index
    %c129_212 = arith.constant 129 : index
    %331 = vector.load %arg14[%c0_211, %c129_212] : memref<49x512xf32, #tpu.memory_space<vmem>>, vector<49x256xf32>
    %cst_213 = arith.constant 0.000000e+00 : f32
    %332 = vector.shape_cast %61 : vector<1x256xi1> to vector<1x256xi1>
    %333 = vector.broadcast %332 : vector<1x256xi1> to vector<49x256xi1>
    %334 = vector.broadcast %cst_213 : f32 to vector<49x256xf32>
    %335 = arith.select %333, %331, %334 : vector<49x256xi1>, vector<49x256xf32>
    %c5_214 = arith.constant 5 : index
    %c0_215 = arith.constant 0 : index
    %c0_216 = arith.constant 0 : index
    %336 = vector.load %arg4[%c5_214, %c0_215, %c0_216] : memref<9x32x49xf32, #tpu.memory_space<vmem>>, vector<1x32x49xf32>
    %337 = vector.shape_cast %336 : vector<1x32x49xf32> to vector<32x49xf32>
    %cst_217 = arith.constant dense<0.000000e+00> : vector<32x256xf32>
    %338 = tpu.matmul %337, %335, %cst_217 {dimension_numbers = #tpu.dot_dimension_numbers<[1], [0], [0], [1], [0, 0, 1, 1], [], []>} : vector<32x49xf32>, vector<49x256xf32>, vector<32x256xf32> -> vector<32x256xf32>
    %339 = arith.addf %330, %338 : vector<32x256xf32>
    %c0_218 = arith.constant 0 : index
    %c143_219 = arith.constant 143 : index
    %340 = vector.load %arg14[%c0_218, %c143_219] : memref<49x512xf32, #tpu.memory_space<vmem>>, vector<49x256xf32>
    %cst_220 = arith.constant 0.000000e+00 : f32
    %341 = vector.shape_cast %52 : vector<1x256xi1> to vector<1x256xi1>
    %342 = vector.broadcast %341 : vector<1x256xi1> to vector<49x256xi1>
    %343 = vector.broadcast %cst_220 : f32 to vector<49x256xf32>
    %344 = arith.select %342, %340, %343 : vector<49x256xi1>, vector<49x256xf32>
    %c6_221 = arith.constant 6 : index
    %c0_222 = arith.constant 0 : index
    %c0_223 = arith.constant 0 : index
    %345 = vector.load %arg4[%c6_221, %c0_222, %c0_223] : memref<9x32x49xf32, #tpu.memory_space<vmem>>, vector<1x32x49xf32>
    %346 = vector.shape_cast %345 : vector<1x32x49xf32> to vector<32x49xf32>
    %cst_224 = arith.constant dense<0.000000e+00> : vector<32x256xf32>
    %347 = tpu.matmul %346, %344, %cst_224 {dimension_numbers = #tpu.dot_dimension_numbers<[1], [0], [0], [1], [0, 0, 1, 1], [], []>} : vector<32x49xf32>, vector<49x256xf32>, vector<32x256xf32> -> vector<32x256xf32>
    %348 = arith.addf %339, %347 : vector<32x256xf32>
    %c0_225 = arith.constant 0 : index
    %c144_226 = arith.constant 144 : index
    %349 = vector.load %arg14[%c0_225, %c144_226] : memref<49x512xf32, #tpu.memory_space<vmem>>, vector<49x256xf32>
    %c7_227 = arith.constant 7 : index
    %c0_228 = arith.constant 0 : index
    %c0_229 = arith.constant 0 : index
    %350 = vector.load %arg4[%c7_227, %c0_228, %c0_229] : memref<9x32x49xf32, #tpu.memory_space<vmem>>, vector<1x32x49xf32>
    %351 = vector.shape_cast %350 : vector<1x32x49xf32> to vector<32x49xf32>
    %cst_230 = arith.constant dense<0.000000e+00> : vector<32x256xf32>
    %352 = tpu.matmul %351, %349, %cst_230 {dimension_numbers = #tpu.dot_dimension_numbers<[1], [0], [0], [1], [0, 0, 1, 1], [], []>} : vector<32x49xf32>, vector<49x256xf32>, vector<32x256xf32> -> vector<32x256xf32>
    %353 = arith.addf %348, %352 : vector<32x256xf32>
    %c0_231 = arith.constant 0 : index
    %c145_232 = arith.constant 145 : index
    %354 = vector.load %arg14[%c0_231, %c145_232] : memref<49x512xf32, #tpu.memory_space<vmem>>, vector<49x256xf32>
    %cst_233 = arith.constant 0.000000e+00 : f32
    %355 = vector.shape_cast %61 : vector<1x256xi1> to vector<1x256xi1>
    %356 = vector.broadcast %355 : vector<1x256xi1> to vector<49x256xi1>
    %357 = vector.broadcast %cst_233 : f32 to vector<49x256xf32>
    %358 = arith.select %356, %354, %357 : vector<49x256xi1>, vector<49x256xf32>
    %c8_234 = arith.constant 8 : index
    %c0_235 = arith.constant 0 : index
    %c0_236 = arith.constant 0 : index
    %359 = vector.load %arg4[%c8_234, %c0_235, %c0_236] : memref<9x32x49xf32, #tpu.memory_space<vmem>>, vector<1x32x49xf32>
    %360 = vector.shape_cast %359 : vector<1x32x49xf32> to vector<32x49xf32>
    %cst_237 = arith.constant dense<0.000000e+00> : vector<32x256xf32>
    %361 = tpu.matmul %360, %358, %cst_237 {dimension_numbers = #tpu.dot_dimension_numbers<[1], [0], [0], [1], [0, 0, 1, 1], [], []>} : vector<32x49xf32>, vector<49x256xf32>, vector<32x256xf32> -> vector<32x256xf32>
    %362 = arith.addf %353, %361 : vector<32x256xf32>
    %c0_238 = arith.constant 0 : index
    %c0_239 = arith.constant 0 : index
    %363 = vector.load %arg5[%c0_238, %c0_239] : memref<32x1xf32, #tpu.memory_space<vmem>>, vector<32x1xf32>
    %364 = vector.broadcast %363 : vector<32x1xf32> to vector<32x256xf32>
    %365 = arith.addf %362, %364 : vector<32x256xf32>
    %cst_240 = arith.constant 0.000000e+00 : f32
    %366 = vector.broadcast %cst_240 : f32 to vector<32x256xf32>
    %367 = arith.maximumf %365, %366 : vector<32x256xf32>
    %c0_241 = arith.constant 0 : index
    %c0_242 = arith.constant 0 : index
    %368 = vector.load %arg6[%c0_241, %c0_242] : memref<1x32xf32, #tpu.memory_space<vmem>>, vector<1x32xf32>
    %cst_243 = arith.constant dense<0.000000e+00> : vector<1x256xf32>
    %369 = tpu.matmul %368, %367, %cst_243 {dimension_numbers = #tpu.dot_dimension_numbers<[1], [0], [0], [1], [0, 0, 1, 1], [], []>} : vector<1x32xf32>, vector<32x256xf32>, vector<1x256xf32> -> vector<1x256xf32>
    %c0_244 = arith.constant 0 : index
    %c0_245 = arith.constant 0 : index
    %370 = vector.load %arg7[%c0_244, %c0_245] : memref<1x1xf32, #tpu.memory_space<vmem>>, vector<1x1xf32>
    %371 = vector.broadcast %370 : vector<1x1xf32> to vector<1x256xf32>
    %372 = arith.addf %369, %371 : vector<1x256xf32>
    %cst_246 = arith.constant dense<0xFF800000> : vector<1xf32>
    %373 = vector.multi_reduction <maximumf>, %372, %cst_246 [1] : vector<1x256xf32> to vector<1xf32>
    %374 = vector.shape_cast %373 : vector<1xf32> to vector<1x1xf32>
    %375 = vector.broadcast %374 : vector<1x1xf32> to vector<1x256xf32>
    %376 = arith.subf %372, %375 : vector<1x256xf32>
    %377 = math.exp %376 : vector<1x256xf32>
    %cst_247 = arith.constant dense<0.000000e+00> : vector<1xf32>
    %378 = vector.multi_reduction <add>, %377, %cst_247 [1] : vector<1x256xf32> to vector<1xf32>
    %379 = vector.shape_cast %378 : vector<1xf32> to vector<1x1xf32>
    %380 = tpu.reciprocal %379 {approx = true} : vector<1x1xf32> -> vector<1x1xf32>
    %381 = vector.broadcast %380 : vector<1x1xf32> to vector<1x256xf32>
    %382 = arith.mulf %377, %381 : vector<1x256xf32>
    %c0_248 = arith.constant 0 : index
    %c0_249 = arith.constant 0 : index
    %383 = vector.load %arg12[%c0_248, %c0_249] : memref<1x384xf32, #tpu.memory_space<vmem>>, vector<1x256xf32>
    tpu.vector_store %arg12[%c0_248, %c0_249], %382 {strides = array<i32>} : memref<1x384xf32, #tpu.memory_space<vmem>>, vector<1x256xf32>,
    %384 = vector.extract_strided_slice %367 {offsets = [0, 0], sizes = [1, 256], strides = [1, 1]} : vector<32x256xf32> to vector<1x256xf32>
    %c0_250 = arith.constant 0 : index
    %c0_251 = arith.constant 0 : index
    %385 = vector.load %arg15[%c0_250, %c0_251] : memref<1x8192xf32, #tpu.memory_space<vmem>>, vector<1x256xf32>
    tpu.vector_store %arg15[%c0_250, %c0_251], %384 {strides = array<i32>} : memref<1x8192xf32, #tpu.memory_space<vmem>>, vector<1x256xf32>,
    %386 = vector.extract_strided_slice %367 {offsets = [1, 0], sizes = [1, 256], strides = [1, 1]} : vector<32x256xf32> to vector<1x256xf32>
    %c0_252 = arith.constant 0 : index
    %c256 = arith.constant 256 : index
    %387 = vector.load %arg15[%c0_252, %c256] : memref<1x8192xf32, #tpu.memory_space<vmem>>, vector<1x256xf32>
    tpu.vector_store %arg15[%c0_252, %c256], %386 {strides = array<i32>} : memref<1x8192xf32, #tpu.memory_space<vmem>>, vector<1x256xf32>,
    %388 = vector.extract_strided_slice %367 {offsets = [2, 0], sizes = [1, 256], strides = [1, 1]} : vector<32x256xf32> to vector<1x256xf32>
    %c0_253 = arith.constant 0 : index
    %c512 = arith.constant 512 : index
    %389 = vector.load %arg15[%c0_253, %c512] : memref<1x8192xf32, #tpu.memory_space<vmem>>, vector<1x256xf32>
    tpu.vector_store %arg15[%c0_253, %c512], %388 {strides = array<i32>} : memref<1x8192xf32, #tpu.memory_space<vmem>>, vector<1x256xf32>,
    %390 = vector.extract_strided_slice %367 {offsets = [3, 0], sizes = [1, 256], strides = [1, 1]} : vector<32x256xf32> to vector<1x256xf32>
    %c0_254 = arith.constant 0 : index
    %c768 = arith.constant 768 : index
    %391 = vector.load %arg15[%c0_254, %c768] : memref<1x8192xf32, #tpu.memory_space<vmem>>, vector<1x256xf32>
    tpu.vector_store %arg15[%c0_254, %c768], %390 {strides = array<i32>} : memref<1x8192xf32, #tpu.memory_space<vmem>>, vector<1x256xf32>,
    %392 = vector.extract_strided_slice %367 {offsets = [4, 0], sizes = [1, 256], strides = [1, 1]} : vector<32x256xf32> to vector<1x256xf32>
    %c0_255 = arith.constant 0 : index
    %c1024 = arith.constant 1024 : index
    %393 = vector.load %arg15[%c0_255, %c1024] : memref<1x8192xf32, #tpu.memory_space<vmem>>, vector<1x256xf32>
    tpu.vector_store %arg15[%c0_255, %c1024], %392 {strides = array<i32>} : memref<1x8192xf32, #tpu.memory_space<vmem>>, vector<1x256xf32>,
    %394 = vector.extract_strided_slice %367 {offsets = [5, 0], sizes = [1, 256], strides = [1, 1]} : vector<32x256xf32> to vector<1x256xf32>
    %c0_256 = arith.constant 0 : index
    %c1280 = arith.constant 1280 : index
    %395 = vector.load %arg15[%c0_256, %c1280] : memref<1x8192xf32, #tpu.memory_space<vmem>>, vector<1x256xf32>
    tpu.vector_store %arg15[%c0_256, %c1280], %394 {strides = array<i32>} : memref<1x8192xf32, #tpu.memory_space<vmem>>, vector<1x256xf32>,
    %396 = vector.extract_strided_slice %367 {offsets = [6, 0], sizes = [1, 256], strides = [1, 1]} : vector<32x256xf32> to vector<1x256xf32>
    %c0_257 = arith.constant 0 : index
    %c1536 = arith.constant 1536 : index
    %397 = vector.load %arg15[%c0_257, %c1536] : memref<1x8192xf32, #tpu.memory_space<vmem>>, vector<1x256xf32>
    tpu.vector_store %arg15[%c0_257, %c1536], %396 {strides = array<i32>} : memref<1x8192xf32, #tpu.memory_space<vmem>>, vector<1x256xf32>,
    %398 = vector.extract_strided_slice %367 {offsets = [7, 0], sizes = [1, 256], strides = [1, 1]} : vector<32x256xf32> to vector<1x256xf32>
    %c0_258 = arith.constant 0 : index
    %c1792 = arith.constant 1792 : index
    %399 = vector.load %arg15[%c0_258, %c1792] : memref<1x8192xf32, #tpu.memory_space<vmem>>, vector<1x256xf32>
    tpu.vector_store %arg15[%c0_258, %c1792], %398 {strides = array<i32>} : memref<1x8192xf32, #tpu.memory_space<vmem>>, vector<1x256xf32>,
    %400 = vector.extract_strided_slice %367 {offsets = [8, 0], sizes = [1, 256], strides = [1, 1]} : vector<32x256xf32> to vector<1x256xf32>
    %c0_259 = arith.constant 0 : index
    %c2048 = arith.constant 2048 : index
    %401 = vector.load %arg15[%c0_259, %c2048] : memref<1x8192xf32, #tpu.memory_space<vmem>>, vector<1x256xf32>
    tpu.vector_store %arg15[%c0_259, %c2048], %400 {strides = array<i32>} : memref<1x8192xf32, #tpu.memory_space<vmem>>, vector<1x256xf32>,
    %402 = vector.extract_strided_slice %367 {offsets = [9, 0], sizes = [1, 256], strides = [1, 1]} : vector<32x256xf32> to vector<1x256xf32>
    %c0_260 = arith.constant 0 : index
    %c2304 = arith.constant 2304 : index
    %403 = vector.load %arg15[%c0_260, %c2304] : memref<1x8192xf32, #tpu.memory_space<vmem>>, vector<1x256xf32>
    tpu.vector_store %arg15[%c0_260, %c2304], %402 {strides = array<i32>} : memref<1x8192xf32, #tpu.memory_space<vmem>>, vector<1x256xf32>,
    %404 = vector.extract_strided_slice %367 {offsets = [10, 0], sizes = [1, 256], strides = [1, 1]} : vector<32x256xf32> to vector<1x256xf32>
    %c0_261 = arith.constant 0 : index
    %c2560 = arith.constant 2560 : index
    %405 = vector.load %arg15[%c0_261, %c2560] : memref<1x8192xf32, #tpu.memory_space<vmem>>, vector<1x256xf32>
    tpu.vector_store %arg15[%c0_261, %c2560], %404 {strides = array<i32>} : memref<1x8192xf32, #tpu.memory_space<vmem>>, vector<1x256xf32>,
    %406 = vector.extract_strided_slice %367 {offsets = [11, 0], sizes = [1, 256], strides = [1, 1]} : vector<32x256xf32> to vector<1x256xf32>
    %c0_262 = arith.constant 0 : index
    %c2816 = arith.constant 2816 : index
    %407 = vector.load %arg15[%c0_262, %c2816] : memref<1x8192xf32, #tpu.memory_space<vmem>>, vector<1x256xf32>
    tpu.vector_store %arg15[%c0_262, %c2816], %406 {strides = array<i32>} : memref<1x8192xf32, #tpu.memory_space<vmem>>, vector<1x256xf32>,
    %408 = vector.extract_strided_slice %367 {offsets = [12, 0], sizes = [1, 256], strides = [1, 1]} : vector<32x256xf32> to vector<1x256xf32>
    %c0_263 = arith.constant 0 : index
    %c3072 = arith.constant 3072 : index
    %409 = vector.load %arg15[%c0_263, %c3072] : memref<1x8192xf32, #tpu.memory_space<vmem>>, vector<1x256xf32>
    tpu.vector_store %arg15[%c0_263, %c3072], %408 {strides = array<i32>} : memref<1x8192xf32, #tpu.memory_space<vmem>>, vector<1x256xf32>,
    %410 = vector.extract_strided_slice %367 {offsets = [13, 0], sizes = [1, 256], strides = [1, 1]} : vector<32x256xf32> to vector<1x256xf32>
    %c0_264 = arith.constant 0 : index
    %c3328 = arith.constant 3328 : index
    %411 = vector.load %arg15[%c0_264, %c3328] : memref<1x8192xf32, #tpu.memory_space<vmem>>, vector<1x256xf32>
    tpu.vector_store %arg15[%c0_264, %c3328], %410 {strides = array<i32>} : memref<1x8192xf32, #tpu.memory_space<vmem>>, vector<1x256xf32>,
    %412 = vector.extract_strided_slice %367 {offsets = [14, 0], sizes = [1, 256], strides = [1, 1]} : vector<32x256xf32> to vector<1x256xf32>
    %c0_265 = arith.constant 0 : index
    %c3584 = arith.constant 3584 : index
    %413 = vector.load %arg15[%c0_265, %c3584] : memref<1x8192xf32, #tpu.memory_space<vmem>>, vector<1x256xf32>
    tpu.vector_store %arg15[%c0_265, %c3584], %412 {strides = array<i32>} : memref<1x8192xf32, #tpu.memory_space<vmem>>, vector<1x256xf32>,
    %414 = vector.extract_strided_slice %367 {offsets = [15, 0], sizes = [1, 256], strides = [1, 1]} : vector<32x256xf32> to vector<1x256xf32>
    %c0_266 = arith.constant 0 : index
    %c3840 = arith.constant 3840 : index
    %415 = vector.load %arg15[%c0_266, %c3840] : memref<1x8192xf32, #tpu.memory_space<vmem>>, vector<1x256xf32>
    tpu.vector_store %arg15[%c0_266, %c3840], %414 {strides = array<i32>} : memref<1x8192xf32, #tpu.memory_space<vmem>>, vector<1x256xf32>,
    %416 = vector.extract_strided_slice %367 {offsets = [16, 0], sizes = [1, 256], strides = [1, 1]} : vector<32x256xf32> to vector<1x256xf32>
    %c0_267 = arith.constant 0 : index
    %c4096 = arith.constant 4096 : index
    %417 = vector.load %arg15[%c0_267, %c4096] : memref<1x8192xf32, #tpu.memory_space<vmem>>, vector<1x256xf32>
    tpu.vector_store %arg15[%c0_267, %c4096], %416 {strides = array<i32>} : memref<1x8192xf32, #tpu.memory_space<vmem>>, vector<1x256xf32>,
    %418 = vector.extract_strided_slice %367 {offsets = [17, 0], sizes = [1, 256], strides = [1, 1]} : vector<32x256xf32> to vector<1x256xf32>
    %c0_268 = arith.constant 0 : index
    %c4352 = arith.constant 4352 : index
    %419 = vector.load %arg15[%c0_268, %c4352] : memref<1x8192xf32, #tpu.memory_space<vmem>>, vector<1x256xf32>
    tpu.vector_store %arg15[%c0_268, %c4352], %418 {strides = array<i32>} : memref<1x8192xf32, #tpu.memory_space<vmem>>, vector<1x256xf32>,
    %420 = vector.extract_strided_slice %367 {offsets = [18, 0], sizes = [1, 256], strides = [1, 1]} : vector<32x256xf32> to vector<1x256xf32>
    %c0_269 = arith.constant 0 : index
    %c4608 = arith.constant 4608 : index
    %421 = vector.load %arg15[%c0_269, %c4608] : memref<1x8192xf32, #tpu.memory_space<vmem>>, vector<1x256xf32>
    tpu.vector_store %arg15[%c0_269, %c4608], %420 {strides = array<i32>} : memref<1x8192xf32, #tpu.memory_space<vmem>>, vector<1x256xf32>,
    %422 = vector.extract_strided_slice %367 {offsets = [19, 0], sizes = [1, 256], strides = [1, 1]} : vector<32x256xf32> to vector<1x256xf32>
    %c0_270 = arith.constant 0 : index
    %c4864 = arith.constant 4864 : index
    %423 = vector.load %arg15[%c0_270, %c4864] : memref<1x8192xf32, #tpu.memory_space<vmem>>, vector<1x256xf32>
    tpu.vector_store %arg15[%c0_270, %c4864], %422 {strides = array<i32>} : memref<1x8192xf32, #tpu.memory_space<vmem>>, vector<1x256xf32>,
    %424 = vector.extract_strided_slice %367 {offsets = [20, 0], sizes = [1, 256], strides = [1, 1]} : vector<32x256xf32> to vector<1x256xf32>
    %c0_271 = arith.constant 0 : index
    %c5120 = arith.constant 5120 : index
    %425 = vector.load %arg15[%c0_271, %c5120] : memref<1x8192xf32, #tpu.memory_space<vmem>>, vector<1x256xf32>
    tpu.vector_store %arg15[%c0_271, %c5120], %424 {strides = array<i32>} : memref<1x8192xf32, #tpu.memory_space<vmem>>, vector<1x256xf32>,
    %426 = vector.extract_strided_slice %367 {offsets = [21, 0], sizes = [1, 256], strides = [1, 1]} : vector<32x256xf32> to vector<1x256xf32>
    %c0_272 = arith.constant 0 : index
    %c5376 = arith.constant 5376 : index
    %427 = vector.load %arg15[%c0_272, %c5376] : memref<1x8192xf32, #tpu.memory_space<vmem>>, vector<1x256xf32>
    tpu.vector_store %arg15[%c0_272, %c5376], %426 {strides = array<i32>} : memref<1x8192xf32, #tpu.memory_space<vmem>>, vector<1x256xf32>,
    %428 = vector.extract_strided_slice %367 {offsets = [22, 0], sizes = [1, 256], strides = [1, 1]} : vector<32x256xf32> to vector<1x256xf32>
    %c0_273 = arith.constant 0 : index
    %c5632 = arith.constant 5632 : index
    %429 = vector.load %arg15[%c0_273, %c5632] : memref<1x8192xf32, #tpu.memory_space<vmem>>, vector<1x256xf32>
    tpu.vector_store %arg15[%c0_273, %c5632], %428 {strides = array<i32>} : memref<1x8192xf32, #tpu.memory_space<vmem>>, vector<1x256xf32>,
    %430 = vector.extract_strided_slice %367 {offsets = [23, 0], sizes = [1, 256], strides = [1, 1]} : vector<32x256xf32> to vector<1x256xf32>
    %c0_274 = arith.constant 0 : index
    %c5888 = arith.constant 5888 : index
    %431 = vector.load %arg15[%c0_274, %c5888] : memref<1x8192xf32, #tpu.memory_space<vmem>>, vector<1x256xf32>
    tpu.vector_store %arg15[%c0_274, %c5888], %430 {strides = array<i32>} : memref<1x8192xf32, #tpu.memory_space<vmem>>, vector<1x256xf32>,
    %432 = vector.extract_strided_slice %367 {offsets = [24, 0], sizes = [1, 256], strides = [1, 1]} : vector<32x256xf32> to vector<1x256xf32>
    %c0_275 = arith.constant 0 : index
    %c6144 = arith.constant 6144 : index
    %433 = vector.load %arg15[%c0_275, %c6144] : memref<1x8192xf32, #tpu.memory_space<vmem>>, vector<1x256xf32>
    tpu.vector_store %arg15[%c0_275, %c6144], %432 {strides = array<i32>} : memref<1x8192xf32, #tpu.memory_space<vmem>>, vector<1x256xf32>,
    %434 = vector.extract_strided_slice %367 {offsets = [25, 0], sizes = [1, 256], strides = [1, 1]} : vector<32x256xf32> to vector<1x256xf32>
    %c0_276 = arith.constant 0 : index
    %c6400 = arith.constant 6400 : index
    %435 = vector.load %arg15[%c0_276, %c6400] : memref<1x8192xf32, #tpu.memory_space<vmem>>, vector<1x256xf32>
    tpu.vector_store %arg15[%c0_276, %c6400], %434 {strides = array<i32>} : memref<1x8192xf32, #tpu.memory_space<vmem>>, vector<1x256xf32>,
    %436 = vector.extract_strided_slice %367 {offsets = [26, 0], sizes = [1, 256], strides = [1, 1]} : vector<32x256xf32> to vector<1x256xf32>
    %c0_277 = arith.constant 0 : index
    %c6656 = arith.constant 6656 : index
    %437 = vector.load %arg15[%c0_277, %c6656] : memref<1x8192xf32, #tpu.memory_space<vmem>>, vector<1x256xf32>
    tpu.vector_store %arg15[%c0_277, %c6656], %436 {strides = array<i32>} : memref<1x8192xf32, #tpu.memory_space<vmem>>, vector<1x256xf32>,
    %438 = vector.extract_strided_slice %367 {offsets = [27, 0], sizes = [1, 256], strides = [1, 1]} : vector<32x256xf32> to vector<1x256xf32>
    %c0_278 = arith.constant 0 : index
    %c6912 = arith.constant 6912 : index
    %439 = vector.load %arg15[%c0_278, %c6912] : memref<1x8192xf32, #tpu.memory_space<vmem>>, vector<1x256xf32>
    tpu.vector_store %arg15[%c0_278, %c6912], %438 {strides = array<i32>} : memref<1x8192xf32, #tpu.memory_space<vmem>>, vector<1x256xf32>,
    %440 = vector.extract_strided_slice %367 {offsets = [28, 0], sizes = [1, 256], strides = [1, 1]} : vector<32x256xf32> to vector<1x256xf32>
    %c0_279 = arith.constant 0 : index
    %c7168 = arith.constant 7168 : index
    %441 = vector.load %arg15[%c0_279, %c7168] : memref<1x8192xf32, #tpu.memory_space<vmem>>, vector<1x256xf32>
    tpu.vector_store %arg15[%c0_279, %c7168], %440 {strides = array<i32>} : memref<1x8192xf32, #tpu.memory_space<vmem>>, vector<1x256xf32>,
    %442 = vector.extract_strided_slice %367 {offsets = [29, 0], sizes = [1, 256], strides = [1, 1]} : vector<32x256xf32> to vector<1x256xf32>
    %c0_280 = arith.constant 0 : index
    %c7424 = arith.constant 7424 : index
    %443 = vector.load %arg15[%c0_280, %c7424] : memref<1x8192xf32, #tpu.memory_space<vmem>>, vector<1x256xf32>
    tpu.vector_store %arg15[%c0_280, %c7424], %442 {strides = array<i32>} : memref<1x8192xf32, #tpu.memory_space<vmem>>, vector<1x256xf32>,
    %444 = vector.extract_strided_slice %367 {offsets = [30, 0], sizes = [1, 256], strides = [1, 1]} : vector<32x256xf32> to vector<1x256xf32>
    %c0_281 = arith.constant 0 : index
    %c7680 = arith.constant 7680 : index
    %445 = vector.load %arg15[%c0_281, %c7680] : memref<1x8192xf32, #tpu.memory_space<vmem>>, vector<1x256xf32>
    tpu.vector_store %arg15[%c0_281, %c7680], %444 {strides = array<i32>} : memref<1x8192xf32, #tpu.memory_space<vmem>>, vector<1x256xf32>,
    %446 = vector.extract_strided_slice %367 {offsets = [31, 0], sizes = [1, 256], strides = [1, 1]} : vector<32x256xf32> to vector<1x256xf32>
    %c0_282 = arith.constant 0 : index
    %c7936 = arith.constant 7936 : index
    %447 = vector.load %arg15[%c0_282, %c7936] : memref<1x8192xf32, #tpu.memory_space<vmem>>, vector<1x256xf32>
    tpu.vector_store %arg15[%c0_282, %c7936], %446 {strides = array<i32>} : memref<1x8192xf32, #tpu.memory_space<vmem>>, vector<1x256xf32>,
    %cst_283 = arith.constant 0.000000e+00 : f32
    %448 = vector.broadcast %cst_283 : f32 to vector<1x256xf32>
    %c0_i32_284 = arith.constant 0 : i32
    %c0_i32_285 = arith.constant 0 : i32
    %c0_i32_286 = arith.constant 0 : i32
    %c0_i32_287 = arith.constant 0 : i32
    %c0_i32_288 = arith.constant 0 : i32
    %449 = tpu.memref_slice %arg11[%c0_i32_284, %c0_i32_287, %c0_i32_288] : memref<8x1024x256xbf16, #tpu.memory_space<any>> -> memref<1x1024x256xbf16, #tpu.memory_space<any>>
    %450 = tpu.memref_squeeze %449 : memref<1x1024x256xbf16, #tpu.memory_space<any>> -> memref<1024x256xbf16, #tpu.memory_space<any>>
    %c0_i32_289 = arith.constant 0 : i32
    %c0_i32_290 = arith.constant 0 : i32
    %451 = tpu.memref_slice %arg16[%c0_i32_285, %c0_i32_289, %c0_i32_290] : memref<4x1024x256xbf16, #tpu.memory_space<vmem>> -> memref<1x1024x256xbf16, #tpu.memory_space<vmem>>
    %452 = tpu.memref_squeeze %451 : memref<1x1024x256xbf16, #tpu.memory_space<vmem>> -> memref<1024x256xbf16, #tpu.memory_space<vmem>>
    %453 = tpu.memref_slice %arg17[%c0_i32_286] : memref<4x!tpu.dma_semaphore, #tpu.memory_space<semaphore_mem>> -> memref<1x!tpu.dma_semaphore, #tpu.memory_space<semaphore_mem>>
    %454 = tpu.memref_squeeze %453 : memref<1x!tpu.dma_semaphore, #tpu.memory_space<semaphore_mem>> -> memref<!tpu.dma_semaphore, #tpu.memory_space<semaphore_mem>>
    tpu.wait_dma2 semaphore(%454 : memref<!tpu.dma_semaphore, #tpu.memory_space<semaphore_mem>>) src(%450 : memref<1024x256xbf16, #tpu.memory_space<any>>) dst(%452 : memref<1024x256xbf16, #tpu.memory_space<vmem>>)
    %c3_i32 = arith.constant 3 : i32
    %c3_i32_291 = arith.constant 3 : i32
    %c3_i32_292 = arith.constant 3 : i32
    %c0_i32_293 = arith.constant 0 : i32
    %c0_i32_294 = arith.constant 0 : i32
    %455 = tpu.memref_slice %arg11[%c3_i32, %c0_i32_293, %c0_i32_294] : memref<8x1024x256xbf16, #tpu.memory_space<any>> -> memref<1x1024x256xbf16, #tpu.memory_space<any>>
    %456 = tpu.memref_squeeze %455 : memref<1x1024x256xbf16, #tpu.memory_space<any>> -> memref<1024x256xbf16, #tpu.memory_space<any>>
    %c0_i32_295 = arith.constant 0 : i32
    %c0_i32_296 = arith.constant 0 : i32
    %457 = tpu.memref_slice %arg16[%c3_i32_291, %c0_i32_295, %c0_i32_296] : memref<4x1024x256xbf16, #tpu.memory_space<vmem>> -> memref<1x1024x256xbf16, #tpu.memory_space<vmem>>
    %458 = tpu.memref_squeeze %457 : memref<1x1024x256xbf16, #tpu.memory_space<vmem>> -> memref<1024x256xbf16, #tpu.memory_space<vmem>>
    %459 = tpu.memref_slice %arg17[%c3_i32_292] : memref<4x!tpu.dma_semaphore, #tpu.memory_space<semaphore_mem>> -> memref<1x!tpu.dma_semaphore, #tpu.memory_space<semaphore_mem>>
    %460 = tpu.memref_squeeze %459 : memref<1x!tpu.dma_semaphore, #tpu.memory_space<semaphore_mem>> -> memref<!tpu.dma_semaphore, #tpu.memory_space<semaphore_mem>>
    tpu.enqueue_dma source(%456 : memref<1024x256xbf16, #tpu.memory_space<any>>) target(%458 : memref<1024x256xbf16, #tpu.memory_space<vmem>>) target_semaphore(%460 : memref<!tpu.dma_semaphore, #tpu.memory_space<semaphore_mem>>)
    %c0_297 = arith.constant 0 : index
    %c0_298 = arith.constant 0 : index
    %461 = vector.load %arg15[%c0_297, %c0_298] : memref<1x8192xf32, #tpu.memory_space<vmem>>, vector<1x1024xf32>
    %462 = arith.truncf %461 : vector<1x1024xf32> to vector<1x1024xbf16>
    %c0_299 = arith.constant 0 : index
    %c0_300 = arith.constant 0 : index
    %c0_301 = arith.constant 0 : index
    %463 = vector.load %arg16[%c0_299, %c0_300, %c0_301] : memref<4x1024x256xbf16, #tpu.memory_space<vmem>>, vector<1x1024x256xbf16>
    %464 = vector.shape_cast %463 : vector<1x1024x256xbf16> to vector<1024x256xbf16>
    %cst_302 = arith.constant dense<0.000000e+00> : vector<1x256xf32>
    %465 = tpu.matmul %462, %464, %cst_302 {dimension_numbers = #tpu.dot_dimension_numbers<[1], [0], [0], [1], [0, 0, 1, 1], [], []>} : vector<1x1024xbf16>, vector<1024x256xbf16>, vector<1x256xf32> -> vector<1x256xf32>
    %466 = arith.addf %448, %465 : vector<1x256xf32>
    %c1_i32_303 = arith.constant 1 : i32
    %c1_i32_304 = arith.constant 1 : i32
    %c1_i32_305 = arith.constant 1 : i32
    %c0_i32_306 = arith.constant 0 : i32
    %c0_i32_307 = arith.constant 0 : i32
    %467 = tpu.memref_slice %arg11[%c1_i32_303, %c0_i32_306, %c0_i32_307] : memref<8x1024x256xbf16, #tpu.memory_space<any>> -> memref<1x1024x256xbf16, #tpu.memory_space<any>>
    %468 = tpu.memref_squeeze %467 : memref<1x1024x256xbf16, #tpu.memory_space<any>> -> memref<1024x256xbf16, #tpu.memory_space<any>>
    %c0_i32_308 = arith.constant 0 : i32
    %c0_i32_309 = arith.constant 0 : i32
    %469 = tpu.memref_slice %arg16[%c1_i32_304, %c0_i32_308, %c0_i32_309] : memref<4x1024x256xbf16, #tpu.memory_space<vmem>> -> memref<1x1024x256xbf16, #tpu.memory_space<vmem>>
    %470 = tpu.memref_squeeze %469 : memref<1x1024x256xbf16, #tpu.memory_space<vmem>> -> memref<1024x256xbf16, #tpu.memory_space<vmem>>
    %471 = tpu.memref_slice %arg17[%c1_i32_305] : memref<4x!tpu.dma_semaphore, #tpu.memory_space<semaphore_mem>> -> memref<1x!tpu.dma_semaphore, #tpu.memory_space<semaphore_mem>>
    %472 = tpu.memref_squeeze %471 : memref<1x!tpu.dma_semaphore, #tpu.memory_space<semaphore_mem>> -> memref<!tpu.dma_semaphore, #tpu.memory_space<semaphore_mem>>
    tpu.wait_dma2 semaphore(%472 : memref<!tpu.dma_semaphore, #tpu.memory_space<semaphore_mem>>) src(%468 : memref<1024x256xbf16, #tpu.memory_space<any>>) dst(%470 : memref<1024x256xbf16, #tpu.memory_space<vmem>>)
    %c4_i32 = arith.constant 4 : i32
    %c0_i32_310 = arith.constant 0 : i32
    %c0_i32_311 = arith.constant 0 : i32
    %c0_i32_312 = arith.constant 0 : i32
    %c0_i32_313 = arith.constant 0 : i32
    %473 = tpu.memref_slice %arg11[%c4_i32, %c0_i32_312, %c0_i32_313] : memref<8x1024x256xbf16, #tpu.memory_space<any>> -> memref<1x1024x256xbf16, #tpu.memory_space<any>>
    %474 = tpu.memref_squeeze %473 : memref<1x1024x256xbf16, #tpu.memory_space<any>> -> memref<1024x256xbf16, #tpu.memory_space<any>>
    %c0_i32_314 = arith.constant 0 : i32
    %c0_i32_315 = arith.constant 0 : i32
    %475 = tpu.memref_slice %arg16[%c0_i32_310, %c0_i32_314, %c0_i32_315] : memref<4x1024x256xbf16, #tpu.memory_space<vmem>> -> memref<1x1024x256xbf16, #tpu.memory_space<vmem>>
    %476 = tpu.memref_squeeze %475 : memref<1x1024x256xbf16, #tpu.memory_space<vmem>> -> memref<1024x256xbf16, #tpu.memory_space<vmem>>
    %477 = tpu.memref_slice %arg17[%c0_i32_311] : memref<4x!tpu.dma_semaphore, #tpu.memory_space<semaphore_mem>> -> memref<1x!tpu.dma_semaphore, #tpu.memory_space<semaphore_mem>>
    %478 = tpu.memref_squeeze %477 : memref<1x!tpu.dma_semaphore, #tpu.memory_space<semaphore_mem>> -> memref<!tpu.dma_semaphore, #tpu.memory_space<semaphore_mem>>
    tpu.enqueue_dma source(%474 : memref<1024x256xbf16, #tpu.memory_space<any>>) target(%476 : memref<1024x256xbf16, #tpu.memory_space<vmem>>) target_semaphore(%478 : memref<!tpu.dma_semaphore, #tpu.memory_space<semaphore_mem>>)
    %c0_316 = arith.constant 0 : index
    %c1024_317 = arith.constant 1024 : index
    %479 = vector.load %arg15[%c0_316, %c1024_317] : memref<1x8192xf32, #tpu.memory_space<vmem>>, vector<1x1024xf32>
    %480 = arith.truncf %479 : vector<1x1024xf32> to vector<1x1024xbf16>
    %c1_318 = arith.constant 1 : index
    %c0_319 = arith.constant 0 : index
    %c0_320 = arith.constant 0 : index
    %481 = vector.load %arg16[%c1_318, %c0_319, %c0_320] : memref<4x1024x256xbf16, #tpu.memory_space<vmem>>, vector<1x1024x256xbf16>
    %482 = vector.shape_cast %481 : vector<1x1024x256xbf16> to vector<1024x256xbf16>
    %cst_321 = arith.constant dense<0.000000e+00> : vector<1x256xf32>
    %483 = tpu.matmul %480, %482, %cst_321 {dimension_numbers = #tpu.dot_dimension_numbers<[1], [0], [0], [1], [0, 0, 1, 1], [], []>} : vector<1x1024xbf16>, vector<1024x256xbf16>, vector<1x256xf32> -> vector<1x256xf32>
    %484 = arith.addf %466, %483 : vector<1x256xf32>
    %c2_i32_322 = arith.constant 2 : i32
    %c2_i32_323 = arith.constant 2 : i32
    %c2_i32_324 = arith.constant 2 : i32
    %c0_i32_325 = arith.constant 0 : i32
    %c0_i32_326 = arith.constant 0 : i32
    %485 = tpu.memref_slice %arg11[%c2_i32_322, %c0_i32_325, %c0_i32_326] : memref<8x1024x256xbf16, #tpu.memory_space<any>> -> memref<1x1024x256xbf16, #tpu.memory_space<any>>
    %486 = tpu.memref_squeeze %485 : memref<1x1024x256xbf16, #tpu.memory_space<any>> -> memref<1024x256xbf16, #tpu.memory_space<any>>
    %c0_i32_327 = arith.constant 0 : i32
    %c0_i32_328 = arith.constant 0 : i32
    %487 = tpu.memref_slice %arg16[%c2_i32_323, %c0_i32_327, %c0_i32_328] : memref<4x1024x256xbf16, #tpu.memory_space<vmem>> -> memref<1x1024x256xbf16, #tpu.memory_space<vmem>>
    %488 = tpu.memref_squeeze %487 : memref<1x1024x256xbf16, #tpu.memory_space<vmem>> -> memref<1024x256xbf16, #tpu.memory_space<vmem>>
    %489 = tpu.memref_slice %arg17[%c2_i32_324] : memref<4x!tpu.dma_semaphore, #tpu.memory_space<semaphore_mem>> -> memref<1x!tpu.dma_semaphore, #tpu.memory_space<semaphore_mem>>
    %490 = tpu.memref_squeeze %489 : memref<1x!tpu.dma_semaphore, #tpu.memory_space<semaphore_mem>> -> memref<!tpu.dma_semaphore, #tpu.memory_space<semaphore_mem>>
    tpu.wait_dma2 semaphore(%490 : memref<!tpu.dma_semaphore, #tpu.memory_space<semaphore_mem>>) src(%486 : memref<1024x256xbf16, #tpu.memory_space<any>>) dst(%488 : memref<1024x256xbf16, #tpu.memory_space<vmem>>)
    %c5_i32 = arith.constant 5 : i32
    %c1_i32_329 = arith.constant 1 : i32
    %c1_i32_330 = arith.constant 1 : i32
    %c0_i32_331 = arith.constant 0 : i32
    %c0_i32_332 = arith.constant 0 : i32
    %491 = tpu.memref_slice %arg11[%c5_i32, %c0_i32_331, %c0_i32_332] : memref<8x1024x256xbf16, #tpu.memory_space<any>> -> memref<1x1024x256xbf16, #tpu.memory_space<any>>
    %492 = tpu.memref_squeeze %491 : memref<1x1024x256xbf16, #tpu.memory_space<any>> -> memref<1024x256xbf16, #tpu.memory_space<any>>
    %c0_i32_333 = arith.constant 0 : i32
    %c0_i32_334 = arith.constant 0 : i32
    %493 = tpu.memref_slice %arg16[%c1_i32_329, %c0_i32_333, %c0_i32_334] : memref<4x1024x256xbf16, #tpu.memory_space<vmem>> -> memref<1x1024x256xbf16, #tpu.memory_space<vmem>>
    %494 = tpu.memref_squeeze %493 : memref<1x1024x256xbf16, #tpu.memory_space<vmem>> -> memref<1024x256xbf16, #tpu.memory_space<vmem>>
    %495 = tpu.memref_slice %arg17[%c1_i32_330] : memref<4x!tpu.dma_semaphore, #tpu.memory_space<semaphore_mem>> -> memref<1x!tpu.dma_semaphore, #tpu.memory_space<semaphore_mem>>
    %496 = tpu.memref_squeeze %495 : memref<1x!tpu.dma_semaphore, #tpu.memory_space<semaphore_mem>> -> memref<!tpu.dma_semaphore, #tpu.memory_space<semaphore_mem>>
    tpu.enqueue_dma source(%492 : memref<1024x256xbf16, #tpu.memory_space<any>>) target(%494 : memref<1024x256xbf16, #tpu.memory_space<vmem>>) target_semaphore(%496 : memref<!tpu.dma_semaphore, #tpu.memory_space<semaphore_mem>>)
    %c0_335 = arith.constant 0 : index
    %c2048_336 = arith.constant 2048 : index
    %497 = vector.load %arg15[%c0_335, %c2048_336] : memref<1x8192xf32, #tpu.memory_space<vmem>>, vector<1x1024xf32>
    %498 = arith.truncf %497 : vector<1x1024xf32> to vector<1x1024xbf16>
    %c2_337 = arith.constant 2 : index
    %c0_338 = arith.constant 0 : index
    %c0_339 = arith.constant 0 : index
    %499 = vector.load %arg16[%c2_337, %c0_338, %c0_339] : memref<4x1024x256xbf16, #tpu.memory_space<vmem>>, vector<1x1024x256xbf16>
    %500 = vector.shape_cast %499 : vector<1x1024x256xbf16> to vector<1024x256xbf16>
    %cst_340 = arith.constant dense<0.000000e+00> : vector<1x256xf32>
    %501 = tpu.matmul %498, %500, %cst_340 {dimension_numbers = #tpu.dot_dimension_numbers<[1], [0], [0], [1], [0, 0, 1, 1], [], []>} : vector<1x1024xbf16>, vector<1024x256xbf16>, vector<1x256xf32> -> vector<1x256xf32>
    %502 = arith.addf %484, %501 : vector<1x256xf32>
    %c3_i32_341 = arith.constant 3 : i32
    %c3_i32_342 = arith.constant 3 : i32
    %c3_i32_343 = arith.constant 3 : i32
    %c0_i32_344 = arith.constant 0 : i32
    %c0_i32_345 = arith.constant 0 : i32
    %503 = tpu.memref_slice %arg11[%c3_i32_341, %c0_i32_344, %c0_i32_345] : memref<8x1024x256xbf16, #tpu.memory_space<any>> -> memref<1x1024x256xbf16, #tpu.memory_space<any>>
    %504 = tpu.memref_squeeze %503 : memref<1x1024x256xbf16, #tpu.memory_space<any>> -> memref<1024x256xbf16, #tpu.memory_space<any>>
    %c0_i32_346 = arith.constant 0 : i32
    %c0_i32_347 = arith.constant 0 : i32
    %505 = tpu.memref_slice %arg16[%c3_i32_342, %c0_i32_346, %c0_i32_347] : memref<4x1024x256xbf16, #tpu.memory_space<vmem>> -> memref<1x1024x256xbf16, #tpu.memory_space<vmem>>
    %506 = tpu.memref_squeeze %505 : memref<1x1024x256xbf16, #tpu.memory_space<vmem>> -> memref<1024x256xbf16, #tpu.memory_space<vmem>>
    %507 = tpu.memref_slice %arg17[%c3_i32_343] : memref<4x!tpu.dma_semaphore, #tpu.memory_space<semaphore_mem>> -> memref<1x!tpu.dma_semaphore, #tpu.memory_space<semaphore_mem>>
    %508 = tpu.memref_squeeze %507 : memref<1x!tpu.dma_semaphore, #tpu.memory_space<semaphore_mem>> -> memref<!tpu.dma_semaphore, #tpu.memory_space<semaphore_mem>>
    tpu.wait_dma2 semaphore(%508 : memref<!tpu.dma_semaphore, #tpu.memory_space<semaphore_mem>>) src(%504 : memref<1024x256xbf16, #tpu.memory_space<any>>) dst(%506 : memref<1024x256xbf16, #tpu.memory_space<vmem>>)
    %c6_i32 = arith.constant 6 : i32
    %c2_i32_348 = arith.constant 2 : i32
    %c2_i32_349 = arith.constant 2 : i32
    %c0_i32_350 = arith.constant 0 : i32
    %c0_i32_351 = arith.constant 0 : i32
    %509 = tpu.memref_slice %arg11[%c6_i32, %c0_i32_350, %c0_i32_351] : memref<8x1024x256xbf16, #tpu.memory_space<any>> -> memref<1x1024x256xbf16, #tpu.memory_space<any>>
    %510 = tpu.memref_squeeze %509 : memref<1x1024x256xbf16, #tpu.memory_space<any>> -> memref<1024x256xbf16, #tpu.memory_space<any>>
    %c0_i32_352 = arith.constant 0 : i32
    %c0_i32_353 = arith.constant 0 : i32
    %511 = tpu.memref_slice %arg16[%c2_i32_348, %c0_i32_352, %c0_i32_353] : memref<4x1024x256xbf16, #tpu.memory_space<vmem>> -> memref<1x1024x256xbf16, #tpu.memory_space<vmem>>
    %512 = tpu.memref_squeeze %511 : memref<1x1024x256xbf16, #tpu.memory_space<vmem>> -> memref<1024x256xbf16, #tpu.memory_space<vmem>>
    %513 = tpu.memref_slice %arg17[%c2_i32_349] : memref<4x!tpu.dma_semaphore, #tpu.memory_space<semaphore_mem>> -> memref<1x!tpu.dma_semaphore, #tpu.memory_space<semaphore_mem>>
    %514 = tpu.memref_squeeze %513 : memref<1x!tpu.dma_semaphore, #tpu.memory_space<semaphore_mem>> -> memref<!tpu.dma_semaphore, #tpu.memory_space<semaphore_mem>>
    tpu.enqueue_dma source(%510 : memref<1024x256xbf16, #tpu.memory_space<any>>) target(%512 : memref<1024x256xbf16, #tpu.memory_space<vmem>>) target_semaphore(%514 : memref<!tpu.dma_semaphore, #tpu.memory_space<semaphore_mem>>)
    %c0_354 = arith.constant 0 : index
    %c3072_355 = arith.constant 3072 : index
    %515 = vector.load %arg15[%c0_354, %c3072_355] : memref<1x8192xf32, #tpu.memory_space<vmem>>, vector<1x1024xf32>
    %516 = arith.truncf %515 : vector<1x1024xf32> to vector<1x1024xbf16>
    %c3_356 = arith.constant 3 : index
    %c0_357 = arith.constant 0 : index
    %c0_358 = arith.constant 0 : index
    %517 = vector.load %arg16[%c3_356, %c0_357, %c0_358] : memref<4x1024x256xbf16, #tpu.memory_space<vmem>>, vector<1x1024x256xbf16>
    %518 = vector.shape_cast %517 : vector<1x1024x256xbf16> to vector<1024x256xbf16>
    %cst_359 = arith.constant dense<0.000000e+00> : vector<1x256xf32>
    %519 = tpu.matmul %516, %518, %cst_359 {dimension_numbers = #tpu.dot_dimension_numbers<[1], [0], [0], [1], [0, 0, 1, 1], [], []>} : vector<1x1024xbf16>, vector<1024x256xbf16>, vector<1x256xf32> -> vector<1x256xf32>
    %520 = arith.addf %502, %519 : vector<1x256xf32>
    %c4_i32_360 = arith.constant 4 : i32
    %c0_i32_361 = arith.constant 0 : i32
    %c0_i32_362 = arith.constant 0 : i32
    %c0_i32_363 = arith.constant 0 : i32
    %c0_i32_364 = arith.constant 0 : i32
    %521 = tpu.memref_slice %arg11[%c4_i32_360, %c0_i32_363, %c0_i32_364] : memref<8x1024x256xbf16, #tpu.memory_space<any>> -> memref<1x1024x256xbf16, #tpu.memory_space<any>>
    %522 = tpu.memref_squeeze %521 : memref<1x1024x256xbf16, #tpu.memory_space<any>> -> memref<1024x256xbf16, #tpu.memory_space<any>>
    %c0_i32_365 = arith.constant 0 : i32
    %c0_i32_366 = arith.constant 0 : i32
    %523 = tpu.memref_slice %arg16[%c0_i32_361, %c0_i32_365, %c0_i32_366] : memref<4x1024x256xbf16, #tpu.memory_space<vmem>> -> memref<1x1024x256xbf16, #tpu.memory_space<vmem>>
    %524 = tpu.memref_squeeze %523 : memref<1x1024x256xbf16, #tpu.memory_space<vmem>> -> memref<1024x256xbf16, #tpu.memory_space<vmem>>
    %525 = tpu.memref_slice %arg17[%c0_i32_362] : memref<4x!tpu.dma_semaphore, #tpu.memory_space<semaphore_mem>> -> memref<1x!tpu.dma_semaphore, #tpu.memory_space<semaphore_mem>>
    %526 = tpu.memref_squeeze %525 : memref<1x!tpu.dma_semaphore, #tpu.memory_space<semaphore_mem>> -> memref<!tpu.dma_semaphore, #tpu.memory_space<semaphore_mem>>
    tpu.wait_dma2 semaphore(%526 : memref<!tpu.dma_semaphore, #tpu.memory_space<semaphore_mem>>) src(%522 : memref<1024x256xbf16, #tpu.memory_space<any>>) dst(%524 : memref<1024x256xbf16, #tpu.memory_space<vmem>>)
    %c7_i32 = arith.constant 7 : i32
    %c3_i32_367 = arith.constant 3 : i32
    %c3_i32_368 = arith.constant 3 : i32
    %c0_i32_369 = arith.constant 0 : i32
    %c0_i32_370 = arith.constant 0 : i32
    %527 = tpu.memref_slice %arg11[%c7_i32, %c0_i32_369, %c0_i32_370] : memref<8x1024x256xbf16, #tpu.memory_space<any>> -> memref<1x1024x256xbf16, #tpu.memory_space<any>>
    %528 = tpu.memref_squeeze %527 : memref<1x1024x256xbf16, #tpu.memory_space<any>> -> memref<1024x256xbf16, #tpu.memory_space<any>>
    %c0_i32_371 = arith.constant 0 : i32
    %c0_i32_372 = arith.constant 0 : i32
    %529 = tpu.memref_slice %arg16[%c3_i32_367, %c0_i32_371, %c0_i32_372] : memref<4x1024x256xbf16, #tpu.memory_space<vmem>> -> memref<1x1024x256xbf16, #tpu.memory_space<vmem>>
    %530 = tpu.memref_squeeze %529 : memref<1x1024x256xbf16, #tpu.memory_space<vmem>> -> memref<1024x256xbf16, #tpu.memory_space<vmem>>
    %531 = tpu.memref_slice %arg17[%c3_i32_368] : memref<4x!tpu.dma_semaphore, #tpu.memory_space<semaphore_mem>> -> memref<1x!tpu.dma_semaphore, #tpu.memory_space<semaphore_mem>>
    %532 = tpu.memref_squeeze %531 : memref<1x!tpu.dma_semaphore, #tpu.memory_space<semaphore_mem>> -> memref<!tpu.dma_semaphore, #tpu.memory_space<semaphore_mem>>
    tpu.enqueue_dma source(%528 : memref<1024x256xbf16, #tpu.memory_space<any>>) target(%530 : memref<1024x256xbf16, #tpu.memory_space<vmem>>) target_semaphore(%532 : memref<!tpu.dma_semaphore, #tpu.memory_space<semaphore_mem>>)
    %c0_373 = arith.constant 0 : index
    %c4096_374 = arith.constant 4096 : index
    %533 = vector.load %arg15[%c0_373, %c4096_374] : memref<1x8192xf32, #tpu.memory_space<vmem>>, vector<1x1024xf32>
    %534 = arith.truncf %533 : vector<1x1024xf32> to vector<1x1024xbf16>
    %c0_375 = arith.constant 0 : index
    %c0_376 = arith.constant 0 : index
    %c0_377 = arith.constant 0 : index
    %535 = vector.load %arg16[%c0_375, %c0_376, %c0_377] : memref<4x1024x256xbf16, #tpu.memory_space<vmem>>, vector<1x1024x256xbf16>
    %536 = vector.shape_cast %535 : vector<1x1024x256xbf16> to vector<1024x256xbf16>
    %cst_378 = arith.constant dense<0.000000e+00> : vector<1x256xf32>
    %537 = tpu.matmul %534, %536, %cst_378 {dimension_numbers = #tpu.dot_dimension_numbers<[1], [0], [0], [1], [0, 0, 1, 1], [], []>} : vector<1x1024xbf16>, vector<1024x256xbf16>, vector<1x256xf32> -> vector<1x256xf32>
    %538 = arith.addf %520, %537 : vector<1x256xf32>
    %c5_i32_379 = arith.constant 5 : i32
    %c1_i32_380 = arith.constant 1 : i32
    %c1_i32_381 = arith.constant 1 : i32
    %c0_i32_382 = arith.constant 0 : i32
    %c0_i32_383 = arith.constant 0 : i32
    %539 = tpu.memref_slice %arg11[%c5_i32_379, %c0_i32_382, %c0_i32_383] : memref<8x1024x256xbf16, #tpu.memory_space<any>> -> memref<1x1024x256xbf16, #tpu.memory_space<any>>
    %540 = tpu.memref_squeeze %539 : memref<1x1024x256xbf16, #tpu.memory_space<any>> -> memref<1024x256xbf16, #tpu.memory_space<any>>
    %c0_i32_384 = arith.constant 0 : i32
    %c0_i32_385 = arith.constant 0 : i32
    %541 = tpu.memref_slice %arg16[%c1_i32_380, %c0_i32_384, %c0_i32_385] : memref<4x1024x256xbf16, #tpu.memory_space<vmem>> -> memref<1x1024x256xbf16, #tpu.memory_space<vmem>>
    %542 = tpu.memref_squeeze %541 : memref<1x1024x256xbf16, #tpu.memory_space<vmem>> -> memref<1024x256xbf16, #tpu.memory_space<vmem>>
    %543 = tpu.memref_slice %arg17[%c1_i32_381] : memref<4x!tpu.dma_semaphore, #tpu.memory_space<semaphore_mem>> -> memref<1x!tpu.dma_semaphore, #tpu.memory_space<semaphore_mem>>
    %544 = tpu.memref_squeeze %543 : memref<1x!tpu.dma_semaphore, #tpu.memory_space<semaphore_mem>> -> memref<!tpu.dma_semaphore, #tpu.memory_space<semaphore_mem>>
    tpu.wait_dma2 semaphore(%544 : memref<!tpu.dma_semaphore, #tpu.memory_space<semaphore_mem>>) src(%540 : memref<1024x256xbf16, #tpu.memory_space<any>>) dst(%542 : memref<1024x256xbf16, #tpu.memory_space<vmem>>)
    %c0_386 = arith.constant 0 : index
    %c5120_387 = arith.constant 5120 : index
    %545 = vector.load %arg15[%c0_386, %c5120_387] : memref<1x8192xf32, #tpu.memory_space<vmem>>, vector<1x1024xf32>
    %546 = arith.truncf %545 : vector<1x1024xf32> to vector<1x1024xbf16>
    %c1_388 = arith.constant 1 : index
    %c0_389 = arith.constant 0 : index
    %c0_390 = arith.constant 0 : index
    %547 = vector.load %arg16[%c1_388, %c0_389, %c0_390] : memref<4x1024x256xbf16, #tpu.memory_space<vmem>>, vector<1x1024x256xbf16>
    %548 = vector.shape_cast %547 : vector<1x1024x256xbf16> to vector<1024x256xbf16>
    %cst_391 = arith.constant dense<0.000000e+00> : vector<1x256xf32>
    %549 = tpu.matmul %546, %548, %cst_391 {dimension_numbers = #tpu.dot_dimension_numbers<[1], [0], [0], [1], [0, 0, 1, 1], [], []>} : vector<1x1024xbf16>, vector<1024x256xbf16>, vector<1x256xf32> -> vector<1x256xf32>
    %550 = arith.addf %538, %549 : vector<1x256xf32>
    %c6_i32_392 = arith.constant 6 : i32
    %c2_i32_393 = arith.constant 2 : i32
    %c2_i32_394 = arith.constant 2 : i32
    %c0_i32_395 = arith.constant 0 : i32
    %c0_i32_396 = arith.constant 0 : i32
    %551 = tpu.memref_slice %arg11[%c6_i32_392, %c0_i32_395, %c0_i32_396] : memref<8x1024x256xbf16, #tpu.memory_space<any>> -> memref<1x1024x256xbf16, #tpu.memory_space<any>>
    %552 = tpu.memref_squeeze %551 : memref<1x1024x256xbf16, #tpu.memory_space<any>> -> memref<1024x256xbf16, #tpu.memory_space<any>>
    %c0_i32_397 = arith.constant 0 : i32
    %c0_i32_398 = arith.constant 0 : i32
    %553 = tpu.memref_slice %arg16[%c2_i32_393, %c0_i32_397, %c0_i32_398] : memref<4x1024x256xbf16, #tpu.memory_space<vmem>> -> memref<1x1024x256xbf16, #tpu.memory_space<vmem>>
    %554 = tpu.memref_squeeze %553 : memref<1x1024x256xbf16, #tpu.memory_space<vmem>> -> memref<1024x256xbf16, #tpu.memory_space<vmem>>
    %555 = tpu.memref_slice %arg17[%c2_i32_394] : memref<4x!tpu.dma_semaphore, #tpu.memory_space<semaphore_mem>> -> memref<1x!tpu.dma_semaphore, #tpu.memory_space<semaphore_mem>>
    %556 = tpu.memref_squeeze %555 : memref<1x!tpu.dma_semaphore, #tpu.memory_space<semaphore_mem>> -> memref<!tpu.dma_semaphore, #tpu.memory_space<semaphore_mem>>
    tpu.wait_dma2 semaphore(%556 : memref<!tpu.dma_semaphore, #tpu.memory_space<semaphore_mem>>) src(%552 : memref<1024x256xbf16, #tpu.memory_space<any>>) dst(%554 : memref<1024x256xbf16, #tpu.memory_space<vmem>>)
    %c0_399 = arith.constant 0 : index
    %c6144_400 = arith.constant 6144 : index
    %557 = vector.load %arg15[%c0_399, %c6144_400] : memref<1x8192xf32, #tpu.memory_space<vmem>>, vector<1x1024xf32>
    %558 = arith.truncf %557 : vector<1x1024xf32> to vector<1x1024xbf16>
    %c2_401 = arith.constant 2 : index
    %c0_402 = arith.constant 0 : index
    %c0_403 = arith.constant 0 : index
    %559 = vector.load %arg16[%c2_401, %c0_402, %c0_403] : memref<4x1024x256xbf16, #tpu.memory_space<vmem>>, vector<1x1024x256xbf16>
    %560 = vector.shape_cast %559 : vector<1x1024x256xbf16> to vector<1024x256xbf16>
    %cst_404 = arith.constant dense<0.000000e+00> : vector<1x256xf32>
    %561 = tpu.matmul %558, %560, %cst_404 {dimension_numbers = #tpu.dot_dimension_numbers<[1], [0], [0], [1], [0, 0, 1, 1], [], []>} : vector<1x1024xbf16>, vector<1024x256xbf16>, vector<1x256xf32> -> vector<1x256xf32>
    %562 = arith.addf %550, %561 : vector<1x256xf32>
    %c7_i32_405 = arith.constant 7 : i32
    %c3_i32_406 = arith.constant 3 : i32
    %c3_i32_407 = arith.constant 3 : i32
    %c0_i32_408 = arith.constant 0 : i32
    %c0_i32_409 = arith.constant 0 : i32
    %563 = tpu.memref_slice %arg11[%c7_i32_405, %c0_i32_408, %c0_i32_409] : memref<8x1024x256xbf16, #tpu.memory_space<any>> -> memref<1x1024x256xbf16, #tpu.memory_space<any>>
    %564 = tpu.memref_squeeze %563 : memref<1x1024x256xbf16, #tpu.memory_space<any>> -> memref<1024x256xbf16, #tpu.memory_space<any>>
    %c0_i32_410 = arith.constant 0 : i32
    %c0_i32_411 = arith.constant 0 : i32
    %565 = tpu.memref_slice %arg16[%c3_i32_406, %c0_i32_410, %c0_i32_411] : memref<4x1024x256xbf16, #tpu.memory_space<vmem>> -> memref<1x1024x256xbf16, #tpu.memory_space<vmem>>
    %566 = tpu.memref_squeeze %565 : memref<1x1024x256xbf16, #tpu.memory_space<vmem>> -> memref<1024x256xbf16, #tpu.memory_space<vmem>>
    %567 = tpu.memref_slice %arg17[%c3_i32_407] : memref<4x!tpu.dma_semaphore, #tpu.memory_space<semaphore_mem>> -> memref<1x!tpu.dma_semaphore, #tpu.memory_space<semaphore_mem>>
    %568 = tpu.memref_squeeze %567 : memref<1x!tpu.dma_semaphore, #tpu.memory_space<semaphore_mem>> -> memref<!tpu.dma_semaphore, #tpu.memory_space<semaphore_mem>>
    tpu.wait_dma2 semaphore(%568 : memref<!tpu.dma_semaphore, #tpu.memory_space<semaphore_mem>>) src(%564 : memref<1024x256xbf16, #tpu.memory_space<any>>) dst(%566 : memref<1024x256xbf16, #tpu.memory_space<vmem>>)
    %c0_412 = arith.constant 0 : index
    %c7168_413 = arith.constant 7168 : index
    %569 = vector.load %arg15[%c0_412, %c7168_413] : memref<1x8192xf32, #tpu.memory_space<vmem>>, vector<1x1024xf32>
    %570 = arith.truncf %569 : vector<1x1024xf32> to vector<1x1024xbf16>
    %c3_414 = arith.constant 3 : index
    %c0_415 = arith.constant 0 : index
    %c0_416 = arith.constant 0 : index
    %571 = vector.load %arg16[%c3_414, %c0_415, %c0_416] : memref<4x1024x256xbf16, #tpu.memory_space<vmem>>, vector<1x1024x256xbf16>
    %572 = vector.shape_cast %571 : vector<1x1024x256xbf16> to vector<1024x256xbf16>
    %cst_417 = arith.constant dense<0.000000e+00> : vector<1x256xf32>
    %573 = tpu.matmul %570, %572, %cst_417 {dimension_numbers = #tpu.dot_dimension_numbers<[1], [0], [0], [1], [0, 0, 1, 1], [], []>} : vector<1x1024xbf16>, vector<1024x256xbf16>, vector<1x256xf32> -> vector<1x256xf32>
    %574 = arith.addf %562, %573 : vector<1x256xf32>
    %c0_418 = arith.constant 0 : index
    %c0_419 = arith.constant 0 : index
    %575 = vector.load %arg8[%c0_418, %c0_419] : memref<1x256xf32, #tpu.memory_space<vmem>>, vector<1x256xf32>
    %576 = arith.addf %574, %575 : vector<1x256xf32>
    %cst_420 = arith.constant 0.000000e+00 : f32
    %577 = vector.broadcast %cst_420 : f32 to vector<1x256xf32>
    %578 = arith.maximumf %576, %577 : vector<1x256xf32>
    %c0_421 = arith.constant 0 : index
    %c0_422 = arith.constant 0 : index
    %579 = vector.load %arg9[%c0_421, %c0_422] : memref<256x3xf32, #tpu.memory_space<vmem>>, vector<256x3xf32>
    %cst_423 = arith.constant dense<0.000000e+00> : vector<1x3xf32>
    %580 = tpu.matmul %578, %579, %cst_423 {dimension_numbers = #tpu.dot_dimension_numbers<[1], [0], [0], [1], [0, 0, 1, 1], [], []>} : vector<1x256xf32>, vector<256x3xf32>, vector<1x3xf32> -> vector<1x3xf32>
    %c0_424 = arith.constant 0 : index
    %c0_425 = arith.constant 0 : index
    %581 = vector.load %arg10[%c0_424, %c0_425] : memref<1x3xf32, #tpu.memory_space<vmem>>, vector<1x3xf32>
    %582 = arith.addf %580, %581 : vector<1x3xf32>
    %583 = vector.extract_strided_slice %582 {offsets = [0, 1], sizes = [1, 2], strides = [1, 1]} : vector<1x3xf32> to vector<1x2xf32>
    %cst_426 = arith.constant dense<0xFF800000> : vector<1xf32>
    %584 = vector.multi_reduction <maximumf>, %583, %cst_426 [1] : vector<1x2xf32> to vector<1xf32>
    %585 = vector.shape_cast %584 : vector<1xf32> to vector<1x1xf32>
    %586 = vector.broadcast %585 : vector<1x1xf32> to vector<1x2xf32>
    %587 = arith.subf %583, %586 : vector<1x2xf32>
    %588 = math.exp %587 : vector<1x2xf32>
    %cst_427 = arith.constant dense<0.000000e+00> : vector<1xf32>
    %589 = vector.multi_reduction <add>, %588, %cst_427 [1] : vector<1x2xf32> to vector<1xf32>
    %590 = vector.shape_cast %589 : vector<1xf32> to vector<1x1xf32>
    %591 = tpu.reciprocal %590 {approx = true} : vector<1x1xf32> -> vector<1x1xf32>
    %592 = vector.broadcast %591 : vector<1x1xf32> to vector<1x2xf32>
    %593 = arith.mulf %588, %592 : vector<1x2xf32>
    %cst_428 = arith.constant 0.000000e+00 : f32
    %594 = vector.broadcast %cst_428 : f32 to vector<1x128xf32>
    %c0_429 = arith.constant 0 : index
    %c256_430 = arith.constant 256 : index
    %595 = vector.load %arg12[%c0_429, %c256_430] : memref<1x384xf32, #tpu.memory_space<vmem>>, vector<1x128xf32>
    tpu.vector_store %arg12[%c0_429, %c256_430], %594 {strides = array<i32>} : memref<1x384xf32, #tpu.memory_space<vmem>>, vector<1x128xf32>,
    %596 = vector.extract_strided_slice %582 {offsets = [0, 0], sizes = [1, 1], strides = [1, 1]} : vector<1x3xf32> to vector<1x1xf32>
    %c0_431 = arith.constant 0 : index
    %c256_432 = arith.constant 256 : index
    %597 = vector.load %arg12[%c0_431, %c256_432] : memref<1x384xf32, #tpu.memory_space<vmem>>, vector<1x1xf32>
    tpu.vector_store %arg12[%c0_431, %c256_432], %596 {strides = array<i32>} : memref<1x384xf32, #tpu.memory_space<vmem>>, vector<1x1xf32>,
    %c0_433 = arith.constant 0 : index
    %c257 = arith.constant 257 : index
    %598 = vector.load %arg12[%c0_433, %c257] : memref<1x384xf32, #tpu.memory_space<vmem>>, vector<1x2xf32>
    tpu.vector_store %arg12[%c0_433, %c257], %593 {strides = array<i32>} : memref<1x384xf32, #tpu.memory_space<vmem>>, vector<1x2xf32>,
    return
  }
}

</mosaic_0001>

<llo_original>
// kernel: grafting_net_forward.1
$region0: #{grafting_net_forward.1}
  #allocation0 [shape = 'u32[]', space=smem, size = 0x4, offset = 0x4, fixed_abs, tag = 'smem constant byte address 0x4 - core index']
  #allocation1 [shape = 'u32[144,128]{1,0:T(1,128)}', space=vmem, size = 0x12000, scoped, tag = 'internal scratch']
  #allocation2 [shape = 'f32[8,512]{1,0:T(8,128)}', space=vmem, size = 0x4000, scoped, tag = 'scratch operand']
  #allocation3 [shape = 'f32[49,512]{1,0:T(8,128)}', space=vmem, size = 0x1c000, scoped, tag = 'scratch operand']
  #allocation4 [shape = 'f32[1,8192]{1,0:T(1,128)}', space=vmem, size = 0x8000, scoped, tag = 'scratch operand']
  #allocation5 [shape = 'bf16[4,1024,256]{2,1,0:T(16,128)(2,1)}', space=vmem, size = 0x200000, scoped, tag = 'scratch operand']
  #allocation6 [shape = 's32[4]{0}', space=sflag, size = 0x10, scoped, tag = 'scratch operand']
  #allocation7 [shape = 'f32[1,1]{1,0:T(1,128)S(1)}', space=vmem, size = 0x200, scoped, tag = 'scoped memory for grafting_net_forward.1']
  #allocation15 [shape = 's32[]', space=sflag, size = 0x4, offset = 0, fixed_abs, tag = 'sflag constant byte address 0x0 - dummy sync flag']
  #allocation17 [shape = 's32[]', space=sflag, size = 0x4, offset = 0, fixed_abs, tag = 'sflag constant byte address 0x0 - dummy sync flag']
  #allocation19 [shape = 's32[]', space=sflag, size = 0x4, offset = 0, fixed_abs, tag = 'sflag constant byte address 0x0 - dummy sync flag']
  #allocation21 [shape = 's32[]', space=sflag, size = 0x4, offset = 0, fixed_abs, tag = 'sflag constant byte address 0x0 - dummy sync flag']
  #allocation23 [shape = 's32[]', space=sflag, size = 0x4, offset = 0, fixed_abs, tag = 'sflag constant byte address 0x0 - dummy sync flag']
  #allocation25 [shape = 's32[]', space=sflag, size = 0x4, offset = 0, fixed_abs, tag = 'sflag constant byte address 0x0 - dummy sync flag']
  #allocation27 [shape = 's32[]', space=sflag, size = 0x4, offset = 0, fixed_abs, tag = 'sflag constant byte address 0x0 - dummy sync flag']
  #allocation29 [shape = 's32[]', space=sflag, size = 0x4, offset = 0, fixed_abs, tag = 'sflag constant byte address 0x0 - dummy sync flag']
  %s0 = inlined_call_operand.vmem [shape: f32[4,256], index: 0, kind: input, shape index: {}]
  %s1 = inlined_call_operand.vmem [shape: f32[1,256], index: 1, kind: input, shape index: {}]
  %s2 = inlined_call_operand.vmem [shape: f32[25,48,8], index: 2, kind: input, shape index: {}]
  %s3 = inlined_call_operand.vmem [shape: f32[48,1], index: 3, kind: input, shape index: {}]
  %s4 = inlined_call_operand.hbm [shape: f32[9,32,49], index: 4, kind: input, shape index: {}]
  %s5 = inlined_call_operand.vmem [shape: f32[32,1], index: 5, kind: input, shape index: {}]
  %s6 = inlined_call_operand.hbm [shape: f32[1,32], index: 6, kind: input, shape index: {}]
  %s7 = inlined_call_operand.<no memory space> [shape: f32[1,1], index: 7, kind: input, shape index: {}]
  %s8 = inlined_call_operand.hbm [shape: f32[1,256], index: 8, kind: input, shape index: {}]
  %s9 = inlined_call_operand.vmem [shape: f32[256,3], index: 9, kind: input, shape index: {}]
  %s10 = inlined_call_operand.hbm [shape: f32[1,3], index: 10, kind: input, shape index: {}]
  %s11 = inlined_call_operand.hbm [shape: bf16[8,1024,256], index: 11, kind: input, shape index: {}]
  %s12 = inlined_call_operand.vmem [shape: f32[1,384], index: 12, kind: output, shape index: {}]
  %s13 = sld [smem:[#allocation0]]
  $region70: #{grafting_net_forward.1} parent=0
    _
  %s15 = ssub.s32 1, %s13
  %s16 = scalar_select 0, %s15, %s13
  %v17 = vstv %s7
  %18 = vst [vmem:[#allocation7] sm:$0x1] %v17
  $region1: #{grafting_net_forward.1} parent=0
    #allocation8 [shape = 'u8[147456]{0}', space=vmem, size = 0x24000, scoped, tag = 'input window, operand 4, single buffered']
    #allocation9 [shape = 's32[1]{0}', space=sflag, size = 0x4, scoped, tag = 'scoped memory for grafting_net_forward.1']
    #allocation10 [shape = 'u8[512]{0}', space=vmem, size = 0x400, scoped, tag = 'input window, operand 6, single buffered']
    #allocation11 [shape = 's32[1]{0}', space=sflag, size = 0x4, scoped, tag = 'scoped memory for grafting_net_forward.1']
    #allocation12 [shape = 'u8[1024]{0}', space=vmem, size = 0x400, scoped, tag = 'input window, operand 8, single buffered']
    #allocation13 [shape = 'u8[512]{0}', space=vmem, size = 0x400, scoped, tag = 'input window, operand 10, single buffered']
    #allocation14 [shape = 's32[1]{0}', space=sflag, size = 0x4, scoped, tag = 'scoped memory for grafting_net_forward.1']
    #allocation16 [shape = 'u32[9]{0}', space=smem, size = 0x24, scoped, tag = 'DMA stride descriptor']
    #allocation18 [shape = 'u32[9]{0}', space=smem, size = 0x24, scoped, tag = 'DMA stride descriptor']
    #allocation20 [shape = 'u32[9]{0}', space=smem, size = 0x24, scoped, tag = 'DMA stride descriptor']
    #allocation22 [shape = 'u32[9]{0}', space=smem, size = 0x24, scoped, tag = 'DMA stride descriptor']
    #allocation24 [shape = 'u32[9]{0}', space=smem, size = 0x24, scoped, tag = 'DMA stride descriptor']
    #allocation26 [shape = 'u32[9]{0}', space=smem, size = 0x24, scoped, tag = 'DMA stride descriptor']
    #allocation28 [shape = 'u32[9]{0}', space=smem, size = 0x24, scoped, tag = 'DMA stride descriptor']
    #allocation30 [shape = 'u32[9]{0}', space=smem, size = 0x24, scoped, tag = 'DMA stride descriptor']
    %19 = vsyncpa [#allocation9], 0
    %20 = vsyncpa [#allocation11], 0
    %21 = vsyncpa [#allocation14], 0
    // Predicated region
    $region2: #{grafting_net_forward.1} parent=1 // pred_check
      _
    $region3: #{grafting_net_forward.1} parent=1 // pred_check_branch
      %23 = sbr.rel (0) target = $region5
    $region4: #{grafting_net_forward.1} parent=1 // pred_region
      _
    $region5: #{grafting_net_forward.1} parent=1 // pred_fallthru
      _
    // Predicated region
    $region6: #{grafting_net_forward.1} parent=1 // pred_check
      _
    $region7: #{grafting_net_forward.1} parent=1 // pred_check_branch
      %25 = sbr.rel (0) target = $region9
    $region8: #{grafting_net_forward.1} parent=1 // pred_region
      _
    $region9: #{grafting_net_forward.1} parent=1 // pred_fallthru
      _
    // Predicated region
    $region10: #{grafting_net_forward.1} parent=1 // pred_check
      _
    $region11: #{grafting_net_forward.1} parent=1 // pred_check_branch
      %27 = sbr.rel (0) target = $region13
    $region12: #{grafting_net_forward.1} parent=1 // pred_region
      _
    $region13: #{grafting_net_forward.1} parent=1 // pred_fallthru
      _
    // Predicated region
    $region14: #{grafting_net_forward.1} parent=1 // pred_check
      _
    $region15: #{grafting_net_forward.1} parent=1 // pred_check_branch
      %29 = sbr.rel (0) target = $region17
    $region16: #{grafting_net_forward.1} parent=1 // pred_region
      _
    $region17: #{grafting_net_forward.1} parent=1 // pred_fallthru
      _
    // Predicated region
    $region18: #{grafting_net_forward.1} parent=1 // pred_check
      _
    $region19: #{grafting_net_forward.1} parent=1 // pred_check_branch
      %31 = sbr.rel (0) target = $region21
    $region20: #{grafting_net_forward.1} parent=1 // pred_region
      %s33 = ssub.s32 4608, 4608
      %34 = vsyncadd [#allocation9], %s33
      %s35 = sshll.u32 [#allocation8], 4
      %s36 = int_to_ptr.vmem [resolvable:$true] %s35
      %41 = dma.hbm_to_vmem [thread:$0]  %s4, 4608, %s36, [#allocation9], 128, 128, 8
    $region21: #{grafting_net_forward.1} parent=1 // pred_fallthru
      _
    // Predicated region
    $region22: #{grafting_net_forward.1} parent=1 // pred_check
      _
    $region23: #{grafting_net_forward.1} parent=1 // pred_check_branch
      %43 = sbr.rel (0) target = $region25
    $region24: #{grafting_net_forward.1} parent=1 // pred_region
      _
    $region25: #{grafting_net_forward.1} parent=1 // pred_fallthru
      _
    // Predicated region
    $region26: #{grafting_net_forward.1} parent=1 // pred_check
      _
    $region27: #{grafting_net_forward.1} parent=1 // pred_check_branch
      %45 = sbr.rel (0) target = $region29
    $region28: #{grafting_net_forward.1} parent=1 // pred_region
      %s47 = ssub.s32 16, 16
      %48 = vsyncadd [#allocation11], %s47
      %s50 = sshll.u32 [#allocation10], 4
      %s51 = int_to_ptr.vmem [resolvable:$true] %s50
      %53 = dma.hbm_to_vmem [thread:$0]  %s6, 16, %s51, [#allocation11]
    $region29: #{grafting_net_forward.1} parent=1 // pred_fallthru
      _
    // Predicated region
    $region30: #{grafting_net_forward.1} parent=1 // pred_check
      _
    $region31: #{grafting_net_forward.1} parent=1 // pred_check_branch
      %55 = sbr.rel (0) target = $region33
    $region32: #{grafting_net_forward.1} parent=1 // pred_region
      _
    $region33: #{grafting_net_forward.1} parent=1 // pred_fallthru
      _
    // Predicated region
    $region34: #{grafting_net_forward.1} parent=1 // pred_check
      _
    $region35: #{grafting_net_forward.1} parent=1 // pred_check_branch
      %57 = sbr.rel (0) target = $region37
    $region36: #{grafting_net_forward.1} parent=1 // pred_region
      %s59 = ssub.s32 32, 32
      %60 = vsyncadd [#allocation11], %s59
      %s62 = sshll.u32 [#allocation12], 4
      %s63 = int_to_ptr.vmem [resolvable:$true] %s62
      %65 = dma.hbm_to_vmem [thread:$0]  %s8, 32, %s63, [#allocation11]
    $region37: #{grafting_net_forward.1} parent=1 // pred_fallthru
      _
    // Predicated region
    $region38: #{grafting_net_forward.1} parent=1 // pred_check
      _
    $region39: #{grafting_net_forward.1} parent=1 // pred_check_branch
      %67 = sbr.rel (0) target = $region41
    $region40: #{grafting_net_forward.1} parent=1 // pred_region
      _
    $region41: #{grafting_net_forward.1} parent=1 // pred_fallthru
      _
    // Predicated region
    $region42: #{grafting_net_forward.1} parent=1 // pred_check
      _
    $region43: #{grafting_net_forward.1} parent=1 // pred_check_branch
      %69 = sbr.rel (0) target = $region45
    $region44: #{grafting_net_forward.1} parent=1 // pred_region
      %s71 = ssub.s32 16, 16
      %72 = vsyncadd [#allocation14], %s71
      %s74 = sshll.u32 [#allocation13], 4
      %s75 = int_to_ptr.vmem [resolvable:$true] %s74
      %77 = dma.hbm_to_vmem [thread:$0]  %s10, 16, %s75, [#allocation14]
    $region45: #{grafting_net_forward.1} parent=1 // pred_fallthru
      _
    // Predicated region
    $region46: #{grafting_net_forward.1} parent=1 // pred_check
      _
    $region47: #{grafting_net_forward.1} parent=1 // pred_check_branch
      %79 = sbr.rel (0) target = $region49
    $region48: #{grafting_net_forward.1} parent=1 // pred_region
      %80 = dma.done [#allocation9], 4608
    $region49: #{grafting_net_forward.1} parent=1 // pred_fallthru
      _
    // Predicated region
    $region50: #{grafting_net_forward.1} parent=1 // pred_check
      _
    $region51: #{grafting_net_forward.1} parent=1 // pred_check_branch
      %82 = sbr.rel (0) target = $region53
    $region52: #{grafting_net_forward.1} parent=1 // pred_region
      %83 = dma.done [#allocation11], 16
    $region53: #{grafting_net_forward.1} parent=1 // pred_fallthru
      _
    // Predicated region
    $region54: #{grafting_net_forward.1} parent=1 // pred_check
      _
    $region55: #{grafting_net_forward.1} parent=1 // pred_check_branch
      %85 = sbr.rel (0) target = $region57
    $region56: #{grafting_net_forward.1} parent=1 // pred_region
      %86 = dma.done [#allocation11], 32
    $region57: #{grafting_net_forward.1} parent=1 // pred_fallthru
      _
    // Predicated region
    $region58: #{grafting_net_forward.1} parent=1 // pred_check
      _
    $region59: #{grafting_net_forward.1} parent=1 // pred_check_branch
      %88 = sbr.rel (0) target = $region61
    $region60: #{grafting_net_forward.1} parent=1 // pred_region
      %89 = dma.done [#allocation14], 16
    $region61: #{grafting_net_forward.1} parent=1 // pred_fallthru
      _
    %s91 = sshll.u32 1, 14
    %s92 = sxor.u32 4294967295, %s91
    %s94 = sld [smem:[#allocation0]]
    %s95 = sadd.s32 2, %s94
    %s97 = sshll.u32 7, 26
    %s98 = sxor.u32 4294967295, %s97
    %s99 = sand.u32 0, %s98
    %s100 = sshll.u32 %s95, 26
    %s101 = sor.u32 %s99, %s100
    %s102 = sshll.u32 [#allocation5], 4
    %s103 = int_to_ptr.vmem [resolvable:$true] %s102
    %106 = sst [smem:[#allocation16]] 256
    %s107 = scalar_lea.smem [#allocation16], 1
    %108 = sst [smem:[%s107]] 256
    %s109 = scalar_lea.smem [#allocation16], 2
    %110 = sst [smem:[%s109]] 2
    %s111 = scalar_lea.smem [#allocation16], 3
    %112 = sst [smem:[%s111]] 64
    %s113 = scalar_lea.smem [#allocation16], 4
    %114 = sst [smem:[%s113]] 128
    %s115 = scalar_lea.smem [#allocation16], 5
    %116 = sst [smem:[%s115]] 2
    %s117 = scalar_lea.smem [#allocation16], 6
    %118 = sst [smem:[%s117]] 128
    %s119 = scalar_lea.smem [#allocation16], 7
    %120 = sst [smem:[%s119]] 64
    %s121 = scalar_lea.smem [#allocation16], 8
    %122 = sst [smem:[%s121]] 4
    %124 = dma.general %s11, 16384, %s103, [#allocation6], [#allocation15], [#allocation16], %s101, 0
    %s125 = scalar_lea.hbm %s11, 16384
    %s126 = scalar_lea.vmem [#allocation5], 1024
    %s127 = scalar_lea.sflag [#allocation6], 1
    %s129 = sshll.u32 1, 14
    %s130 = sxor.u32 4294967295, %s129
    %s132 = sadd.s32 2, %s94
    %s134 = sshll.u32 7, 26
    %s135 = sxor.u32 4294967295, %s134
    %s136 = sand.u32 0, %s135
    %s137 = sshll.u32 %s132, 26
    %s138 = sor.u32 %s136, %s137
    %s139 = sshll.u32 %s126, 4
    %s140 = int_to_ptr.vmem [resolvable:$true] %s139
    %143 = sst [smem:[#allocation18]] 256
    %s144 = scalar_lea.smem [#allocation18], 1
    %145 = sst [smem:[%s144]] 256
    %s146 = scalar_lea.smem [#allocation18], 2
    %147 = sst [smem:[%s146]] 2
    %s148 = scalar_lea.smem [#allocation18], 3
    %149 = sst [smem:[%s148]] 64
    %s150 = scalar_lea.smem [#allocation18], 4
    %151 = sst [smem:[%s150]] 128
    %s152 = scalar_lea.smem [#allocation18], 5
    %153 = sst [smem:[%s152]] 2
    %s154 = scalar_lea.smem [#allocation18], 6
    %155 = sst [smem:[%s154]] 128
    %s156 = scalar_lea.smem [#allocation18], 7
    %157 = sst [smem:[%s156]] 64
    %s158 = scalar_lea.smem [#allocation18], 8
    %159 = sst [smem:[%s158]] 4
    %161 = dma.general %s125, 16384, %s140, %s127, [#allocation17], [#allocation18], %s138, 0
    %s162 = scalar_lea.hbm %s11, 32768
    %s163 = scalar_lea.vmem [#allocation5], 2048
    %s164 = scalar_lea.sflag [#allocation6], 2
    %s166 = sshll.u32 1, 14
    %s167 = sxor.u32 4294967295, %s166
    %s169 = sadd.s32 2, %s94
    %s171 = sshll.u32 7, 26
    %s172 = sxor.u32 4294967295, %s171
    %s173 = sand.u32 0, %s172
    %s174 = sshll.u32 %s169, 26
    %s175 = sor.u32 %s173, %s174
    %s176 = sshll.u32 %s163, 4
    %s177 = int_to_ptr.vmem [resolvable:$true] %s176
    %180 = sst [smem:[#allocation20]] 256
    %s181 = scalar_lea.smem [#allocation20], 1
    %182 = sst [smem:[%s181]] 256
    %s183 = scalar_lea.smem [#allocation20], 2
    %184 = sst [smem:[%s183]] 2
    %s185 = scalar_lea.smem [#allocation20], 3
    %186 = sst [smem:[%s185]] 64
    %s187 = scalar_lea.smem [#allocation20], 4
    %188 = sst [smem:[%s187]] 128
    %s189 = scalar_lea.smem [#allocation20], 5
    %190 = sst [smem:[%s189]] 2
    %s191 = scalar_lea.smem [#allocation20], 6
    %192 = sst [smem:[%s191]] 128
    %s193 = scalar_lea.smem [#allocation20], 7
    %194 = sst [smem:[%s193]] 64
    %s195 = scalar_lea.smem [#allocation20], 8
    %196 = sst [smem:[%s195]] 4
    %198 = dma.general %s162, 16384, %s177, %s164, [#allocation19], [#allocation20], %s175, 0
    %v199 = vlaneseq
    %v200 = vand.u32 %v199, 127
    %v201 = vadd.s32 %v200, 128
    %vm202 = vcmp.lt.s32.totalorder %v200, 0
    %v203 = vsub.s32 0, %v200
    %v204 = vsel %vm202, %v203, %v200
    %v205 = vshrl.u32 %v204, 4
    %v206 = vand.u32 %v204, 15
    %v207 = vsub.s32 0, %v206
    %v208 = vsel %vm202, %v207, %v206
    %vm209 = vcmp.lt.s32.totalorder %v201, 0
    %v210 = vsub.s32 0, %v201
    %v211 = vsel %vm209, %v210, %v201
    %v212 = vshrl.u32 %v211, 4
    %v213 = vand.u32 %v211, 15
    %v214 = vsub.s32 0, %v213
    %v215 = vsel %vm209, %v214, %v213
    %vm216 = vcmp.ne.s32.totalorder %v208, 0
    %vm217 = vcmp.ne.s32.totalorder %v215, 0
    %vm218 = vcmp.lt.s32.totalorder %v208, 0
    %vm219 = vcmp.lt.s32.totalorder %v215, 0
    %vm220 = vmand %vm218, %vm216
    %vm221 = vmand %vm219, %vm217
    %v222 = vadd.s32 %v208, 16
    %v223 = vadd.s32 %v215, 16
    %v224 = vsel %vm220, %v222, %v208
    %v225 = vsel %vm221, %v223, %v215
    %v226 = vadd.s32 %v224, 4294967294
    %v227 = vadd.s32 %v225, 4294967294
    %vm228 = vcmp.ge.s32.totalorder %v226, 0
    %vm229 = vcmp.ge.s32.totalorder %v227, 0
    %vm230 = vcmp.lt.s32.totalorder %v226, 16
    %vm231 = vcmp.lt.s32.totalorder %v227, 16
    %vm232 = vmand %vm228, %vm230
    %vm233 = vmand %vm229, %vm231
    %v234 = vadd.s32 %v224, 4294967295
    %v235 = vadd.s32 %v225, 4294967295
    %vm236 = vcmp.ge.s32.totalorder %v234, 0
    %vm237 = vcmp.ge.s32.totalorder %v235, 0
    %vm238 = vcmp.lt.s32.totalorder %v234, 16
    %vm239 = vcmp.lt.s32.totalorder %v235, 16
    %vm240 = vmand %vm236, %vm238
    %vm241 = vmand %vm237, %vm239
    %v242 = vadd.s32 %v224, 1
    %v243 = vadd.s32 %v225, 1
    %vm244 = vcmp.ge.s32.totalorder %v242, 0
    %vm245 = vcmp.ge.s32.totalorder %v243, 0
    %vm246 = vcmp.lt.s32.totalorder %v242, 16
    %vm247 = vcmp.lt.s32.totalorder %v243, 16
    %vm248 = vmand %vm244, %vm246
    %vm249 = vmand %vm245, %vm247
    %v250 = vadd.s32 %v224, 2
    %v251 = vadd.s32 %v225, 2
    %vm252 = vcmp.ge.s32.totalorder %v250, 0
    %vm253 = vcmp.ge.s32.totalorder %v251, 0
    %vm254 = vcmp.lt.s32.totalorder %v250, 16
    %vm255 = vcmp.lt.s32.totalorder %v251, 16
    %vm256 = vmand %vm252, %vm254
    %vm257 = vmand %vm253, %vm255
    %258 = vst [vmem:[#allocation2] sm:$0xff] 0.0
    %259 = vst [vmem:[#allocation2 + $0x8] sm:$0xff] 0.0
    %260 = vst [vmem:[#allocation2 + $0x10] sm:$0xff] 0.0
    %261 = vst [vmem:[#allocation2 + $0x18] sm:$0xff] 0.0
    %v262 = vld [vmem:[%s0] sm:$0xff]
    %v264 = vcombine.high %v262, %v262
    %266 = vst [vmem:[#allocation2 + $0x8] sm:$0xf] %v262
    %267 = vst [vmem:[#allocation2 + $0x10] sm:$0xf] %v264
    %v268 = vld [vmem:[#allocation2] sm:$0xff]
    %v269 = vld [vmem:[#allocation2 + $0x8] sm:$0xff]
    %v270 = vld [vmem:[#allocation2 + $0x10] sm:$0xff]
    %v271 = vsel %vm232, 1, 0
    %v272 = vsel %vm233, 1, 0
    %vm273 = vcmp.eq.s32.totalorder %v271, 1
    %vm274 = vcmp.eq.s32.totalorder %v272, 1
    %278 = vrot.lane.b32.xlu0 %v268, 34
    %v279 = vpop.permute.xlu0 %278
    %280 = vrot.lane.b32.xlu0 %v269, 34
    %v281 = vpop.permute.xlu0 %280
    %282 = vrot.lane.b32.xlu0 %v270, 34
    %v283 = vpop.permute.xlu0 %282
    %vm284 = vcmask 277504
    %v285 = vsel %vm284, %v279, %v281
    %v286 = vsel %vm284, %v281, %v283
    %v289 = vsel %vm273, %v285, 0.0
    %v290 = vsel %vm274, %v286, 0.0
    %v291 = vld [vmem:[%s2] sm:$0xff]
    %v292 = vld [vmem:[%s2 + $0x8] sm:$0xff]
    %v293 = vld [vmem:[%s2 + $0x10] sm:$0xff]
    %v294 = vld [vmem:[%s2 + $0x18] sm:$0xff]
    %v295 = vld [vmem:[%s2 + $0x20] sm:$0xff]
    %v296 = vld [vmem:[%s2 + $0x28] sm:$0xff]
    %v297 = vsel %vm240, 1, 0
    %v298 = vsel %vm241, 1, 0
    %vm299 = vcmp.eq.s32.totalorder %v297, 1
    %vm300 = vcmp.eq.s32.totalorder %v298, 1
    %301 = vrot.lane.b32.xlu0 %v268, 33
    %v302 = vpop.permute.xlu0 %301
    %303 = vrot.lane.b32.xlu0 %v269, 33
    %v304 = vpop.permute.xlu0 %303
    %305 = vrot.lane.b32.xlu0 %v270, 33
    %v306 = vpop.permute.xlu0 %305
    %vm307 = vcmask 269312
    %v308 = vsel %vm307, %v302, %v304
    %v309 = vsel %vm307, %v304, %v306
    %v312 = vsel %vm299, %v308, 0.0
    %v313 = vsel %vm300, %v309, 0.0
    %s314 = scalar_lea.vmem %s2, 48
    %v315 = vld [vmem:[%s314] sm:$0xff]
    %v316 = vld [vmem:[%s314 + $0x8] sm:$0xff]
    %v317 = vld [vmem:[%s314 + $0x10] sm:$0xff]
    %v318 = vld [vmem:[%s314 + $0x18] sm:$0xff]
    %v319 = vld [vmem:[%s314 + $0x20] sm:$0xff]
    %v320 = vld [vmem:[%s314 + $0x28] sm:$0xff]
    %vm321 = vcmask 64512
    %v323 = vsel %vm321, %v315, 0
    %v326 = vsel %vm321, %v316, 0
    %v329 = vsel %vm321, %v317, 0
    %v332 = vsel %vm321, %v318, 0
    %v335 = vsel %vm321, %v319, 0
    %v338 = vsel %vm321, %v320, 0
    %340 = vmatprep.subr.mxu0 %v313
    %341 = vmatpush1.msra.mxu0 %v312
    %342 = vmatprep.subr.mxu0 0.0
    %343 = vmatpush1.msra.mxu0 0.0
    %344 = vmatprep.subr.mxu0 0.0
    %345 = vmatpush1.msra.mxu0 0.0
    %346 = vmatprep.subr.mxu0 0.0
    %347 = vmatpush1.msra.mxu0 0.0
    %348 = vmatprep.subr.mxu0 0.0
    %349 = vmatpush1.msra.mxu0 0.0
    %350 = vmatprep.subr.mxu0 0.0
    %351 = vmatpush1.msra.mxu0 0.0
    %352 = vmatprep.subr.mxu0 0.0
    %353 = vmatpush1.msra.mxu0 0.0
    %354 = vmatprep.subr.mxu0 0.0
    %355 = vmatpush1.msra.mxu0 0.0
    %356 = vmatprep.subr.mxu0 0.0
    %357 = vmatpush1.msra.mxu0 0.0
    %358 = vmatprep.subr.mxu0 0.0
    %359 = vmatpush1.msra.mxu0 0.0
    %360 = vmatprep.subr.mxu0 0.0
    %361 = vmatpush1.msra.mxu0 0.0
    %362 = vmatprep.subr.mxu0 0.0
    %363 = vmatpush1.msra.mxu0 0.0
    %364 = vmatprep.subr.mxu0 0.0
    %365 = vmatpush1.msra.mxu0 0.0
    %366 = vmatprep.subr.mxu0 0.0
    %367 = vmatpush1.msra.mxu0 0.0
    %368 = vmatprep.subr.mxu0 0.0
    %369 = vmatpush1.msra.mxu0 0.0
    %370 = vmatprep.subr.mxu0 0.0
    %371 = vmatpush1.msra.mxu0 0.0
    %372 = vmatprep.subr.mxu0 0.0
    %373 = vmatpush1.msra.mxu0 0.0
    %374 = vmatprep.subr.mxu0 0.0
    %375 = vmatpush1.msra.mxu0 0.0
    %376 = vmatprep.subr.mxu0 0.0
    %377 = vmatpush1.msra.mxu0 0.0
    %378 = vmatprep.subr.mxu0 0.0
    %379 = vmatpush1.msra.mxu0 0.0
    %380 = vmatprep.subr.mxu0 0.0
    %381 = vmatpush1.msra.mxu0 0.0
    %382 = vmatprep.subr.mxu0 0.0
    %383 = vmatpush1.msra.mxu0 0.0
    %384 = vmatprep.subr.mxu0 0.0
    %385 = vmatpush1.msra.mxu0 0.0
    %386 = vmatprep.subr.mxu0 0.0
    %387 = vmatpush1.msra.mxu0 0.0
    %388 = vmatprep.subr.mxu0 0.0
    %389 = vmatpush1.msra.mxu0 0.0
    %390 = vmatprep.subr.mxu0 0.0
    %391 = vmatpush1.msra.mxu0 0.0
    %392 = vmatprep.subr.mxu0 0.0
    %393 = vmatpush1.msra.mxu0 0.0
    %394 = vmatprep.subr.mxu0 0.0
    %395 = vmatpush1.msra.mxu0 0.0
    %396 = vmatprep.subr.mxu0 0.0
    %397 = vmatpush1.msra.mxu0 0.0
    %398 = vmatprep.subr.mxu0 0.0
    %399 = vmatpush1.msra.mxu0 0.0
    %400 = vmatprep.subr.mxu0 0.0
    %401 = vmatpush1.msra.mxu0 0.0
    %402 = vmatprep.subr.mxu0 0.0
    %403 = vmatpush1.msra.mxu0 0.0
    %404 = vmatprep.mubr.f32.mxu0 0.0
    %405 = vmatmul.mubr.f32.gmra.mrb[0].mxu0 %v323
    %v406 = vpop.f32.mrb[0].mxu0
    %v407 = vadd.f32 0.0, %v406
    %v408 = vpop.f32.mrb[0].mxu0
    %v409 = vadd.f32 0.0, %v408
    %410 = vmatprep.mubr.f32.mxu0 0.0
    %411 = vmatmul.mubr.f32.gmra.mrb[0].mxu0 %v326
    %v412 = vpop.f32.mrb[0].mxu0
    %v413 = vadd.f32 0.0, %v412
    %v414 = vpop.f32.mrb[0].mxu0
    %v415 = vadd.f32 0.0, %v414
    %416 = vmatprep.mubr.f32.mxu0 0.0
    %417 = vmatmul.mubr.f32.gmra.mrb[0].mxu0 %v329
    %v418 = vpop.f32.mrb[0].mxu0
    %v419 = vadd.f32 0.0, %v418
    %v420 = vpop.f32.mrb[0].mxu0
    %v421 = vadd.f32 0.0, %v420
    %422 = vmatprep.mubr.f32.mxu0 0.0
    %423 = vmatmul.mubr.f32.gmra.mrb[0].mxu0 %v332
    %v424 = vpop.f32.mrb[0].mxu0
    %v425 = vadd.f32 0.0, %v424
    %v426 = vpop.f32.mrb[0].mxu0
    %v427 = vadd.f32 0.0, %v426
    %428 = vmatprep.mubr.f32.mxu0 0.0
    %429 = vmatmul.mubr.f32.gmra.mrb[0].mxu0 %v335
    %v430 = vpop.f32.mrb[0].mxu0
    %v431 = vadd.f32 0.0, %v430
    %v432 = vpop.f32.mrb[0].mxu0
    %v433 = vadd.f32 0.0, %v432
    %434 = vmatprep.mubr.f32.mxu0 0.0
    %435 = vmatmul.mubr.f32.gmra.mrb[0].mxu0 %v338
    %v436 = vpop.f32.mrb[0].mxu0
    %v437 = vadd.f32 0.0, %v436
    %v438 = vpop.f32.mrb[0].mxu0
    %v439 = vadd.f32 0.0, %v438
    %440 = vdwg.mxu0
    %v442 = vsel %vm321, %v291, 0
    %v445 = vsel %vm321, %v292, 0
    %v448 = vsel %vm321, %v293, 0
    %v451 = vsel %vm321, %v294, 0
    %v454 = vsel %vm321, %v295, 0
    %v457 = vsel %vm321, %v296, 0
    %459 = vmatprep.subr.mxu0 %v290
    %460 = vmatpush1.msra.mxu0 %v289
    %461 = vmatprep.subr.mxu0 0.0
    %462 = vmatpush1.msra.mxu0 0.0
    %463 = vmatprep.subr.mxu0 0.0
    %464 = vmatpush1.msra.mxu0 0.0
    %465 = vmatprep.subr.mxu0 0.0
    %466 = vmatpush1.msra.mxu0 0.0
    %467 = vmatprep.subr.mxu0 0.0
    %468 = vmatpush1.msra.mxu0 0.0
    %469 = vmatprep.subr.mxu0 0.0
    %470 = vmatpush1.msra.mxu0 0.0
    %471 = vmatprep.subr.mxu0 0.0
    %472 = vmatpush1.msra.mxu0 0.0
    %473 = vmatprep.subr.mxu0 0.0
    %474 = vmatpush1.msra.mxu0 0.0
    %475 = vmatprep.subr.mxu0 0.0
    %476 = vmatpush1.msra.mxu0 0.0
    %477 = vmatprep.subr.mxu0 0.0
    %478 = vmatpush1.msra.mxu0 0.0
    %479 = vmatprep.subr.mxu0 0.0
    %480 = vmatpush1.msra.mxu0 0.0
    %481 = vmatprep.subr.mxu0 0.0
    %482 = vmatpush1.msra.mxu0 0.0
    %483 = vmatprep.subr.mxu0 0.0
    %484 = vmatpush1.msra.mxu0 0.0
    %485 = vmatprep.subr.mxu0 0.0
    %486 = vmatpush1.msra.mxu0 0.0
    %487 = vmatprep.subr.mxu0 0.0
    %488 = vmatpush1.msra.mxu0 0.0
    %489 = vmatprep.subr.mxu0 0.0
    %490 = vmatpush1.msra.mxu0 0.0
    %491 = vmatprep.subr.mxu0 0.0
    %492 = vmatpush1.msra.mxu0 0.0
    %493 = vmatprep.subr.mxu0 0.0
    %494 = vmatpush1.msra.mxu0 0.0
    %495 = vmatprep.subr.mxu0 0.0
    %496 = vmatpush1.msra.mxu0 0.0
    %497 = vmatprep.subr.mxu0 0.0
    %498 = vmatpush1.msra.mxu0 0.0
    %499 = vmatprep.subr.mxu0 0.0
    %500 = vmatpush1.msra.mxu0 0.0
    %501 = vmatprep.subr.mxu0 0.0
    %502 = vmatpush1.msra.mxu0 0.0
    %503 = vmatprep.subr.mxu0 0.0
    %504 = vmatpush1.msra.mxu0 0.0
    %505 = vmatprep.subr.mxu0 0.0
    %506 = vmatpush1.msra.mxu0 0.0
    %507 = vmatprep.subr.mxu0 0.0
    %508 = vmatpush1.msra.mxu0 0.0
    %509 = vmatprep.subr.mxu0 0.0
    %510 = vmatpush1.msra.mxu0 0.0
    %511 = vmatprep.subr.mxu0 0.0
    %512 = vmatpush1.msra.mxu0 0.0
    %513 = vmatprep.subr.mxu0 0.0
    %514 = vmatpush1.msra.mxu0 0.0
    %515 = vmatprep.subr.mxu0 0.0
    %516 = vmatpush1.msra.mxu0 0.0
    %517 = vmatprep.subr.mxu0 0.0
    %518 = vmatpush1.msra.mxu0 0.0
    %519 = vmatprep.subr.mxu0 0.0
    %520 = vmatpush1.msra.mxu0 0.0
    %521 = vmatprep.subr.mxu0 0.0
    %522 = vmatpush1.msra.mxu0 0.0
    %523 = vmatprep.mubr.f32.mxu0 0.0
    %524 = vmatmul.mubr.f32.gmra.mrb[0].mxu0 %v442
    %v525 = vpop.f32.mrb[0].mxu0
    %v526 = vadd.f32 %v407, %v525
    %v527 = vpop.f32.mrb[0].mxu0
    %v528 = vadd.f32 %v409, %v527
    %529 = vmatprep.mubr.f32.mxu0 0.0
    %530 = vmatmul.mubr.f32.gmra.mrb[0].mxu0 %v445
    %v531 = vpop.f32.mrb[0].mxu0
    %v532 = vadd.f32 %v413, %v531
    %v533 = vpop.f32.mrb[0].mxu0
    %v534 = vadd.f32 %v415, %v533
    %535 = vmatprep.mubr.f32.mxu0 0.0
    %536 = vmatmul.mubr.f32.gmra.mrb[0].mxu0 %v448
    %v537 = vpop.f32.mrb[0].mxu0
    %v538 = vadd.f32 %v419, %v537
    %v539 = vpop.f32.mrb[0].mxu0
    %v540 = vadd.f32 %v421, %v539
    %541 = vmatprep.mubr.f32.mxu0 0.0
    %542 = vmatmul.mubr.f32.gmra.mrb[0].mxu0 %v451
    %v543 = vpop.f32.mrb[0].mxu0
    %v544 = vadd.f32 %v425, %v543
    %v545 = vpop.f32.mrb[0].mxu0
    %v546 = vadd.f32 %v427, %v545
    %547 = vmatprep.mubr.f32.mxu0 0.0
    %548 = vmatmul.mubr.f32.gmra.mrb[0].mxu0 %v454
    %v549 = vpop.f32.mrb[0].mxu0
    %v550 = vadd.f32 %v431, %v549
    %v551 = vpop.f32.mrb[0].mxu0
    %v552 = vadd.f32 %v433, %v551
    %553 = vmatprep.mubr.f32.mxu0 0.0
    %554 = vmatmul.mubr.f32.gmra.mrb[0].mxu0 %v457
    %v555 = vpop.f32.mrb[0].mxu0
    %v556 = vadd.f32 %v437, %v555
    %v557 = vpop.f32.mrb[0].mxu0
    %v558 = vadd.f32 %v439, %v557
    %559 = vdwg.mxu0
    %s560 = scalar_lea.vmem %s2, 96
    %v561 = vld [vmem:[%s560] sm:$0xff]
    %v562 = vld [vmem:[%s560 + $0x8] sm:$0xff]
    %v563 = vld [vmem:[%s560 + $0x10] sm:$0xff]
    %v564 = vld [vmem:[%s560 + $0x18] sm:$0xff]
    %v565 = vld [vmem:[%s560 + $0x20] sm:$0xff]
    %v566 = vld [vmem:[%s560 + $0x28] sm:$0xff]
    %567 = vrot.lane.b32.xlu0 %v268, 32
    %v568 = vpop.permute.xlu0 %567
    %569 = vrot.lane.b32.xlu0 %v269, 32
    %v570 = vpop.permute.xlu0 %569
    %571 = vrot.lane.b32.xlu0 %v270, 32
    %v572 = vpop.permute.xlu0 %571
    %vm573 = vcmask 261120
    %v574 = vsel %vm573, %v568, %v570
    %v575 = vsel %vm573, %v570, %v572
    %v579 = vsel %vm321, %v561, 0
    %v582 = vsel %vm321, %v562, 0
    %v585 = vsel %vm321, %v563, 0
    %v588 = vsel %vm321, %v564, 0
    %v591 = vsel %vm321, %v565, 0
    %v594 = vsel %vm321, %v566, 0
    %596 = vmatprep.subr.mxu0 %v575
    %597 = vmatpush1.msra.mxu0 %v574
    %598 = vmatprep.subr.mxu0 0.0
    %599 = vmatpush1.msra.mxu0 0.0
    %600 = vmatprep.subr.mxu0 0.0
    %601 = vmatpush1.msra.mxu0 0.0
    %602 = vmatprep.subr.mxu0 0.0
    %603 = vmatpush1.msra.mxu0 0.0
    %604 = vmatprep.subr.mxu0 0.0
    %605 = vmatpush1.msra.mxu0 0.0
    %606 = vmatprep.subr.mxu0 0.0
    %607 = vmatpush1.msra.mxu0 0.0
    %608 = vmatprep.subr.mxu0 0.0
    %609 = vmatpush1.msra.mxu0 0.0
    %610 = vmatprep.subr.mxu0 0.0
    %611 = vmatpush1.msra.mxu0 0.0
    %612 = vmatprep.subr.mxu0 0.0
    %613 = vmatpush1.msra.mxu0 0.0
    %614 = vmatprep.subr.mxu0 0.0
    %615 = vmatpush1.msra.mxu0 0.0
    %616 = vmatprep.subr.mxu0 0.0
    %617 = vmatpush1.msra.mxu0 0.0
    %618 = vmatprep.subr.mxu0 0.0
    %619 = vmatpush1.msra.mxu0 0.0
    %620 = vmatprep.subr.mxu0 0.0
    %621 = vmatpush1.msra.mxu0 0.0
    %622 = vmatprep.subr.mxu0 0.0
    %623 = vmatpush1.msra.mxu0 0.0
    %624 = vmatprep.subr.mxu0 0.0
    %625 = vmatpush1.msra.mxu0 0.0
    %626 = vmatprep.subr.mxu0 0.0
    %627 = vmatpush1.msra.mxu0 0.0
    %628 = vmatprep.subr.mxu0 0.0
    %629 = vmatpush1.msra.mxu0 0.0
    %630 = vmatprep.subr.mxu0 0.0
    %631 = vmatpush1.msra.mxu0 0.0
    %632 = vmatprep.subr.mxu0 0.0
    %633 = vmatpush1.msra.mxu0 0.0
    %634 = vmatprep.subr.mxu0 0.0
    %635 = vmatpush1.msra.mxu0 0.0
    %636 = vmatprep.subr.mxu0 0.0
    %637 = vmatpush1.msra.mxu0 0.0
    %638 = vmatprep.subr.mxu0 0.0
    %639 = vmatpush1.msra.mxu0 0.0
    %640 = vmatprep.subr.mxu0 0.0
    %641 = vmatpush1.msra.mxu0 0.0
    %642 = vmatprep.subr.mxu0 0.0
    %643 = vmatpush1.msra.mxu0 0.0
    %644 = vmatprep.subr.mxu0 0.0
    %645 = vmatpush1.msra.mxu0 0.0
    %646 = vmatprep.subr.mxu0 0.0
    %647 = vmatpush1.msra.mxu0 0.0
    %648 = vmatprep.subr.mxu0 0.0
    %649 = vmatpush1.msra.mxu0 0.0
    %650 = vmatprep.subr.mxu0 0.0
    %651 = vmatpush1.msra.mxu0 0.0
    %652 = vmatprep.subr.mxu0 0.0
    %653 = vmatpush1.msra.mxu0 0.0
    %654 = vmatprep.subr.mxu0 0.0
    %655 = vmatpush1.msra.mxu0 0.0
    %656 = vmatprep.subr.mxu0 0.0
    %657 = vmatpush1.msra.mxu0 0.0
    %658 = vmatprep.subr.mxu0 0.0
    %659 = vmatpush1.msra.mxu0 0.0
    %660 = vmatprep.mubr.f32.mxu0 0.0
    %661 = vmatmul.mubr.f32.gmra.mrb[0].mxu0 %v579
    %v662 = vpop.f32.mrb[0].mxu0
    %v663 = vadd.f32 0.0, %v662
    %v664 = vpop.f32.mrb[0].mxu0
    %v665 = vadd.f32 0.0, %v664
    %666 = vmatprep.mubr.f32.mxu0 0.0
    %667 = vmatmul.mubr.f32.gmra.mrb[0].mxu0 %v582
    %v668 = vpop.f32.mrb[0].mxu0
    %v669 = vadd.f32 0.0, %v668
    %v670 = vpop.f32.mrb[0].mxu0
    %v671 = vadd.f32 0.0, %v670
    %672 = vmatprep.mubr.f32.mxu0 0.0
    %673 = vmatmul.mubr.f32.gmra.mrb[0].mxu0 %v585
    %v674 = vpop.f32.mrb[0].mxu0
    %v675 = vadd.f32 0.0, %v674
    %v676 = vpop.f32.mrb[0].mxu0
    %v677 = vadd.f32 0.0, %v676
    %678 = vmatprep.mubr.f32.mxu0 0.0
    %679 = vmatmul.mubr.f32.gmra.mrb[0].mxu0 %v588
    %v680 = vpop.f32.mrb[0].mxu0
    %v681 = vadd.f32 0.0, %v680
    %v682 = vpop.f32.mrb[0].mxu0
    %v683 = vadd.f32 0.0, %v682
    %684 = vmatprep.mubr.f32.mxu0 0.0
    %685 = vmatmul.mubr.f32.gmra.mrb[0].mxu0 %v591
    %v686 = vpop.f32.mrb[0].mxu0
    %v687 = vadd.f32 0.0, %v686
    %v688 = vpop.f32.mrb[0].mxu0
    %v689 = vadd.f32 0.0, %v688
    %690 = vmatprep.mubr.f32.mxu0 0.0
    %691 = vmatmul.mubr.f32.gmra.mrb[0].mxu0 %v594
    %v692 = vpop.f32.mrb[0].mxu0
    %v693 = vadd.f32 0.0, %v692
    %v694 = vpop.f32.mrb[0].mxu0
    %v695 = vadd.f32 0.0, %v694
    %696 = vdwg.mxu0
    %v697 = vadd.f32 %v526, %v663
    %v698 = vadd.f32 %v528, %v665
    %v699 = vadd.f32 %v532, %v669
    %v700 = vadd.f32 %v534, %v671
    %v701 = vadd.f32 %v538, %v675
    %v702 = vadd.f32 %v540, %v677
    %v703 = vadd.f32 %v544, %v681
    %v704 = vadd.f32 %v546, %v683
    %v705 = vadd.f32 %v550, %v687
    %v706 = vadd.f32 %v552, %v689
    %v707 = vadd.f32 %v556, %v693
    %v708 = vadd.f32 %v558, %v695
    %v709 = vsel %vm248, 1, 0
    %v710 = vsel %vm249, 1, 0
    %vm711 = vcmp.eq.s32.totalorder %v709, 1
    %vm712 = vcmp.eq.s32.totalorder %v710, 1
    %713 = vrot.lane.b32.xlu0 %v268, 31
    %v714 = vpop.permute.xlu0 %713
    %715 = vrot.lane.b32.xlu0 %v269, 31
    %v716 = vpop.permute.xlu0 %715
    %717 = vrot.lane.b32.xlu0 %v270, 31
    %v718 = vpop.permute.xlu0 %717
    %vm719 = vcmask 252928
    %v720 = vsel %vm719, %v714, %v716
    %v721 = vsel %vm719, %v716, %v718
    %v724 = vsel %vm711, %v720, 0.0
    %v725 = vsel %vm712, %v721, 0.0
    %s726 = scalar_lea.vmem %s2, 144
    %v727 = vld [vmem:[%s726] sm:$0xff]
    %v728 = vld [vmem:[%s726 + $0x8] sm:$0xff]
    %v729 = vld [vmem:[%s726 + $0x10] sm:$0xff]
    %v730 = vld [vmem:[%s726 + $0x18] sm:$0xff]
    %v731 = vld [vmem:[%s726 + $0x20] sm:$0xff]
    %v732 = vld [vmem:[%s726 + $0x28] sm:$0xff]
    %v734 = vsel %vm321, %v727, 0
    %v737 = vsel %vm321, %v728, 0
    %v740 = vsel %vm321, %v729, 0
    %v743 = vsel %vm321, %v730, 0
    %v746 = vsel %vm321, %v731, 0
    %v749 = vsel %vm321, %v732, 0
    %751 = vmatprep.subr.mxu0 %v725
    %752 = vmatpush1.msra.mxu0 %v724
    %753 = vmatprep.subr.mxu0 0.0
    %754 = vmatpush1.msra.mxu0 0.0
    %755 = vmatprep.subr.mxu0 0.0
    %756 = vmatpush1.msra.mxu0 0.0
    %757 = vmatprep.subr.mxu0 0.0
    %758 = vmatpush1.msra.mxu0 0.0
    %759 = vmatprep.subr.mxu0 0.0
    %760 = vmatpush1.msra.mxu0 0.0
    %761 = vmatprep.subr.mxu0 0.0
    %762 = vmatpush1.msra.mxu0 0.0
    %763 = vmatprep.subr.mxu0 0.0
    %764 = vmatpush1.msra.mxu0 0.0
    %765 = vmatprep.subr.mxu0 0.0
    %766 = vmatpush1.msra.mxu0 0.0
    %767 = vmatprep.subr.mxu0 0.0
    %768 = vmatpush1.msra.mxu0 0.0
    %769 = vmatprep.subr.mxu0 0.0
    %770 = vmatpush1.msra.mxu0 0.0
    %771 = vmatprep.subr.mxu0 0.0
    %772 = vmatpush1.msra.mxu0 0.0
    %773 = vmatprep.subr.mxu0 0.0
    %774 = vmatpush1.msra.mxu0 0.0
    %775 = vmatprep.subr.mxu0 0.0
    %776 = vmatpush1.msra.mxu0 0.0
    %777 = vmatprep.subr.mxu0 0.0
    %778 = vmatpush1.msra.mxu0 0.0
    %779 = vmatprep.subr.mxu0 0.0
    %780 = vmatpush1.msra.mxu0 0.0
    %781 = vmatprep.subr.mxu0 0.0
    %782 = vmatpush1.msra.mxu0 0.0
    %783 = vmatprep.subr.mxu0 0.0
    %784 = vmatpush1.msra.mxu0 0.0
    %785 = vmatprep.subr.mxu0 0.0
    %786 = vmatpush1.msra.mxu0 0.0
    %787 = vmatprep.subr.mxu0 0.0
    %788 = vmatpush1.msra.mxu0 0.0
    %789 = vmatprep.subr.mxu0 0.0
    %790 = vmatpush1.msra.mxu0 0.0
    %791 = vmatprep.subr.mxu0 0.0
    %792 = vmatpush1.msra.mxu0 0.0
    %793 = vmatprep.subr.mxu0 0.0
    %794 = vmatpush1.msra.mxu0 0.0
    %795 = vmatprep.subr.mxu0 0.0
    %796 = vmatpush1.msra.mxu0 0.0
    %797 = vmatprep.subr.mxu0 0.0
    %798 = vmatpush1.msra.mxu0 0.0
    %799 = vmatprep.subr.mxu0 0.0
    %800 = vmatpush1.msra.mxu0 0.0
    %801 = vmatprep.subr.mxu0 0.0
    %802 = vmatpush1.msra.mxu0 0.0
    %803 = vmatprep.subr.mxu0 0.0
    %804 = vmatpush1.msra.mxu0 0.0
    %805 = vmatprep.subr.mxu0 0.0
    %806 = vmatpush1.msra.mxu0 0.0
    %807 = vmatprep.subr.mxu0 0.0
    %808 = vmatpush1.msra.mxu0 0.0
    %809 = vmatprep.subr.mxu0 0.0
    %810 = vmatpush1.msra.mxu0 0.0
    %811 = vmatprep.subr.mxu0 0.0
    %812 = vmatpush1.msra.mxu0 0.0
    %813 = vmatprep.subr.mxu0 0.0
    %814 = vmatpush1.msra.mxu0 0.0
    %815 = vmatprep.mubr.f32.mxu0 0.0
    %816 = vmatmul.mubr.f32.gmra.mrb[0].mxu0 %v734
    %v817 = vpop.f32.mrb[0].mxu0
    %v818 = vadd.f32 0.0, %v817
    %v819 = vpop.f32.mrb[0].mxu0
    %v820 = vadd.f32 0.0, %v819
    %821 = vmatprep.mubr.f32.mxu0 0.0
    %822 = vmatmul.mubr.f32.gmra.mrb[0].mxu0 %v737
    %v823 = vpop.f32.mrb[0].mxu0
    %v824 = vadd.f32 0.0, %v823
    %v825 = vpop.f32.mrb[0].mxu0
    %v826 = vadd.f32 0.0, %v825
    %827 = vmatprep.mubr.f32.mxu0 0.0
    %828 = vmatmul.mubr.f32.gmra.mrb[0].mxu0 %v740
    %v829 = vpop.f32.mrb[0].mxu0
    %v830 = vadd.f32 0.0, %v829
    %v831 = vpop.f32.mrb[0].mxu0
    %v832 = vadd.f32 0.0, %v831
    %833 = vmatprep.mubr.f32.mxu0 0.0
    %834 = vmatmul.mubr.f32.gmra.mrb[0].mxu0 %v743
    %v835 = vpop.f32.mrb[0].mxu0
    %v836 = vadd.f32 0.0, %v835
    %v837 = vpop.f32.mrb[0].mxu0
    %v838 = vadd.f32 0.0, %v837
    %839 = vmatprep.mubr.f32.mxu0 0.0
    %840 = vmatmul.mubr.f32.gmra.mrb[0].mxu0 %v746
    %v841 = vpop.f32.mrb[0].mxu0
    %v842 = vadd.f32 0.0, %v841
    %v843 = vpop.f32.mrb[0].mxu0
    %v844 = vadd.f32 0.0, %v843
    %845 = vmatprep.mubr.f32.mxu0 0.0
    %846 = vmatmul.mubr.f32.gmra.mrb[0].mxu0 %v749
    %v847 = vpop.f32.mrb[0].mxu0
    %v848 = vadd.f32 0.0, %v847
    %v849 = vpop.f32.mrb[0].mxu0
    %v850 = vadd.f32 0.0, %v849
    %851 = vdwg.mxu0
    %v852 = vadd.f32 %v697, %v818
    %v853 = vadd.f32 %v698, %v820
    %v854 = vadd.f32 %v699, %v824
    %v855 = vadd.f32 %v700, %v826
    %v856 = vadd.f32 %v701, %v830
    %v857 = vadd.f32 %v702, %v832
    %v858 = vadd.f32 %v703, %v836
    %v859 = vadd.f32 %v704, %v838
    %v860 = vadd.f32 %v705, %v842
    %v861 = vadd.f32 %v706, %v844
    %v862 = vadd.f32 %v707, %v848
    %v863 = vadd.f32 %v708, %v850
    %v864 = vsel %vm256, 1, 0
    %v865 = vsel %vm257, 1, 0
    %vm866 = vcmp.eq.s32.totalorder %v864, 1
    %vm867 = vcmp.eq.s32.totalorder %v865, 1
    %868 = vrot.lane.b32.xlu0 %v268, 30
    %v869 = vpop.permute.xlu0 %868
    %870 = vrot.lane.b32.xlu0 %v269, 30
    %v871 = vpop.permute.xlu0 %870
    %872 = vrot.lane.b32.xlu0 %v270, 30
    %v873 = vpop.permute.xlu0 %872
    %vm874 = vcmask 244736
    %v875 = vsel %vm874, %v869, %v871
    %v876 = vsel %vm874, %v871, %v873
    %v879 = vsel %vm866, %v875, 0.0
    %v880 = vsel %vm867, %v876, 0.0
    %s881 = scalar_lea.vmem %s2, 192
    %v882 = vld [vmem:[%s881] sm:$0xff]
    %v883 = vld [vmem:[%s881 + $0x8] sm:$0xff]
    %v884 = vld [vmem:[%s881 + $0x10] sm:$0xff]
    %v885 = vld [vmem:[%s881 + $0x18] sm:$0xff]
    %v886 = vld [vmem:[%s881 + $0x20] sm:$0xff]
    %v887 = vld [vmem:[%s881 + $0x28] sm:$0xff]
    %v889 = vsel %vm321, %v882, 0
    %v892 = vsel %vm321, %v883, 0
    %v895 = vsel %vm321, %v884, 0
    %v898 = vsel %vm321, %v885, 0
    %v901 = vsel %vm321, %v886, 0
    %v904 = vsel %vm321, %v887, 0
    %906 = vmatprep.subr.mxu0 %v880
    %907 = vmatpush1.msra.mxu0 %v879
    %908 = vmatprep.subr.mxu0 0.0
    %909 = vmatpush1.msra.mxu0 0.0
    %910 = vmatprep.subr.mxu0 0.0
    %911 = vmatpush1.msra.mxu0 0.0
    %912 = vmatprep.subr.mxu0 0.0
    %913 = vmatpush1.msra.mxu0 0.0
    %914 = vmatprep.subr.mxu0 0.0
    %915 = vmatpush1.msra.mxu0 0.0
    %916 = vmatprep.subr.mxu0 0.0
    %917 = vmatpush1.msra.mxu0 0.0
    %918 = vmatprep.subr.mxu0 0.0
    %919 = vmatpush1.msra.mxu0 0.0
    %920 = vmatprep.subr.mxu0 0.0
    %921 = vmatpush1.msra.mxu0 0.0
    %922 = vmatprep.subr.mxu0 0.0
    %923 = vmatpush1.msra.mxu0 0.0
    %924 = vmatprep.subr.mxu0 0.0
    %925 = vmatpush1.msra.mxu0 0.0
    %926 = vmatprep.subr.mxu0 0.0
    %927 = vmatpush1.msra.mxu0 0.0
    %928 = vmatprep.subr.mxu0 0.0
    %929 = vmatpush1.msra.mxu0 0.0
    %930 = vmatprep.subr.mxu0 0.0
    %931 = vmatpush1.msra.mxu0 0.0
    %932 = vmatprep.subr.mxu0 0.0
    %933 = vmatpush1.msra.mxu0 0.0
    %934 = vmatprep.subr.mxu0 0.0
    %935 = vmatpush1.msra.mxu0 0.0
    %936 = vmatprep.subr.mxu0 0.0
    %937 = vmatpush1.msra.mxu0 0.0
    %938 = vmatprep.subr.mxu0 0.0
    %939 = vmatpush1.msra.mxu0 0.0
    %940 = vmatprep.subr.mxu0 0.0
    %941 = vmatpush1.msra.mxu0 0.0
    %942 = vmatprep.subr.mxu0 0.0
    %943 = vmatpush1.msra.mxu0 0.0
    %944 = vmatprep.subr.mxu0 0.0
    %945 = vmatpush1.msra.mxu0 0.0
    %946 = vmatprep.subr.mxu0 0.0
    %947 = vmatpush1.msra.mxu0 0.0
    %948 = vmatprep.subr.mxu0 0.0
    %949 = vmatpush1.msra.mxu0 0.0
    %950 = vmatprep.subr.mxu0 0.0
    %951 = vmatpush1.msra.mxu0 0.0
    %952 = vmatprep.subr.mxu0 0.0
    %953 = vmatpush1.msra.mxu0 0.0
    %954 = vmatprep.subr.mxu0 0.0
    %955 = vmatpush1.msra.mxu0 0.0
    %956 = vmatprep.subr.mxu0 0.0
    %957 = vmatpush1.msra.mxu0 0.0
    %958 = vmatprep.subr.mxu0 0.0
    %959 = vmatpush1.msra.mxu0 0.0
    %960 = vmatprep.subr.mxu0 0.0
    %961 = vmatpush1.msra.mxu0 0.0
    %962 = vmatprep.subr.mxu0 0.0
    %963 = vmatpush1.msra.mxu0 0.0
    %964 = vmatprep.subr.mxu0 0.0
    %965 = vmatpush1.msra.mxu0 0.0
    %966 = vmatprep.subr.mxu0 0.0
    %967 = vmatpush1.msra.mxu0 0.0
    %968 = vmatprep.subr.mxu0 0.0
    %969 = vmatpush1.msra.mxu0 0.0
    %970 = vmatprep.mubr.f32.mxu0 0.0
    %971 = vmatmul.mubr.f32.gmra.mrb[0].mxu0 %v889
    %v972 = vpop.f32.mrb[0].mxu0
    %v973 = vadd.f32 0.0, %v972
    %v974 = vpop.f32.mrb[0].mxu0
    %v975 = vadd.f32 0.0, %v974
    %976 = vmatprep.mubr.f32.mxu0 0.0
    %977 = vmatmul.mubr.f32.gmra.mrb[0].mxu0 %v892
    %v978 = vpop.f32.mrb[0].mxu0
    %v979 = vadd.f32 0.0, %v978
    %v980 = vpop.f32.mrb[0].mxu0
    %v981 = vadd.f32 0.0, %v980
    %982 = vmatprep.mubr.f32.mxu0 0.0
    %983 = vmatmul.mubr.f32.gmra.mrb[0].mxu0 %v895
    %v984 = vpop.f32.mrb[0].mxu0
    %v985 = vadd.f32 0.0, %v984
    %v986 = vpop.f32.mrb[0].mxu0
    %v987 = vadd.f32 0.0, %v986
    %988 = vmatprep.mubr.f32.mxu0 0.0
    %989 = vmatmul.mubr.f32.gmra.mrb[0].mxu0 %v898
    %v990 = vpop.f32.mrb[0].mxu0
    %v991 = vadd.f32 0.0, %v990
    %v992 = vpop.f32.mrb[0].mxu0
    %v993 = vadd.f32 0.0, %v992
    %994 = vmatprep.mubr.f32.mxu0 0.0
    %995 = vmatmul.mubr.f32.gmra.mrb[0].mxu0 %v901
    %v996 = vpop.f32.mrb[0].mxu0
    %v997 = vadd.f32 0.0, %v996
    %v998 = vpop.f32.mrb[0].mxu0
    %v999 = vadd.f32 0.0, %v998
    %1000 = vmatprep.mubr.f32.mxu0 0.0
    %1001 = vmatmul.mubr.f32.gmra.mrb[0].mxu0 %v904
    %v1002 = vpop.f32.mrb[0].mxu0
    %v1003 = vadd.f32 0.0, %v1002
    %v1004 = vpop.f32.mrb[0].mxu0
    %v1005 = vadd.f32 0.0, %v1004
    %1006 = vdwg.mxu0
    %v1007 = vadd.f32 %v852, %v973
    %v1008 = vadd.f32 %v853, %v975
    %v1009 = vadd.f32 %v854, %v979
    %v1010 = vadd.f32 %v855, %v981
    %v1011 = vadd.f32 %v856, %v985
    %v1012 = vadd.f32 %v857, %v987
    %v1013 = vadd.f32 %v858, %v991
    %v1014 = vadd.f32 %v859, %v993
    %v1015 = vadd.f32 %v860, %v997
    %v1016 = vadd.f32 %v861, %v999
    %v1017 = vadd.f32 %v862, %v1003
    %v1018 = vadd.f32 %v863, %v1005
    %1019 = vrot.lane.b32.xlu0 %v268, 18
    %v1020 = vpop.permute.xlu0 %1019
    %1021 = vrot.lane.b32.xlu0 %v269, 18
    %v1022 = vpop.permute.xlu0 %1021
    %1023 = vrot.lane.b32.xlu0 %v270, 18
    %v1024 = vpop.permute.xlu0 %1023
    %vm1025 = vcmask 146432
    %v1026 = vsel %vm1025, %v1020, %v1022
    %v1027 = vsel %vm1025, %v1022, %v1024
    %v1030 = vsel %vm273, %v1026, 0.0
    %v1031 = vsel %vm274, %v1027, 0.0
    %s1032 = scalar_lea.vmem %s2, 240
    %v1033 = vld [vmem:[%s1032] sm:$0xff]
    %v1034 = vld [vmem:[%s1032 + $0x8] sm:$0xff]
    %v1035 = vld [vmem:[%s1032 + $0x10] sm:$0xff]
    %v1036 = vld [vmem:[%s1032 + $0x18] sm:$0xff]
    %v1037 = vld [vmem:[%s1032 + $0x20] sm:$0xff]
    %v1038 = vld [vmem:[%s1032 + $0x28] sm:$0xff]
    %v1040 = vsel %vm321, %v1033, 0
    %v1043 = vsel %vm321, %v1034, 0
    %v1046 = vsel %vm321, %v1035, 0
    %v1049 = vsel %vm321, %v1036, 0
    %v1052 = vsel %vm321, %v1037, 0
    %v1055 = vsel %vm321, %v1038, 0
    %1057 = vmatprep.subr.mxu0 %v1031
    %1058 = vmatpush1.msra.mxu0 %v1030
    %1059 = vmatprep.subr.mxu0 0.0
    %1060 = vmatpush1.msra.mxu0 0.0
    %1061 = vmatprep.subr.mxu0 0.0
    %1062 = vmatpush1.msra.mxu0 0.0
    %1063 = vmatprep.subr.mxu0 0.0
    %1064 = vmatpush1.msra.mxu0 0.0
    %1065 = vmatprep.subr.mxu0 0.0
    %1066 = vmatpush1.msra.mxu0 0.0
    %1067 = vmatprep.subr.mxu0 0.0
    %1068 = vmatpush1.msra.mxu0 0.0
    %1069 = vmatprep.subr.mxu0 0.0
    %1070 = vmatpush1.msra.mxu0 0.0
    %1071 = vmatprep.subr.mxu0 0.0
    %1072 = vmatpush1.msra.mxu0 0.0
    %1073 = vmatprep.subr.mxu0 0.0
    %1074 = vmatpush1.msra.mxu0 0.0
    %1075 = vmatprep.subr.mxu0 0.0
    %1076 = vmatpush1.msra.mxu0 0.0
    %1077 = vmatprep.subr.mxu0 0.0
    %1078 = vmatpush1.msra.mxu0 0.0
    %1079 = vmatprep.subr.mxu0 0.0
    %1080 = vmatpush1.msra.mxu0 0.0
    %1081 = vmatprep.subr.mxu0 0.0
    %1082 = vmatpush1.msra.mxu0 0.0
    %1083 = vmatprep.subr.mxu0 0.0
    %1084 = vmatpush1.msra.mxu0 0.0
    %1085 = vmatprep.subr.mxu0 0.0
    %1086 = vmatpush1.msra.mxu0 0.0
    %1087 = vmatprep.subr.mxu0 0.0
    %1088 = vmatpush1.msra.mxu0 0.0
    %1089 = vmatprep.subr.mxu0 0.0
    %1090 = vmatpush1.msra.mxu0 0.0
    %1091 = vmatprep.subr.mxu0 0.0
    %1092 = vmatpush1.msra.mxu0 0.0
    %1093 = vmatprep.subr.mxu0 0.0
    %1094 = vmatpush1.msra.mxu0 0.0
    %1095 = vmatprep.subr.mxu0 0.0
    %1096 = vmatpush1.msra.mxu0 0.0
    %1097 = vmatprep.subr.mxu0 0.0
    %1098 = vmatpush1.msra.mxu0 0.0
    %1099 = vmatprep.subr.mxu0 0.0
    %1100 = vmatpush1.msra.mxu0 0.0
    %1101 = vmatprep.subr.mxu0 0.0
    %1102 = vmatpush1.msra.mxu0 0.0
    %1103 = vmatprep.subr.mxu0 0.0
    %1104 = vmatpush1.msra.mxu0 0.0
    %1105 = vmatprep.subr.mxu0 0.0
    %1106 = vmatpush1.msra.mxu0 0.0
    %1107 = vmatprep.subr.mxu0 0.0
    %1108 = vmatpush1.msra.mxu0 0.0
    %1109 = vmatprep.subr.mxu0 0.0
    %1110 = vmatpush1.msra.mxu0 0.0
    %1111 = vmatprep.subr.mxu0 0.0
    %1112 = vmatpush1.msra.mxu0 0.0
    %1113 = vmatprep.subr.mxu0 0.0
    %1114 = vmatpush1.msra.mxu0 0.0
    %1115 = vmatprep.subr.mxu0 0.0
    %1116 = vmatpush1.msra.mxu0 0.0
    %1117 = vmatprep.subr.mxu0 0.0
    %1118 = vmatpush1.msra.mxu0 0.0
    %1119 = vmatprep.subr.mxu0 0.0
    %1120 = vmatpush1.msra.mxu0 0.0
    %1121 = vmatprep.mubr.f32.mxu0 0.0
    %1122 = vmatmul.mubr.f32.gmra.mrb[0].mxu0 %v1040
    %v1123 = vpop.f32.mrb[0].mxu0
    %v1124 = vadd.f32 0.0, %v1123
    %v1125 = vpop.f32.mrb[0].mxu0
    %v1126 = vadd.f32 0.0, %v1125
    %1127 = vmatprep.mubr.f32.mxu0 0.0
    %1128 = vmatmul.mubr.f32.gmra.mrb[0].mxu0 %v1043
    %v1129 = vpop.f32.mrb[0].mxu0
    %v1130 = vadd.f32 0.0, %v1129
    %v1131 = vpop.f32.mrb[0].mxu0
    %v1132 = vadd.f32 0.0, %v1131
    %1133 = vmatprep.mubr.f32.mxu0 0.0
    %1134 = vmatmul.mubr.f32.gmra.mrb[0].mxu0 %v1046
    %v1135 = vpop.f32.mrb[0].mxu0
    %v1136 = vadd.f32 0.0, %v1135
    %v1137 = vpop.f32.mrb[0].mxu0
    %v1138 = vadd.f32 0.0, %v1137
    %1139 = vmatprep.mubr.f32.mxu0 0.0
    %1140 = vmatmul.mubr.f32.gmra.mrb[0].mxu0 %v1049
    %v1141 = vpop.f32.mrb[0].mxu0
    %v1142 = vadd.f32 0.0, %v1141
    %v1143 = vpop.f32.mrb[0].mxu0
    %v1144 = vadd.f32 0.0, %v1143
    %1145 = vmatprep.mubr.f32.mxu0 0.0
    %1146 = vmatmul.mubr.f32.gmra.mrb[0].mxu0 %v1052
    %v1147 = vpop.f32.mrb[0].mxu0
    %v1148 = vadd.f32 0.0, %v1147
    %v1149 = vpop.f32.mrb[0].mxu0
    %v1150 = vadd.f32 0.0, %v1149
    %1151 = vmatprep.mubr.f32.mxu0 0.0
    %1152 = vmatmul.mubr.f32.gmra.mrb[0].mxu0 %v1055
    %v1153 = vpop.f32.mrb[0].mxu0
    %v1154 = vadd.f32 0.0, %v1153
    %v1155 = vpop.f32.mrb[0].mxu0
    %v1156 = vadd.f32 0.0, %v1155
    %1157 = vdwg.mxu0
    %v1158 = vadd.f32 %v1007, %v1124
    %v1159 = vadd.f32 %v1008, %v1126
    %v1160 = vadd.f32 %v1009, %v1130
    %v1161 = vadd.f32 %v1010, %v1132
    %v1162 = vadd.f32 %v1011, %v1136
    %v1163 = vadd.f32 %v1012, %v1138
    %v1164 = vadd.f32 %v1013, %v1142
    %v1165 = vadd.f32 %v1014, %v1144
    %v1166 = vadd.f32 %v1015, %v1148
    %v1167 = vadd.f32 %v1016, %v1150
    %v1168 = vadd.f32 %v1017, %v1154
    %v1169 = vadd.f32 %v1018, %v1156
    %1170 = vrot.lane.b32.xlu0 %v268, 17
    %v1171 = vpop.permute.xlu0 %1170
    %1172 = vrot.lane.b32.xlu0 %v269, 17
    %v1173 = vpop.permute.xlu0 %1172
    %1174 = vrot.lane.b32.xlu0 %v270, 17
    %v1175 = vpop.permute.xlu0 %1174
    %vm1176 = vcmask 138240
    %v1177 = vsel %vm1176, %v1171, %v1173
    %v1178 = vsel %vm1176, %v1173, %v1175
    %v1181 = vsel %vm299, %v1177, 0.0
    %v1182 = vsel %vm300, %v1178, 0.0
    %s1183 = scalar_lea.vmem %s2, 288
    %v1184 = vld [vmem:[%s1183] sm:$0xff]
    %v1185 = vld [vmem:[%s1183 + $0x8] sm:$0xff]
    %v1186 = vld [vmem:[%s1183 + $0x10] sm:$0xff]
    %v1187 = vld [vmem:[%s1183 + $0x18] sm:$0xff]
    %v1188 = vld [vmem:[%s1183 + $0x20] sm:$0xff]
    %v1189 = vld [vmem:[%s1183 + $0x28] sm:$0xff]
    %v1191 = vsel %vm321, %v1184, 0
    %v1194 = vsel %vm321, %v1185, 0
    %v1197 = vsel %vm321, %v1186, 0
    %v1200 = vsel %vm321, %v1187, 0
    %v1203 = vsel %vm321, %v1188, 0
    %v1206 = vsel %vm321, %v1189, 0
    %1208 = vmatprep.subr.mxu0 %v1182
    %1209 = vmatpush1.msra.mxu0 %v1181
    %1210 = vmatprep.subr.mxu0 0.0
    %1211 = vmatpush1.msra.mxu0 0.0
    %1212 = vmatprep.subr.mxu0 0.0
    %1213 = vmatpush1.msra.mxu0 0.0
    %1214 = vmatprep.subr.mxu0 0.0
    %1215 = vmatpush1.msra.mxu0 0.0
    %1216 = vmatprep.subr.mxu0 0.0
    %1217 = vmatpush1.msra.mxu0 0.0
    %1218 = vmatprep.subr.mxu0 0.0
    %1219 = vmatpush1.msra.mxu0 0.0
    %1220 = vmatprep.subr.mxu0 0.0
    %1221 = vmatpush1.msra.mxu0 0.0
    %1222 = vmatprep.subr.mxu0 0.0
    %1223 = vmatpush1.msra.mxu0 0.0
    %1224 = vmatprep.subr.mxu0 0.0
    %1225 = vmatpush1.msra.mxu0 0.0
    %1226 = vmatprep.subr.mxu0 0.0
    %1227 = vmatpush1.msra.mxu0 0.0
    %1228 = vmatprep.subr.mxu0 0.0
    %1229 = vmatpush1.msra.mxu0 0.0
    %1230 = vmatprep.subr.mxu0 0.0
    %1231 = vmatpush1.msra.mxu0 0.0
    %1232 = vmatprep.subr.mxu0 0.0
    %1233 = vmatpush1.msra.mxu0 0.0
    %1234 = vmatprep.subr.mxu0 0.0
    %1235 = vmatpush1.msra.mxu0 0.0
    %1236 = vmatprep.subr.mxu0 0.0
    %1237 = vmatpush1.msra.mxu0 0.0
    %1238 = vmatprep.subr.mxu0 0.0
    %1239 = vmatpush1.msra.mxu0 0.0
    %1240 = vmatprep.subr.mxu0 0.0
    %1241 = vmatpush1.msra.mxu0 0.0
    %1242 = vmatprep.subr.mxu0 0.0
    %1243 = vmatpush1.msra.mxu0 0.0
    %1244 = vmatprep.subr.mxu0 0.0
    %1245 = vmatpush1.msra.mxu0 0.0
    %1246 = vmatprep.subr.mxu0 0.0
    %1247 = vmatpush1.msra.mxu0 0.0
    %1248 = vmatprep.subr.mxu0 0.0
    %1249 = vmatpush1.msra.mxu0 0.0
    %1250 = vmatprep.subr.mxu0 0.0
    %1251 = vmatpush1.msra.mxu0 0.0
    %1252 = vmatprep.subr.mxu0 0.0
    %1253 = vmatpush1.msra.mxu0 0.0
    %1254 = vmatprep.subr.mxu0 0.0
    %1255 = vmatpush1.msra.mxu0 0.0
    %1256 = vmatprep.subr.mxu0 0.0
    %1257 = vmatpush1.msra.mxu0 0.0
    %1258 = vmatprep.subr.mxu0 0.0
    %1259 = vmatpush1.msra.mxu0 0.0
    %1260 = vmatprep.subr.mxu0 0.0
    %1261 = vmatpush1.msra.mxu0 0.0
    %1262 = vmatprep.subr.mxu0 0.0
    %1263 = vmatpush1.msra.mxu0 0.0
    %1264 = vmatprep.subr.mxu0 0.0
    %1265 = vmatpush1.msra.mxu0 0.0
    %1266 = vmatprep.subr.mxu0 0.0
    %1267 = vmatpush1.msra.mxu0 0.0
    %1268 = vmatprep.subr.mxu0 0.0
    %1269 = vmatpush1.msra.mxu0 0.0
    %1270 = vmatprep.subr.mxu0 0.0
    %1271 = vmatpush1.msra.mxu0 0.0
    %1272 = vmatprep.mubr.f32.mxu0 0.0
    %1273 = vmatmul.mubr.f32.gmra.mrb[0].mxu0 %v1191
    %v1274 = vpop.f32.mrb[0].mxu0
    %v1275 = vadd.f32 0.0, %v1274
    %v1276 = vpop.f32.mrb[0].mxu0
    %v1277 = vadd.f32 0.0, %v1276
    %1278 = vmatprep.mubr.f32.mxu0 0.0
    %1279 = vmatmul.mubr.f32.gmra.mrb[0].mxu0 %v1194
    %v1280 = vpop.f32.mrb[0].mxu0
    %v1281 = vadd.f32 0.0, %v1280
    %v1282 = vpop.f32.mrb[0].mxu0
    %v1283 = vadd.f32 0.0, %v1282
    %1284 = vmatprep.mubr.f32.mxu0 0.0
    %1285 = vmatmul.mubr.f32.gmra.mrb[0].mxu0 %v1197
    %v1286 = vpop.f32.mrb[0].mxu0
    %v1287 = vadd.f32 0.0, %v1286
    %v1288 = vpop.f32.mrb[0].mxu0
    %v1289 = vadd.f32 0.0, %v1288
    %1290 = vmatprep.mubr.f32.mxu0 0.0
    %1291 = vmatmul.mubr.f32.gmra.mrb[0].mxu0 %v1200
    %v1292 = vpop.f32.mrb[0].mxu0
    %v1293 = vadd.f32 0.0, %v1292
    %v1294 = vpop.f32.mrb[0].mxu0
    %v1295 = vadd.f32 0.0, %v1294
    %1296 = vmatprep.mubr.f32.mxu0 0.0
    %1297 = vmatmul.mubr.f32.gmra.mrb[0].mxu0 %v1203
    %v1298 = vpop.f32.mrb[0].mxu0
    %v1299 = vadd.f32 0.0, %v1298
    %v1300 = vpop.f32.mrb[0].mxu0
    %v1301 = vadd.f32 0.0, %v1300
    %1302 = vmatprep.mubr.f32.mxu0 0.0
    %1303 = vmatmul.mubr.f32.gmra.mrb[0].mxu0 %v1206
    %v1304 = vpop.f32.mrb[0].mxu0
    %v1305 = vadd.f32 0.0, %v1304
    %v1306 = vpop.f32.mrb[0].mxu0
    %v1307 = vadd.f32 0.0, %v1306
    %1308 = vdwg.mxu0
    %v1309 = vadd.f32 %v1158, %v1275
    %v1310 = vadd.f32 %v1159, %v1277
    %v1311 = vadd.f32 %v1160, %v1281
    %v1312 = vadd.f32 %v1161, %v1283
    %v1313 = vadd.f32 %v1162, %v1287
    %v1314 = vadd.f32 %v1163, %v1289
    %v1315 = vadd.f32 %v1164, %v1293
    %v1316 = vadd.f32 %v1165, %v1295
    %v1317 = vadd.f32 %v1166, %v1299
    %v1318 = vadd.f32 %v1167, %v1301
    %v1319 = vadd.f32 %v1168, %v1305
    %v1320 = vadd.f32 %v1169, %v1307
    %s1321 = scalar_lea.vmem %s2, 336
    %v1322 = vld [vmem:[%s1321] sm:$0xff]
    %v1323 = vld [vmem:[%s1321 + $0x8] sm:$0xff]
    %v1324 = vld [vmem:[%s1321 + $0x10] sm:$0xff]
    %v1325 = vld [vmem:[%s1321 + $0x18] sm:$0xff]
    %v1326 = vld [vmem:[%s1321 + $0x20] sm:$0xff]
    %v1327 = vld [vmem:[%s1321 + $0x28] sm:$0xff]
    %1328 = vrot.lane.b32.xlu0 %v268, 16
    %v1329 = vpop.permute.xlu0 %1328
    %1330 = vrot.lane.b32.xlu0 %v269, 16
    %v1331 = vpop.permute.xlu0 %1330
    %1332 = vrot.lane.b32.xlu0 %v270, 16
    %v1333 = vpop.permute.xlu0 %1332
    %vm1334 = vcmask 130048
    %v1335 = vsel %vm1334, %v1329, %v1331
    %v1336 = vsel %vm1334, %v1331, %v1333
    %v1340 = vsel %vm321, %v1322, 0
    %v1343 = vsel %vm321, %v1323, 0
    %v1346 = vsel %vm321, %v1324, 0
    %v1349 = vsel %vm321, %v1325, 0
    %v1352 = vsel %vm321, %v1326, 0
    %v1355 = vsel %vm321, %v1327, 0
    %1357 = vmatprep.subr.mxu0 %v1336
    %1358 = vmatpush1.msra.mxu0 %v1335
    %1359 = vmatprep.subr.mxu0 0.0
    %1360 = vmatpush1.msra.mxu0 0.0
    %1361 = vmatprep.subr.mxu0 0.0
    %1362 = vmatpush1.msra.mxu0 0.0
    %1363 = vmatprep.subr.mxu0 0.0
    %1364 = vmatpush1.msra.mxu0 0.0
    %1365 = vmatprep.subr.mxu0 0.0
    %1366 = vmatpush1.msra.mxu0 0.0
    %1367 = vmatprep.subr.mxu0 0.0
    %1368 = vmatpush1.msra.mxu0 0.0
    %1369 = vmatprep.subr.mxu0 0.0
    %1370 = vmatpush1.msra.mxu0 0.0
    %1371 = vmatprep.subr.mxu0 0.0
    %1372 = vmatpush1.msra.mxu0 0.0
    %1373 = vmatprep.subr.mxu0 0.0
    %1374 = vmatpush1.msra.mxu0 0.0
    %1375 = vmatprep.subr.mxu0 0.0
    %1376 = vmatpush1.msra.mxu0 0.0
    %1377 = vmatprep.subr.mxu0 0.0
    %1378 = vmatpush1.msra.mxu0 0.0
    %1379 = vmatprep.subr.mxu0 0.0
    %1380 = vmatpush1.msra.mxu0 0.0
    %1381 = vmatprep.subr.mxu0 0.0
    %1382 = vmatpush1.msra.mxu0 0.0
    %1383 = vmatprep.subr.mxu0 0.0
    %1384 = vmatpush1.msra.mxu0 0.0
    %1385 = vmatprep.subr.mxu0 0.0
    %1386 = vmatpush1.msra.mxu0 0.0
    %1387 = vmatprep.subr.mxu0 0.0
    %1388 = vmatpush1.msra.mxu0 0.0
    %1389 = vmatprep.subr.mxu0 0.0
    %1390 = vmatpush1.msra.mxu0 0.0
    %1391 = vmatprep.subr.mxu0 0.0
    %1392 = vmatpush1.msra.mxu0 0.0
    %1393 = vmatprep.subr.mxu0 0.0
    %1394 = vmatpush1.msra.mxu0 0.0
    %1395 = vmatprep.subr.mxu0 0.0
    %1396 = vmatpush1.msra.mxu0 0.0
    %1397 = vmatprep.subr.mxu0 0.0
    %1398 = vmatpush1.msra.mxu0 0.0
    %1399 = vmatprep.subr.mxu0 0.0
    %1400 = vmatpush1.msra.mxu0 0.0
    %1401 = vmatprep.subr.mxu0 0.0
    %1402 = vmatpush1.msra.mxu0 0.0
    %1403 = vmatprep.subr.mxu0 0.0
    %1404 = vmatpush1.msra.mxu0 0.0
    %1405 = vmatprep.subr.mxu0 0.0
    %1406 = vmatpush1.msra.mxu0 0.0
    %1407 = vmatprep.subr.mxu0 0.0
    %1408 = vmatpush1.msra.mxu0 0.0
    %1409 = vmatprep.subr.mxu0 0.0
    %1410 = vmatpush1.msra.mxu0 0.0
    %1411 = vmatprep.subr.mxu0 0.0
    %1412 = vmatpush1.msra.mxu0 0.0
    %1413 = vmatprep.subr.mxu0 0.0
    %1414 = vmatpush1.msra.mxu0 0.0
    %1415 = vmatprep.subr.mxu0 0.0
    %1416 = vmatpush1.msra.mxu0 0.0
    %1417 = vmatprep.subr.mxu0 0.0
    %1418 = vmatpush1.msra.mxu0 0.0
    %1419 = vmatprep.subr.mxu0 0.0
    %1420 = vmatpush1.msra.mxu0 0.0
    %1421 = vmatprep.mubr.f32.mxu0 0.0
    %1422 = vmatmul.mubr.f32.gmra.mrb[0].mxu0 %v1340
    %v1423 = vpop.f32.mrb[0].mxu0
    %v1424 = vadd.f32 0.0, %v1423
    %v1425 = vpop.f32.mrb[0].mxu0
    %v1426 = vadd.f32 0.0, %v1425
    %1427 = vmatprep.mubr.f32.mxu0 0.0
    %1428 = vmatmul.mubr.f32.gmra.mrb[0].mxu0 %v1343
    %v1429 = vpop.f32.mrb[0].mxu0
    %v1430 = vadd.f32 0.0, %v1429
    %v1431 = vpop.f32.mrb[0].mxu0
    %v1432 = vadd.f32 0.0, %v1431
    %1433 = vmatprep.mubr.f32.mxu0 0.0
    %1434 = vmatmul.mubr.f32.gmra.mrb[0].mxu0 %v1346
    %v1435 = vpop.f32.mrb[0].mxu0
    %v1436 = vadd.f32 0.0, %v1435
    %v1437 = vpop.f32.mrb[0].mxu0
    %v1438 = vadd.f32 0.0, %v1437
    %1439 = vmatprep.mubr.f32.mxu0 0.0
    %1440 = vmatmul.mubr.f32.gmra.mrb[0].mxu0 %v1349
    %v1441 = vpop.f32.mrb[0].mxu0
    %v1442 = vadd.f32 0.0, %v1441
    %v1443 = vpop.f32.mrb[0].mxu0
    %v1444 = vadd.f32 0.0, %v1443
    %1445 = vmatprep.mubr.f32.mxu0 0.0
    %1446 = vmatmul.mubr.f32.gmra.mrb[0].mxu0 %v1352
    %v1447 = vpop.f32.mrb[0].mxu0
    %v1448 = vadd.f32 0.0, %v1447
    %v1449 = vpop.f32.mrb[0].mxu0
    %v1450 = vadd.f32 0.0, %v1449
    %1451 = vmatprep.mubr.f32.mxu0 0.0
    %1452 = vmatmul.mubr.f32.gmra.mrb[0].mxu0 %v1355
    %v1453 = vpop.f32.mrb[0].mxu0
    %v1454 = vadd.f32 0.0, %v1453
    %v1455 = vpop.f32.mrb[0].mxu0
    %v1456 = vadd.f32 0.0, %v1455
    %1457 = vdwg.mxu0
    %v1458 = vadd.f32 %v1309, %v1424
    %v1459 = vadd.f32 %v1310, %v1426
    %v1460 = vadd.f32 %v1311, %v1430
    %v1461 = vadd.f32 %v1312, %v1432
    %v1462 = vadd.f32 %v1313, %v1436
    %v1463 = vadd.f32 %v1314, %v1438
    %v1464 = vadd.f32 %v1315, %v1442
    %v1465 = vadd.f32 %v1316, %v1444
    %v1466 = vadd.f32 %v1317, %v1448
    %v1467 = vadd.f32 %v1318, %v1450
    %v1468 = vadd.f32 %v1319, %v1454
    %v1469 = vadd.f32 %v1320, %v1456
    %1470 = vrot.lane.b32.xlu0 %v268, 15
    %v1471 = vpop.permute.xlu0 %1470
    %1472 = vrot.lane.b32.xlu0 %v269, 15
    %v1473 = vpop.permute.xlu0 %1472
    %1474 = vrot.lane.b32.xlu0 %v270, 15
    %v1475 = vpop.permute.xlu0 %1474
    %vm1476 = vcmask 121856
    %v1477 = vsel %vm1476, %v1471, %v1473
    %v1478 = vsel %vm1476, %v1473, %v1475
    %v1481 = vsel %vm711, %v1477, 0.0
    %v1482 = vsel %vm712, %v1478, 0.0
    %s1483 = scalar_lea.vmem %s2, 384
    %v1484 = vld [vmem:[%s1483] sm:$0xff]
    %v1485 = vld [vmem:[%s1483 + $0x8] sm:$0xff]
    %v1486 = vld [vmem:[%s1483 + $0x10] sm:$0xff]
    %v1487 = vld [vmem:[%s1483 + $0x18] sm:$0xff]
    %v1488 = vld [vmem:[%s1483 + $0x20] sm:$0xff]
    %v1489 = vld [vmem:[%s1483 + $0x28] sm:$0xff]
    %v1491 = vsel %vm321, %v1484, 0
    %v1494 = vsel %vm321, %v1485, 0
    %v1497 = vsel %vm321, %v1486, 0
    %v1500 = vsel %vm321, %v1487, 0
    %v1503 = vsel %vm321, %v1488, 0
    %v1506 = vsel %vm321, %v1489, 0
    %1508 = vmatprep.subr.mxu0 %v1482
    %1509 = vmatpush1.msra.mxu0 %v1481
    %1510 = vmatprep.subr.mxu0 0.0
    %1511 = vmatpush1.msra.mxu0 0.0
    %1512 = vmatprep.subr.mxu0 0.0
    %1513 = vmatpush1.msra.mxu0 0.0
    %1514 = vmatprep.subr.mxu0 0.0
    %1515 = vmatpush1.msra.mxu0 0.0
    %1516 = vmatprep.subr.mxu0 0.0
    %1517 = vmatpush1.msra.mxu0 0.0
    %1518 = vmatprep.subr.mxu0 0.0
    %1519 = vmatpush1.msra.mxu0 0.0
    %1520 = vmatprep.subr.mxu0 0.0
    %1521 = vmatpush1.msra.mxu0 0.0
    %1522 = vmatprep.subr.mxu0 0.0
    %1523 = vmatpush1.msra.mxu0 0.0
    %1524 = vmatprep.subr.mxu0 0.0
    %1525 = vmatpush1.msra.mxu0 0.0
    %1526 = vmatprep.subr.mxu0 0.0
    %1527 = vmatpush1.msra.mxu0 0.0
    %1528 = vmatprep.subr.mxu0 0.0
    %1529 = vmatpush1.msra.mxu0 0.0
    %1530 = vmatprep.subr.mxu0 0.0
    %1531 = vmatpush1.msra.mxu0 0.0
    %1532 = vmatprep.subr.mxu0 0.0
    %1533 = vmatpush1.msra.mxu0 0.0
    %1534 = vmatprep.subr.mxu0 0.0
    %1535 = vmatpush1.msra.mxu0 0.0
    %1536 = vmatprep.subr.mxu0 0.0
    %1537 = vmatpush1.msra.mxu0 0.0
    %1538 = vmatprep.subr.mxu0 0.0
    %1539 = vmatpush1.msra.mxu0 0.0
    %1540 = vmatprep.subr.mxu0 0.0
    %1541 = vmatpush1.msra.mxu0 0.0
    %1542 = vmatprep.subr.mxu0 0.0
    %1543 = vmatpush1.msra.mxu0 0.0
    %1544 = vmatprep.subr.mxu0 0.0
    %1545 = vmatpush1.msra.mxu0 0.0
    %1546 = vmatprep.subr.mxu0 0.0
    %1547 = vmatpush1.msra.mxu0 0.0
    %1548 = vmatprep.subr.mxu0 0.0
    %1549 = vmatpush1.msra.mxu0 0.0
    %1550 = vmatprep.subr.mxu0 0.0
    %1551 = vmatpush1.msra.mxu0 0.0
    %1552 = vmatprep.subr.mxu0 0.0
    %1553 = vmatpush1.msra.mxu0 0.0
    %1554 = vmatprep.subr.mxu0 0.0
    %1555 = vmatpush1.msra.mxu0 0.0
    %1556 = vmatprep.subr.mxu0 0.0
    %1557 = vmatpush1.msra.mxu0 0.0
    %1558 = vmatprep.subr.mxu0 0.0
    %1559 = vmatpush1.msra.mxu0 0.0
    %1560 = vmatprep.subr.mxu0 0.0
    %1561 = vmatpush1.msra.mxu0 0.0
    %1562 = vmatprep.subr.mxu0 0.0
    %1563 = vmatpush1.msra.mxu0 0.0
    %1564 = vmatprep.subr.mxu0 0.0
    %1565 = vmatpush1.msra.mxu0 0.0
    %1566 = vmatprep.subr.mxu0 0.0
    %1567 = vmatpush1.msra.mxu0 0.0
    %1568 = vmatprep.subr.mxu0 0.0
    %1569 = vmatpush1.msra.mxu0 0.0
    %1570 = vmatprep.subr.mxu0 0.0
    %1571 = vmatpush1.msra.mxu0 0.0
    %1572 = vmatprep.mubr.f32.mxu0 0.0
    %1573 = vmatmul.mubr.f32.gmra.mrb[0].mxu0 %v1491
    %v1574 = vpop.f32.mrb[0].mxu0
    %v1575 = vadd.f32 0.0, %v1574
    %v1576 = vpop.f32.mrb[0].mxu0
    %v1577 = vadd.f32 0.0, %v1576
    %1578 = vmatprep.mubr.f32.mxu0 0.0
    %1579 = vmatmul.mubr.f32.gmra.mrb[0].mxu0 %v1494
    %v1580 = vpop.f32.mrb[0].mxu0
    %v1581 = vadd.f32 0.0, %v1580
    %v1582 = vpop.f32.mrb[0].mxu0
    %v1583 = vadd.f32 0.0, %v1582
    %1584 = vmatprep.mubr.f32.mxu0 0.0
    %1585 = vmatmul.mubr.f32.gmra.mrb[0].mxu0 %v1497
    %v1586 = vpop.f32.mrb[0].mxu0
    %v1587 = vadd.f32 0.0, %v1586
    %v1588 = vpop.f32.mrb[0].mxu0
    %v1589 = vadd.f32 0.0, %v1588
    %1590 = vmatprep.mubr.f32.mxu0 0.0
    %1591 = vmatmul.mubr.f32.gmra.mrb[0].mxu0 %v1500
    %v1592 = vpop.f32.mrb[0].mxu0
    %v1593 = vadd.f32 0.0, %v1592
    %v1594 = vpop.f32.mrb[0].mxu0
    %v1595 = vadd.f32 0.0, %v1594
    %1596 = vmatprep.mubr.f32.mxu0 0.0
    %1597 = vmatmul.mubr.f32.gmra.mrb[0].mxu0 %v1503
    %v1598 = vpop.f32.mrb[0].mxu0
    %v1599 = vadd.f32 0.0, %v1598
    %v1600 = vpop.f32.mrb[0].mxu0
    %v1601 = vadd.f32 0.0, %v1600
    %1602 = vmatprep.mubr.f32.mxu0 0.0
    %1603 = vmatmul.mubr.f32.gmra.mrb[0].mxu0 %v1506
    %v1604 = vpop.f32.mrb[0].mxu0
    %v1605 = vadd.f32 0.0, %v1604
    %v1606 = vpop.f32.mrb[0].mxu0
    %v1607 = vadd.f32 0.0, %v1606
    %1608 = vdwg.mxu0
    %v1609 = vadd.f32 %v1458, %v1575
    %v1610 = vadd.f32 %v1459, %v1577
    %v1611 = vadd.f32 %v1460, %v1581
    %v1612 = vadd.f32 %v1461, %v1583
    %v1613 = vadd.f32 %v1462, %v1587
    %v1614 = vadd.f32 %v1463, %v1589
    %v1615 = vadd.f32 %v1464, %v1593
    %v1616 = vadd.f32 %v1465, %v1595
    %v1617 = vadd.f32 %v1466, %v1599
    %v1618 = vadd.f32 %v1467, %v1601
    %v1619 = vadd.f32 %v1468, %v1605
    %v1620 = vadd.f32 %v1469, %v1607
    %1621 = vrot.lane.b32.xlu0 %v268, 14
    %v1622 = vpop.permute.xlu0 %1621
    %1623 = vrot.lane.b32.xlu0 %v269, 14
    %v1624 = vpop.permute.xlu0 %1623
    %1625 = vrot.lane.b32.xlu0 %v270, 14
    %v1626 = vpop.permute.xlu0 %1625
    %vm1627 = vcmask 113664
    %v1628 = vsel %vm1627, %v1622, %v1624
    %v1629 = vsel %vm1627, %v1624, %v1626
    %v1632 = vsel %vm866, %v1628, 0.0
    %v1633 = vsel %vm867, %v1629, 0.0
    %s1634 = scalar_lea.vmem %s2, 432
    %v1635 = vld [vmem:[%s1634] sm:$0xff]
    %v1636 = vld [vmem:[%s1634 + $0x8] sm:$0xff]
    %v1637 = vld [vmem:[%s1634 + $0x10] sm:$0xff]
    %v1638 = vld [vmem:[%s1634 + $0x18] sm:$0xff]
    %v1639 = vld [vmem:[%s1634 + $0x20] sm:$0xff]
    %v1640 = vld [vmem:[%s1634 + $0x28] sm:$0xff]
    %v1642 = vsel %vm321, %v1635, 0
    %v1645 = vsel %vm321, %v1636, 0
    %v1648 = vsel %vm321, %v1637, 0
    %v1651 = vsel %vm321, %v1638, 0
    %v1654 = vsel %vm321, %v1639, 0
    %v1657 = vsel %vm321, %v1640, 0
    %1659 = vmatprep.subr.mxu0 %v1633
    %1660 = vmatpush1.msra.mxu0 %v1632
    %1661 = vmatprep.subr.mxu0 0.0
    %1662 = vmatpush1.msra.mxu0 0.0
    %1663 = vmatprep.subr.mxu0 0.0
    %1664 = vmatpush1.msra.mxu0 0.0
    %1665 = vmatprep.subr.mxu0 0.0
    %1666 = vmatpush1.msra.mxu0 0.0
    %1667 = vmatprep.subr.mxu0 0.0
    %1668 = vmatpush1.msra.mxu0 0.0
    %1669 = vmatprep.subr.mxu0 0.0
    %1670 = vmatpush1.msra.mxu0 0.0
    %1671 = vmatprep.subr.mxu0 0.0
    %1672 = vmatpush1.msra.mxu0 0.0
    %1673 = vmatprep.subr.mxu0 0.0
    %1674 = vmatpush1.msra.mxu0 0.0
    %1675 = vmatprep.subr.mxu0 0.0
    %1676 = vmatpush1.msra.mxu0 0.0
    %1677 = vmatprep.subr.mxu0 0.0
    %1678 = vmatpush1.msra.mxu0 0.0
    %1679 = vmatprep.subr.mxu0 0.0
    %1680 = vmatpush1.msra.mxu0 0.0
    %1681 = vmatprep.subr.mxu0 0.0
    %1682 = vmatpush1.msra.mxu0 0.0
    %1683 = vmatprep.subr.mxu0 0.0
    %1684 = vmatpush1.msra.mxu0 0.0
    %1685 = vmatprep.subr.mxu0 0.0
    %1686 = vmatpush1.msra.mxu0 0.0
    %1687 = vmatprep.subr.mxu0 0.0
    %1688 = vmatpush1.msra.mxu0 0.0
    %1689 = vmatprep.subr.mxu0 0.0
    %1690 = vmatpush1.msra.mxu0 0.0
    %1691 = vmatprep.subr.mxu0 0.0
    %1692 = vmatpush1.msra.mxu0 0.0
    %1693 = vmatprep.subr.mxu0 0.0
    %1694 = vmatpush1.msra.mxu0 0.0
    %1695 = vmatprep.subr.mxu0 0.0
    %1696 = vmatpush1.msra.mxu0 0.0
    %1697 = vmatprep.subr.mxu0 0.0
    %1698 = vmatpush1.msra.mxu0 0.0
    %1699 = vmatprep.subr.mxu0 0.0
    %1700 = vmatpush1.msra.mxu0 0.0
    %1701 = vmatprep.subr.mxu0 0.0
    %1702 = vmatpush1.msra.mxu0 0.0
    %1703 = vmatprep.subr.mxu0 0.0
    %1704 = vmatpush1.msra.mxu0 0.0
    %1705 = vmatprep.subr.mxu0 0.0
    %1706 = vmatpush1.msra.mxu0 0.0
    %1707 = vmatprep.subr.mxu0 0.0
    %1708 = vmatpush1.msra.mxu0 0.0
    %1709 = vmatprep.subr.mxu0 0.0
    %1710 = vmatpush1.msra.mxu0 0.0
    %1711 = vmatprep.subr.mxu0 0.0
    %1712 = vmatpush1.msra.mxu0 0.0
    %1713 = vmatprep.subr.mxu0 0.0
    %1714 = vmatpush1.msra.mxu0 0.0
    %1715 = vmatprep.subr.mxu0 0.0
    %1716 = vmatpush1.msra.mxu0 0.0
    %1717 = vmatprep.subr.mxu0 0.0
    %1718 = vmatpush1.msra.mxu0 0.0
    %1719 = vmatprep.subr.mxu0 0.0
    %1720 = vmatpush1.msra.mxu0 0.0
    %1721 = vmatprep.subr.mxu0 0.0
    %1722 = vmatpush1.msra.mxu0 0.0
    %1723 = vmatprep.mubr.f32.mxu0 0.0
    %1724 = vmatmul.mubr.f32.gmra.mrb[0].mxu0 %v1642
    %v1725 = vpop.f32.mrb[0].mxu0
    %v1726 = vadd.f32 0.0, %v1725
    %v1727 = vpop.f32.mrb[0].mxu0
    %v1728 = vadd.f32 0.0, %v1727
    %1729 = vmatprep.mubr.f32.mxu0 0.0
    %1730 = vmatmul.mubr.f32.gmra.mrb[0].mxu0 %v1645
    %v1731 = vpop.f32.mrb[0].mxu0
    %v1732 = vadd.f32 0.0, %v1731
    %v1733 = vpop.f32.mrb[0].mxu0
    %v1734 = vadd.f32 0.0, %v1733
    %1735 = vmatprep.mubr.f32.mxu0 0.0
    %1736 = vmatmul.mubr.f32.gmra.mrb[0].mxu0 %v1648
    %v1737 = vpop.f32.mrb[0].mxu0
    %v1738 = vadd.f32 0.0, %v1737
    %v1739 = vpop.f32.mrb[0].mxu0
    %v1740 = vadd.f32 0.0, %v1739
    %1741 = vmatprep.mubr.f32.mxu0 0.0
    %1742 = vmatmul.mubr.f32.gmra.mrb[0].mxu0 %v1651
    %v1743 = vpop.f32.mrb[0].mxu0
    %v1744 = vadd.f32 0.0, %v1743
    %v1745 = vpop.f32.mrb[0].mxu0
    %v1746 = vadd.f32 0.0, %v1745
    %1747 = vmatprep.mubr.f32.mxu0 0.0
    %1748 = vmatmul.mubr.f32.gmra.mrb[0].mxu0 %v1654
    %v1749 = vpop.f32.mrb[0].mxu0
    %v1750 = vadd.f32 0.0, %v1749
    %v1751 = vpop.f32.mrb[0].mxu0
    %v1752 = vadd.f32 0.0, %v1751
    %1753 = vmatprep.mubr.f32.mxu0 0.0
    %1754 = vmatmul.mubr.f32.gmra.mrb[0].mxu0 %v1657
    %v1755 = vpop.f32.mrb[0].mxu0
    %v1756 = vadd.f32 0.0, %v1755
    %v1757 = vpop.f32.mrb[0].mxu0
    %v1758 = vadd.f32 0.0, %v1757
    %1759 = vdwg.mxu0
    %v1760 = vadd.f32 %v1609, %v1726
    %v1761 = vadd.f32 %v1610, %v1728
    %v1762 = vadd.f32 %v1611, %v1732
    %v1763 = vadd.f32 %v1612, %v1734
    %v1764 = vadd.f32 %v1613, %v1738
    %v1765 = vadd.f32 %v1614, %v1740
    %v1766 = vadd.f32 %v1615, %v1744
    %v1767 = vadd.f32 %v1616, %v1746
    %v1768 = vadd.f32 %v1617, %v1750
    %v1769 = vadd.f32 %v1618, %v1752
    %v1770 = vadd.f32 %v1619, %v1756
    %v1771 = vadd.f32 %v1620, %v1758
    %1772 = vrot.lane.b32.xlu0 %v268, 2
    %v1773 = vpop.permute.xlu0 %1772
    %1774 = vrot.lane.b32.xlu0 %v269, 2
    %v1775 = vpop.permute.xlu0 %1774
    %1776 = vrot.lane.b32.xlu0 %v270, 2
    %v1777 = vpop.permute.xlu0 %1776
    %vm1778 = vcmask 15360
    %v1779 = vsel %vm1778, %v1773, %v1775
    %v1780 = vsel %vm1778, %v1775, %v1777
    %v1783 = vsel %vm273, %v1779, 0.0
    %v1784 = vsel %vm274, %v1780, 0.0
    %s1785 = scalar_lea.vmem %s2, 480
    %v1786 = vld [vmem:[%s1785] sm:$0xff]
    %v1787 = vld [vmem:[%s1785 + $0x8] sm:$0xff]
    %v1788 = vld [vmem:[%s1785 + $0x10] sm:$0xff]
    %v1789 = vld [vmem:[%s1785 + $0x18] sm:$0xff]
    %v1790 = vld [vmem:[%s1785 + $0x20] sm:$0xff]
    %v1791 = vld [vmem:[%s1785 + $0x28] sm:$0xff]
    %v1793 = vsel %vm321, %v1786, 0
    %v1796 = vsel %vm321, %v1787, 0
    %v1799 = vsel %vm321, %v1788, 0
    %v1802 = vsel %vm321, %v1789, 0
    %v1805 = vsel %vm321, %v1790, 0
    %v1808 = vsel %vm321, %v1791, 0
    %1810 = vmatprep.subr.mxu0 %v1784
    %1811 = vmatpush1.msra.mxu0 %v1783
    %1812 = vmatprep.subr.mxu0 0.0
    %1813 = vmatpush1.msra.mxu0 0.0
    %1814 = vmatprep.subr.mxu0 0.0
    %1815 = vmatpush1.msra.mxu0 0.0
    %1816 = vmatprep.subr.mxu0 0.0
    %1817 = vmatpush1.msra.mxu0 0.0
    %1818 = vmatprep.subr.mxu0 0.0
    %1819 = vmatpush1.msra.mxu0 0.0
    %1820 = vmatprep.subr.mxu0 0.0
    %1821 = vmatpush1.msra.mxu0 0.0
    %1822 = vmatprep.subr.mxu0 0.0
    %1823 = vmatpush1.msra.mxu0 0.0
    %1824 = vmatprep.subr.mxu0 0.0
    %1825 = vmatpush1.msra.mxu0 0.0
    %1826 = vmatprep.subr.mxu0 0.0
    %1827 = vmatpush1.msra.mxu0 0.0
    %1828 = vmatprep.subr.mxu0 0.0
    %1829 = vmatpush1.msra.mxu0 0.0
    %1830 = vmatprep.subr.mxu0 0.0
    %1831 = vmatpush1.msra.mxu0 0.0
    %1832 = vmatprep.subr.mxu0 0.0
    %1833 = vmatpush1.msra.mxu0 0.0
    %1834 = vmatprep.subr.mxu0 0.0
    %1835 = vmatpush1.msra.mxu0 0.0
    %1836 = vmatprep.subr.mxu0 0.0
    %1837 = vmatpush1.msra.mxu0 0.0
    %1838 = vmatprep.subr.mxu0 0.0
    %1839 = vmatpush1.msra.mxu0 0.0
    %1840 = vmatprep.subr.mxu0 0.0
    %1841 = vmatpush1.msra.mxu0 0.0
    %1842 = vmatprep.subr.mxu0 0.0
    %1843 = vmatpush1.msra.mxu0 0.0
    %1844 = vmatprep.subr.mxu0 0.0
    %1845 = vmatpush1.msra.mxu0 0.0
    %1846 = vmatprep.subr.mxu0 0.0
    %1847 = vmatpush1.msra.mxu0 0.0
    %1848 = vmatprep.subr.mxu0 0.0
    %1849 = vmatpush1.msra.mxu0 0.0
    %1850 = vmatprep.subr.mxu0 0.0
    %1851 = vmatpush1.msra.mxu0 0.0
    %1852 = vmatprep.subr.mxu0 0.0
    %1853 = vmatpush1.msra.mxu0 0.0
    %1854 = vmatprep.subr.mxu0 0.0
    %1855 = vmatpush1.msra.mxu0 0.0
    %1856 = vmatprep.subr.mxu0 0.0
    %1857 = vmatpush1.msra.mxu0 0.0
    %1858 = vmatprep.subr.mxu0 0.0
    %1859 = vmatpush1.msra.mxu0 0.0
    %1860 = vmatprep.subr.mxu0 0.0
    %1861 = vmatpush1.msra.mxu0 0.0
    %1862 = vmatprep.subr.mxu0 0.0
    %1863 = vmatpush1.msra.mxu0 0.0
    %1864 = vmatprep.subr.mxu0 0.0
    %1865 = vmatpush1.msra.mxu0 0.0
    %1866 = vmatprep.subr.mxu0 0.0
    %1867 = vmatpush1.msra.mxu0 0.0
    %1868 = vmatprep.subr.mxu0 0.0
    %1869 = vmatpush1.msra.mxu0 0.0
    %1870 = vmatprep.subr.mxu0 0.0
    %1871 = vmatpush1.msra.mxu0 0.0
    %1872 = vmatprep.subr.mxu0 0.0
    %1873 = vmatpush1.msra.mxu0 0.0
    %1874 = vmatprep.mubr.f32.mxu0 0.0
    %1875 = vmatmul.mubr.f32.gmra.mrb[0].mxu0 %v1793
    %v1876 = vpop.f32.mrb[0].mxu0
    %v1877 = vadd.f32 0.0, %v1876
    %v1878 = vpop.f32.mrb[0].mxu0
    %v1879 = vadd.f32 0.0, %v1878
    %1880 = vmatprep.mubr.f32.mxu0 0.0
    %1881 = vmatmul.mubr.f32.gmra.mrb[0].mxu0 %v1796
    %v1882 = vpop.f32.mrb[0].mxu0
    %v1883 = vadd.f32 0.0, %v1882
    %v1884 = vpop.f32.mrb[0].mxu0
    %v1885 = vadd.f32 0.0, %v1884
    %1886 = vmatprep.mubr.f32.mxu0 0.0
    %1887 = vmatmul.mubr.f32.gmra.mrb[0].mxu0 %v1799
    %v1888 = vpop.f32.mrb[0].mxu0
    %v1889 = vadd.f32 0.0, %v1888
    %v1890 = vpop.f32.mrb[0].mxu0
    %v1891 = vadd.f32 0.0, %v1890
    %1892 = vmatprep.mubr.f32.mxu0 0.0
    %1893 = vmatmul.mubr.f32.gmra.mrb[0].mxu0 %v1802
    %v1894 = vpop.f32.mrb[0].mxu0
    %v1895 = vadd.f32 0.0, %v1894
    %v1896 = vpop.f32.mrb[0].mxu0
    %v1897 = vadd.f32 0.0, %v1896
    %1898 = vmatprep.mubr.f32.mxu0 0.0
    %1899 = vmatmul.mubr.f32.gmra.mrb[0].mxu0 %v1805
    %v1900 = vpop.f32.mrb[0].mxu0
    %v1901 = vadd.f32 0.0, %v1900
    %v1902 = vpop.f32.mrb[0].mxu0
    %v1903 = vadd.f32 0.0, %v1902
    %1904 = vmatprep.mubr.f32.mxu0 0.0
    %1905 = vmatmul.mubr.f32.gmra.mrb[0].mxu0 %v1808
    %v1906 = vpop.f32.mrb[0].mxu0
    %v1907 = vadd.f32 0.0, %v1906
    %v1908 = vpop.f32.mrb[0].mxu0
    %v1909 = vadd.f32 0.0, %v1908
    %1910 = vdwg.mxu0
    %v1911 = vadd.f32 %v1760, %v1877
    %v1912 = vadd.f32 %v1761, %v1879
    %v1913 = vadd.f32 %v1762, %v1883
    %v1914 = vadd.f32 %v1763, %v1885
    %v1915 = vadd.f32 %v1764, %v1889
    %v1916 = vadd.f32 %v1765, %v1891
    %v1917 = vadd.f32 %v1766, %v1895
    %v1918 = vadd.f32 %v1767, %v1897
    %v1919 = vadd.f32 %v1768, %v1901
    %v1920 = vadd.f32 %v1769, %v1903
    %v1921 = vadd.f32 %v1770, %v1907
    %v1922 = vadd.f32 %v1771, %v1909
    %1923 = vrot.lane.b32.xlu0 %v268, 1
    %v1924 = vpop.permute.xlu0 %1923
    %1925 = vrot.lane.b32.xlu0 %v269, 1
    %v1926 = vpop.permute.xlu0 %1925
    %1927 = vrot.lane.b32.xlu0 %v270, 1
    %v1928 = vpop.permute.xlu0 %1927
    %vm1929 = vcmask 7168
    %v1930 = vsel %vm1929, %v1924, %v1926
    %v1931 = vsel %vm1929, %v1926, %v1928
    %v1934 = vsel %vm299, %v1930, 0.0
    %v1935 = vsel %vm300, %v1931, 0.0
    %s1936 = scalar_lea.vmem %s2, 528
    %v1937 = vld [vmem:[%s1936] sm:$0xff]
    %v1938 = vld [vmem:[%s1936 + $0x8] sm:$0xff]
    %v1939 = vld [vmem:[%s1936 + $0x10] sm:$0xff]
    %v1940 = vld [vmem:[%s1936 + $0x18] sm:$0xff]
    %v1941 = vld [vmem:[%s1936 + $0x20] sm:$0xff]
    %v1942 = vld [vmem:[%s1936 + $0x28] sm:$0xff]
    %v1944 = vsel %vm321, %v1937, 0
    %v1947 = vsel %vm321, %v1938, 0
    %v1950 = vsel %vm321, %v1939, 0
    %v1953 = vsel %vm321, %v1940, 0
    %v1956 = vsel %vm321, %v1941, 0
    %v1959 = vsel %vm321, %v1942, 0
    %1961 = vmatprep.subr.mxu0 %v1935
    %1962 = vmatpush1.msra.mxu0 %v1934
    %1963 = vmatprep.subr.mxu0 0.0
    %1964 = vmatpush1.msra.mxu0 0.0
    %1965 = vmatprep.subr.mxu0 0.0
    %1966 = vmatpush1.msra.mxu0 0.0
    %1967 = vmatprep.subr.mxu0 0.0
    %1968 = vmatpush1.msra.mxu0 0.0
    %1969 = vmatprep.subr.mxu0 0.0
    %1970 = vmatpush1.msra.mxu0 0.0
    %1971 = vmatprep.subr.mxu0 0.0
    %1972 = vmatpush1.msra.mxu0 0.0
    %1973 = vmatprep.subr.mxu0 0.0
    %1974 = vmatpush1.msra.mxu0 0.0
    %1975 = vmatprep.subr.mxu0 0.0
    %1976 = vmatpush1.msra.mxu0 0.0
    %1977 = vmatprep.subr.mxu0 0.0
    %1978 = vmatpush1.msra.mxu0 0.0
    %1979 = vmatprep.subr.mxu0 0.0
    %1980 = vmatpush1.msra.mxu0 0.0
    %1981 = vmatprep.subr.mxu0 0.0
    %1982 = vmatpush1.msra.mxu0 0.0
    %1983 = vmatprep.subr.mxu0 0.0
    %1984 = vmatpush1.msra.mxu0 0.0
    %1985 = vmatprep.subr.mxu0 0.0
    %1986 = vmatpush1.msra.mxu0 0.0
    %1987 = vmatprep.subr.mxu0 0.0
    %1988 = vmatpush1.msra.mxu0 0.0
    %1989 = vmatprep.subr.mxu0 0.0
    %1990 = vmatpush1.msra.mxu0 0.0
    %1991 = vmatprep.subr.mxu0 0.0
    %1992 = vmatpush1.msra.mxu0 0.0
    %1993 = vmatprep.subr.mxu0 0.0
    %1994 = vmatpush1.msra.mxu0 0.0
    %1995 = vmatprep.subr.mxu0 0.0
    %1996 = vmatpush1.msra.mxu0 0.0
    %1997 = vmatprep.subr.mxu0 0.0
    %1998 = vmatpush1.msra.mxu0 0.0
    %1999 = vmatprep.subr.mxu0 0.0
    %2000 = vmatpush1.msra.mxu0 0.0
    %2001 = vmatprep.subr.mxu0 0.0
    %2002 = vmatpush1.msra.mxu0 0.0
    %2003 = vmatprep.subr.mxu0 0.0
    %2004 = vmatpush1.msra.mxu0 0.0
    %2005 = vmatprep.subr.mxu0 0.0
    %2006 = vmatpush1.msra.mxu0 0.0
    %2007 = vmatprep.subr.mxu0 0.0
    %2008 = vmatpush1.msra.mxu0 0.0
    %2009 = vmatprep.subr.mxu0 0.0
    %2010 = vmatpush1.msra.mxu0 0.0
    %2011 = vmatprep.subr.mxu0 0.0
    %2012 = vmatpush1.msra.mxu0 0.0
    %2013 = vmatprep.subr.mxu0 0.0
    %2014 = vmatpush1.msra.mxu0 0.0
    %2015 = vmatprep.subr.mxu0 0.0
    %2016 = vmatpush1.msra.mxu0 0.0
    %2017 = vmatprep.subr.mxu0 0.0
    %2018 = vmatpush1.msra.mxu0 0.0
    %2019 = vmatprep.subr.mxu0 0.0
    %2020 = vmatpush1.msra.mxu0 0.0
    %2021 = vmatprep.subr.mxu0 0.0
    %2022 = vmatpush1.msra.mxu0 0.0
    %2023 = vmatprep.subr.mxu0 0.0
    %2024 = vmatpush1.msra.mxu0 0.0
    %2025 = vmatprep.mubr.f32.mxu0 0.0
    %2026 = vmatmul.mubr.f32.gmra.mrb[0].mxu0 %v1944
    %v2027 = vpop.f32.mrb[0].mxu0
    %v2028 = vadd.f32 0.0, %v2027
    %v2029 = vpop.f32.mrb[0].mxu0
    %v2030 = vadd.f32 0.0, %v2029
    %2031 = vmatprep.mubr.f32.mxu0 0.0
    %2032 = vmatmul.mubr.f32.gmra.mrb[0].mxu0 %v1947
    %v2033 = vpop.f32.mrb[0].mxu0
    %v2034 = vadd.f32 0.0, %v2033
    %v2035 = vpop.f32.mrb[0].mxu0
    %v2036 = vadd.f32 0.0, %v2035
    %2037 = vmatprep.mubr.f32.mxu0 0.0
    %2038 = vmatmul.mubr.f32.gmra.mrb[0].mxu0 %v1950
    %v2039 = vpop.f32.mrb[0].mxu0
    %v2040 = vadd.f32 0.0, %v2039
    %v2041 = vpop.f32.mrb[0].mxu0
    %v2042 = vadd.f32 0.0, %v2041
    %2043 = vmatprep.mubr.f32.mxu0 0.0
    %2044 = vmatmul.mubr.f32.gmra.mrb[0].mxu0 %v1953
    %v2045 = vpop.f32.mrb[0].mxu0
    %v2046 = vadd.f32 0.0, %v2045
    %v2047 = vpop.f32.mrb[0].mxu0
    %v2048 = vadd.f32 0.0, %v2047
    %2049 = vmatprep.mubr.f32.mxu0 0.0
    %2050 = vmatmul.mubr.f32.gmra.mrb[0].mxu0 %v1956
    %v2051 = vpop.f32.mrb[0].mxu0
    %v2052 = vadd.f32 0.0, %v2051
    %v2053 = vpop.f32.mrb[0].mxu0
    %v2054 = vadd.f32 0.0, %v2053
    %2055 = vmatprep.mubr.f32.mxu0 0.0
    %2056 = vmatmul.mubr.f32.gmra.mrb[0].mxu0 %v1959
    %v2057 = vpop.f32.mrb[0].mxu0
    %v2058 = vadd.f32 0.0, %v2057
    %v2059 = vpop.f32.mrb[0].mxu0
    %v2060 = vadd.f32 0.0, %v2059
    %2061 = vdwg.mxu0
    %v2062 = vadd.f32 %v1911, %v2028
    %v2063 = vadd.f32 %v1912, %v2030
    %v2064 = vadd.f32 %v1913, %v2034
    %v2065 = vadd.f32 %v1914, %v2036
    %v2066 = vadd.f32 %v1915, %v2040
    %v2067 = vadd.f32 %v1916, %v2042
    %v2068 = vadd.f32 %v1917, %v2046
    %v2069 = vadd.f32 %v1918, %v2048
    %v2070 = vadd.f32 %v1919, %v2052
    %v2071 = vadd.f32 %v1920, %v2054
    %v2072 = vadd.f32 %v1921, %v2058
    %v2073 = vadd.f32 %v1922, %v2060
    %s2074 = scalar_lea.vmem %s2, 576
    %v2075 = vld [vmem:[%s2074] sm:$0xff]
    %v2076 = vld [vmem:[%s2074 + $0x8] sm:$0xff]
    %v2077 = vld [vmem:[%s2074 + $0x10] sm:$0xff]
    %v2078 = vld [vmem:[%s2074 + $0x18] sm:$0xff]
    %v2079 = vld [vmem:[%s2074 + $0x20] sm:$0xff]
    %v2080 = vld [vmem:[%s2074 + $0x28] sm:$0xff]
    %v2082 = vsel %vm321, %v2075, 0
    %v2085 = vsel %vm321, %v2076, 0
    %v2088 = vsel %vm321, %v2077, 0
    %v2091 = vsel %vm321, %v2078, 0
    %v2094 = vsel %vm321, %v2079, 0
    %v2097 = vsel %vm321, %v2080, 0
    %2099 = vmatprep.subr.mxu0 %v270
    %2100 = vmatpush1.msra.mxu0 %v269
    %2101 = vmatprep.subr.mxu0 0.0
    %2102 = vmatpush1.msra.mxu0 0.0
    %2103 = vmatprep.subr.mxu0 0.0
    %2104 = vmatpush1.msra.mxu0 0.0
    %2105 = vmatprep.subr.mxu0 0.0
    %2106 = vmatpush1.msra.mxu0 0.0
    %2107 = vmatprep.subr.mxu0 0.0
    %2108 = vmatpush1.msra.mxu0 0.0
    %2109 = vmatprep.subr.mxu0 0.0
    %2110 = vmatpush1.msra.mxu0 0.0
    %2111 = vmatprep.subr.mxu0 0.0
    %2112 = vmatpush1.msra.mxu0 0.0
    %2113 = vmatprep.subr.mxu0 0.0
    %2114 = vmatpush1.msra.mxu0 0.0
    %2115 = vmatprep.subr.mxu0 0.0
    %2116 = vmatpush1.msra.mxu0 0.0
    %2117 = vmatprep.subr.mxu0 0.0
    %2118 = vmatpush1.msra.mxu0 0.0
    %2119 = vmatprep.subr.mxu0 0.0
    %2120 = vmatpush1.msra.mxu0 0.0
    %2121 = vmatprep.subr.mxu0 0.0
    %2122 = vmatpush1.msra.mxu0 0.0
    %2123 = vmatprep.subr.mxu0 0.0
    %2124 = vmatpush1.msra.mxu0 0.0
    %2125 = vmatprep.subr.mxu0 0.0
    %2126 = vmatpush1.msra.mxu0 0.0
    %2127 = vmatprep.subr.mxu0 0.0
    %2128 = vmatpush1.msra.mxu0 0.0
    %2129 = vmatprep.subr.mxu0 0.0
    %2130 = vmatpush1.msra.mxu0 0.0
    %2131 = vmatprep.subr.mxu0 0.0
    %2132 = vmatpush1.msra.mxu0 0.0
    %2133 = vmatprep.subr.mxu0 0.0
    %2134 = vmatpush1.msra.mxu0 0.0
    %2135 = vmatprep.subr.mxu0 0.0
    %2136 = vmatpush1.msra.mxu0 0.0
    %2137 = vmatprep.subr.mxu0 0.0
    %2138 = vmatpush1.msra.mxu0 0.0
    %2139 = vmatprep.subr.mxu0 0.0
    %2140 = vmatpush1.msra.mxu0 0.0
    %2141 = vmatprep.subr.mxu0 0.0
    %2142 = vmatpush1.msra.mxu0 0.0
    %2143 = vmatprep.subr.mxu0 0.0
    %2144 = vmatpush1.msra.mxu0 0.0
    %2145 = vmatprep.subr.mxu0 0.0
    %2146 = vmatpush1.msra.mxu0 0.0
    %2147 = vmatprep.subr.mxu0 0.0
    %2148 = vmatpush1.msra.mxu0 0.0
    %2149 = vmatprep.subr.mxu0 0.0
    %2150 = vmatpush1.msra.mxu0 0.0
    %2151 = vmatprep.subr.mxu0 0.0
    %2152 = vmatpush1.msra.mxu0 0.0
    %2153 = vmatprep.subr.mxu0 0.0
    %2154 = vmatpush1.msra.mxu0 0.0
    %2155 = vmatprep.subr.mxu0 0.0
    %2156 = vmatpush1.msra.mxu0 0.0
    %2157 = vmatprep.subr.mxu0 0.0
    %2158 = vmatpush1.msra.mxu0 0.0
    %2159 = vmatprep.subr.mxu0 0.0
    %2160 = vmatpush1.msra.mxu0 0.0
    %2161 = vmatprep.subr.mxu0 0.0
    %2162 = vmatpush1.msra.mxu0 0.0
    %2163 = vmatprep.mubr.f32.mxu0 0.0
    %2164 = vmatmul.mubr.f32.gmra.mrb[0].mxu0 %v2082
    %v2165 = vpop.f32.mrb[0].mxu0
    %v2166 = vadd.f32 0.0, %v2165
    %v2167 = vpop.f32.mrb[0].mxu0
    %v2168 = vadd.f32 0.0, %v2167
    %2169 = vmatprep.mubr.f32.mxu0 0.0
    %2170 = vmatmul.mubr.f32.gmra.mrb[0].mxu0 %v2085
    %v2171 = vpop.f32.mrb[0].mxu0
    %v2172 = vadd.f32 0.0, %v2171
    %v2173 = vpop.f32.mrb[0].mxu0
    %v2174 = vadd.f32 0.0, %v2173
    %2175 = vmatprep.mubr.f32.mxu0 0.0
    %2176 = vmatmul.mubr.f32.gmra.mrb[0].mxu0 %v2088
    %v2177 = vpop.f32.mrb[0].mxu0
    %v2178 = vadd.f32 0.0, %v2177
    %v2179 = vpop.f32.mrb[0].mxu0
    %v2180 = vadd.f32 0.0, %v2179
    %2181 = vmatprep.mubr.f32.mxu0 0.0
    %2182 = vmatmul.mubr.f32.gmra.mrb[0].mxu0 %v2091
    %v2183 = vpop.f32.mrb[0].mxu0
    %v2184 = vadd.f32 0.0, %v2183
    %v2185 = vpop.f32.mrb[0].mxu0
    %v2186 = vadd.f32 0.0, %v2185
    %2187 = vmatprep.mubr.f32.mxu0 0.0
    %2188 = vmatmul.mubr.f32.gmra.mrb[0].mxu0 %v2094
    %v2189 = vpop.f32.mrb[0].mxu0
    %v2190 = vadd.f32 0.0, %v2189
    %v2191 = vpop.f32.mrb[0].mxu0
    %v2192 = vadd.f32 0.0, %v2191
    %2193 = vmatprep.mubr.f32.mxu0 0.0
    %2194 = vmatmul.mubr.f32.gmra.mrb[0].mxu0 %v2097
    %v2195 = vpop.f32.mrb[0].mxu0
    %v2196 = vadd.f32 0.0, %v2195
    %v2197 = vpop.f32.mrb[0].mxu0
    %v2198 = vadd.f32 0.0, %v2197
    %2199 = vdwg.mxu0
    %v2200 = vadd.f32 %v2062, %v2166
    %v2201 = vadd.f32 %v2063, %v2168
    %v2202 = vadd.f32 %v2064, %v2172
    %v2203 = vadd.f32 %v2065, %v2174
    %v2204 = vadd.f32 %v2066, %v2178
    %v2205 = vadd.f32 %v2067, %v2180
    %v2206 = vadd.f32 %v2068, %v2184
    %v2207 = vadd.f32 %v2069, %v2186
    %v2208 = vadd.f32 %v2070, %v2190
    %v2209 = vadd.f32 %v2071, %v2192
    %v2210 = vadd.f32 %v2072, %v2196
    %v2211 = vadd.f32 %v2073, %v2198
    %v2212 = vld [vmem:[#allocation2 + $0x8] sm:$0xff]
    %v2213 = vld [vmem:[#allocation2 + $0x10] sm:$0xff]
    %v2214 = vld [vmem:[#allocation2 + $0x18] sm:$0xff]
    %2218 = vrot.lane.b32.xlu0 %v2212, 127
    %v2219 = vpop.permute.xlu0 %2218
    %2220 = vrot.lane.b32.xlu0 %v2213, 127
    %v2221 = vpop.permute.xlu0 %2220
    %2222 = vrot.lane.b32.xlu0 %v2214, 127
    %v2223 = vpop.permute.xlu0 %2222
    %vm2224 = vcmask 1039360
    %v2225 = vsel %vm2224, %v2219, %v2221
    %v2226 = vsel %vm2224, %v2221, %v2223
    %v2229 = vsel %vm711, %v2225, 0.0
    %v2230 = vsel %vm712, %v2226, 0.0
    %s2231 = scalar_lea.vmem %s2, 624
    %v2232 = vld [vmem:[%s2231] sm:$0xff]
    %v2233 = vld [vmem:[%s2231 + $0x8] sm:$0xff]
    %v2234 = vld [vmem:[%s2231 + $0x10] sm:$0xff]
    %v2235 = vld [vmem:[%s2231 + $0x18] sm:$0xff]
    %v2236 = vld [vmem:[%s2231 + $0x20] sm:$0xff]
    %v2237 = vld [vmem:[%s2231 + $0x28] sm:$0xff]
    %v2239 = vsel %vm321, %v2232, 0
    %v2242 = vsel %vm321, %v2233, 0
    %v2245 = vsel %vm321, %v2234, 0
    %v2248 = vsel %vm321, %v2235, 0
    %v2251 = vsel %vm321, %v2236, 0
    %v2254 = vsel %vm321, %v2237, 0
    %2256 = vmatprep.subr.mxu0 %v2230
    %2257 = vmatpush1.msra.mxu0 %v2229
    %2258 = vmatprep.subr.mxu0 0.0
    %2259 = vmatpush1.msra.mxu0 0.0
    %2260 = vmatprep.subr.mxu0 0.0
    %2261 = vmatpush1.msra.mxu0 0.0
    %2262 = vmatprep.subr.mxu0 0.0
    %2263 = vmatpush1.msra.mxu0 0.0
    %2264 = vmatprep.subr.mxu0 0.0
    %2265 = vmatpush1.msra.mxu0 0.0
    %2266 = vmatprep.subr.mxu0 0.0
    %2267 = vmatpush1.msra.mxu0 0.0
    %2268 = vmatprep.subr.mxu0 0.0
    %2269 = vmatpush1.msra.mxu0 0.0
    %2270 = vmatprep.subr.mxu0 0.0
    %2271 = vmatpush1.msra.mxu0 0.0
    %2272 = vmatprep.subr.mxu0 0.0
    %2273 = vmatpush1.msra.mxu0 0.0
    %2274 = vmatprep.subr.mxu0 0.0
    %2275 = vmatpush1.msra.mxu0 0.0
    %2276 = vmatprep.subr.mxu0 0.0
    %2277 = vmatpush1.msra.mxu0 0.0
    %2278 = vmatprep.subr.mxu0 0.0
    %2279 = vmatpush1.msra.mxu0 0.0
    %2280 = vmatprep.subr.mxu0 0.0
    %2281 = vmatpush1.msra.mxu0 0.0
    %2282 = vmatprep.subr.mxu0 0.0
    %2283 = vmatpush1.msra.mxu0 0.0
    %2284 = vmatprep.subr.mxu0 0.0
    %2285 = vmatpush1.msra.mxu0 0.0
    %2286 = vmatprep.subr.mxu0 0.0
    %2287 = vmatpush1.msra.mxu0 0.0
    %2288 = vmatprep.subr.mxu0 0.0
    %2289 = vmatpush1.msra.mxu0 0.0
    %2290 = vmatprep.subr.mxu0 0.0
    %2291 = vmatpush1.msra.mxu0 0.0
    %2292 = vmatprep.subr.mxu0 0.0
    %2293 = vmatpush1.msra.mxu0 0.0
    %2294 = vmatprep.subr.mxu0 0.0
    %2295 = vmatpush1.msra.mxu0 0.0
    %2296 = vmatprep.subr.mxu0 0.0
    %2297 = vmatpush1.msra.mxu0 0.0
    %2298 = vmatprep.subr.mxu0 0.0
    %2299 = vmatpush1.msra.mxu0 0.0
    %2300 = vmatprep.subr.mxu0 0.0
    %2301 = vmatpush1.msra.mxu0 0.0
    %2302 = vmatprep.subr.mxu0 0.0
    %2303 = vmatpush1.msra.mxu0 0.0
    %2304 = vmatprep.subr.mxu0 0.0
    %2305 = vmatpush1.msra.mxu0 0.0
    %2306 = vmatprep.subr.mxu0 0.0
    %2307 = vmatpush1.msra.mxu0 0.0
    %2308 = vmatprep.subr.mxu0 0.0
    %2309 = vmatpush1.msra.mxu0 0.0
    %2310 = vmatprep.subr.mxu0 0.0
    %2311 = vmatpush1.msra.mxu0 0.0
    %2312 = vmatprep.subr.mxu0 0.0
    %2313 = vmatpush1.msra.mxu0 0.0
    %2314 = vmatprep.subr.mxu0 0.0
    %2315 = vmatpush1.msra.mxu0 0.0
    %2316 = vmatprep.subr.mxu0 0.0
    %2317 = vmatpush1.msra.mxu0 0.0
    %2318 = vmatprep.subr.mxu0 0.0
    %2319 = vmatpush1.msra.mxu0 0.0
    %2320 = vmatprep.mubr.f32.mxu0 0.0
    %2321 = vmatmul.mubr.f32.gmra.mrb[0].mxu0 %v2239
    %v2322 = vpop.f32.mrb[0].mxu0
    %v2323 = vadd.f32 0.0, %v2322
    %v2324 = vpop.f32.mrb[0].mxu0
    %v2325 = vadd.f32 0.0, %v2324
    %2326 = vmatprep.mubr.f32.mxu0 0.0
    %2327 = vmatmul.mubr.f32.gmra.mrb[0].mxu0 %v2242
    %v2328 = vpop.f32.mrb[0].mxu0
    %v2329 = vadd.f32 0.0, %v2328
    %v2330 = vpop.f32.mrb[0].mxu0
    %v2331 = vadd.f32 0.0, %v2330
    %2332 = vmatprep.mubr.f32.mxu0 0.0
    %2333 = vmatmul.mubr.f32.gmra.mrb[0].mxu0 %v2245
    %v2334 = vpop.f32.mrb[0].mxu0
    %v2335 = vadd.f32 0.0, %v2334
    %v2336 = vpop.f32.mrb[0].mxu0
    %v2337 = vadd.f32 0.0, %v2336
    %2338 = vmatprep.mubr.f32.mxu0 0.0
    %2339 = vmatmul.mubr.f32.gmra.mrb[0].mxu0 %v2248
    %v2340 = vpop.f32.mrb[0].mxu0
    %v2341 = vadd.f32 0.0, %v2340
    %v2342 = vpop.f32.mrb[0].mxu0
    %v2343 = vadd.f32 0.0, %v2342
    %2344 = vmatprep.mubr.f32.mxu0 0.0
    %2345 = vmatmul.mubr.f32.gmra.mrb[0].mxu0 %v2251
    %v2346 = vpop.f32.mrb[0].mxu0
    %v2347 = vadd.f32 0.0, %v2346
    %v2348 = vpop.f32.mrb[0].mxu0
    %v2349 = vadd.f32 0.0, %v2348
    %2350 = vmatprep.mubr.f32.mxu0 0.0
    %2351 = vmatmul.mubr.f32.gmra.mrb[0].mxu0 %v2254
    %v2352 = vpop.f32.mrb[0].mxu0
    %v2353 = vadd.f32 0.0, %v2352
    %v2354 = vpop.f32.mrb[0].mxu0
    %v2355 = vadd.f32 0.0, %v2354
    %2356 = vdwg.mxu0
    %v2357 = vadd.f32 %v2200, %v2323
    %v2358 = vadd.f32 %v2201, %v2325
    %v2359 = vadd.f32 %v2202, %v2329
    %v2360 = vadd.f32 %v2203, %v2331
    %v2361 = vadd.f32 %v2204, %v2335
    %v2362 = vadd.f32 %v2205, %v2337
    %v2363 = vadd.f32 %v2206, %v2341
    %v2364 = vadd.f32 %v2207, %v2343
    %v2365 = vadd.f32 %v2208, %v2347
    %v2366 = vadd.f32 %v2209, %v2349
    %v2367 = vadd.f32 %v2210, %v2353
    %v2368 = vadd.f32 %v2211, %v2355
    %2369 = vrot.lane.b32.xlu0 %v2212, 126
    %v2370 = vpop.permute.xlu0 %2369
    %2371 = vrot.lane.b32.xlu0 %v2213, 126
    %v2372 = vpop.permute.xlu0 %2371
    %2373 = vrot.lane.b32.xlu0 %v2214, 126
    %v2374 = vpop.permute.xlu0 %2373
    %vm2375 = vcmask 1031168
    %v2376 = vsel %vm2375, %v2370, %v2372
    %v2377 = vsel %vm2375, %v2372, %v2374
    %v2380 = vsel %vm866, %v2376, 0.0
    %v2381 = vsel %vm867, %v2377, 0.0
    %s2382 = scalar_lea.vmem %s2, 672
    %v2383 = vld [vmem:[%s2382] sm:$0xff]
    %v2384 = vld [vmem:[%s2382 + $0x8] sm:$0xff]
    %v2385 = vld [vmem:[%s2382 + $0x10] sm:$0xff]
    %v2386 = vld [vmem:[%s2382 + $0x18] sm:$0xff]
    %v2387 = vld [vmem:[%s2382 + $0x20] sm:$0xff]
    %v2388 = vld [vmem:[%s2382 + $0x28] sm:$0xff]
    %v2390 = vsel %vm321, %v2383, 0
    %v2393 = vsel %vm321, %v2384, 0
    %v2396 = vsel %vm321, %v2385, 0
    %v2399 = vsel %vm321, %v2386, 0
    %v2402 = vsel %vm321, %v2387, 0
    %v2405 = vsel %vm321, %v2388, 0
    %2407 = vmatprep.subr.mxu0 %v2381
    %2408 = vmatpush1.msra.mxu0 %v2380
    %2409 = vmatprep.subr.mxu0 0.0
    %2410 = vmatpush1.msra.mxu0 0.0
    %2411 = vmatprep.subr.mxu0 0.0
    %2412 = vmatpush1.msra.mxu0 0.0
    %2413 = vmatprep.subr.mxu0 0.0
    %2414 = vmatpush1.msra.mxu0 0.0
    %2415 = vmatprep.subr.mxu0 0.0
    %2416 = vmatpush1.msra.mxu0 0.0
    %2417 = vmatprep.subr.mxu0 0.0
    %2418 = vmatpush1.msra.mxu0 0.0
    %2419 = vmatprep.subr.mxu0 0.0
    %2420 = vmatpush1.msra.mxu0 0.0
    %2421 = vmatprep.subr.mxu0 0.0
    %2422 = vmatpush1.msra.mxu0 0.0
    %2423 = vmatprep.subr.mxu0 0.0
    %2424 = vmatpush1.msra.mxu0 0.0
    %2425 = vmatprep.subr.mxu0 0.0
    %2426 = vmatpush1.msra.mxu0 0.0
    %2427 = vmatprep.subr.mxu0 0.0
    %2428 = vmatpush1.msra.mxu0 0.0
    %2429 = vmatprep.subr.mxu0 0.0
    %2430 = vmatpush1.msra.mxu0 0.0
    %2431 = vmatprep.subr.mxu0 0.0
    %2432 = vmatpush1.msra.mxu0 0.0
    %2433 = vmatprep.subr.mxu0 0.0
    %2434 = vmatpush1.msra.mxu0 0.0
    %2435 = vmatprep.subr.mxu0 0.0
    %2436 = vmatpush1.msra.mxu0 0.0
    %2437 = vmatprep.subr.mxu0 0.0
    %2438 = vmatpush1.msra.mxu0 0.0
    %2439 = vmatprep.subr.mxu0 0.0
    %2440 = vmatpush1.msra.mxu0 0.0
    %2441 = vmatprep.subr.mxu0 0.0
    %2442 = vmatpush1.msra.mxu0 0.0
    %2443 = vmatprep.subr.mxu0 0.0
    %2444 = vmatpush1.msra.mxu0 0.0
    %2445 = vmatprep.subr.mxu0 0.0
    %2446 = vmatpush1.msra.mxu0 0.0
    %2447 = vmatprep.subr.mxu0 0.0
    %2448 = vmatpush1.msra.mxu0 0.0
    %2449 = vmatprep.subr.mxu0 0.0
    %2450 = vmatpush1.msra.mxu0 0.0
    %2451 = vmatprep.subr.mxu0 0.0
    %2452 = vmatpush1.msra.mxu0 0.0
    %2453 = vmatprep.subr.mxu0 0.0
    %2454 = vmatpush1.msra.mxu0 0.0
    %2455 = vmatprep.subr.mxu0 0.0
    %2456 = vmatpush1.msra.mxu0 0.0
    %2457 = vmatprep.subr.mxu0 0.0
    %2458 = vmatpush1.msra.mxu0 0.0
    %2459 = vmatprep.subr.mxu0 0.0
    %2460 = vmatpush1.msra.mxu0 0.0
    %2461 = vmatprep.subr.mxu0 0.0
    %2462 = vmatpush1.msra.mxu0 0.0
    %2463 = vmatprep.subr.mxu0 0.0
    %2464 = vmatpush1.msra.mxu0 0.0
    %2465 = vmatprep.subr.mxu0 0.0
    %2466 = vmatpush1.msra.mxu0 0.0
    %2467 = vmatprep.subr.mxu0 0.0
    %2468 = vmatpush1.msra.mxu0 0.0
    %2469 = vmatprep.subr.mxu0 0.0
    %2470 = vmatpush1.msra.mxu0 0.0
    %2471 = vmatprep.mubr.f32.mxu0 0.0
    %2472 = vmatmul.mubr.f32.gmra.mrb[0].mxu0 %v2390
    %v2473 = vpop.f32.mrb[0].mxu0
    %v2474 = vadd.f32 0.0, %v2473
    %v2475 = vpop.f32.mrb[0].mxu0
    %v2476 = vadd.f32 0.0, %v2475
    %2477 = vmatprep.mubr.f32.mxu0 0.0
    %2478 = vmatmul.mubr.f32.gmra.mrb[0].mxu0 %v2393
    %v2479 = vpop.f32.mrb[0].mxu0
    %v2480 = vadd.f32 0.0, %v2479
    %v2481 = vpop.f32.mrb[0].mxu0
    %v2482 = vadd.f32 0.0, %v2481
    %2483 = vmatprep.mubr.f32.mxu0 0.0
    %2484 = vmatmul.mubr.f32.gmra.mrb[0].mxu0 %v2396
    %v2485 = vpop.f32.mrb[0].mxu0
    %v2486 = vadd.f32 0.0, %v2485
    %v2487 = vpop.f32.mrb[0].mxu0
    %v2488 = vadd.f32 0.0, %v2487
    %2489 = vmatprep.mubr.f32.mxu0 0.0
    %2490 = vmatmul.mubr.f32.gmra.mrb[0].mxu0 %v2399
    %v2491 = vpop.f32.mrb[0].mxu0
    %v2492 = vadd.f32 0.0, %v2491
    %v2493 = vpop.f32.mrb[0].mxu0
    %v2494 = vadd.f32 0.0, %v2493
    %2495 = vmatprep.mubr.f32.mxu0 0.0
    %2496 = vmatmul.mubr.f32.gmra.mrb[0].mxu0 %v2402
    %v2497 = vpop.f32.mrb[0].mxu0
    %v2498 = vadd.f32 0.0, %v2497
    %v2499 = vpop.f32.mrb[0].mxu0
    %v2500 = vadd.f32 0.0, %v2499
    %2501 = vmatprep.mubr.f32.mxu0 0.0
    %2502 = vmatmul.mubr.f32.gmra.mrb[0].mxu0 %v2405
    %v2503 = vpop.f32.mrb[0].mxu0
    %v2504 = vadd.f32 0.0, %v2503
    %v2505 = vpop.f32.mrb[0].mxu0
    %v2506 = vadd.f32 0.0, %v2505
    %2507 = vdwg.mxu0
    %v2508 = vadd.f32 %v2357, %v2474
    %v2509 = vadd.f32 %v2358, %v2476
    %v2510 = vadd.f32 %v2359, %v2480
    %v2511 = vadd.f32 %v2360, %v2482
    %v2512 = vadd.f32 %v2361, %v2486
    %v2513 = vadd.f32 %v2362, %v2488
    %v2514 = vadd.f32 %v2363, %v2492
    %v2515 = vadd.f32 %v2364, %v2494
    %v2516 = vadd.f32 %v2365, %v2498
    %v2517 = vadd.f32 %v2366, %v2500
    %v2518 = vadd.f32 %v2367, %v2504
    %v2519 = vadd.f32 %v2368, %v2506
    %2520 = vrot.lane.b32.xlu0 %v2212, 114
    %v2521 = vpop.permute.xlu0 %2520
    %2522 = vrot.lane.b32.xlu0 %v2213, 114
    %v2523 = vpop.permute.xlu0 %2522
    %2524 = vrot.lane.b32.xlu0 %v2214, 114
    %v2525 = vpop.permute.xlu0 %2524
    %vm2526 = vcmask 932864
    %v2527 = vsel %vm2526, %v2521, %v2523
    %v2528 = vsel %vm2526, %v2523, %v2525
    %v2531 = vsel %vm273, %v2527, 0.0
    %v2532 = vsel %vm274, %v2528, 0.0
    %s2533 = scalar_lea.vmem %s2, 720
    %v2534 = vld [vmem:[%s2533] sm:$0xff]
    %v2535 = vld [vmem:[%s2533 + $0x8] sm:$0xff]
    %v2536 = vld [vmem:[%s2533 + $0x10] sm:$0xff]
    %v2537 = vld [vmem:[%s2533 + $0x18] sm:$0xff]
    %v2538 = vld [vmem:[%s2533 + $0x20] sm:$0xff]
    %v2539 = vld [vmem:[%s2533 + $0x28] sm:$0xff]
    %v2541 = vsel %vm321, %v2534, 0
    %v2544 = vsel %vm321, %v2535, 0
    %v2547 = vsel %vm321, %v2536, 0
    %v2550 = vsel %vm321, %v2537, 0
    %v2553 = vsel %vm321, %v2538, 0
    %v2556 = vsel %vm321, %v2539, 0
    %2558 = vmatprep.subr.mxu0 %v2532
    %2559 = vmatpush1.msra.mxu0 %v2531
    %2560 = vmatprep.subr.mxu0 0.0
    %2561 = vmatpush1.msra.mxu0 0.0
    %2562 = vmatprep.subr.mxu0 0.0
    %2563 = vmatpush1.msra.mxu0 0.0
    %2564 = vmatprep.subr.mxu0 0.0
    %2565 = vmatpush1.msra.mxu0 0.0
    %2566 = vmatprep.subr.mxu0 0.0
    %2567 = vmatpush1.msra.mxu0 0.0
    %2568 = vmatprep.subr.mxu0 0.0
    %2569 = vmatpush1.msra.mxu0 0.0
    %2570 = vmatprep.subr.mxu0 0.0
    %2571 = vmatpush1.msra.mxu0 0.0
    %2572 = vmatprep.subr.mxu0 0.0
    %2573 = vmatpush1.msra.mxu0 0.0
    %2574 = vmatprep.subr.mxu0 0.0
    %2575 = vmatpush1.msra.mxu0 0.0
    %2576 = vmatprep.subr.mxu0 0.0
    %2577 = vmatpush1.msra.mxu0 0.0
    %2578 = vmatprep.subr.mxu0 0.0
    %2579 = vmatpush1.msra.mxu0 0.0
    %2580 = vmatprep.subr.mxu0 0.0
    %2581 = vmatpush1.msra.mxu0 0.0
    %2582 = vmatprep.subr.mxu0 0.0
    %2583 = vmatpush1.msra.mxu0 0.0
    %2584 = vmatprep.subr.mxu0 0.0
    %2585 = vmatpush1.msra.mxu0 0.0
    %2586 = vmatprep.subr.mxu0 0.0
    %2587 = vmatpush1.msra.mxu0 0.0
    %2588 = vmatprep.subr.mxu0 0.0
    %2589 = vmatpush1.msra.mxu0 0.0
    %2590 = vmatprep.subr.mxu0 0.0
    %2591 = vmatpush1.msra.mxu0 0.0
    %2592 = vmatprep.subr.mxu0 0.0
    %2593 = vmatpush1.msra.mxu0 0.0
    %2594 = vmatprep.subr.mxu0 0.0
    %2595 = vmatpush1.msra.mxu0 0.0
    %2596 = vmatprep.subr.mxu0 0.0
    %2597 = vmatpush1.msra.mxu0 0.0
    %2598 = vmatprep.subr.mxu0 0.0
    %2599 = vmatpush1.msra.mxu0 0.0
    %2600 = vmatprep.subr.mxu0 0.0
    %2601 = vmatpush1.msra.mxu0 0.0
    %2602 = vmatprep.subr.mxu0 0.0
    %2603 = vmatpush1.msra.mxu0 0.0
    %2604 = vmatprep.subr.mxu0 0.0
    %2605 = vmatpush1.msra.mxu0 0.0
    %2606 = vmatprep.subr.mxu0 0.0
    %2607 = vmatpush1.msra.mxu0 0.0
    %2608 = vmatprep.subr.mxu0 0.0
    %2609 = vmatpush1.msra.mxu0 0.0
    %2610 = vmatprep.subr.mxu0 0.0
    %2611 = vmatpush1.msra.mxu0 0.0
    %2612 = vmatprep.subr.mxu0 0.0
    %2613 = vmatpush1.msra.mxu0 0.0
    %2614 = vmatprep.subr.mxu0 0.0
    %2615 = vmatpush1.msra.mxu0 0.0
    %2616 = vmatprep.subr.mxu0 0.0
    %2617 = vmatpush1.msra.mxu0 0.0
    %2618 = vmatprep.subr.mxu0 0.0
    %2619 = vmatpush1.msra.mxu0 0.0
    %2620 = vmatprep.subr.mxu0 0.0
    %2621 = vmatpush1.msra.mxu0 0.0
    %2622 = vmatprep.mubr.f32.mxu0 0.0
    %2623 = vmatmul.mubr.f32.gmra.mrb[0].mxu0 %v2541
    %v2624 = vpop.f32.mrb[0].mxu0
    %v2625 = vadd.f32 0.0, %v2624
    %v2626 = vpop.f32.mrb[0].mxu0
    %v2627 = vadd.f32 0.0, %v2626
    %2628 = vmatprep.mubr.f32.mxu0 0.0
    %2629 = vmatmul.mubr.f32.gmra.mrb[0].mxu0 %v2544
    %v2630 = vpop.f32.mrb[0].mxu0
    %v2631 = vadd.f32 0.0, %v2630
    %v2632 = vpop.f32.mrb[0].mxu0
    %v2633 = vadd.f32 0.0, %v2632
    %2634 = vmatprep.mubr.f32.mxu0 0.0
    %2635 = vmatmul.mubr.f32.gmra.mrb[0].mxu0 %v2547
    %v2636 = vpop.f32.mrb[0].mxu0
    %v2637 = vadd.f32 0.0, %v2636
    %v2638 = vpop.f32.mrb[0].mxu0
    %v2639 = vadd.f32 0.0, %v2638
    %2640 = vmatprep.mubr.f32.mxu0 0.0
    %2641 = vmatmul.mubr.f32.gmra.mrb[0].mxu0 %v2550
    %v2642 = vpop.f32.mrb[0].mxu0
    %v2643 = vadd.f32 0.0, %v2642
    %v2644 = vpop.f32.mrb[0].mxu0
    %v2645 = vadd.f32 0.0, %v2644
    %2646 = vmatprep.mubr.f32.mxu0 0.0
    %2647 = vmatmul.mubr.f32.gmra.mrb[0].mxu0 %v2553
    %v2648 = vpop.f32.mrb[0].mxu0
    %v2649 = vadd.f32 0.0, %v2648
    %v2650 = vpop.f32.mrb[0].mxu0
    %v2651 = vadd.f32 0.0, %v2650
    %2652 = vmatprep.mubr.f32.mxu0 0.0
    %2653 = vmatmul.mubr.f32.gmra.mrb[0].mxu0 %v2556
    %v2654 = vpop.f32.mrb[0].mxu0
    %v2655 = vadd.f32 0.0, %v2654
    %v2656 = vpop.f32.mrb[0].mxu0
    %v2657 = vadd.f32 0.0, %v2656
    %2658 = vdwg.mxu0
    %v2659 = vadd.f32 %v2508, %v2625
    %v2660 = vadd.f32 %v2509, %v2627
    %v2661 = vadd.f32 %v2510, %v2631
    %v2662 = vadd.f32 %v2511, %v2633
    %v2663 = vadd.f32 %v2512, %v2637
    %v2664 = vadd.f32 %v2513, %v2639
    %v2665 = vadd.f32 %v2514, %v2643
    %v2666 = vadd.f32 %v2515, %v2645
    %v2667 = vadd.f32 %v2516, %v2649
    %v2668 = vadd.f32 %v2517, %v2651
    %v2669 = vadd.f32 %v2518, %v2655
    %v2670 = vadd.f32 %v2519, %v2657
    %2671 = vrot.lane.b32.xlu0 %v2212, 113
    %v2672 = vpop.permute.xlu0 %2671
    %2673 = vrot.lane.b32.xlu0 %v2213, 113
    %v2674 = vpop.permute.xlu0 %2673
    %2675 = vrot.lane.b32.xlu0 %v2214, 113
    %v2676 = vpop.permute.xlu0 %2675
    %vm2677 = vcmask 924672
    %v2678 = vsel %vm2677, %v2672, %v2674
    %v2679 = vsel %vm2677, %v2674, %v2676
    %v2682 = vsel %vm299, %v2678, 0.0
    %v2683 = vsel %vm300, %v2679, 0.0
    %s2684 = scalar_lea.vmem %s2, 768
    %v2685 = vld [vmem:[%s2684] sm:$0xff]
    %v2686 = vld [vmem:[%s2684 + $0x8] sm:$0xff]
    %v2687 = vld [vmem:[%s2684 + $0x10] sm:$0xff]
    %v2688 = vld [vmem:[%s2684 + $0x18] sm:$0xff]
    %v2689 = vld [vmem:[%s2684 + $0x20] sm:$0xff]
    %v2690 = vld [vmem:[%s2684 + $0x28] sm:$0xff]
    %v2692 = vsel %vm321, %v2685, 0
    %v2695 = vsel %vm321, %v2686, 0
    %v2698 = vsel %vm321, %v2687, 0
    %v2701 = vsel %vm321, %v2688, 0
    %v2704 = vsel %vm321, %v2689, 0
    %v2707 = vsel %vm321, %v2690, 0
    %2709 = vmatprep.subr.mxu0 %v2683
    %2710 = vmatpush1.msra.mxu0 %v2682
    %2711 = vmatprep.subr.mxu0 0.0
    %2712 = vmatpush1.msra.mxu0 0.0
    %2713 = vmatprep.subr.mxu0 0.0
    %2714 = vmatpush1.msra.mxu0 0.0
    %2715 = vmatprep.subr.mxu0 0.0
    %2716 = vmatpush1.msra.mxu0 0.0
    %2717 = vmatprep.subr.mxu0 0.0
    %2718 = vmatpush1.msra.mxu0 0.0
    %2719 = vmatprep.subr.mxu0 0.0
    %2720 = vmatpush1.msra.mxu0 0.0
    %2721 = vmatprep.subr.mxu0 0.0
    %2722 = vmatpush1.msra.mxu0 0.0
    %2723 = vmatprep.subr.mxu0 0.0
    %2724 = vmatpush1.msra.mxu0 0.0
    %2725 = vmatprep.subr.mxu0 0.0
    %2726 = vmatpush1.msra.mxu0 0.0
    %2727 = vmatprep.subr.mxu0 0.0
    %2728 = vmatpush1.msra.mxu0 0.0
    %2729 = vmatprep.subr.mxu0 0.0
    %2730 = vmatpush1.msra.mxu0 0.0
    %2731 = vmatprep.subr.mxu0 0.0
    %2732 = vmatpush1.msra.mxu0 0.0
    %2733 = vmatprep.subr.mxu0 0.0
    %2734 = vmatpush1.msra.mxu0 0.0
    %2735 = vmatprep.subr.mxu0 0.0
    %2736 = vmatpush1.msra.mxu0 0.0
    %2737 = vmatprep.subr.mxu0 0.0
    %2738 = vmatpush1.msra.mxu0 0.0
    %2739 = vmatprep.subr.mxu0 0.0
    %2740 = vmatpush1.msra.mxu0 0.0
    %2741 = vmatprep.subr.mxu0 0.0
    %2742 = vmatpush1.msra.mxu0 0.0
    %2743 = vmatprep.subr.mxu0 0.0
    %2744 = vmatpush1.msra.mxu0 0.0
    %2745 = vmatprep.subr.mxu0 0.0
    %2746 = vmatpush1.msra.mxu0 0.0
    %2747 = vmatprep.subr.mxu0 0.0
    %2748 = vmatpush1.msra.mxu0 0.0
    %2749 = vmatprep.subr.mxu0 0.0
    %2750 = vmatpush1.msra.mxu0 0.0
    %2751 = vmatprep.subr.mxu0 0.0
    %2752 = vmatpush1.msra.mxu0 0.0
    %2753 = vmatprep.subr.mxu0 0.0
    %2754 = vmatpush1.msra.mxu0 0.0
    %2755 = vmatprep.subr.mxu0 0.0
    %2756 = vmatpush1.msra.mxu0 0.0
    %2757 = vmatprep.subr.mxu0 0.0
    %2758 = vmatpush1.msra.mxu0 0.0
    %2759 = vmatprep.subr.mxu0 0.0
    %2760 = vmatpush1.msra.mxu0 0.0
    %2761 = vmatprep.subr.mxu0 0.0
    %2762 = vmatpush1.msra.mxu0 0.0
    %2763 = vmatprep.subr.mxu0 0.0
    %2764 = vmatpush1.msra.mxu0 0.0
    %2765 = vmatprep.subr.mxu0 0.0
    %2766 = vmatpush1.msra.mxu0 0.0
    %2767 = vmatprep.subr.mxu0 0.0
    %2768 = vmatpush1.msra.mxu0 0.0
    %2769 = vmatprep.subr.mxu0 0.0
    %2770 = vmatpush1.msra.mxu0 0.0
    %2771 = vmatprep.subr.mxu0 0.0
    %2772 = vmatpush1.msra.mxu0 0.0
    %2773 = vmatprep.mubr.f32.mxu0 0.0
    %2774 = vmatmul.mubr.f32.gmra.mrb[0].mxu0 %v2692
    %v2775 = vpop.f32.mrb[0].mxu0
    %v2776 = vadd.f32 0.0, %v2775
    %v2777 = vpop.f32.mrb[0].mxu0
    %v2778 = vadd.f32 0.0, %v2777
    %2779 = vmatprep.mubr.f32.mxu0 0.0
    %2780 = vmatmul.mubr.f32.gmra.mrb[0].mxu0 %v2695
    %v2781 = vpop.f32.mrb[0].mxu0
    %v2782 = vadd.f32 0.0, %v2781
    %v2783 = vpop.f32.mrb[0].mxu0
    %v2784 = vadd.f32 0.0, %v2783
    %2785 = vmatprep.mubr.f32.mxu0 0.0
    %2786 = vmatmul.mubr.f32.gmra.mrb[0].mxu0 %v2698
    %v2787 = vpop.f32.mrb[0].mxu0
    %v2788 = vadd.f32 0.0, %v2787
    %v2789 = vpop.f32.mrb[0].mxu0
    %v2790 = vadd.f32 0.0, %v2789
    %2791 = vmatprep.mubr.f32.mxu0 0.0
    %2792 = vmatmul.mubr.f32.gmra.mrb[0].mxu0 %v2701
    %v2793 = vpop.f32.mrb[0].mxu0
    %v2794 = vadd.f32 0.0, %v2793
    %v2795 = vpop.f32.mrb[0].mxu0
    %v2796 = vadd.f32 0.0, %v2795
    %2797 = vmatprep.mubr.f32.mxu0 0.0
    %2798 = vmatmul.mubr.f32.gmra.mrb[0].mxu0 %v2704
    %v2799 = vpop.f32.mrb[0].mxu0
    %v2800 = vadd.f32 0.0, %v2799
    %v2801 = vpop.f32.mrb[0].mxu0
    %v2802 = vadd.f32 0.0, %v2801
    %2803 = vmatprep.mubr.f32.mxu0 0.0
    %2804 = vmatmul.mubr.f32.gmra.mrb[0].mxu0 %v2707
    %v2805 = vpop.f32.mrb[0].mxu0
    %v2806 = vadd.f32 0.0, %v2805
    %v2807 = vpop.f32.mrb[0].mxu0
    %v2808 = vadd.f32 0.0, %v2807
    %2809 = vdwg.mxu0
    %v2810 = vadd.f32 %v2659, %v2776
    %v2811 = vadd.f32 %v2660, %v2778
    %v2812 = vadd.f32 %v2661, %v2782
    %v2813 = vadd.f32 %v2662, %v2784
    %v2814 = vadd.f32 %v2663, %v2788
    %v2815 = vadd.f32 %v2664, %v2790
    %v2816 = vadd.f32 %v2665, %v2794
    %v2817 = vadd.f32 %v2666, %v2796
    %v2818 = vadd.f32 %v2667, %v2800
    %v2819 = vadd.f32 %v2668, %v2802
    %v2820 = vadd.f32 %v2669, %v2806
    %v2821 = vadd.f32 %v2670, %v2808
    %s2822 = scalar_lea.vmem %s2, 816
    %v2823 = vld [vmem:[%s2822] sm:$0xff]
    %v2824 = vld [vmem:[%s2822 + $0x8] sm:$0xff]
    %v2825 = vld [vmem:[%s2822 + $0x10] sm:$0xff]
    %v2826 = vld [vmem:[%s2822 + $0x18] sm:$0xff]
    %v2827 = vld [vmem:[%s2822 + $0x20] sm:$0xff]
    %v2828 = vld [vmem:[%s2822 + $0x28] sm:$0xff]
    %2829 = vrot.lane.b32.xlu0 %v2212, 112
    %v2830 = vpop.permute.xlu0 %2829
    %2831 = vrot.lane.b32.xlu0 %v2213, 112
    %v2832 = vpop.permute.xlu0 %2831
    %2833 = vrot.lane.b32.xlu0 %v2214, 112
    %v2834 = vpop.permute.xlu0 %2833
    %vm2835 = vcmask 916480
    %v2836 = vsel %vm2835, %v2830, %v2832
    %v2837 = vsel %vm2835, %v2832, %v2834
    %v2841 = vsel %vm321, %v2823, 0
    %v2844 = vsel %vm321, %v2824, 0
    %v2847 = vsel %vm321, %v2825, 0
    %v2850 = vsel %vm321, %v2826, 0
    %v2853 = vsel %vm321, %v2827, 0
    %v2856 = vsel %vm321, %v2828, 0
    %2858 = vmatprep.subr.mxu0 %v2837
    %2859 = vmatpush1.msra.mxu0 %v2836
    %2860 = vmatprep.subr.mxu0 0.0
    %2861 = vmatpush1.msra.mxu0 0.0
    %2862 = vmatprep.subr.mxu0 0.0
    %2863 = vmatpush1.msra.mxu0 0.0
    %2864 = vmatprep.subr.mxu0 0.0
    %2865 = vmatpush1.msra.mxu0 0.0
    %2866 = vmatprep.subr.mxu0 0.0
    %2867 = vmatpush1.msra.mxu0 0.0
    %2868 = vmatprep.subr.mxu0 0.0
    %2869 = vmatpush1.msra.mxu0 0.0
    %2870 = vmatprep.subr.mxu0 0.0
    %2871 = vmatpush1.msra.mxu0 0.0
    %2872 = vmatprep.subr.mxu0 0.0
    %2873 = vmatpush1.msra.mxu0 0.0
    %2874 = vmatprep.subr.mxu0 0.0
    %2875 = vmatpush1.msra.mxu0 0.0
    %2876 = vmatprep.subr.mxu0 0.0
    %2877 = vmatpush1.msra.mxu0 0.0
    %2878 = vmatprep.subr.mxu0 0.0
    %2879 = vmatpush1.msra.mxu0 0.0
    %2880 = vmatprep.subr.mxu0 0.0
    %2881 = vmatpush1.msra.mxu0 0.0
    %2882 = vmatprep.subr.mxu0 0.0
    %2883 = vmatpush1.msra.mxu0 0.0
    %2884 = vmatprep.subr.mxu0 0.0
    %2885 = vmatpush1.msra.mxu0 0.0
    %2886 = vmatprep.subr.mxu0 0.0
    %2887 = vmatpush1.msra.mxu0 0.0
    %2888 = vmatprep.subr.mxu0 0.0
    %2889 = vmatpush1.msra.mxu0 0.0
    %2890 = vmatprep.subr.mxu0 0.0
    %2891 = vmatpush1.msra.mxu0 0.0
    %2892 = vmatprep.subr.mxu0 0.0
    %2893 = vmatpush1.msra.mxu0 0.0
    %2894 = vmatprep.subr.mxu0 0.0
    %2895 = vmatpush1.msra.mxu0 0.0
    %2896 = vmatprep.subr.mxu0 0.0
    %2897 = vmatpush1.msra.mxu0 0.0
    %2898 = vmatprep.subr.mxu0 0.0
    %2899 = vmatpush1.msra.mxu0 0.0
    %2900 = vmatprep.subr.mxu0 0.0
    %2901 = vmatpush1.msra.mxu0 0.0
    %2902 = vmatprep.subr.mxu0 0.0
    %2903 = vmatpush1.msra.mxu0 0.0
    %2904 = vmatprep.subr.mxu0 0.0
    %2905 = vmatpush1.msra.mxu0 0.0
    %2906 = vmatprep.subr.mxu0 0.0
    %2907 = vmatpush1.msra.mxu0 0.0
    %2908 = vmatprep.subr.mxu0 0.0
    %2909 = vmatpush1.msra.mxu0 0.0
    %2910 = vmatprep.subr.mxu0 0.0
    %2911 = vmatpush1.msra.mxu0 0.0
    %2912 = vmatprep.subr.mxu0 0.0
    %2913 = vmatpush1.msra.mxu0 0.0
    %2914 = vmatprep.subr.mxu0 0.0
    %2915 = vmatpush1.msra.mxu0 0.0
    %2916 = vmatprep.subr.mxu0 0.0
    %2917 = vmatpush1.msra.mxu0 0.0
    %2918 = vmatprep.subr.mxu0 0.0
    %2919 = vmatpush1.msra.mxu0 0.0
    %2920 = vmatprep.subr.mxu0 0.0
    %2921 = vmatpush1.msra.mxu0 0.0
    %2922 = vmatprep.mubr.f32.mxu0 0.0
    %2923 = vmatmul.mubr.f32.gmra.mrb[0].mxu0 %v2841
    %v2924 = vpop.f32.mrb[0].mxu0
    %v2925 = vadd.f32 0.0, %v2924
    %v2926 = vpop.f32.mrb[0].mxu0
    %v2927 = vadd.f32 0.0, %v2926
    %2928 = vmatprep.mubr.f32.mxu0 0.0
    %2929 = vmatmul.mubr.f32.gmra.mrb[0].mxu0 %v2844
    %v2930 = vpop.f32.mrb[0].mxu0
    %v2931 = vadd.f32 0.0, %v2930
    %v2932 = vpop.f32.mrb[0].mxu0
    %v2933 = vadd.f32 0.0, %v2932
    %2934 = vmatprep.mubr.f32.mxu0 0.0
    %2935 = vmatmul.mubr.f32.gmra.mrb[0].mxu0 %v2847
    %v2936 = vpop.f32.mrb[0].mxu0
    %v2937 = vadd.f32 0.0, %v2936
    %v2938 = vpop.f32.mrb[0].mxu0
    %v2939 = vadd.f32 0.0, %v2938
    %2940 = vmatprep.mubr.f32.mxu0 0.0
    %2941 = vmatmul.mubr.f32.gmra.mrb[0].mxu0 %v2850
    %v2942 = vpop.f32.mrb[0].mxu0
    %v2943 = vadd.f32 0.0, %v2942
    %v2944 = vpop.f32.mrb[0].mxu0
    %v2945 = vadd.f32 0.0, %v2944
    %2946 = vmatprep.mubr.f32.mxu0 0.0
    %2947 = vmatmul.mubr.f32.gmra.mrb[0].mxu0 %v2853
    %v2948 = vpop.f32.mrb[0].mxu0
    %v2949 = vadd.f32 0.0, %v2948
    %v2950 = vpop.f32.mrb[0].mxu0
    %v2951 = vadd.f32 0.0, %v2950
    %2952 = vmatprep.mubr.f32.mxu0 0.0
    %2953 = vmatmul.mubr.f32.gmra.mrb[0].mxu0 %v2856
    %v2954 = vpop.f32.mrb[0].mxu0
    %v2955 = vadd.f32 0.0, %v2954
    %v2956 = vpop.f32.mrb[0].mxu0
    %v2957 = vadd.f32 0.0, %v2956
    %2958 = vdwg.mxu0
    %v2959 = vadd.f32 %v2810, %v2925
    %v2960 = vadd.f32 %v2811, %v2927
    %v2961 = vadd.f32 %v2812, %v2931
    %v2962 = vadd.f32 %v2813, %v2933
    %v2963 = vadd.f32 %v2814, %v2937
    %v2964 = vadd.f32 %v2815, %v2939
    %v2965 = vadd.f32 %v2816, %v2943
    %v2966 = vadd.f32 %v2817, %v2945
    %v2967 = vadd.f32 %v2818, %v2949
    %v2968 = vadd.f32 %v2819, %v2951
    %v2969 = vadd.f32 %v2820, %v2955
    %v2970 = vadd.f32 %v2821, %v2957
    %2971 = vrot.lane.b32.xlu0 %v2212, 111
    %v2972 = vpop.permute.xlu0 %2971
    %2973 = vrot.lane.b32.xlu0 %v2213, 111
    %v2974 = vpop.permute.xlu0 %2973
    %2975 = vrot.lane.b32.xlu0 %v2214, 111
    %v2976 = vpop.permute.xlu0 %2975
    %vm2977 = vcmask 908288
    %v2978 = vsel %vm2977, %v2972, %v2974
    %v2979 = vsel %vm2977, %v2974, %v2976
    %v2982 = vsel %vm711, %v2978, 0.0
    %v2983 = vsel %vm712, %v2979, 0.0
    %s2984 = scalar_lea.vmem %s2, 864
    %v2985 = vld [vmem:[%s2984] sm:$0xff]
    %v2986 = vld [vmem:[%s2984 + $0x8] sm:$0xff]
    %v2987 = vld [vmem:[%s2984 + $0x10] sm:$0xff]
    %v2988 = vld [vmem:[%s2984 + $0x18] sm:$0xff]
    %v2989 = vld [vmem:[%s2984 + $0x20] sm:$0xff]
    %v2990 = vld [vmem:[%s2984 + $0x28] sm:$0xff]
    %v2992 = vsel %vm321, %v2985, 0
    %v2995 = vsel %vm321, %v2986, 0
    %v2998 = vsel %vm321, %v2987, 0
    %v3001 = vsel %vm321, %v2988, 0
    %v3004 = vsel %vm321, %v2989, 0
    %v3007 = vsel %vm321, %v2990, 0
    %3009 = vmatprep.subr.mxu0 %v2983
    %3010 = vmatpush1.msra.mxu0 %v2982
    %3011 = vmatprep.subr.mxu0 0.0
    %3012 = vmatpush1.msra.mxu0 0.0
    %3013 = vmatprep.subr.mxu0 0.0
    %3014 = vmatpush1.msra.mxu0 0.0
    %3015 = vmatprep.subr.mxu0 0.0
    %3016 = vmatpush1.msra.mxu0 0.0
    %3017 = vmatprep.subr.mxu0 0.0
    %3018 = vmatpush1.msra.mxu0 0.0
    %3019 = vmatprep.subr.mxu0 0.0
    %3020 = vmatpush1.msra.mxu0 0.0
    %3021 = vmatprep.subr.mxu0 0.0
    %3022 = vmatpush1.msra.mxu0 0.0
    %3023 = vmatprep.subr.mxu0 0.0
    %3024 = vmatpush1.msra.mxu0 0.0
    %3025 = vmatprep.subr.mxu0 0.0
    %3026 = vmatpush1.msra.mxu0 0.0
    %3027 = vmatprep.subr.mxu0 0.0
    %3028 = vmatpush1.msra.mxu0 0.0
    %3029 = vmatprep.subr.mxu0 0.0
    %3030 = vmatpush1.msra.mxu0 0.0
    %3031 = vmatprep.subr.mxu0 0.0
    %3032 = vmatpush1.msra.mxu0 0.0
    %3033 = vmatprep.subr.mxu0 0.0
    %3034 = vmatpush1.msra.mxu0 0.0
    %3035 = vmatprep.subr.mxu0 0.0
    %3036 = vmatpush1.msra.mxu0 0.0
    %3037 = vmatprep.subr.mxu0 0.0
    %3038 = vmatpush1.msra.mxu0 0.0
    %3039 = vmatprep.subr.mxu0 0.0
    %3040 = vmatpush1.msra.mxu0 0.0
    %3041 = vmatprep.subr.mxu0 0.0
    %3042 = vmatpush1.msra.mxu0 0.0
    %3043 = vmatprep.subr.mxu0 0.0
    %3044 = vmatpush1.msra.mxu0 0.0
    %3045 = vmatprep.subr.mxu0 0.0
    %3046 = vmatpush1.msra.mxu0 0.0
    %3047 = vmatprep.subr.mxu0 0.0
    %3048 = vmatpush1.msra.mxu0 0.0
    %3049 = vmatprep.subr.mxu0 0.0
    %3050 = vmatpush1.msra.mxu0 0.0
    %3051 = vmatprep.subr.mxu0 0.0
    %3052 = vmatpush1.msra.mxu0 0.0
    %3053 = vmatprep.subr.mxu0 0.0
    %3054 = vmatpush1.msra.mxu0 0.0
    %3055 = vmatprep.subr.mxu0 0.0
    %3056 = vmatpush1.msra.mxu0 0.0
    %3057 = vmatprep.subr.mxu0 0.0
    %3058 = vmatpush1.msra.mxu0 0.0
    %3059 = vmatprep.subr.mxu0 0.0
    %3060 = vmatpush1.msra.mxu0 0.0
    %3061 = vmatprep.subr.mxu0 0.0
    %3062 = vmatpush1.msra.mxu0 0.0
    %3063 = vmatprep.subr.mxu0 0.0
    %3064 = vmatpush1.msra.mxu0 0.0
    %3065 = vmatprep.subr.mxu0 0.0
    %3066 = vmatpush1.msra.mxu0 0.0
    %3067 = vmatprep.subr.mxu0 0.0
    %3068 = vmatpush1.msra.mxu0 0.0
    %3069 = vmatprep.subr.mxu0 0.0
    %3070 = vmatpush1.msra.mxu0 0.0
    %3071 = vmatprep.subr.mxu0 0.0
    %3072 = vmatpush1.msra.mxu0 0.0
    %3073 = vmatprep.mubr.f32.mxu0 0.0
    %3074 = vmatmul.mubr.f32.gmra.mrb[0].mxu0 %v2992
    %v3075 = vpop.f32.mrb[0].mxu0
    %v3076 = vadd.f32 0.0, %v3075
    %v3077 = vpop.f32.mrb[0].mxu0
    %v3078 = vadd.f32 0.0, %v3077
    %3079 = vmatprep.mubr.f32.mxu0 0.0
    %3080 = vmatmul.mubr.f32.gmra.mrb[0].mxu0 %v2995
    %v3081 = vpop.f32.mrb[0].mxu0
    %v3082 = vadd.f32 0.0, %v3081
    %v3083 = vpop.f32.mrb[0].mxu0
    %v3084 = vadd.f32 0.0, %v3083
    %3085 = vmatprep.mubr.f32.mxu0 0.0
    %3086 = vmatmul.mubr.f32.gmra.mrb[0].mxu0 %v2998
    %v3087 = vpop.f32.mrb[0].mxu0
    %v3088 = vadd.f32 0.0, %v3087
    %v3089 = vpop.f32.mrb[0].mxu0
    %v3090 = vadd.f32 0.0, %v3089
    %3091 = vmatprep.mubr.f32.mxu0 0.0
    %3092 = vmatmul.mubr.f32.gmra.mrb[0].mxu0 %v3001
    %v3093 = vpop.f32.mrb[0].mxu0
    %v3094 = vadd.f32 0.0, %v3093
    %v3095 = vpop.f32.mrb[0].mxu0
    %v3096 = vadd.f32 0.0, %v3095
    %3097 = vmatprep.mubr.f32.mxu0 0.0
    %3098 = vmatmul.mubr.f32.gmra.mrb[0].mxu0 %v3004
    %v3099 = vpop.f32.mrb[0].mxu0
    %v3100 = vadd.f32 0.0, %v3099
    %v3101 = vpop.f32.mrb[0].mxu0
    %v3102 = vadd.f32 0.0, %v3101
    %3103 = vmatprep.mubr.f32.mxu0 0.0
    %3104 = vmatmul.mubr.f32.gmra.mrb[0].mxu0 %v3007
    %v3105 = vpop.f32.mrb[0].mxu0
    %v3106 = vadd.f32 0.0, %v3105
    %v3107 = vpop.f32.mrb[0].mxu0
    %v3108 = vadd.f32 0.0, %v3107
    %3109 = vdwg.mxu0
    %v3110 = vadd.f32 %v2959, %v3076
    %v3111 = vadd.f32 %v2960, %v3078
    %v3112 = vadd.f32 %v2961, %v3082
    %v3113 = vadd.f32 %v2962, %v3084
    %v3114 = vadd.f32 %v2963, %v3088
    %v3115 = vadd.f32 %v2964, %v3090
    %v3116 = vadd.f32 %v2965, %v3094
    %v3117 = vadd.f32 %v2966, %v3096
    %v3118 = vadd.f32 %v2967, %v3100
    %v3119 = vadd.f32 %v2968, %v3102
    %v3120 = vadd.f32 %v2969, %v3106
    %v3121 = vadd.f32 %v2970, %v3108
    %3122 = vrot.lane.b32.xlu0 %v2212, 110
    %v3123 = vpop.permute.xlu0 %3122
    %3124 = vrot.lane.b32.xlu0 %v2213, 110
    %v3125 = vpop.permute.xlu0 %3124
    %3126 = vrot.lane.b32.xlu0 %v2214, 110
    %v3127 = vpop.permute.xlu0 %3126
    %vm3128 = vcmask 900096
    %v3129 = vsel %vm3128, %v3123, %v3125
    %v3130 = vsel %vm3128, %v3125, %v3127
    %v3133 = vsel %vm866, %v3129, 0.0
    %v3134 = vsel %vm867, %v3130, 0.0
    %s3135 = scalar_lea.vmem %s2, 912
    %v3136 = vld [vmem:[%s3135] sm:$0xff]
    %v3137 = vld [vmem:[%s3135 + $0x8] sm:$0xff]
    %v3138 = vld [vmem:[%s3135 + $0x10] sm:$0xff]
    %v3139 = vld [vmem:[%s3135 + $0x18] sm:$0xff]
    %v3140 = vld [vmem:[%s3135 + $0x20] sm:$0xff]
    %v3141 = vld [vmem:[%s3135 + $0x28] sm:$0xff]
    %v3143 = vsel %vm321, %v3136, 0
    %v3146 = vsel %vm321, %v3137, 0
    %v3149 = vsel %vm321, %v3138, 0
    %v3152 = vsel %vm321, %v3139, 0
    %v3155 = vsel %vm321, %v3140, 0
    %v3158 = vsel %vm321, %v3141, 0
    %3160 = vmatprep.subr.mxu0 %v3134
    %3161 = vmatpush1.msra.mxu0 %v3133
    %3162 = vmatprep.subr.mxu0 0.0
    %3163 = vmatpush1.msra.mxu0 0.0
    %3164 = vmatprep.subr.mxu0 0.0
    %3165 = vmatpush1.msra.mxu0 0.0
    %3166 = vmatprep.subr.mxu0 0.0
    %3167 = vmatpush1.msra.mxu0 0.0
    %3168 = vmatprep.subr.mxu0 0.0
    %3169 = vmatpush1.msra.mxu0 0.0
    %3170 = vmatprep.subr.mxu0 0.0
    %3171 = vmatpush1.msra.mxu0 0.0
    %3172 = vmatprep.subr.mxu0 0.0
    %3173 = vmatpush1.msra.mxu0 0.0
    %3174 = vmatprep.subr.mxu0 0.0
    %3175 = vmatpush1.msra.mxu0 0.0
    %3176 = vmatprep.subr.mxu0 0.0
    %3177 = vmatpush1.msra.mxu0 0.0
    %3178 = vmatprep.subr.mxu0 0.0
    %3179 = vmatpush1.msra.mxu0 0.0
    %3180 = vmatprep.subr.mxu0 0.0
    %3181 = vmatpush1.msra.mxu0 0.0
    %3182 = vmatprep.subr.mxu0 0.0
    %3183 = vmatpush1.msra.mxu0 0.0
    %3184 = vmatprep.subr.mxu0 0.0
    %3185 = vmatpush1.msra.mxu0 0.0
    %3186 = vmatprep.subr.mxu0 0.0
    %3187 = vmatpush1.msra.mxu0 0.0
    %3188 = vmatprep.subr.mxu0 0.0
    %3189 = vmatpush1.msra.mxu0 0.0
    %3190 = vmatprep.subr.mxu0 0.0
    %3191 = vmatpush1.msra.mxu0 0.0
    %3192 = vmatprep.subr.mxu0 0.0
    %3193 = vmatpush1.msra.mxu0 0.0
    %3194 = vmatprep.subr.mxu0 0.0
    %3195 = vmatpush1.msra.mxu0 0.0
    %3196 = vmatprep.subr.mxu0 0.0
    %3197 = vmatpush1.msra.mxu0 0.0
    %3198 = vmatprep.subr.mxu0 0.0
    %3199 = vmatpush1.msra.mxu0 0.0
    %3200 = vmatprep.subr.mxu0 0.0
    %3201 = vmatpush1.msra.mxu0 0.0
    %3202 = vmatprep.subr.mxu0 0.0
    %3203 = vmatpush1.msra.mxu0 0.0
    %3204 = vmatprep.subr.mxu0 0.0
    %3205 = vmatpush1.msra.mxu0 0.0
    %3206 = vmatprep.subr.mxu0 0.0
    %3207 = vmatpush1.msra.mxu0 0.0
    %3208 = vmatprep.subr.mxu0 0.0
    %3209 = vmatpush1.msra.mxu0 0.0
    %3210 = vmatprep.subr.mxu0 0.0
    %3211 = vmatpush1.msra.mxu0 0.0
    %3212 = vmatprep.subr.mxu0 0.0
    %3213 = vmatpush1.msra.mxu0 0.0
    %3214 = vmatprep.subr.mxu0 0.0
    %3215 = vmatpush1.msra.mxu0 0.0
    %3216 = vmatprep.subr.mxu0 0.0
    %3217 = vmatpush1.msra.mxu0 0.0
    %3218 = vmatprep.subr.mxu0 0.0
    %3219 = vmatpush1.msra.mxu0 0.0
    %3220 = vmatprep.subr.mxu0 0.0
    %3221 = vmatpush1.msra.mxu0 0.0
    %3222 = vmatprep.subr.mxu0 0.0
    %3223 = vmatpush1.msra.mxu0 0.0
    %3224 = vmatprep.mubr.f32.mxu0 0.0
    %3225 = vmatmul.mubr.f32.gmra.mrb[0].mxu0 %v3143
    %v3226 = vpop.f32.mrb[0].mxu0
    %v3227 = vadd.f32 0.0, %v3226
    %v3228 = vpop.f32.mrb[0].mxu0
    %v3229 = vadd.f32 0.0, %v3228
    %3230 = vmatprep.mubr.f32.mxu0 0.0
    %3231 = vmatmul.mubr.f32.gmra.mrb[0].mxu0 %v3146
    %v3232 = vpop.f32.mrb[0].mxu0
    %v3233 = vadd.f32 0.0, %v3232
    %v3234 = vpop.f32.mrb[0].mxu0
    %v3235 = vadd.f32 0.0, %v3234
    %3236 = vmatprep.mubr.f32.mxu0 0.0
    %3237 = vmatmul.mubr.f32.gmra.mrb[0].mxu0 %v3149
    %v3238 = vpop.f32.mrb[0].mxu0
    %v3239 = vadd.f32 0.0, %v3238
    %v3240 = vpop.f32.mrb[0].mxu0
    %v3241 = vadd.f32 0.0, %v3240
    %3242 = vmatprep.mubr.f32.mxu0 0.0
    %3243 = vmatmul.mubr.f32.gmra.mrb[0].mxu0 %v3152
    %v3244 = vpop.f32.mrb[0].mxu0
    %v3245 = vadd.f32 0.0, %v3244
    %v3246 = vpop.f32.mrb[0].mxu0
    %v3247 = vadd.f32 0.0, %v3246
    %3248 = vmatprep.mubr.f32.mxu0 0.0
    %3249 = vmatmul.mubr.f32.gmra.mrb[0].mxu0 %v3155
    %v3250 = vpop.f32.mrb[0].mxu0
    %v3251 = vadd.f32 0.0, %v3250
    %v3252 = vpop.f32.mrb[0].mxu0
    %v3253 = vadd.f32 0.0, %v3252
    %3254 = vmatprep.mubr.f32.mxu0 0.0
    %3255 = vmatmul.mubr.f32.gmra.mrb[0].mxu0 %v3158
    %v3256 = vpop.f32.mrb[0].mxu0
    %v3257 = vadd.f32 0.0, %v3256
    %v3258 = vpop.f32.mrb[0].mxu0
    %v3259 = vadd.f32 0.0, %v3258
    %3260 = vdwg.mxu0
    %v3261 = vadd.f32 %v3110, %v3227
    %v3262 = vadd.f32 %v3111, %v3229
    %v3263 = vadd.f32 %v3112, %v3233
    %v3264 = vadd.f32 %v3113, %v3235
    %v3265 = vadd.f32 %v3114, %v3239
    %v3266 = vadd.f32 %v3115, %v3241
    %v3267 = vadd.f32 %v3116, %v3245
    %v3268 = vadd.f32 %v3117, %v3247
    %v3269 = vadd.f32 %v3118, %v3251
    %v3270 = vadd.f32 %v3119, %v3253
    %v3271 = vadd.f32 %v3120, %v3257
    %v3272 = vadd.f32 %v3121, %v3259
    %3273 = vrot.lane.b32.xlu0 %v2212, 98
    %v3274 = vpop.permute.xlu0 %3273
    %3275 = vrot.lane.b32.xlu0 %v2213, 98
    %v3276 = vpop.permute.xlu0 %3275
    %3277 = vrot.lane.b32.xlu0 %v2214, 98
    %v3278 = vpop.permute.xlu0 %3277
    %vm3279 = vcmask 801792
    %v3280 = vsel %vm3279, %v3274, %v3276
    %v3281 = vsel %vm3279, %v3276, %v3278
    %v3284 = vsel %vm273, %v3280, 0.0
    %v3285 = vsel %vm274, %v3281, 0.0
    %s3286 = scalar_lea.vmem %s2, 960
    %v3287 = vld [vmem:[%s3286] sm:$0xff]
    %v3288 = vld [vmem:[%s3286 + $0x8] sm:$0xff]
    %v3289 = vld [vmem:[%s3286 + $0x10] sm:$0xff]
    %v3290 = vld [vmem:[%s3286 + $0x18] sm:$0xff]
    %v3291 = vld [vmem:[%s3286 + $0x20] sm:$0xff]
    %v3292 = vld [vmem:[%s3286 + $0x28] sm:$0xff]
    %v3294 = vsel %vm321, %v3287, 0
    %v3297 = vsel %vm321, %v3288, 0
    %v3300 = vsel %vm321, %v3289, 0
    %v3303 = vsel %vm321, %v3290, 0
    %v3306 = vsel %vm321, %v3291, 0
    %v3309 = vsel %vm321, %v3292, 0
    %3311 = vmatprep.subr.mxu0 %v3285
    %3312 = vmatpush1.msra.mxu0 %v3284
    %3313 = vmatprep.subr.mxu0 0.0
    %3314 = vmatpush1.msra.mxu0 0.0
    %3315 = vmatprep.subr.mxu0 0.0
    %3316 = vmatpush1.msra.mxu0 0.0
    %3317 = vmatprep.subr.mxu0 0.0
    %3318 = vmatpush1.msra.mxu0 0.0
    %3319 = vmatprep.subr.mxu0 0.0
    %3320 = vmatpush1.msra.mxu0 0.0
    %3321 = vmatprep.subr.mxu0 0.0
    %3322 = vmatpush1.msra.mxu0 0.0
    %3323 = vmatprep.subr.mxu0 0.0
    %3324 = vmatpush1.msra.mxu0 0.0
    %3325 = vmatprep.subr.mxu0 0.0
    %3326 = vmatpush1.msra.mxu0 0.0
    %3327 = vmatprep.subr.mxu0 0.0
    %3328 = vmatpush1.msra.mxu0 0.0
    %3329 = vmatprep.subr.mxu0 0.0
    %3330 = vmatpush1.msra.mxu0 0.0
    %3331 = vmatprep.subr.mxu0 0.0
    %3332 = vmatpush1.msra.mxu0 0.0
    %3333 = vmatprep.subr.mxu0 0.0
    %3334 = vmatpush1.msra.mxu0 0.0
    %3335 = vmatprep.subr.mxu0 0.0
    %3336 = vmatpush1.msra.mxu0 0.0
    %3337 = vmatprep.subr.mxu0 0.0
    %3338 = vmatpush1.msra.mxu0 0.0
    %3339 = vmatprep.subr.mxu0 0.0
    %3340 = vmatpush1.msra.mxu0 0.0
    %3341 = vmatprep.subr.mxu0 0.0
    %3342 = vmatpush1.msra.mxu0 0.0
    %3343 = vmatprep.subr.mxu0 0.0
    %3344 = vmatpush1.msra.mxu0 0.0
    %3345 = vmatprep.subr.mxu0 0.0
    %3346 = vmatpush1.msra.mxu0 0.0
    %3347 = vmatprep.subr.mxu0 0.0
    %3348 = vmatpush1.msra.mxu0 0.0
    %3349 = vmatprep.subr.mxu0 0.0
    %3350 = vmatpush1.msra.mxu0 0.0
    %3351 = vmatprep.subr.mxu0 0.0
    %3352 = vmatpush1.msra.mxu0 0.0
    %3353 = vmatprep.subr.mxu0 0.0
    %3354 = vmatpush1.msra.mxu0 0.0
    %3355 = vmatprep.subr.mxu0 0.0
    %3356 = vmatpush1.msra.mxu0 0.0
    %3357 = vmatprep.subr.mxu0 0.0
    %3358 = vmatpush1.msra.mxu0 0.0
    %3359 = vmatprep.subr.mxu0 0.0
    %3360 = vmatpush1.msra.mxu0 0.0
    %3361 = vmatprep.subr.mxu0 0.0
    %3362 = vmatpush1.msra.mxu0 0.0
    %3363 = vmatprep.subr.mxu0 0.0
    %3364 = vmatpush1.msra.mxu0 0.0
    %3365 = vmatprep.subr.mxu0 0.0
    %3366 = vmatpush1.msra.mxu0 0.0
    %3367 = vmatprep.subr.mxu0 0.0
    %3368 = vmatpush1.msra.mxu0 0.0
    %3369 = vmatprep.subr.mxu0 0.0
    %3370 = vmatpush1.msra.mxu0 0.0
    %3371 = vmatprep.subr.mxu0 0.0
    %3372 = vmatpush1.msra.mxu0 0.0
    %3373 = vmatprep.subr.mxu0 0.0
    %3374 = vmatpush1.msra.mxu0 0.0
    %3375 = vmatprep.mubr.f32.mxu0 0.0
    %3376 = vmatmul.mubr.f32.gmra.mrb[0].mxu0 %v3294
    %v3377 = vpop.f32.mrb[0].mxu0
    %v3378 = vadd.f32 0.0, %v3377
    %v3379 = vpop.f32.mrb[0].mxu0
    %v3380 = vadd.f32 0.0, %v3379
    %3381 = vmatprep.mubr.f32.mxu0 0.0
    %3382 = vmatmul.mubr.f32.gmra.mrb[0].mxu0 %v3297
    %v3383 = vpop.f32.mrb[0].mxu0
    %v3384 = vadd.f32 0.0, %v3383
    %v3385 = vpop.f32.mrb[0].mxu0
    %v3386 = vadd.f32 0.0, %v3385
    %3387 = vmatprep.mubr.f32.mxu0 0.0
    %3388 = vmatmul.mubr.f32.gmra.mrb[0].mxu0 %v3300
    %v3389 = vpop.f32.mrb[0].mxu0
    %v3390 = vadd.f32 0.0, %v3389
    %v3391 = vpop.f32.mrb[0].mxu0
    %v3392 = vadd.f32 0.0, %v3391
    %3393 = vmatprep.mubr.f32.mxu0 0.0
    %3394 = vmatmul.mubr.f32.gmra.mrb[0].mxu0 %v3303
    %v3395 = vpop.f32.mrb[0].mxu0
    %v3396 = vadd.f32 0.0, %v3395
    %v3397 = vpop.f32.mrb[0].mxu0
    %v3398 = vadd.f32 0.0, %v3397
    %3399 = vmatprep.mubr.f32.mxu0 0.0
    %3400 = vmatmul.mubr.f32.gmra.mrb[0].mxu0 %v3306
    %v3401 = vpop.f32.mrb[0].mxu0
    %v3402 = vadd.f32 0.0, %v3401
    %v3403 = vpop.f32.mrb[0].mxu0
    %v3404 = vadd.f32 0.0, %v3403
    %3405 = vmatprep.mubr.f32.mxu0 0.0
    %3406 = vmatmul.mubr.f32.gmra.mrb[0].mxu0 %v3309
    %v3407 = vpop.f32.mrb[0].mxu0
    %v3408 = vadd.f32 0.0, %v3407
    %v3409 = vpop.f32.mrb[0].mxu0
    %v3410 = vadd.f32 0.0, %v3409
    %3411 = vdwg.mxu0
    %v3412 = vadd.f32 %v3261, %v3378
    %v3413 = vadd.f32 %v3262, %v3380
    %v3414 = vadd.f32 %v3263, %v3384
    %v3415 = vadd.f32 %v3264, %v3386
    %v3416 = vadd.f32 %v3265, %v3390
    %v3417 = vadd.f32 %v3266, %v3392
    %v3418 = vadd.f32 %v3267, %v3396
    %v3419 = vadd.f32 %v3268, %v3398
    %v3420 = vadd.f32 %v3269, %v3402
    %v3421 = vadd.f32 %v3270, %v3404
    %v3422 = vadd.f32 %v3271, %v3408
    %v3423 = vadd.f32 %v3272, %v3410
    %3424 = vrot.lane.b32.xlu0 %v2212, 97
    %v3425 = vpop.permute.xlu0 %3424
    %3426 = vrot.lane.b32.xlu0 %v2213, 97
    %v3427 = vpop.permute.xlu0 %3426
    %3428 = vrot.lane.b32.xlu0 %v2214, 97
    %v3429 = vpop.permute.xlu0 %3428
    %vm3430 = vcmask 793600
    %v3431 = vsel %vm3430, %v3425, %v3427
    %v3432 = vsel %vm3430, %v3427, %v3429
    %v3435 = vsel %vm299, %v3431, 0.0
    %v3436 = vsel %vm300, %v3432, 0.0
    %s3437 = scalar_lea.vmem %s2, 1008
    %v3438 = vld [vmem:[%s3437] sm:$0xff]
    %v3439 = vld [vmem:[%s3437 + $0x8] sm:$0xff]
    %v3440 = vld [vmem:[%s3437 + $0x10] sm:$0xff]
    %v3441 = vld [vmem:[%s3437 + $0x18] sm:$0xff]
    %v3442 = vld [vmem:[%s3437 + $0x20] sm:$0xff]
    %v3443 = vld [vmem:[%s3437 + $0x28] sm:$0xff]
    %v3445 = vsel %vm321, %v3438, 0
    %v3448 = vsel %vm321, %v3439, 0
    %v3451 = vsel %vm321, %v3440, 0
    %v3454 = vsel %vm321, %v3441, 0
    %v3457 = vsel %vm321, %v3442, 0
    %v3460 = vsel %vm321, %v3443, 0
    %3462 = vmatprep.subr.mxu0 %v3436
    %3463 = vmatpush1.msra.mxu0 %v3435
    %3464 = vmatprep.subr.mxu0 0.0
    %3465 = vmatpush1.msra.mxu0 0.0
    %3466 = vmatprep.subr.mxu0 0.0
    %3467 = vmatpush1.msra.mxu0 0.0
    %3468 = vmatprep.subr.mxu0 0.0
    %3469 = vmatpush1.msra.mxu0 0.0
    %3470 = vmatprep.subr.mxu0 0.0
    %3471 = vmatpush1.msra.mxu0 0.0
    %3472 = vmatprep.subr.mxu0 0.0
    %3473 = vmatpush1.msra.mxu0 0.0
    %3474 = vmatprep.subr.mxu0 0.0
    %3475 = vmatpush1.msra.mxu0 0.0
    %3476 = vmatprep.subr.mxu0 0.0
    %3477 = vmatpush1.msra.mxu0 0.0
    %3478 = vmatprep.subr.mxu0 0.0
    %3479 = vmatpush1.msra.mxu0 0.0
    %3480 = vmatprep.subr.mxu0 0.0
    %3481 = vmatpush1.msra.mxu0 0.0
    %3482 = vmatprep.subr.mxu0 0.0
    %3483 = vmatpush1.msra.mxu0 0.0
    %3484 = vmatprep.subr.mxu0 0.0
    %3485 = vmatpush1.msra.mxu0 0.0
    %3486 = vmatprep.subr.mxu0 0.0
    %3487 = vmatpush1.msra.mxu0 0.0
    %3488 = vmatprep.subr.mxu0 0.0
    %3489 = vmatpush1.msra.mxu0 0.0
    %3490 = vmatprep.subr.mxu0 0.0
    %3491 = vmatpush1.msra.mxu0 0.0
    %3492 = vmatprep.subr.mxu0 0.0
    %3493 = vmatpush1.msra.mxu0 0.0
    %3494 = vmatprep.subr.mxu0 0.0
    %3495 = vmatpush1.msra.mxu0 0.0
    %3496 = vmatprep.subr.mxu0 0.0
    %3497 = vmatpush1.msra.mxu0 0.0
    %3498 = vmatprep.subr.mxu0 0.0
    %3499 = vmatpush1.msra.mxu0 0.0
    %3500 = vmatprep.subr.mxu0 0.0
    %3501 = vmatpush1.msra.mxu0 0.0
    %3502 = vmatprep.subr.mxu0 0.0
    %3503 = vmatpush1.msra.mxu0 0.0
    %3504 = vmatprep.subr.mxu0 0.0
    %3505 = vmatpush1.msra.mxu0 0.0
    %3506 = vmatprep.subr.mxu0 0.0
    %3507 = vmatpush1.msra.mxu0 0.0
    %3508 = vmatprep.subr.mxu0 0.0
    %3509 = vmatpush1.msra.mxu0 0.0
    %3510 = vmatprep.subr.mxu0 0.0
    %3511 = vmatpush1.msra.mxu0 0.0
    %3512 = vmatprep.subr.mxu0 0.0
    %3513 = vmatpush1.msra.mxu0 0.0
    %3514 = vmatprep.subr.mxu0 0.0
    %3515 = vmatpush1.msra.mxu0 0.0
    %3516 = vmatprep.subr.mxu0 0.0
    %3517 = vmatpush1.msra.mxu0 0.0
    %3518 = vmatprep.subr.mxu0 0.0
    %3519 = vmatpush1.msra.mxu0 0.0
    %3520 = vmatprep.subr.mxu0 0.0
    %3521 = vmatpush1.msra.mxu0 0.0
    %3522 = vmatprep.subr.mxu0 0.0
    %3523 = vmatpush1.msra.mxu0 0.0
    %3524 = vmatprep.subr.mxu0 0.0
    %3525 = vmatpush1.msra.mxu0 0.0
    %3526 = vmatprep.mubr.f32.mxu0 0.0
    %3527 = vmatmul.mubr.f32.gmra.mrb[0].mxu0 %v3445
    %v3528 = vpop.f32.mrb[0].mxu0
    %v3529 = vadd.f32 0.0, %v3528
    %v3530 = vpop.f32.mrb[0].mxu0
    %v3531 = vadd.f32 0.0, %v3530
    %3532 = vmatprep.mubr.f32.mxu0 0.0
    %3533 = vmatmul.mubr.f32.gmra.mrb[0].mxu0 %v3448
    %v3534 = vpop.f32.mrb[0].mxu0
    %v3535 = vadd.f32 0.0, %v3534
    %v3536 = vpop.f32.mrb[0].mxu0
    %v3537 = vadd.f32 0.0, %v3536
    %3538 = vmatprep.mubr.f32.mxu0 0.0
    %3539 = vmatmul.mubr.f32.gmra.mrb[0].mxu0 %v3451
    %v3540 = vpop.f32.mrb[0].mxu0
    %v3541 = vadd.f32 0.0, %v3540
    %v3542 = vpop.f32.mrb[0].mxu0
    %v3543 = vadd.f32 0.0, %v3542
    %3544 = vmatprep.mubr.f32.mxu0 0.0
    %3545 = vmatmul.mubr.f32.gmra.mrb[0].mxu0 %v3454
    %v3546 = vpop.f32.mrb[0].mxu0
    %v3547 = vadd.f32 0.0, %v3546
    %v3548 = vpop.f32.mrb[0].mxu0
    %v3549 = vadd.f32 0.0, %v3548
    %3550 = vmatprep.mubr.f32.mxu0 0.0
    %3551 = vmatmul.mubr.f32.gmra.mrb[0].mxu0 %v3457
    %v3552 = vpop.f32.mrb[0].mxu0
    %v3553 = vadd.f32 0.0, %v3552
    %v3554 = vpop.f32.mrb[0].mxu0
    %v3555 = vadd.f32 0.0, %v3554
    %3556 = vmatprep.mubr.f32.mxu0 0.0
    %3557 = vmatmul.mubr.f32.gmra.mrb[0].mxu0 %v3460
    %v3558 = vpop.f32.mrb[0].mxu0
    %v3559 = vadd.f32 0.0, %v3558
    %v3560 = vpop.f32.mrb[0].mxu0
    %v3561 = vadd.f32 0.0, %v3560
    %3562 = vdwg.mxu0
    %v3563 = vadd.f32 %v3412, %v3529
    %v3564 = vadd.f32 %v3413, %v3531
    %v3565 = vadd.f32 %v3414, %v3535
    %v3566 = vadd.f32 %v3415, %v3537
    %v3567 = vadd.f32 %v3416, %v3541
    %v3568 = vadd.f32 %v3417, %v3543
    %v3569 = vadd.f32 %v3418, %v3547
    %v3570 = vadd.f32 %v3419, %v3549
    %v3571 = vadd.f32 %v3420, %v3553
    %v3572 = vadd.f32 %v3421, %v3555
    %v3573 = vadd.f32 %v3422, %v3559
    %v3574 = vadd.f32 %v3423, %v3561
    %s3575 = scalar_lea.vmem %s2, 1056
    %v3576 = vld [vmem:[%s3575] sm:$0xff]
    %v3577 = vld [vmem:[%s3575 + $0x8] sm:$0xff]
    %v3578 = vld [vmem:[%s3575 + $0x10] sm:$0xff]
    %v3579 = vld [vmem:[%s3575 + $0x18] sm:$0xff]
    %v3580 = vld [vmem:[%s3575 + $0x20] sm:$0xff]
    %v3581 = vld [vmem:[%s3575 + $0x28] sm:$0xff]
    %3582 = vrot.lane.b32.xlu0 %v2212, 96
    %v3583 = vpop.permute.xlu0 %3582
    %3584 = vrot.lane.b32.xlu0 %v2213, 96
    %v3585 = vpop.permute.xlu0 %3584
    %3586 = vrot.lane.b32.xlu0 %v2214, 96
    %v3587 = vpop.permute.xlu0 %3586
    %vm3588 = vcmask 785408
    %v3589 = vsel %vm3588, %v3583, %v3585
    %v3590 = vsel %vm3588, %v3585, %v3587
    %v3594 = vsel %vm321, %v3576, 0
    %v3597 = vsel %vm321, %v3577, 0
    %v3600 = vsel %vm321, %v3578, 0
    %v3603 = vsel %vm321, %v3579, 0
    %v3606 = vsel %vm321, %v3580, 0
    %v3609 = vsel %vm321, %v3581, 0
    %3611 = vmatprep.subr.mxu0 %v3590
    %3612 = vmatpush1.msra.mxu0 %v3589
    %3613 = vmatprep.subr.mxu0 0.0
    %3614 = vmatpush1.msra.mxu0 0.0
    %3615 = vmatprep.subr.mxu0 0.0
    %3616 = vmatpush1.msra.mxu0 0.0
    %3617 = vmatprep.subr.mxu0 0.0
    %3618 = vmatpush1.msra.mxu0 0.0
    %3619 = vmatprep.subr.mxu0 0.0
    %3620 = vmatpush1.msra.mxu0 0.0
    %3621 = vmatprep.subr.mxu0 0.0
    %3622 = vmatpush1.msra.mxu0 0.0
    %3623 = vmatprep.subr.mxu0 0.0
    %3624 = vmatpush1.msra.mxu0 0.0
    %3625 = vmatprep.subr.mxu0 0.0
    %3626 = vmatpush1.msra.mxu0 0.0
    %3627 = vmatprep.subr.mxu0 0.0
    %3628 = vmatpush1.msra.mxu0 0.0
    %3629 = vmatprep.subr.mxu0 0.0
    %3630 = vmatpush1.msra.mxu0 0.0
    %3631 = vmatprep.subr.mxu0 0.0
    %3632 = vmatpush1.msra.mxu0 0.0
    %3633 = vmatprep.subr.mxu0 0.0
    %3634 = vmatpush1.msra.mxu0 0.0
    %3635 = vmatprep.subr.mxu0 0.0
    %3636 = vmatpush1.msra.mxu0 0.0
    %3637 = vmatprep.subr.mxu0 0.0
    %3638 = vmatpush1.msra.mxu0 0.0
    %3639 = vmatprep.subr.mxu0 0.0
    %3640 = vmatpush1.msra.mxu0 0.0
    %3641 = vmatprep.subr.mxu0 0.0
    %3642 = vmatpush1.msra.mxu0 0.0
    %3643 = vmatprep.subr.mxu0 0.0
    %3644 = vmatpush1.msra.mxu0 0.0
    %3645 = vmatprep.subr.mxu0 0.0
    %3646 = vmatpush1.msra.mxu0 0.0
    %3647 = vmatprep.subr.mxu0 0.0
    %3648 = vmatpush1.msra.mxu0 0.0
    %3649 = vmatprep.subr.mxu0 0.0
    %3650 = vmatpush1.msra.mxu0 0.0
    %3651 = vmatprep.subr.mxu0 0.0
    %3652 = vmatpush1.msra.mxu0 0.0
    %3653 = vmatprep.subr.mxu0 0.0
    %3654 = vmatpush1.msra.mxu0 0.0
    %3655 = vmatprep.subr.mxu0 0.0
    %3656 = vmatpush1.msra.mxu0 0.0
    %3657 = vmatprep.subr.mxu0 0.0
    %3658 = vmatpush1.msra.mxu0 0.0
    %3659 = vmatprep.subr.mxu0 0.0
    %3660 = vmatpush1.msra.mxu0 0.0
    %3661 = vmatprep.subr.mxu0 0.0
    %3662 = vmatpush1.msra.mxu0 0.0
    %3663 = vmatprep.subr.mxu0 0.0
    %3664 = vmatpush1.msra.mxu0 0.0
    %3665 = vmatprep.subr.mxu0 0.0
    %3666 = vmatpush1.msra.mxu0 0.0
    %3667 = vmatprep.subr.mxu0 0.0
    %3668 = vmatpush1.msra.mxu0 0.0
    %3669 = vmatprep.subr.mxu0 0.0
    %3670 = vmatpush1.msra.mxu0 0.0
    %3671 = vmatprep.subr.mxu0 0.0
    %3672 = vmatpush1.msra.mxu0 0.0
    %3673 = vmatprep.subr.mxu0 0.0
    %3674 = vmatpush1.msra.mxu0 0.0
    %3675 = vmatprep.mubr.f32.mxu0 0.0
    %3676 = vmatmul.mubr.f32.gmra.mrb[0].mxu0 %v3594
    %v3677 = vpop.f32.mrb[0].mxu0
    %v3678 = vadd.f32 0.0, %v3677
    %v3679 = vpop.f32.mrb[0].mxu0
    %v3680 = vadd.f32 0.0, %v3679
    %3681 = vmatprep.mubr.f32.mxu0 0.0
    %3682 = vmatmul.mubr.f32.gmra.mrb[0].mxu0 %v3597
    %v3683 = vpop.f32.mrb[0].mxu0
    %v3684 = vadd.f32 0.0, %v3683
    %v3685 = vpop.f32.mrb[0].mxu0
    %v3686 = vadd.f32 0.0, %v3685
    %3687 = vmatprep.mubr.f32.mxu0 0.0
    %3688 = vmatmul.mubr.f32.gmra.mrb[0].mxu0 %v3600
    %v3689 = vpop.f32.mrb[0].mxu0
    %v3690 = vadd.f32 0.0, %v3689
    %v3691 = vpop.f32.mrb[0].mxu0
    %v3692 = vadd.f32 0.0, %v3691
    %3693 = vmatprep.mubr.f32.mxu0 0.0
    %3694 = vmatmul.mubr.f32.gmra.mrb[0].mxu0 %v3603
    %v3695 = vpop.f32.mrb[0].mxu0
    %v3696 = vadd.f32 0.0, %v3695
    %v3697 = vpop.f32.mrb[0].mxu0
    %v3698 = vadd.f32 0.0, %v3697
    %3699 = vmatprep.mubr.f32.mxu0 0.0
    %3700 = vmatmul.mubr.f32.gmra.mrb[0].mxu0 %v3606
    %v3701 = vpop.f32.mrb[0].mxu0
    %v3702 = vadd.f32 0.0, %v3701
    %v3703 = vpop.f32.mrb[0].mxu0
    %v3704 = vadd.f32 0.0, %v3703
    %3705 = vmatprep.mubr.f32.mxu0 0.0
    %3706 = vmatmul.mubr.f32.gmra.mrb[0].mxu0 %v3609
    %v3707 = vpop.f32.mrb[0].mxu0
    %v3708 = vadd.f32 0.0, %v3707
    %v3709 = vpop.f32.mrb[0].mxu0
    %v3710 = vadd.f32 0.0, %v3709
    %3711 = vdwg.mxu0
    %v3712 = vadd.f32 %v3563, %v3678
    %v3713 = vadd.f32 %v3564, %v3680
    %v3714 = vadd.f32 %v3565, %v3684
    %v3715 = vadd.f32 %v3566, %v3686
    %v3716 = vadd.f32 %v3567, %v3690
    %v3717 = vadd.f32 %v3568, %v3692
    %v3718 = vadd.f32 %v3569, %v3696
    %v3719 = vadd.f32 %v3570, %v3698
    %v3720 = vadd.f32 %v3571, %v3702
    %v3721 = vadd.f32 %v3572, %v3704
    %v3722 = vadd.f32 %v3573, %v3708
    %v3723 = vadd.f32 %v3574, %v3710
    %3724 = vrot.lane.b32.xlu0 %v2212, 95
    %v3725 = vpop.permute.xlu0 %3724
    %3726 = vrot.lane.b32.xlu0 %v2213, 95
    %v3727 = vpop.permute.xlu0 %3726
    %3728 = vrot.lane.b32.xlu0 %v2214, 95
    %v3729 = vpop.permute.xlu0 %3728
    %vm3730 = vcmask 777216
    %v3731 = vsel %vm3730, %v3725, %v3727
    %v3732 = vsel %vm3730, %v3727, %v3729
    %v3735 = vsel %vm711, %v3731, 0.0
    %v3736 = vsel %vm712, %v3732, 0.0
    %s3737 = scalar_lea.vmem %s2, 1104
    %v3738 = vld [vmem:[%s3737] sm:$0xff]
    %v3739 = vld [vmem:[%s3737 + $0x8] sm:$0xff]
    %v3740 = vld [vmem:[%s3737 + $0x10] sm:$0xff]
    %v3741 = vld [vmem:[%s3737 + $0x18] sm:$0xff]
    %v3742 = vld [vmem:[%s3737 + $0x20] sm:$0xff]
    %v3743 = vld [vmem:[%s3737 + $0x28] sm:$0xff]
    %v3745 = vsel %vm321, %v3738, 0
    %v3748 = vsel %vm321, %v3739, 0
    %v3751 = vsel %vm321, %v3740, 0
    %v3754 = vsel %vm321, %v3741, 0
    %v3757 = vsel %vm321, %v3742, 0
    %v3760 = vsel %vm321, %v3743, 0
    %3762 = vmatprep.subr.mxu0 %v3736
    %3763 = vmatpush1.msra.mxu0 %v3735
    %3764 = vmatprep.subr.mxu0 0.0
    %3765 = vmatpush1.msra.mxu0 0.0
    %3766 = vmatprep.subr.mxu0 0.0
    %3767 = vmatpush1.msra.mxu0 0.0
    %3768 = vmatprep.subr.mxu0 0.0
    %3769 = vmatpush1.msra.mxu0 0.0
    %3770 = vmatprep.subr.mxu0 0.0
    %3771 = vmatpush1.msra.mxu0 0.0
    %3772 = vmatprep.subr.mxu0 0.0
    %3773 = vmatpush1.msra.mxu0 0.0
    %3774 = vmatprep.subr.mxu0 0.0
    %3775 = vmatpush1.msra.mxu0 0.0
    %3776 = vmatprep.subr.mxu0 0.0
    %3777 = vmatpush1.msra.mxu0 0.0
    %3778 = vmatprep.subr.mxu0 0.0
    %3779 = vmatpush1.msra.mxu0 0.0
    %3780 = vmatprep.subr.mxu0 0.0
    %3781 = vmatpush1.msra.mxu0 0.0
    %3782 = vmatprep.subr.mxu0 0.0
    %3783 = vmatpush1.msra.mxu0 0.0
    %3784 = vmatprep.subr.mxu0 0.0
    %3785 = vmatpush1.msra.mxu0 0.0
    %3786 = vmatprep.subr.mxu0 0.0
    %3787 = vmatpush1.msra.mxu0 0.0
    %3788 = vmatprep.subr.mxu0 0.0
    %3789 = vmatpush1.msra.mxu0 0.0
    %3790 = vmatprep.subr.mxu0 0.0
    %3791 = vmatpush1.msra.mxu0 0.0
    %3792 = vmatprep.subr.mxu0 0.0
    %3793 = vmatpush1.msra.mxu0 0.0
    %3794 = vmatprep.subr.mxu0 0.0
    %3795 = vmatpush1.msra.mxu0 0.0
    %3796 = vmatprep.subr.mxu0 0.0
    %3797 = vmatpush1.msra.mxu0 0.0
    %3798 = vmatprep.subr.mxu0 0.0
    %3799 = vmatpush1.msra.mxu0 0.0
    %3800 = vmatprep.subr.mxu0 0.0
    %3801 = vmatpush1.msra.mxu0 0.0
    %3802 = vmatprep.subr.mxu0 0.0
    %3803 = vmatpush1.msra.mxu0 0.0
    %3804 = vmatprep.subr.mxu0 0.0
    %3805 = vmatpush1.msra.mxu0 0.0
    %3806 = vmatprep.subr.mxu0 0.0
    %3807 = vmatpush1.msra.mxu0 0.0
    %3808 = vmatprep.subr.mxu0 0.0
    %3809 = vmatpush1.msra.mxu0 0.0
    %3810 = vmatprep.subr.mxu0 0.0
    %3811 = vmatpush1.msra.mxu0 0.0
    %3812 = vmatprep.subr.mxu0 0.0
    %3813 = vmatpush1.msra.mxu0 0.0
    %3814 = vmatprep.subr.mxu0 0.0
    %3815 = vmatpush1.msra.mxu0 0.0
    %3816 = vmatprep.subr.mxu0 0.0
    %3817 = vmatpush1.msra.mxu0 0.0
    %3818 = vmatprep.subr.mxu0 0.0
    %3819 = vmatpush1.msra.mxu0 0.0
    %3820 = vmatprep.subr.mxu0 0.0
    %3821 = vmatpush1.msra.mxu0 0.0
    %3822 = vmatprep.subr.mxu0 0.0
    %3823 = vmatpush1.msra.mxu0 0.0
    %3824 = vmatprep.subr.mxu0 0.0
    %3825 = vmatpush1.msra.mxu0 0.0
    %3826 = vmatprep.mubr.f32.mxu0 0.0
    %3827 = vmatmul.mubr.f32.gmra.mrb[0].mxu0 %v3745
    %v3828 = vpop.f32.mrb[0].mxu0
    %v3829 = vadd.f32 0.0, %v3828
    %v3830 = vpop.f32.mrb[0].mxu0
    %v3831 = vadd.f32 0.0, %v3830
    %3832 = vmatprep.mubr.f32.mxu0 0.0
    %3833 = vmatmul.mubr.f32.gmra.mrb[0].mxu0 %v3748
    %v3834 = vpop.f32.mrb[0].mxu0
    %v3835 = vadd.f32 0.0, %v3834
    %v3836 = vpop.f32.mrb[0].mxu0
    %v3837 = vadd.f32 0.0, %v3836
    %3838 = vmatprep.mubr.f32.mxu0 0.0
    %3839 = vmatmul.mubr.f32.gmra.mrb[0].mxu0 %v3751
    %v3840 = vpop.f32.mrb[0].mxu0
    %v3841 = vadd.f32 0.0, %v3840
    %v3842 = vpop.f32.mrb[0].mxu0
    %v3843 = vadd.f32 0.0, %v3842
    %3844 = vmatprep.mubr.f32.mxu0 0.0
    %3845 = vmatmul.mubr.f32.gmra.mrb[0].mxu0 %v3754
    %v3846 = vpop.f32.mrb[0].mxu0
    %v3847 = vadd.f32 0.0, %v3846
    %v3848 = vpop.f32.mrb[0].mxu0
    %v3849 = vadd.f32 0.0, %v3848
    %3850 = vmatprep.mubr.f32.mxu0 0.0
    %3851 = vmatmul.mubr.f32.gmra.mrb[0].mxu0 %v3757
    %v3852 = vpop.f32.mrb[0].mxu0
    %v3853 = vadd.f32 0.0, %v3852
    %v3854 = vpop.f32.mrb[0].mxu0
    %v3855 = vadd.f32 0.0, %v3854
    %3856 = vmatprep.mubr.f32.mxu0 0.0
    %3857 = vmatmul.mubr.f32.gmra.mrb[0].mxu0 %v3760
    %v3858 = vpop.f32.mrb[0].mxu0
    %v3859 = vadd.f32 0.0, %v3858
    %v3860 = vpop.f32.mrb[0].mxu0
    %v3861 = vadd.f32 0.0, %v3860
    %3862 = vdwg.mxu0
    %v3863 = vadd.f32 %v3712, %v3829
    %v3864 = vadd.f32 %v3713, %v3831
    %v3865 = vadd.f32 %v3714, %v3835
    %v3866 = vadd.f32 %v3715, %v3837
    %v3867 = vadd.f32 %v3716, %v3841
    %v3868 = vadd.f32 %v3717, %v3843
    %v3869 = vadd.f32 %v3718, %v3847
    %v3870 = vadd.f32 %v3719, %v3849
    %v3871 = vadd.f32 %v3720, %v3853
    %v3872 = vadd.f32 %v3721, %v3855
    %v3873 = vadd.f32 %v3722, %v3859
    %v3874 = vadd.f32 %v3723, %v3861
    %3875 = vrot.lane.b32.xlu0 %v2212, 94
    %v3876 = vpop.permute.xlu0 %3875
    %3877 = vrot.lane.b32.xlu0 %v2213, 94
    %v3878 = vpop.permute.xlu0 %3877
    %3879 = vrot.lane.b32.xlu0 %v2214, 94
    %v3880 = vpop.permute.xlu0 %3879
    %vm3881 = vcmask 769024
    %v3882 = vsel %vm3881, %v3876, %v3878
    %v3883 = vsel %vm3881, %v3878, %v3880
    %v3886 = vsel %vm866, %v3882, 0.0
    %v3887 = vsel %vm867, %v3883, 0.0
    %s3888 = scalar_lea.vmem %s2, 1152
    %v3889 = vld [vmem:[%s3888] sm:$0xff]
    %v3890 = vld [vmem:[%s3888 + $0x8] sm:$0xff]
    %v3891 = vld [vmem:[%s3888 + $0x10] sm:$0xff]
    %v3892 = vld [vmem:[%s3888 + $0x18] sm:$0xff]
    %v3893 = vld [vmem:[%s3888 + $0x20] sm:$0xff]
    %v3894 = vld [vmem:[%s3888 + $0x28] sm:$0xff]
    %v3896 = vsel %vm321, %v3889, 0
    %v3899 = vsel %vm321, %v3890, 0
    %v3902 = vsel %vm321, %v3891, 0
    %v3905 = vsel %vm321, %v3892, 0
    %v3908 = vsel %vm321, %v3893, 0
    %v3911 = vsel %vm321, %v3894, 0
    %3913 = vmatprep.subr.mxu0 %v3887
    %3914 = vmatpush1.msra.mxu0 %v3886
    %3915 = vmatprep.subr.mxu0 0.0
    %3916 = vmatpush1.msra.mxu0 0.0
    %3917 = vmatprep.subr.mxu0 0.0
    %3918 = vmatpush1.msra.mxu0 0.0
    %3919 = vmatprep.subr.mxu0 0.0
    %3920 = vmatpush1.msra.mxu0 0.0
    %3921 = vmatprep.subr.mxu0 0.0
    %3922 = vmatpush1.msra.mxu0 0.0
    %3923 = vmatprep.subr.mxu0 0.0
    %3924 = vmatpush1.msra.mxu0 0.0
    %3925 = vmatprep.subr.mxu0 0.0
    %3926 = vmatpush1.msra.mxu0 0.0
    %3927 = vmatprep.subr.mxu0 0.0
    %3928 = vmatpush1.msra.mxu0 0.0
    %3929 = vmatprep.subr.mxu0 0.0
    %3930 = vmatpush1.msra.mxu0 0.0
    %3931 = vmatprep.subr.mxu0 0.0
    %3932 = vmatpush1.msra.mxu0 0.0
    %3933 = vmatprep.subr.mxu0 0.0
    %3934 = vmatpush1.msra.mxu0 0.0
    %3935 = vmatprep.subr.mxu0 0.0
    %3936 = vmatpush1.msra.mxu0 0.0
    %3937 = vmatprep.subr.mxu0 0.0
    %3938 = vmatpush1.msra.mxu0 0.0
    %3939 = vmatprep.subr.mxu0 0.0
    %3940 = vmatpush1.msra.mxu0 0.0
    %3941 = vmatprep.subr.mxu0 0.0
    %3942 = vmatpush1.msra.mxu0 0.0
    %3943 = vmatprep.subr.mxu0 0.0
    %3944 = vmatpush1.msra.mxu0 0.0
    %3945 = vmatprep.subr.mxu0 0.0
    %3946 = vmatpush1.msra.mxu0 0.0
    %3947 = vmatprep.subr.mxu0 0.0
    %3948 = vmatpush1.msra.mxu0 0.0
    %3949 = vmatprep.subr.mxu0 0.0
    %3950 = vmatpush1.msra.mxu0 0.0
    %3951 = vmatprep.subr.mxu0 0.0
    %3952 = vmatpush1.msra.mxu0 0.0
    %3953 = vmatprep.subr.mxu0 0.0
    %3954 = vmatpush1.msra.mxu0 0.0
    %3955 = vmatprep.subr.mxu0 0.0
    %3956 = vmatpush1.msra.mxu0 0.0
    %3957 = vmatprep.subr.mxu0 0.0
    %3958 = vmatpush1.msra.mxu0 0.0
    %3959 = vmatprep.subr.mxu0 0.0
    %3960 = vmatpush1.msra.mxu0 0.0
    %3961 = vmatprep.subr.mxu0 0.0
    %3962 = vmatpush1.msra.mxu0 0.0
    %3963 = vmatprep.subr.mxu0 0.0
    %3964 = vmatpush1.msra.mxu0 0.0
    %3965 = vmatprep.subr.mxu0 0.0
    %3966 = vmatpush1.msra.mxu0 0.0
    %3967 = vmatprep.subr.mxu0 0.0
    %3968 = vmatpush1.msra.mxu0 0.0
    %3969 = vmatprep.subr.mxu0 0.0
    %3970 = vmatpush1.msra.mxu0 0.0
    %3971 = vmatprep.subr.mxu0 0.0
    %3972 = vmatpush1.msra.mxu0 0.0
    %3973 = vmatprep.subr.mxu0 0.0
    %3974 = vmatpush1.msra.mxu0 0.0
    %3975 = vmatprep.subr.mxu0 0.0
    %3976 = vmatpush1.msra.mxu0 0.0
    %3977 = vmatprep.mubr.f32.mxu0 0.0
    %3978 = vmatmul.mubr.f32.gmra.mrb[0].mxu0 %v3896
    %v3979 = vpop.f32.mrb[0].mxu0
    %v3980 = vadd.f32 0.0, %v3979
    %v3981 = vpop.f32.mrb[0].mxu0
    %v3982 = vadd.f32 0.0, %v3981
    %3983 = vmatprep.mubr.f32.mxu0 0.0
    %3984 = vmatmul.mubr.f32.gmra.mrb[0].mxu0 %v3899
    %v3985 = vpop.f32.mrb[0].mxu0
    %v3986 = vadd.f32 0.0, %v3985
    %v3987 = vpop.f32.mrb[0].mxu0
    %v3988 = vadd.f32 0.0, %v3987
    %3989 = vmatprep.mubr.f32.mxu0 0.0
    %3990 = vmatmul.mubr.f32.gmra.mrb[0].mxu0 %v3902
    %v3991 = vpop.f32.mrb[0].mxu0
    %v3992 = vadd.f32 0.0, %v3991
    %v3993 = vpop.f32.mrb[0].mxu0
    %v3994 = vadd.f32 0.0, %v3993
    %3995 = vmatprep.mubr.f32.mxu0 0.0
    %3996 = vmatmul.mubr.f32.gmra.mrb[0].mxu0 %v3905
    %v3997 = vpop.f32.mrb[0].mxu0
    %v3998 = vadd.f32 0.0, %v3997
    %v3999 = vpop.f32.mrb[0].mxu0
    %v4000 = vadd.f32 0.0, %v3999
    %4001 = vmatprep.mubr.f32.mxu0 0.0
    %4002 = vmatmul.mubr.f32.gmra.mrb[0].mxu0 %v3908
    %v4003 = vpop.f32.mrb[0].mxu0
    %v4004 = vadd.f32 0.0, %v4003
    %v4005 = vpop.f32.mrb[0].mxu0
    %v4006 = vadd.f32 0.0, %v4005
    %4007 = vmatprep.mubr.f32.mxu0 0.0
    %4008 = vmatmul.mubr.f32.gmra.mrb[0].mxu0 %v3911
    %v4009 = vpop.f32.mrb[0].mxu0
    %v4010 = vadd.f32 0.0, %v4009
    %v4011 = vpop.f32.mrb[0].mxu0
    %v4012 = vadd.f32 0.0, %v4011
    %4013 = vdwg.mxu0
    %v4014 = vadd.f32 %v3863, %v3980
    %v4015 = vadd.f32 %v3864, %v3982
    %v4016 = vadd.f32 %v3865, %v3986
    %v4017 = vadd.f32 %v3866, %v3988
    %v4018 = vadd.f32 %v3867, %v3992
    %v4019 = vadd.f32 %v3868, %v3994
    %v4020 = vadd.f32 %v3869, %v3998
    %v4021 = vadd.f32 %v3870, %v4000
    %v4022 = vadd.f32 %v3871, %v4004
    %v4023 = vadd.f32 %v3872, %v4006
    %v4024 = vadd.f32 %v3873, %v4010
    %v4025 = vadd.f32 %v3874, %v4012
    %v4026 = vld [vmem:[%s3] sm:$0xff]
    %v4027 = vld [vmem:[%s3 + $0x8] sm:$0xff]
    %v4028 = vld [vmem:[%s3 + $0x10] sm:$0xff]
    %v4029 = vld [vmem:[%s3 + $0x18] sm:$0xff]
    %v4030 = vld [vmem:[%s3 + $0x20] sm:$0xff]
    %v4031 = vld [vmem:[%s3 + $0x28] sm:$0xff]
    %4033 = vset.pattern.permute.xlu0 0
    %4034 = vperm.xlu0 %4033, %v4026
    %v4035 = vpop.permute.xlu0 %4034
    %4038 = vset.pattern.permute.xlu0 0
    %4039 = vperm.xlu0 %4038, %v4027
    %v4040 = vpop.permute.xlu0 %4039
    %4043 = vset.pattern.permute.xlu0 0
    %4044 = vperm.xlu0 %4043, %v4028
    %v4045 = vpop.permute.xlu0 %4044
    %4048 = vset.pattern.permute.xlu0 0
    %4049 = vperm.xlu0 %4048, %v4029
    %v4050 = vpop.permute.xlu0 %4049
    %4053 = vset.pattern.permute.xlu0 0
    %4054 = vperm.xlu0 %4053, %v4030
    %v4055 = vpop.permute.xlu0 %4054
    %4058 = vset.pattern.permute.xlu0 0
    %4059 = vperm.xlu0 %4058, %v4031
    %v4060 = vpop.permute.xlu0 %4059
    %v4062 = vadd.f32 %v4014, %v4035
    %v4063 = vadd.f32 %v4015, %v4035
    %v4064 = vadd.f32 %v4016, %v4040
    %v4065 = vadd.f32 %v4017, %v4040
    %v4066 = vadd.f32 %v4018, %v4045
    %v4067 = vadd.f32 %v4019, %v4045
    %v4068 = vadd.f32 %v4020, %v4050
    %v4069 = vadd.f32 %v4021, %v4050
    %v4070 = vadd.f32 %v4022, %v4055
    %v4071 = vadd.f32 %v4023, %v4055
    %v4072 = vadd.f32 %v4024, %v4060
    %v4073 = vadd.f32 %v4025, %v4060
    %v4074 = vmax.f32 %v4062, 0.0
    %v4075 = vmax.f32 %v4063, 0.0
    %v4076 = vmax.f32 %v4064, 0.0
    %v4077 = vmax.f32 %v4065, 0.0
    %v4078 = vmax.f32 %v4066, 0.0
    %v4079 = vmax.f32 %v4067, 0.0
    %v4080 = vmax.f32 %v4068, 0.0
    %v4081 = vmax.f32 %v4069, 0.0
    %v4082 = vmax.f32 %v4070, 0.0
    %v4083 = vmax.f32 %v4071, 0.0
    %v4084 = vmax.f32 %v4072, 0.0
    %v4085 = vmax.f32 %v4073, 0.0
    %4086 = vst [vmem:[#allocation3] sm:$0xff] 0.0
    %4087 = vst [vmem:[#allocation3 + $0x20] sm:$0xff] 0.0
    %4088 = vst [vmem:[#allocation3 + $0x40] sm:$0xff] 0.0
    %4089 = vst [vmem:[#allocation3 + $0x60] sm:$0xff] 0.0
    %4090 = vst [vmem:[#allocation3 + $0x80] sm:$0xff] 0.0
    %4091 = vst [vmem:[#allocation3 + $0xa0] sm:$0xff] 0.0
    %4092 = vst [vmem:[#allocation3 + $0xc0] sm:$0x1] 0.0
    %4093 = vst [vmem:[#allocation3 + $0x18] sm:$0xff] 0.0
    %4094 = vst [vmem:[#allocation3 + $0x38] sm:$0xff] 0.0
    %4095 = vst [vmem:[#allocation3 + $0x58] sm:$0xff] 0.0
    %4096 = vst [vmem:[#allocation3 + $0x78] sm:$0xff] 0.0
    %4097 = vst [vmem:[#allocation3 + $0x98] sm:$0xff] 0.0
    %4098 = vst [vmem:[#allocation3 + $0xb8] sm:$0xff] 0.0
    %4099 = vst [vmem:[#allocation3 + $0xd8] sm:$0x1] 0.0
    %4100 = vst [vmem:[#allocation3 + $0x8] sm:$0xff] %v4074
    %4101 = vst [vmem:[#allocation3 + $0x10] sm:$0xff] %v4075
    %4102 = vst [vmem:[#allocation3 + $0x28] sm:$0xff] %v4076
    %4103 = vst [vmem:[#allocation3 + $0x30] sm:$0xff] %v4077
    %4104 = vst [vmem:[#allocation3 + $0x48] sm:$0xff] %v4078
    %4105 = vst [vmem:[#allocation3 + $0x50] sm:$0xff] %v4079
    %4106 = vst [vmem:[#allocation3 + $0x68] sm:$0xff] %v4080
    %4107 = vst [vmem:[#allocation3 + $0x70] sm:$0xff] %v4081
    %4108 = vst [vmem:[#allocation3 + $0x88] sm:$0xff] %v4082
    %4109 = vst [vmem:[#allocation3 + $0x90] sm:$0xff] %v4083
    %4110 = vst [vmem:[#allocation3 + $0xa8] sm:$0xff] %v4084
    %4111 = vst [vmem:[#allocation3 + $0xb0] sm:$0xff] %v4085
    %v4112 = vld [vmem:[%s1] sm:$0x3]
    %v4113 = vlaneseq
    %vm4114 = vcmp.ge.s32.totalorder %v4113, 0
    %vm4115 = vcmp.lt.s32.totalorder %v4113, 256
    %vm4116 = vmand %vm4114, %vm4115
    %s4117 = scalar_lea.vmem [#allocation3], 200
    %4118 = vst.msk [vmem:[%s4117] ss:$8 sm:$0x3] %vm4116, %v4112
    %4119 = vst.msk [vmem:[%s4117] ss:$8 sm:$0x0] %vm4116, %v4112
    %v4120 = vld [vmem:[#allocation3] sm:$0xff]
    %v4121 = vld [vmem:[#allocation3 + $0x8] sm:$0xff]
    %v4122 = vld [vmem:[#allocation3 + $0x10] sm:$0xff]
    %v4123 = vld [vmem:[#allocation3 + $0x20] sm:$0xff]
    %v4124 = vld [vmem:[#allocation3 + $0x28] sm:$0xff]
    %v4125 = vld [vmem:[#allocation3 + $0x30] sm:$0xff]
    %v4126 = vld [vmem:[#allocation3 + $0x40] sm:$0xff]
    %v4127 = vld [vmem:[#allocation3 + $0x48] sm:$0xff]
    %v4128 = vld [vmem:[#allocation3 + $0x50] sm:$0xff]
    %v4129 = vld [vmem:[#allocation3 + $0x60] sm:$0xff]
    %v4130 = vld [vmem:[#allocation3 + $0x68] sm:$0xff]
    %v4131 = vld [vmem:[#allocation3 + $0x70] sm:$0xff]
    %v4132 = vld [vmem:[#allocation3 + $0x80] sm:$0xff]
    %v4133 = vld [vmem:[#allocation3 + $0x88] sm:$0xff]
    %v4134 = vld [vmem:[#allocation3 + $0x90] sm:$0xff]
    %v4135 = vld [vmem:[#allocation3 + $0xa0] sm:$0xff]
    %v4136 = vld [vmem:[#allocation3 + $0xa8] sm:$0xff]
    %v4137 = vld [vmem:[#allocation3 + $0xb0] sm:$0xff]
    %v4138 = vld [vmem:[#allocation3 + $0xc0] sm:$0x1]
    %v4139 = vld [vmem:[#allocation3 + $0xc8] sm:$0x1]
    %v4140 = vld [vmem:[#allocation3 + $0xd0] sm:$0x1]
    %4162 = vrot.lane.b32.xlu0 %v4120, 17
    %v4163 = vpop.permute.xlu0 %4162
    %4164 = vrot.lane.b32.xlu0 %v4121, 17
    %v4165 = vpop.permute.xlu0 %4164
    %4166 = vrot.lane.b32.xlu0 %v4122, 17
    %v4167 = vpop.permute.xlu0 %4166
    %4168 = vrot.lane.b32.xlu0 %v4123, 17
    %v4169 = vpop.permute.xlu0 %4168
    %4170 = vrot.lane.b32.xlu0 %v4124, 17
    %v4171 = vpop.permute.xlu0 %4170
    %4172 = vrot.lane.b32.xlu0 %v4125, 17
    %v4173 = vpop.permute.xlu0 %4172
    %4174 = vrot.lane.b32.xlu0 %v4126, 17
    %v4175 = vpop.permute.xlu0 %4174
    %4176 = vrot.lane.b32.xlu0 %v4127, 17
    %v4177 = vpop.permute.xlu0 %4176
    %4178 = vrot.lane.b32.xlu0 %v4128, 17
    %v4179 = vpop.permute.xlu0 %4178
    %4180 = vrot.lane.b32.xlu0 %v4129, 17
    %v4181 = vpop.permute.xlu0 %4180
    %4182 = vrot.lane.b32.xlu0 %v4130, 17
    %v4183 = vpop.permute.xlu0 %4182
    %4184 = vrot.lane.b32.xlu0 %v4131, 17
    %v4185 = vpop.permute.xlu0 %4184
    %4186 = vrot.lane.b32.xlu0 %v4132, 17
    %v4187 = vpop.permute.xlu0 %4186
    %4188 = vrot.lane.b32.xlu0 %v4133, 17
    %v4189 = vpop.permute.xlu0 %4188
    %4190 = vrot.lane.b32.xlu0 %v4134, 17
    %v4191 = vpop.permute.xlu0 %4190
    %4192 = vrot.lane.b32.xlu0 %v4135, 17
    %v4193 = vpop.permute.xlu0 %4192
    %4194 = vrot.lane.b32.xlu0 %v4136, 17
    %v4195 = vpop.permute.xlu0 %4194
    %4196 = vrot.lane.b32.xlu0 %v4137, 17
    %v4197 = vpop.permute.xlu0 %4196
    %4198 = vrot.lane.b32.xlu0 %v4138, 17
    %v4199 = vpop.permute.xlu0 %4198
    %4200 = vrot.lane.b32.xlu0 %v4139, 17
    %v4201 = vpop.permute.xlu0 %4200
    %4202 = vrot.lane.b32.xlu0 %v4140, 17
    %v4203 = vpop.permute.xlu0 %4202
    %v4204 = vsel %vm1176, %v4163, %v4165
    %v4205 = vsel %vm1176, %v4165, %v4167
    %v4206 = vsel %vm1176, %v4169, %v4171
    %v4207 = vsel %vm1176, %v4171, %v4173
    %v4208 = vsel %vm1176, %v4175, %v4177
    %v4209 = vsel %vm1176, %v4177, %v4179
    %v4210 = vsel %vm1176, %v4181, %v4183
    %v4211 = vsel %vm1176, %v4183, %v4185
    %v4212 = vsel %vm1176, %v4187, %v4189
    %v4213 = vsel %vm1176, %v4189, %v4191
    %v4214 = vsel %vm1176, %v4193, %v4195
    %v4215 = vsel %vm1176, %v4195, %v4197
    %v4216 = vsel %vm1176, %v4199, %v4201
    %v4217 = vsel %vm1176, %v4201, %v4203
    %v4232 = vsel %vm299, %v4204, 0.0
    %v4233 = vsel %vm300, %v4205, 0.0
    %v4234 = vsel %vm299, %v4206, 0.0
    %v4235 = vsel %vm300, %v4207, 0.0
    %v4236 = vsel %vm299, %v4208, 0.0
    %v4237 = vsel %vm300, %v4209, 0.0
    %v4238 = vsel %vm299, %v4210, 0.0
    %v4239 = vsel %vm300, %v4211, 0.0
    %v4240 = vsel %vm299, %v4212, 0.0
    %v4241 = vsel %vm300, %v4213, 0.0
    %v4242 = vsel %vm299, %v4214, 0.0
    %v4243 = vsel %vm300, %v4215, 0.0
    %v4244 = vsel %vm299, %v4216, 0.0
    %v4245 = vsel %vm300, %v4217, 0.0
    %v4246 = vld [vmem:[#allocation8] sm:$0xff]
    %v4247 = vld [vmem:[#allocation8 + $0x8] sm:$0xff]
    %v4248 = vld [vmem:[#allocation8 + $0x10] sm:$0xff]
    %v4249 = vld [vmem:[#allocation8 + $0x18] sm:$0xff]
    %s4250 = scalar_lea.vmem [#allocation8], 32
    %v4251 = vld [vmem:[%s4250] sm:$0xff]
    %v4252 = vld [vmem:[%s4250 + $0x8] sm:$0xff]
    %v4253 = vld [vmem:[%s4250 + $0x10] sm:$0xff]
    %v4254 = vld [vmem:[%s4250 + $0x18] sm:$0xff]
    %4255 = vrot.lane.b32.xlu0 %v4120, 16
    %v4256 = vpop.permute.xlu0 %4255
    %4257 = vrot.lane.b32.xlu0 %v4121, 16
    %v4258 = vpop.permute.xlu0 %4257
    %4259 = vrot.lane.b32.xlu0 %v4122, 16
    %v4260 = vpop.permute.xlu0 %4259
    %4261 = vrot.lane.b32.xlu0 %v4123, 16
    %v4262 = vpop.permute.xlu0 %4261
    %4263 = vrot.lane.b32.xlu0 %v4124, 16
    %v4264 = vpop.permute.xlu0 %4263
    %4265 = vrot.lane.b32.xlu0 %v4125, 16
    %v4266 = vpop.permute.xlu0 %4265
    %4267 = vrot.lane.b32.xlu0 %v4126, 16
    %v4268 = vpop.permute.xlu0 %4267
    %4269 = vrot.lane.b32.xlu0 %v4127, 16
    %v4270 = vpop.permute.xlu0 %4269
    %4271 = vrot.lane.b32.xlu0 %v4128, 16
    %v4272 = vpop.permute.xlu0 %4271
    %4273 = vrot.lane.b32.xlu0 %v4129, 16
    %v4274 = vpop.permute.xlu0 %4273
    %4275 = vrot.lane.b32.xlu0 %v4130, 16
    %v4276 = vpop.permute.xlu0 %4275
    %4277 = vrot.lane.b32.xlu0 %v4131, 16
    %v4278 = vpop.permute.xlu0 %4277
    %4279 = vrot.lane.b32.xlu0 %v4132, 16
    %v4280 = vpop.permute.xlu0 %4279
    %4281 = vrot.lane.b32.xlu0 %v4133, 16
    %v4282 = vpop.permute.xlu0 %4281
    %4283 = vrot.lane.b32.xlu0 %v4134, 16
    %v4284 = vpop.permute.xlu0 %4283
    %4285 = vrot.lane.b32.xlu0 %v4135, 16
    %v4286 = vpop.permute.xlu0 %4285
    %4287 = vrot.lane.b32.xlu0 %v4136, 16
    %v4288 = vpop.permute.xlu0 %4287
    %4289 = vrot.lane.b32.xlu0 %v4137, 16
    %v4290 = vpop.permute.xlu0 %4289
    %4291 = vrot.lane.b32.xlu0 %v4138, 16
    %v4292 = vpop.permute.xlu0 %4291
    %4293 = vrot.lane.b32.xlu0 %v4139, 16
    %v4294 = vpop.permute.xlu0 %4293
    %4295 = vrot.lane.b32.xlu0 %v4140, 16
    %v4296 = vpop.permute.xlu0 %4295
    %v4297 = vsel %vm1334, %v4256, %v4258
    %v4298 = vsel %vm1334, %v4258, %v4260
    %v4299 = vsel %vm1334, %v4262, %v4264
    %v4300 = vsel %vm1334, %v4264, %v4266
    %v4301 = vsel %vm1334, %v4268, %v4270
    %v4302 = vsel %vm1334, %v4270, %v4272
    %v4303 = vsel %vm1334, %v4274, %v4276
    %v4304 = vsel %vm1334, %v4276, %v4278
    %v4305 = vsel %vm1334, %v4280, %v4282
    %v4306 = vsel %vm1334, %v4282, %v4284
    %v4307 = vsel %vm1334, %v4286, %v4288
    %v4308 = vsel %vm1334, %v4288, %v4290
    %v4309 = vsel %vm1334, %v4292, %v4294
    %v4310 = vsel %vm1334, %v4294, %v4296
    %vm4323 = vcmask 400384
    %v4325 = vsel %vm4323, %v4251, 0
    %v4328 = vsel %vm4323, %v4252, 0
    %v4331 = vsel %vm4323, %v4253, 0
    %v4334 = vsel %vm4323, %v4254, 0
    %vm4336 = vcmask 1040384
    %v4337 = vsel %vm4336, %v4309, 0
    %v4339 = vsel %vm4336, %v4310, 0
    %4341 = vmatprep.subr.mxu0 %v4298
    %4342 = vmatpush1.msra.mxu0 %v4297
    %4343 = vmatprep.subr.mxu0 %v4300
    %4344 = vmatpush1.msra.mxu0 %v4299
    %4345 = vmatprep.subr.mxu0 %v4302
    %4346 = vmatpush1.msra.mxu0 %v4301
    %4347 = vmatprep.subr.mxu0 %v4304
    %4348 = vmatpush1.msra.mxu0 %v4303
    %4349 = vmatprep.subr.mxu0 %v4306
    %4350 = vmatpush1.msra.mxu0 %v4305
    %4351 = vmatprep.subr.mxu0 %v4308
    %4352 = vmatpush1.msra.mxu0 %v4307
    %4353 = vmatprep.subr.mxu0 %v4339
    %4354 = vmatpush1.msra.mxu0 %v4337
    %4355 = vmatprep.subr.mxu0 0.0
    %4356 = vmatpush1.msra.mxu0 0.0
    %4357 = vmatprep.subr.mxu0 0.0
    %4358 = vmatpush1.msra.mxu0 0.0
    %4359 = vmatprep.subr.mxu0 0.0
    %4360 = vmatpush1.msra.mxu0 0.0
    %4361 = vmatprep.subr.mxu0 0.0
    %4362 = vmatpush1.msra.mxu0 0.0
    %4363 = vmatprep.subr.mxu0 0.0
    %4364 = vmatpush1.msra.mxu0 0.0
    %4365 = vmatprep.subr.mxu0 0.0
    %4366 = vmatpush1.msra.mxu0 0.0
    %4367 = vmatprep.subr.mxu0 0.0
    %4368 = vmatpush1.msra.mxu0 0.0
    %4369 = vmatprep.subr.mxu0 0.0
    %4370 = vmatpush1.msra.mxu0 0.0
    %4371 = vmatprep.subr.mxu0 0.0
    %4372 = vmatpush1.msra.mxu0 0.0
    %4373 = vmatprep.subr.mxu0 0.0
    %4374 = vmatpush1.msra.mxu0 0.0
    %4375 = vmatprep.subr.mxu0 0.0
    %4376 = vmatpush1.msra.mxu0 0.0
    %4377 = vmatprep.subr.mxu0 0.0
    %4378 = vmatpush1.msra.mxu0 0.0
    %4379 = vmatprep.subr.mxu0 0.0
    %4380 = vmatpush1.msra.mxu0 0.0
    %4381 = vmatprep.subr.mxu0 0.0
    %4382 = vmatpush1.msra.mxu0 0.0
    %4383 = vmatprep.subr.mxu0 0.0
    %4384 = vmatpush1.msra.mxu0 0.0
    %4385 = vmatprep.subr.mxu0 0.0
    %4386 = vmatpush1.msra.mxu0 0.0
    %4387 = vmatprep.subr.mxu0 0.0
    %4388 = vmatpush1.msra.mxu0 0.0
    %4389 = vmatprep.subr.mxu0 0.0
    %4390 = vmatpush1.msra.mxu0 0.0
    %4391 = vmatprep.subr.mxu0 0.0
    %4392 = vmatpush1.msra.mxu0 0.0
    %4393 = vmatprep.subr.mxu0 0.0
    %4394 = vmatpush1.msra.mxu0 0.0
    %4395 = vmatprep.subr.mxu0 0.0
    %4396 = vmatpush1.msra.mxu0 0.0
    %4397 = vmatprep.subr.mxu0 0.0
    %4398 = vmatpush1.msra.mxu0 0.0
    %4399 = vmatprep.subr.mxu0 0.0
    %4400 = vmatpush1.msra.mxu0 0.0
    %4401 = vmatprep.subr.mxu0 0.0
    %4402 = vmatpush1.msra.mxu0 0.0
    %4403 = vmatprep.subr.mxu0 0.0
    %4404 = vmatpush1.msra.mxu0 0.0
    %4405 = vmatprep.mubr.f32.mxu0 0.0
    %4406 = vmatmul.mubr.f32.gmra.mrb[0].mxu0 %v4325
    %v4407 = vpop.f32.mrb[0].mxu0
    %v4408 = vadd.f32 0.0, %v4407
    %v4409 = vpop.f32.mrb[0].mxu0
    %v4410 = vadd.f32 0.0, %v4409
    %4411 = vmatprep.mubr.f32.mxu0 0.0
    %4412 = vmatmul.mubr.f32.gmra.mrb[0].mxu0 %v4328
    %v4413 = vpop.f32.mrb[0].mxu0
    %v4414 = vadd.f32 0.0, %v4413
    %v4415 = vpop.f32.mrb[0].mxu0
    %v4416 = vadd.f32 0.0, %v4415
    %4417 = vmatprep.mubr.f32.mxu0 0.0
    %4418 = vmatmul.mubr.f32.gmra.mrb[0].mxu0 %v4331
    %v4419 = vpop.f32.mrb[0].mxu0
    %v4420 = vadd.f32 0.0, %v4419
    %v4421 = vpop.f32.mrb[0].mxu0
    %v4422 = vadd.f32 0.0, %v4421
    %4423 = vmatprep.mubr.f32.mxu0 0.0
    %4424 = vmatmul.mubr.f32.gmra.mrb[0].mxu0 %v4334
    %v4425 = vpop.f32.mrb[0].mxu0
    %v4426 = vadd.f32 0.0, %v4425
    %v4427 = vpop.f32.mrb[0].mxu0
    %v4428 = vadd.f32 0.0, %v4427
    %4429 = vdwg.mxu0
    %v4431 = vsel %vm4323, %v4246, 0
    %v4434 = vsel %vm4323, %v4247, 0
    %v4437 = vsel %vm4323, %v4248, 0
    %v4440 = vsel %vm4323, %v4249, 0
    %v4443 = vsel %vm4336, %v4244, 0
    %v4446 = vsel %vm4336, %v4245, 0
    %4448 = vmatprep.subr.mxu0 %v4233
    %4449 = vmatpush1.msra.mxu0 %v4232
    %4450 = vmatprep.subr.mxu0 %v4235
    %4451 = vmatpush1.msra.mxu0 %v4234
    %4452 = vmatprep.subr.mxu0 %v4237
    %4453 = vmatpush1.msra.mxu0 %v4236
    %4454 = vmatprep.subr.mxu0 %v4239
    %4455 = vmatpush1.msra.mxu0 %v4238
    %4456 = vmatprep.subr.mxu0 %v4241
    %4457 = vmatpush1.msra.mxu0 %v4240
    %4458 = vmatprep.subr.mxu0 %v4243
    %4459 = vmatpush1.msra.mxu0 %v4242
    %4460 = vmatprep.subr.mxu0 %v4446
    %4461 = vmatpush1.msra.mxu0 %v4443
    %4462 = vmatprep.subr.mxu0 0.0
    %4463 = vmatpush1.msra.mxu0 0.0
    %4464 = vmatprep.subr.mxu0 0.0
    %4465 = vmatpush1.msra.mxu0 0.0
    %4466 = vmatprep.subr.mxu0 0.0
    %4467 = vmatpush1.msra.mxu0 0.0
    %4468 = vmatprep.subr.mxu0 0.0
    %4469 = vmatpush1.msra.mxu0 0.0
    %4470 = vmatprep.subr.mxu0 0.0
    %4471 = vmatpush1.msra.mxu0 0.0
    %4472 = vmatprep.subr.mxu0 0.0
    %4473 = vmatpush1.msra.mxu0 0.0
    %4474 = vmatprep.subr.mxu0 0.0
    %4475 = vmatpush1.msra.mxu0 0.0
    %4476 = vmatprep.subr.mxu0 0.0
    %4477 = vmatpush1.msra.mxu0 0.0
    %4478 = vmatprep.subr.mxu0 0.0
    %4479 = vmatpush1.msra.mxu0 0.0
    %4480 = vmatprep.subr.mxu0 0.0
    %4481 = vmatpush1.msra.mxu0 0.0
    %4482 = vmatprep.subr.mxu0 0.0
    %4483 = vmatpush1.msra.mxu0 0.0
    %4484 = vmatprep.subr.mxu0 0.0
    %4485 = vmatpush1.msra.mxu0 0.0
    %4486 = vmatprep.subr.mxu0 0.0
    %4487 = vmatpush1.msra.mxu0 0.0
    %4488 = vmatprep.subr.mxu0 0.0
    %4489 = vmatpush1.msra.mxu0 0.0
    %4490 = vmatprep.subr.mxu0 0.0
    %4491 = vmatpush1.msra.mxu0 0.0
    %4492 = vmatprep.subr.mxu0 0.0
    %4493 = vmatpush1.msra.mxu0 0.0
    %4494 = vmatprep.subr.mxu0 0.0
    %4495 = vmatpush1.msra.mxu0 0.0
    %4496 = vmatprep.subr.mxu0 0.0
    %4497 = vmatpush1.msra.mxu0 0.0
    %4498 = vmatprep.subr.mxu0 0.0
    %4499 = vmatpush1.msra.mxu0 0.0
    %4500 = vmatprep.subr.mxu0 0.0
    %4501 = vmatpush1.msra.mxu0 0.0
    %4502 = vmatprep.subr.mxu0 0.0
    %4503 = vmatpush1.msra.mxu0 0.0
    %4504 = vmatprep.subr.mxu0 0.0
    %4505 = vmatpush1.msra.mxu0 0.0
    %4506 = vmatprep.subr.mxu0 0.0
    %4507 = vmatpush1.msra.mxu0 0.0
    %4508 = vmatprep.subr.mxu0 0.0
    %4509 = vmatpush1.msra.mxu0 0.0
    %4510 = vmatprep.subr.mxu0 0.0
    %4511 = vmatpush1.msra.mxu0 0.0
    %4512 = vmatprep.mubr.f32.mxu0 0.0
    %4513 = vmatmul.mubr.f32.gmra.mrb[0].mxu0 %v4431
    %v4514 = vpop.f32.mrb[0].mxu0
    %v4515 = vadd.f32 %v4408, %v4514
    %v4516 = vpop.f32.mrb[0].mxu0
    %v4517 = vadd.f32 %v4410, %v4516
    %4518 = vmatprep.mubr.f32.mxu0 0.0
    %4519 = vmatmul.mubr.f32.gmra.mrb[0].mxu0 %v4434
    %v4520 = vpop.f32.mrb[0].mxu0
    %v4521 = vadd.f32 %v4414, %v4520
    %v4522 = vpop.f32.mrb[0].mxu0
    %v4523 = vadd.f32 %v4416, %v4522
    %4524 = vmatprep.mubr.f32.mxu0 0.0
    %4525 = vmatmul.mubr.f32.gmra.mrb[0].mxu0 %v4437
    %v4526 = vpop.f32.mrb[0].mxu0
    %v4527 = vadd.f32 %v4420, %v4526
    %v4528 = vpop.f32.mrb[0].mxu0
    %v4529 = vadd.f32 %v4422, %v4528
    %4530 = vmatprep.mubr.f32.mxu0 0.0
    %4531 = vmatmul.mubr.f32.gmra.mrb[0].mxu0 %v4440
    %v4532 = vpop.f32.mrb[0].mxu0
    %v4533 = vadd.f32 %v4426, %v4532
    %v4534 = vpop.f32.mrb[0].mxu0
    %v4535 = vadd.f32 %v4428, %v4534
    %4536 = vdwg.mxu0
    %4537 = vrot.lane.b32.xlu0 %v4120, 15
    %v4538 = vpop.permute.xlu0 %4537
    %4539 = vrot.lane.b32.xlu0 %v4121, 15
    %v4540 = vpop.permute.xlu0 %4539
    %4541 = vrot.lane.b32.xlu0 %v4122, 15
    %v4542 = vpop.permute.xlu0 %4541
    %4543 = vrot.lane.b32.xlu0 %v4123, 15
    %v4544 = vpop.permute.xlu0 %4543
    %4545 = vrot.lane.b32.xlu0 %v4124, 15
    %v4546 = vpop.permute.xlu0 %4545
    %4547 = vrot.lane.b32.xlu0 %v4125, 15
    %v4548 = vpop.permute.xlu0 %4547
    %4549 = vrot.lane.b32.xlu0 %v4126, 15
    %v4550 = vpop.permute.xlu0 %4549
    %4551 = vrot.lane.b32.xlu0 %v4127, 15
    %v4552 = vpop.permute.xlu0 %4551
    %4553 = vrot.lane.b32.xlu0 %v4128, 15
    %v4554 = vpop.permute.xlu0 %4553
    %4555 = vrot.lane.b32.xlu0 %v4129, 15
    %v4556 = vpop.permute.xlu0 %4555
    %4557 = vrot.lane.b32.xlu0 %v4130, 15
    %v4558 = vpop.permute.xlu0 %4557
    %4559 = vrot.lane.b32.xlu0 %v4131, 15
    %v4560 = vpop.permute.xlu0 %4559
    %4561 = vrot.lane.b32.xlu0 %v4132, 15
    %v4562 = vpop.permute.xlu0 %4561
    %4563 = vrot.lane.b32.xlu0 %v4133, 15
    %v4564 = vpop.permute.xlu0 %4563
    %4565 = vrot.lane.b32.xlu0 %v4134, 15
    %v4566 = vpop.permute.xlu0 %4565
    %4567 = vrot.lane.b32.xlu0 %v4135, 15
    %v4568 = vpop.permute.xlu0 %4567
    %4569 = vrot.lane.b32.xlu0 %v4136, 15
    %v4570 = vpop.permute.xlu0 %4569
    %4571 = vrot.lane.b32.xlu0 %v4137, 15
    %v4572 = vpop.permute.xlu0 %4571
    %4573 = vrot.lane.b32.xlu0 %v4138, 15
    %v4574 = vpop.permute.xlu0 %4573
    %4575 = vrot.lane.b32.xlu0 %v4139, 15
    %v4576 = vpop.permute.xlu0 %4575
    %4577 = vrot.lane.b32.xlu0 %v4140, 15
    %v4578 = vpop.permute.xlu0 %4577
    %v4579 = vsel %vm1476, %v4538, %v4540
    %v4580 = vsel %vm1476, %v4540, %v4542
    %v4581 = vsel %vm1476, %v4544, %v4546
    %v4582 = vsel %vm1476, %v4546, %v4548
    %v4583 = vsel %vm1476, %v4550, %v4552
    %v4584 = vsel %vm1476, %v4552, %v4554
    %v4585 = vsel %vm1476, %v4556, %v4558
    %v4586 = vsel %vm1476, %v4558, %v4560
    %v4587 = vsel %vm1476, %v4562, %v4564
    %v4588 = vsel %vm1476, %v4564, %v4566
    %v4589 = vsel %vm1476, %v4568, %v4570
    %v4590 = vsel %vm1476, %v4570, %v4572
    %v4591 = vsel %vm1476, %v4574, %v4576
    %v4592 = vsel %vm1476, %v4576, %v4578
    %v4607 = vsel %vm711, %v4579, 0.0
    %v4608 = vsel %vm712, %v4580, 0.0
    %v4609 = vsel %vm711, %v4581, 0.0
    %v4610 = vsel %vm712, %v4582, 0.0
    %v4611 = vsel %vm711, %v4583, 0.0
    %v4612 = vsel %vm712, %v4584, 0.0
    %v4613 = vsel %vm711, %v4585, 0.0
    %v4614 = vsel %vm712, %v4586, 0.0
    %v4615 = vsel %vm711, %v4587, 0.0
    %v4616 = vsel %vm712, %v4588, 0.0
    %v4617 = vsel %vm711, %v4589, 0.0
    %v4618 = vsel %vm712, %v4590, 0.0
    %v4619 = vsel %vm711, %v4591, 0.0
    %v4620 = vsel %vm712, %v4592, 0.0
    %s4621 = scalar_lea.vmem [#allocation8], 64
    %v4622 = vld [vmem:[%s4621] sm:$0xff]
    %v4623 = vld [vmem:[%s4621 + $0x8] sm:$0xff]
    %v4624 = vld [vmem:[%s4621 + $0x10] sm:$0xff]
    %v4625 = vld [vmem:[%s4621 + $0x18] sm:$0xff]
    %v4627 = vsel %vm4323, %v4622, 0
    %v4630 = vsel %vm4323, %v4623, 0
    %v4633 = vsel %vm4323, %v4624, 0
    %v4636 = vsel %vm4323, %v4625, 0
    %v4639 = vsel %vm4336, %v4619, 0
    %v4642 = vsel %vm4336, %v4620, 0
    %4644 = vmatprep.subr.mxu0 %v4608
    %4645 = vmatpush1.msra.mxu0 %v4607
    %4646 = vmatprep.subr.mxu0 %v4610
    %4647 = vmatpush1.msra.mxu0 %v4609
    %4648 = vmatprep.subr.mxu0 %v4612
    %4649 = vmatpush1.msra.mxu0 %v4611
    %4650 = vmatprep.subr.mxu0 %v4614
    %4651 = vmatpush1.msra.mxu0 %v4613
    %4652 = vmatprep.subr.mxu0 %v4616
    %4653 = vmatpush1.msra.mxu0 %v4615
    %4654 = vmatprep.subr.mxu0 %v4618
    %4655 = vmatpush1.msra.mxu0 %v4617
    %4656 = vmatprep.subr.mxu0 %v4642
    %4657 = vmatpush1.msra.mxu0 %v4639
    %4658 = vmatprep.subr.mxu0 0.0
    %4659 = vmatpush1.msra.mxu0 0.0
    %4660 = vmatprep.subr.mxu0 0.0
    %4661 = vmatpush1.msra.mxu0 0.0
    %4662 = vmatprep.subr.mxu0 0.0
    %4663 = vmatpush1.msra.mxu0 0.0
    %4664 = vmatprep.subr.mxu0 0.0
    %4665 = vmatpush1.msra.mxu0 0.0
    %4666 = vmatprep.subr.mxu0 0.0
    %4667 = vmatpush1.msra.mxu0 0.0
    %4668 = vmatprep.subr.mxu0 0.0
    %4669 = vmatpush1.msra.mxu0 0.0
    %4670 = vmatprep.subr.mxu0 0.0
    %4671 = vmatpush1.msra.mxu0 0.0
    %4672 = vmatprep.subr.mxu0 0.0
    %4673 = vmatpush1.msra.mxu0 0.0
    %4674 = vmatprep.subr.mxu0 0.0
    %4675 = vmatpush1.msra.mxu0 0.0
    %4676 = vmatprep.subr.mxu0 0.0
    %4677 = vmatpush1.msra.mxu0 0.0
    %4678 = vmatprep.subr.mxu0 0.0
    %4679 = vmatpush1.msra.mxu0 0.0
    %4680 = vmatprep.subr.mxu0 0.0
    %4681 = vmatpush1.msra.mxu0 0.0
    %4682 = vmatprep.subr.mxu0 0.0
    %4683 = vmatpush1.msra.mxu0 0.0
    %4684 = vmatprep.subr.mxu0 0.0
    %4685 = vmatpush1.msra.mxu0 0.0
    %4686 = vmatprep.subr.mxu0 0.0
    %4687 = vmatpush1.msra.mxu0 0.0
    %4688 = vmatprep.subr.mxu0 0.0
    %4689 = vmatpush1.msra.mxu0 0.0
    %4690 = vmatprep.subr.mxu0 0.0
    %4691 = vmatpush1.msra.mxu0 0.0
    %4692 = vmatprep.subr.mxu0 0.0
    %4693 = vmatpush1.msra.mxu0 0.0
    %4694 = vmatprep.subr.mxu0 0.0
    %4695 = vmatpush1.msra.mxu0 0.0
    %4696 = vmatprep.subr.mxu0 0.0
    %4697 = vmatpush1.msra.mxu0 0.0
    %4698 = vmatprep.subr.mxu0 0.0
    %4699 = vmatpush1.msra.mxu0 0.0
    %4700 = vmatprep.subr.mxu0 0.0
    %4701 = vmatpush1.msra.mxu0 0.0
    %4702 = vmatprep.subr.mxu0 0.0
    %4703 = vmatpush1.msra.mxu0 0.0
    %4704 = vmatprep.subr.mxu0 0.0
    %4705 = vmatpush1.msra.mxu0 0.0
    %4706 = vmatprep.subr.mxu0 0.0
    %4707 = vmatpush1.msra.mxu0 0.0
    %4708 = vmatprep.mubr.f32.mxu0 0.0
    %4709 = vmatmul.mubr.f32.gmra.mrb[0].mxu0 %v4627
    %v4710 = vpop.f32.mrb[0].mxu0
    %v4711 = vadd.f32 0.0, %v4710
    %v4712 = vpop.f32.mrb[0].mxu0
    %v4713 = vadd.f32 0.0, %v4712
    %4714 = vmatprep.mubr.f32.mxu0 0.0
    %4715 = vmatmul.mubr.f32.gmra.mrb[0].mxu0 %v4630
    %v4716 = vpop.f32.mrb[0].mxu0
    %v4717 = vadd.f32 0.0, %v4716
    %v4718 = vpop.f32.mrb[0].mxu0
    %v4719 = vadd.f32 0.0, %v4718
    %4720 = vmatprep.mubr.f32.mxu0 0.0
    %4721 = vmatmul.mubr.f32.gmra.mrb[0].mxu0 %v4633
    %v4722 = vpop.f32.mrb[0].mxu0
    %v4723 = vadd.f32 0.0, %v4722
    %v4724 = vpop.f32.mrb[0].mxu0
    %v4725 = vadd.f32 0.0, %v4724
    %4726 = vmatprep.mubr.f32.mxu0 0.0
    %4727 = vmatmul.mubr.f32.gmra.mrb[0].mxu0 %v4636
    %v4728 = vpop.f32.mrb[0].mxu0
    %v4729 = vadd.f32 0.0, %v4728
    %v4730 = vpop.f32.mrb[0].mxu0
    %v4731 = vadd.f32 0.0, %v4730
    %4732 = vdwg.mxu0
    %v4733 = vadd.f32 %v4515, %v4711
    %v4734 = vadd.f32 %v4517, %v4713
    %v4735 = vadd.f32 %v4521, %v4717
    %v4736 = vadd.f32 %v4523, %v4719
    %v4737 = vadd.f32 %v4527, %v4723
    %v4738 = vadd.f32 %v4529, %v4725
    %v4739 = vadd.f32 %v4533, %v4729
    %v4740 = vadd.f32 %v4535, %v4731
    %4741 = vrot.lane.b32.xlu0 %v4120, 1
    %v4742 = vpop.permute.xlu0 %4741
    %4743 = vrot.lane.b32.xlu0 %v4121, 1
    %v4744 = vpop.permute.xlu0 %4743
    %4745 = vrot.lane.b32.xlu0 %v4122, 1
    %v4746 = vpop.permute.xlu0 %4745
    %4747 = vrot.lane.b32.xlu0 %v4123, 1
    %v4748 = vpop.permute.xlu0 %4747
    %4749 = vrot.lane.b32.xlu0 %v4124, 1
    %v4750 = vpop.permute.xlu0 %4749
    %4751 = vrot.lane.b32.xlu0 %v4125, 1
    %v4752 = vpop.permute.xlu0 %4751
    %4753 = vrot.lane.b32.xlu0 %v4126, 1
    %v4754 = vpop.permute.xlu0 %4753
    %4755 = vrot.lane.b32.xlu0 %v4127, 1
    %v4756 = vpop.permute.xlu0 %4755
    %4757 = vrot.lane.b32.xlu0 %v4128, 1
    %v4758 = vpop.permute.xlu0 %4757
    %4759 = vrot.lane.b32.xlu0 %v4129, 1
    %v4760 = vpop.permute.xlu0 %4759
    %4761 = vrot.lane.b32.xlu0 %v4130, 1
    %v4762 = vpop.permute.xlu0 %4761
    %4763 = vrot.lane.b32.xlu0 %v4131, 1
    %v4764 = vpop.permute.xlu0 %4763
    %4765 = vrot.lane.b32.xlu0 %v4132, 1
    %v4766 = vpop.permute.xlu0 %4765
    %4767 = vrot.lane.b32.xlu0 %v4133, 1
    %v4768 = vpop.permute.xlu0 %4767
    %4769 = vrot.lane.b32.xlu0 %v4134, 1
    %v4770 = vpop.permute.xlu0 %4769
    %4771 = vrot.lane.b32.xlu0 %v4135, 1
    %v4772 = vpop.permute.xlu0 %4771
    %4773 = vrot.lane.b32.xlu0 %v4136, 1
    %v4774 = vpop.permute.xlu0 %4773
    %4775 = vrot.lane.b32.xlu0 %v4137, 1
    %v4776 = vpop.permute.xlu0 %4775
    %4777 = vrot.lane.b32.xlu0 %v4138, 1
    %v4778 = vpop.permute.xlu0 %4777
    %4779 = vrot.lane.b32.xlu0 %v4139, 1
    %v4780 = vpop.permute.xlu0 %4779
    %4781 = vrot.lane.b32.xlu0 %v4140, 1
    %v4782 = vpop.permute.xlu0 %4781
    %v4783 = vsel %vm1929, %v4742, %v4744
    %v4784 = vsel %vm1929, %v4744, %v4746
    %v4785 = vsel %vm1929, %v4748, %v4750
    %v4786 = vsel %vm1929, %v4750, %v4752
    %v4787 = vsel %vm1929, %v4754, %v4756
    %v4788 = vsel %vm1929, %v4756, %v4758
    %v4789 = vsel %vm1929, %v4760, %v4762
    %v4790 = vsel %vm1929, %v4762, %v4764
    %v4791 = vsel %vm1929, %v4766, %v4768
    %v4792 = vsel %vm1929, %v4768, %v4770
    %v4793 = vsel %vm1929, %v4772, %v4774
    %v4794 = vsel %vm1929, %v4774, %v4776
    %v4795 = vsel %vm1929, %v4778, %v4780
    %v4796 = vsel %vm1929, %v4780, %v4782
    %v4811 = vsel %vm299, %v4783, 0.0
    %v4812 = vsel %vm300, %v4784, 0.0
    %v4813 = vsel %vm299, %v4785, 0.0
    %v4814 = vsel %vm300, %v4786, 0.0
    %v4815 = vsel %vm299, %v4787, 0.0
    %v4816 = vsel %vm300, %v4788, 0.0
    %v4817 = vsel %vm299, %v4789, 0.0
    %v4818 = vsel %vm300, %v4790, 0.0
    %v4819 = vsel %vm299, %v4791, 0.0
    %v4820 = vsel %vm300, %v4792, 0.0
    %v4821 = vsel %vm299, %v4793, 0.0
    %v4822 = vsel %vm300, %v4794, 0.0
    %v4823 = vsel %vm299, %v4795, 0.0
    %v4824 = vsel %vm300, %v4796, 0.0
    %s4825 = scalar_lea.vmem [#allocation8], 96
    %v4826 = vld [vmem:[%s4825] sm:$0xff]
    %v4827 = vld [vmem:[%s4825 + $0x8] sm:$0xff]
    %v4828 = vld [vmem:[%s4825 + $0x10] sm:$0xff]
    %v4829 = vld [vmem:[%s4825 + $0x18] sm:$0xff]
    %v4831 = vsel %vm4323, %v4826, 0
    %v4834 = vsel %vm4323, %v4827, 0
    %v4837 = vsel %vm4323, %v4828, 0
    %v4840 = vsel %vm4323, %v4829, 0
    %v4843 = vsel %vm4336, %v4823, 0
    %v4846 = vsel %vm4336, %v4824, 0
    %4848 = vmatprep.subr.mxu0 %v4812
    %4849 = vmatpush1.msra.mxu0 %v4811
    %4850 = vmatprep.subr.mxu0 %v4814
    %4851 = vmatpush1.msra.mxu0 %v4813
    %4852 = vmatprep.subr.mxu0 %v4816
    %4853 = vmatpush1.msra.mxu0 %v4815
    %4854 = vmatprep.subr.mxu0 %v4818
    %4855 = vmatpush1.msra.mxu0 %v4817
    %4856 = vmatprep.subr.mxu0 %v4820
    %4857 = vmatpush1.msra.mxu0 %v4819
    %4858 = vmatprep.subr.mxu0 %v4822
    %4859 = vmatpush1.msra.mxu0 %v4821
    %4860 = vmatprep.subr.mxu0 %v4846
    %4861 = vmatpush1.msra.mxu0 %v4843
    %4862 = vmatprep.subr.mxu0 0.0
    %4863 = vmatpush1.msra.mxu0 0.0
    %4864 = vmatprep.subr.mxu0 0.0
    %4865 = vmatpush1.msra.mxu0 0.0
    %4866 = vmatprep.subr.mxu0 0.0
    %4867 = vmatpush1.msra.mxu0 0.0
    %4868 = vmatprep.subr.mxu0 0.0
    %4869 = vmatpush1.msra.mxu0 0.0
    %4870 = vmatprep.subr.mxu0 0.0
    %4871 = vmatpush1.msra.mxu0 0.0
    %4872 = vmatprep.subr.mxu0 0.0
    %4873 = vmatpush1.msra.mxu0 0.0
    %4874 = vmatprep.subr.mxu0 0.0
    %4875 = vmatpush1.msra.mxu0 0.0
    %4876 = vmatprep.subr.mxu0 0.0
    %4877 = vmatpush1.msra.mxu0 0.0
    %4878 = vmatprep.subr.mxu0 0.0
    %4879 = vmatpush1.msra.mxu0 0.0
    %4880 = vmatprep.subr.mxu0 0.0
    %4881 = vmatpush1.msra.mxu0 0.0
    %4882 = vmatprep.subr.mxu0 0.0
    %4883 = vmatpush1.msra.mxu0 0.0
    %4884 = vmatprep.subr.mxu0 0.0
    %4885 = vmatpush1.msra.mxu0 0.0
    %4886 = vmatprep.subr.mxu0 0.0
    %4887 = vmatpush1.msra.mxu0 0.0
    %4888 = vmatprep.subr.mxu0 0.0
    %4889 = vmatpush1.msra.mxu0 0.0
    %4890 = vmatprep.subr.mxu0 0.0
    %4891 = vmatpush1.msra.mxu0 0.0
    %4892 = vmatprep.subr.mxu0 0.0
    %4893 = vmatpush1.msra.mxu0 0.0
    %4894 = vmatprep.subr.mxu0 0.0
    %4895 = vmatpush1.msra.mxu0 0.0
    %4896 = vmatprep.subr.mxu0 0.0
    %4897 = vmatpush1.msra.mxu0 0.0
    %4898 = vmatprep.subr.mxu0 0.0
    %4899 = vmatpush1.msra.mxu0 0.0
    %4900 = vmatprep.subr.mxu0 0.0
    %4901 = vmatpush1.msra.mxu0 0.0
    %4902 = vmatprep.subr.mxu0 0.0
    %4903 = vmatpush1.msra.mxu0 0.0
    %4904 = vmatprep.subr.mxu0 0.0
    %4905 = vmatpush1.msra.mxu0 0.0
    %4906 = vmatprep.subr.mxu0 0.0
    %4907 = vmatpush1.msra.mxu0 0.0
    %4908 = vmatprep.subr.mxu0 0.0
    %4909 = vmatpush1.msra.mxu0 0.0
    %4910 = vmatprep.subr.mxu0 0.0
    %4911 = vmatpush1.msra.mxu0 0.0
    %4912 = vmatprep.mubr.f32.mxu0 0.0
    %4913 = vmatmul.mubr.f32.gmra.mrb[0].mxu0 %v4831
    %v4914 = vpop.f32.mrb[0].mxu0
    %v4915 = vadd.f32 0.0, %v4914
    %v4916 = vpop.f32.mrb[0].mxu0
    %v4917 = vadd.f32 0.0, %v4916
    %4918 = vmatprep.mubr.f32.mxu0 0.0
    %4919 = vmatmul.mubr.f32.gmra.mrb[0].mxu0 %v4834
    %v4920 = vpop.f32.mrb[0].mxu0
    %v4921 = vadd.f32 0.0, %v4920
    %v4922 = vpop.f32.mrb[0].mxu0
    %v4923 = vadd.f32 0.0, %v4922
    %4924 = vmatprep.mubr.f32.mxu0 0.0
    %4925 = vmatmul.mubr.f32.gmra.mrb[0].mxu0 %v4837
    %v4926 = vpop.f32.mrb[0].mxu0
    %v4927 = vadd.f32 0.0, %v4926
    %v4928 = vpop.f32.mrb[0].mxu0
    %v4929 = vadd.f32 0.0, %v4928
    %4930 = vmatprep.mubr.f32.mxu0 0.0
    %4931 = vmatmul.mubr.f32.gmra.mrb[0].mxu0 %v4840
    %v4932 = vpop.f32.mrb[0].mxu0
    %v4933 = vadd.f32 0.0, %v4932
    %v4934 = vpop.f32.mrb[0].mxu0
    %v4935 = vadd.f32 0.0, %v4934
    %4936 = vdwg.mxu0
    %v4937 = vadd.f32 %v4733, %v4915
    %v4938 = vadd.f32 %v4734, %v4917
    %v4939 = vadd.f32 %v4735, %v4921
    %v4940 = vadd.f32 %v4736, %v4923
    %v4941 = vadd.f32 %v4737, %v4927
    %v4942 = vadd.f32 %v4738, %v4929
    %v4943 = vadd.f32 %v4739, %v4933
    %v4944 = vadd.f32 %v4740, %v4935
    %s4945 = scalar_lea.vmem [#allocation8], 128
    %v4946 = vld [vmem:[%s4945] sm:$0xff]
    %v4947 = vld [vmem:[%s4945 + $0x8] sm:$0xff]
    %v4948 = vld [vmem:[%s4945 + $0x10] sm:$0xff]
    %v4949 = vld [vmem:[%s4945 + $0x18] sm:$0xff]
    %v4951 = vsel %vm4323, %v4946, 0
    %v4954 = vsel %vm4323, %v4947, 0
    %v4957 = vsel %vm4323, %v4948, 0
    %v4960 = vsel %vm4323, %v4949, 0
    %v4962 = vsel %vm4336, %v4139, 0
    %v4964 = vsel %vm4336, %v4140, 0
    %4966 = vmatprep.subr.mxu0 %v4122
    %4967 = vmatpush1.msra.mxu0 %v4121
    %4968 = vmatprep.subr.mxu0 %v4125
    %4969 = vmatpush1.msra.mxu0 %v4124
    %4970 = vmatprep.subr.mxu0 %v4128
    %4971 = vmatpush1.msra.mxu0 %v4127
    %4972 = vmatprep.subr.mxu0 %v4131
    %4973 = vmatpush1.msra.mxu0 %v4130
    %4974 = vmatprep.subr.mxu0 %v4134
    %4975 = vmatpush1.msra.mxu0 %v4133
    %4976 = vmatprep.subr.mxu0 %v4137
    %4977 = vmatpush1.msra.mxu0 %v4136
    %4978 = vmatprep.subr.mxu0 %v4964
    %4979 = vmatpush1.msra.mxu0 %v4962
    %4980 = vmatprep.subr.mxu0 0.0
    %4981 = vmatpush1.msra.mxu0 0.0
    %4982 = vmatprep.subr.mxu0 0.0
    %4983 = vmatpush1.msra.mxu0 0.0
    %4984 = vmatprep.subr.mxu0 0.0
    %4985 = vmatpush1.msra.mxu0 0.0
    %4986 = vmatprep.subr.mxu0 0.0
    %4987 = vmatpush1.msra.mxu0 0.0
    %4988 = vmatprep.subr.mxu0 0.0
    %4989 = vmatpush1.msra.mxu0 0.0
    %4990 = vmatprep.subr.mxu0 0.0
    %4991 = vmatpush1.msra.mxu0 0.0
    %4992 = vmatprep.subr.mxu0 0.0
    %4993 = vmatpush1.msra.mxu0 0.0
    %4994 = vmatprep.subr.mxu0 0.0
    %4995 = vmatpush1.msra.mxu0 0.0
    %4996 = vmatprep.subr.mxu0 0.0
    %4997 = vmatpush1.msra.mxu0 0.0
    %4998 = vmatprep.subr.mxu0 0.0
    %4999 = vmatpush1.msra.mxu0 0.0
    %5000 = vmatprep.subr.mxu0 0.0
    %5001 = vmatpush1.msra.mxu0 0.0
    %5002 = vmatprep.subr.mxu0 0.0
    %5003 = vmatpush1.msra.mxu0 0.0
    %5004 = vmatprep.subr.mxu0 0.0
    %5005 = vmatpush1.msra.mxu0 0.0
    %5006 = vmatprep.subr.mxu0 0.0
    %5007 = vmatpush1.msra.mxu0 0.0
    %5008 = vmatprep.subr.mxu0 0.0
    %5009 = vmatpush1.msra.mxu0 0.0
    %5010 = vmatprep.subr.mxu0 0.0
    %5011 = vmatpush1.msra.mxu0 0.0
    %5012 = vmatprep.subr.mxu0 0.0
    %5013 = vmatpush1.msra.mxu0 0.0
    %5014 = vmatprep.subr.mxu0 0.0
    %5015 = vmatpush1.msra.mxu0 0.0
    %5016 = vmatprep.subr.mxu0 0.0
    %5017 = vmatpush1.msra.mxu0 0.0
    %5018 = vmatprep.subr.mxu0 0.0
    %5019 = vmatpush1.msra.mxu0 0.0
    %5020 = vmatprep.subr.mxu0 0.0
    %5021 = vmatpush1.msra.mxu0 0.0
    %5022 = vmatprep.subr.mxu0 0.0
    %5023 = vmatpush1.msra.mxu0 0.0
    %5024 = vmatprep.subr.mxu0 0.0
    %5025 = vmatpush1.msra.mxu0 0.0
    %5026 = vmatprep.subr.mxu0 0.0
    %5027 = vmatpush1.msra.mxu0 0.0
    %5028 = vmatprep.subr.mxu0 0.0
    %5029 = vmatpush1.msra.mxu0 0.0
    %5030 = vmatprep.mubr.f32.mxu0 0.0
    %5031 = vmatmul.mubr.f32.gmra.mrb[0].mxu0 %v4951
    %v5032 = vpop.f32.mrb[0].mxu0
    %v5033 = vadd.f32 0.0, %v5032
    %v5034 = vpop.f32.mrb[0].mxu0
    %v5035 = vadd.f32 0.0, %v5034
    %5036 = vmatprep.mubr.f32.mxu0 0.0
    %5037 = vmatmul.mubr.f32.gmra.mrb[0].mxu0 %v4954
    %v5038 = vpop.f32.mrb[0].mxu0
    %v5039 = vadd.f32 0.0, %v5038
    %v5040 = vpop.f32.mrb[0].mxu0
    %v5041 = vadd.f32 0.0, %v5040
    %5042 = vmatprep.mubr.f32.mxu0 0.0
    %5043 = vmatmul.mubr.f32.gmra.mrb[0].mxu0 %v4957
    %v5044 = vpop.f32.mrb[0].mxu0
    %v5045 = vadd.f32 0.0, %v5044
    %v5046 = vpop.f32.mrb[0].mxu0
    %v5047 = vadd.f32 0.0, %v5046
    %5048 = vmatprep.mubr.f32.mxu0 0.0
    %5049 = vmatmul.mubr.f32.gmra.mrb[0].mxu0 %v4960
    %v5050 = vpop.f32.mrb[0].mxu0
    %v5051 = vadd.f32 0.0, %v5050
    %v5052 = vpop.f32.mrb[0].mxu0
    %v5053 = vadd.f32 0.0, %v5052
    %5054 = vdwg.mxu0
    %v5055 = vadd.f32 %v4937, %v5033
    %v5056 = vadd.f32 %v4938, %v5035
    %v5057 = vadd.f32 %v4939, %v5039
    %v5058 = vadd.f32 %v4940, %v5041
    %v5059 = vadd.f32 %v4941, %v5045
    %v5060 = vadd.f32 %v4942, %v5047
    %v5061 = vadd.f32 %v4943, %v5051
    %v5062 = vadd.f32 %v4944, %v5053
    %v5063 = vld [vmem:[#allocation3 + $0x8] sm:$0xff]
    %v5064 = vld [vmem:[#allocation3 + $0x10] sm:$0xff]
    %v5065 = vld [vmem:[#allocation3 + $0x18] sm:$0xff]
    %v5066 = vld [vmem:[#allocation3 + $0x28] sm:$0xff]
    %v5067 = vld [vmem:[#allocation3 + $0x30] sm:$0xff]
    %v5068 = vld [vmem:[#allocation3 + $0x38] sm:$0xff]
    %v5069 = vld [vmem:[#allocation3 + $0x48] sm:$0xff]
    %v5070 = vld [vmem:[#allocation3 + $0x50] sm:$0xff]
    %v5071 = vld [vmem:[#allocation3 + $0x58] sm:$0xff]
    %v5072 = vld [vmem:[#allocation3 + $0x68] sm:$0xff]
    %v5073 = vld [vmem:[#allocation3 + $0x70] sm:$0xff]
    %v5074 = vld [vmem:[#allocation3 + $0x78] sm:$0xff]
    %v5075 = vld [vmem:[#allocation3 + $0x88] sm:$0xff]
    %v5076 = vld [vmem:[#allocation3 + $0x90] sm:$0xff]
    %v5077 = vld [vmem:[#allocation3 + $0x98] sm:$0xff]
    %v5078 = vld [vmem:[#allocation3 + $0xa8] sm:$0xff]
    %v5079 = vld [vmem:[#allocation3 + $0xb0] sm:$0xff]
    %v5080 = vld [vmem:[#allocation3 + $0xb8] sm:$0xff]
    %v5081 = vld [vmem:[#allocation3 + $0xc8] sm:$0x1]
    %v5082 = vld [vmem:[#allocation3 + $0xd0] sm:$0x1]
    %v5083 = vld [vmem:[#allocation3 + $0xd8] sm:$0x1]
    %5105 = vrot.lane.b32.xlu0 %v5063, 127
    %v5106 = vpop.permute.xlu0 %5105
    %5107 = vrot.lane.b32.xlu0 %v5064, 127
    %v5108 = vpop.permute.xlu0 %5107
    %5109 = vrot.lane.b32.xlu0 %v5065, 127
    %v5110 = vpop.permute.xlu0 %5109
    %5111 = vrot.lane.b32.xlu0 %v5066, 127
    %v5112 = vpop.permute.xlu0 %5111
    %5113 = vrot.lane.b32.xlu0 %v5067, 127
    %v5114 = vpop.permute.xlu0 %5113
    %5115 = vrot.lane.b32.xlu0 %v5068, 127
    %v5116 = vpop.permute.xlu0 %5115
    %5117 = vrot.lane.b32.xlu0 %v5069, 127
    %v5118 = vpop.permute.xlu0 %5117
    %5119 = vrot.lane.b32.xlu0 %v5070, 127
    %v5120 = vpop.permute.xlu0 %5119
    %5121 = vrot.lane.b32.xlu0 %v5071, 127
    %v5122 = vpop.permute.xlu0 %5121
    %5123 = vrot.lane.b32.xlu0 %v5072, 127
    %v5124 = vpop.permute.xlu0 %5123
    %5125 = vrot.lane.b32.xlu0 %v5073, 127
    %v5126 = vpop.permute.xlu0 %5125
    %5127 = vrot.lane.b32.xlu0 %v5074, 127
    %v5128 = vpop.permute.xlu0 %5127
    %5129 = vrot.lane.b32.xlu0 %v5075, 127
    %v5130 = vpop.permute.xlu0 %5129
    %5131 = vrot.lane.b32.xlu0 %v5076, 127
    %v5132 = vpop.permute.xlu0 %5131
    %5133 = vrot.lane.b32.xlu0 %v5077, 127
    %v5134 = vpop.permute.xlu0 %5133
    %5135 = vrot.lane.b32.xlu0 %v5078, 127
    %v5136 = vpop.permute.xlu0 %5135
    %5137 = vrot.lane.b32.xlu0 %v5079, 127
    %v5138 = vpop.permute.xlu0 %5137
    %5139 = vrot.lane.b32.xlu0 %v5080, 127
    %v5140 = vpop.permute.xlu0 %5139
    %5141 = vrot.lane.b32.xlu0 %v5081, 127
    %v5142 = vpop.permute.xlu0 %5141
    %5143 = vrot.lane.b32.xlu0 %v5082, 127
    %v5144 = vpop.permute.xlu0 %5143
    %5145 = vrot.lane.b32.xlu0 %v5083, 127
    %v5146 = vpop.permute.xlu0 %5145
    %v5147 = vsel %vm2224, %v5106, %v5108
    %v5148 = vsel %vm2224, %v5108, %v5110
    %v5149 = vsel %vm2224, %v5112, %v5114
    %v5150 = vsel %vm2224, %v5114, %v5116
    %v5151 = vsel %vm2224, %v5118, %v5120
    %v5152 = vsel %vm2224, %v5120, %v5122
    %v5153 = vsel %vm2224, %v5124, %v5126
    %v5154 = vsel %vm2224, %v5126, %v5128
    %v5155 = vsel %vm2224, %v5130, %v5132
    %v5156 = vsel %vm2224, %v5132, %v5134
    %v5157 = vsel %vm2224, %v5136, %v5138
    %v5158 = vsel %vm2224, %v5138, %v5140
    %v5159 = vsel %vm2224, %v5142, %v5144
    %v5160 = vsel %vm2224, %v5144, %v5146
    %v5175 = vsel %vm711, %v5147, 0.0
    %v5176 = vsel %vm712, %v5148, 0.0
    %v5177 = vsel %vm711, %v5149, 0.0
    %v5178 = vsel %vm712, %v5150, 0.0
    %v5179 = vsel %vm711, %v5151, 0.0
    %v5180 = vsel %vm712, %v5152, 0.0
    %v5181 = vsel %vm711, %v5153, 0.0
    %v5182 = vsel %vm712, %v5154, 0.0
    %v5183 = vsel %vm711, %v5155, 0.0
    %v5184 = vsel %vm712, %v5156, 0.0
    %v5185 = vsel %vm711, %v5157, 0.0
    %v5186 = vsel %vm712, %v5158, 0.0
    %v5187 = vsel %vm711, %v5159, 0.0
    %v5188 = vsel %vm712, %v5160, 0.0
    %s5189 = scalar_lea.vmem [#allocation8], 160
    %v5190 = vld [vmem:[%s5189] sm:$0xff]
    %v5191 = vld [vmem:[%s5189 + $0x8] sm:$0xff]
    %v5192 = vld [vmem:[%s5189 + $0x10] sm:$0xff]
    %v5193 = vld [vmem:[%s5189 + $0x18] sm:$0xff]
    %v5195 = vsel %vm4323, %v5190, 0
    %v5198 = vsel %vm4323, %v5191, 0
    %v5201 = vsel %vm4323, %v5192, 0
    %v5204 = vsel %vm4323, %v5193, 0
    %v5207 = vsel %vm4336, %v5187, 0
    %v5210 = vsel %vm4336, %v5188, 0
    %5212 = vmatprep.subr.mxu0 %v5176
    %5213 = vmatpush1.msra.mxu0 %v5175
    %5214 = vmatprep.subr.mxu0 %v5178
    %5215 = vmatpush1.msra.mxu0 %v5177
    %5216 = vmatprep.subr.mxu0 %v5180
    %5217 = vmatpush1.msra.mxu0 %v5179
    %5218 = vmatprep.subr.mxu0 %v5182
    %5219 = vmatpush1.msra.mxu0 %v5181
    %5220 = vmatprep.subr.mxu0 %v5184
    %5221 = vmatpush1.msra.mxu0 %v5183
    %5222 = vmatprep.subr.mxu0 %v5186
    %5223 = vmatpush1.msra.mxu0 %v5185
    %5224 = vmatprep.subr.mxu0 %v5210
    %5225 = vmatpush1.msra.mxu0 %v5207
    %5226 = vmatprep.subr.mxu0 0.0
    %5227 = vmatpush1.msra.mxu0 0.0
    %5228 = vmatprep.subr.mxu0 0.0
    %5229 = vmatpush1.msra.mxu0 0.0
    %5230 = vmatprep.subr.mxu0 0.0
    %5231 = vmatpush1.msra.mxu0 0.0
    %5232 = vmatprep.subr.mxu0 0.0
    %5233 = vmatpush1.msra.mxu0 0.0
    %5234 = vmatprep.subr.mxu0 0.0
    %5235 = vmatpush1.msra.mxu0 0.0
    %5236 = vmatprep.subr.mxu0 0.0
    %5237 = vmatpush1.msra.mxu0 0.0
    %5238 = vmatprep.subr.mxu0 0.0
    %5239 = vmatpush1.msra.mxu0 0.0
    %5240 = vmatprep.subr.mxu0 0.0
    %5241 = vmatpush1.msra.mxu0 0.0
    %5242 = vmatprep.subr.mxu0 0.0
    %5243 = vmatpush1.msra.mxu0 0.0
    %5244 = vmatprep.subr.mxu0 0.0
    %5245 = vmatpush1.msra.mxu0 0.0
    %5246 = vmatprep.subr.mxu0 0.0
    %5247 = vmatpush1.msra.mxu0 0.0
    %5248 = vmatprep.subr.mxu0 0.0
    %5249 = vmatpush1.msra.mxu0 0.0
    %5250 = vmatprep.subr.mxu0 0.0
    %5251 = vmatpush1.msra.mxu0 0.0
    %5252 = vmatprep.subr.mxu0 0.0
    %5253 = vmatpush1.msra.mxu0 0.0
    %5254 = vmatprep.subr.mxu0 0.0
    %5255 = vmatpush1.msra.mxu0 0.0
    %5256 = vmatprep.subr.mxu0 0.0
    %5257 = vmatpush1.msra.mxu0 0.0
    %5258 = vmatprep.subr.mxu0 0.0
    %5259 = vmatpush1.msra.mxu0 0.0
    %5260 = vmatprep.subr.mxu0 0.0
    %5261 = vmatpush1.msra.mxu0 0.0
    %5262 = vmatprep.subr.mxu0 0.0
    %5263 = vmatpush1.msra.mxu0 0.0
    %5264 = vmatprep.subr.mxu0 0.0
    %5265 = vmatpush1.msra.mxu0 0.0
    %5266 = vmatprep.subr.mxu0 0.0
    %5267 = vmatpush1.msra.mxu0 0.0
    %5268 = vmatprep.subr.mxu0 0.0
    %5269 = vmatpush1.msra.mxu0 0.0
    %5270 = vmatprep.subr.mxu0 0.0
    %5271 = vmatpush1.msra.mxu0 0.0
    %5272 = vmatprep.subr.mxu0 0.0
    %5273 = vmatpush1.msra.mxu0 0.0
    %5274 = vmatprep.subr.mxu0 0.0
    %5275 = vmatpush1.msra.mxu0 0.0
    %5276 = vmatprep.mubr.f32.mxu0 0.0
    %5277 = vmatmul.mubr.f32.gmra.mrb[0].mxu0 %v5195
    %v5278 = vpop.f32.mrb[0].mxu0
    %v5279 = vadd.f32 0.0, %v5278
    %v5280 = vpop.f32.mrb[0].mxu0
    %v5281 = vadd.f32 0.0, %v5280
    %5282 = vmatprep.mubr.f32.mxu0 0.0
    %5283 = vmatmul.mubr.f32.gmra.mrb[0].mxu0 %v5198
    %v5284 = vpop.f32.mrb[0].mxu0
    %v5285 = vadd.f32 0.0, %v5284
    %v5286 = vpop.f32.mrb[0].mxu0
    %v5287 = vadd.f32 0.0, %v5286
    %5288 = vmatprep.mubr.f32.mxu0 0.0
    %5289 = vmatmul.mubr.f32.gmra.mrb[0].mxu0 %v5201
    %v5290 = vpop.f32.mrb[0].mxu0
    %v5291 = vadd.f32 0.0, %v5290
    %v5292 = vpop.f32.mrb[0].mxu0
    %v5293 = vadd.f32 0.0, %v5292
    %5294 = vmatprep.mubr.f32.mxu0 0.0
    %5295 = vmatmul.mubr.f32.gmra.mrb[0].mxu0 %v5204
    %v5296 = vpop.f32.mrb[0].mxu0
    %v5297 = vadd.f32 0.0, %v5296
    %v5298 = vpop.f32.mrb[0].mxu0
    %v5299 = vadd.f32 0.0, %v5298
    %5300 = vdwg.mxu0
    %v5301 = vadd.f32 %v5055, %v5279
    %v5302 = vadd.f32 %v5056, %v5281
    %v5303 = vadd.f32 %v5057, %v5285
    %v5304 = vadd.f32 %v5058, %v5287
    %v5305 = vadd.f32 %v5059, %v5291
    %v5306 = vadd.f32 %v5060, %v5293
    %v5307 = vadd.f32 %v5061, %v5297
    %v5308 = vadd.f32 %v5062, %v5299
    %5309 = vrot.lane.b32.xlu0 %v5063, 113
    %v5310 = vpop.permute.xlu0 %5309
    %5311 = vrot.lane.b32.xlu0 %v5064, 113
    %v5312 = vpop.permute.xlu0 %5311
    %5313 = vrot.lane.b32.xlu0 %v5065, 113
    %v5314 = vpop.permute.xlu0 %5313
    %5315 = vrot.lane.b32.xlu0 %v5066, 113
    %v5316 = vpop.permute.xlu0 %5315
    %5317 = vrot.lane.b32.xlu0 %v5067, 113
    %v5318 = vpop.permute.xlu0 %5317
    %5319 = vrot.lane.b32.xlu0 %v5068, 113
    %v5320 = vpop.permute.xlu0 %5319
    %5321 = vrot.lane.b32.xlu0 %v5069, 113
    %v5322 = vpop.permute.xlu0 %5321
    %5323 = vrot.lane.b32.xlu0 %v5070, 113
    %v5324 = vpop.permute.xlu0 %5323
    %5325 = vrot.lane.b32.xlu0 %v5071, 113
    %v5326 = vpop.permute.xlu0 %5325
    %5327 = vrot.lane.b32.xlu0 %v5072, 113
    %v5328 = vpop.permute.xlu0 %5327
    %5329 = vrot.lane.b32.xlu0 %v5073, 113
    %v5330 = vpop.permute.xlu0 %5329
    %5331 = vrot.lane.b32.xlu0 %v5074, 113
    %v5332 = vpop.permute.xlu0 %5331
    %5333 = vrot.lane.b32.xlu0 %v5075, 113
    %v5334 = vpop.permute.xlu0 %5333
    %5335 = vrot.lane.b32.xlu0 %v5076, 113
    %v5336 = vpop.permute.xlu0 %5335
    %5337 = vrot.lane.b32.xlu0 %v5077, 113
    %v5338 = vpop.permute.xlu0 %5337
    %5339 = vrot.lane.b32.xlu0 %v5078, 113
    %v5340 = vpop.permute.xlu0 %5339
    %5341 = vrot.lane.b32.xlu0 %v5079, 113
    %v5342 = vpop.permute.xlu0 %5341
    %5343 = vrot.lane.b32.xlu0 %v5080, 113
    %v5344 = vpop.permute.xlu0 %5343
    %5345 = vrot.lane.b32.xlu0 %v5081, 113
    %v5346 = vpop.permute.xlu0 %5345
    %5347 = vrot.lane.b32.xlu0 %v5082, 113
    %v5348 = vpop.permute.xlu0 %5347
    %5349 = vrot.lane.b32.xlu0 %v5083, 113
    %v5350 = vpop.permute.xlu0 %5349
    %v5351 = vsel %vm2677, %v5310, %v5312
    %v5352 = vsel %vm2677, %v5312, %v5314
    %v5353 = vsel %vm2677, %v5316, %v5318
    %v5354 = vsel %vm2677, %v5318, %v5320
    %v5355 = vsel %vm2677, %v5322, %v5324
    %v5356 = vsel %vm2677, %v5324, %v5326
    %v5357 = vsel %vm2677, %v5328, %v5330
    %v5358 = vsel %vm2677, %v5330, %v5332
    %v5359 = vsel %vm2677, %v5334, %v5336
    %v5360 = vsel %vm2677, %v5336, %v5338
    %v5361 = vsel %vm2677, %v5340, %v5342
    %v5362 = vsel %vm2677, %v5342, %v5344
    %v5363 = vsel %vm2677, %v5346, %v5348
    %v5364 = vsel %vm2677, %v5348, %v5350
    %v5379 = vsel %vm299, %v5351, 0.0
    %v5380 = vsel %vm300, %v5352, 0.0
    %v5381 = vsel %vm299, %v5353, 0.0
    %v5382 = vsel %vm300, %v5354, 0.0
    %v5383 = vsel %vm299, %v5355, 0.0
    %v5384 = vsel %vm300, %v5356, 0.0
    %v5385 = vsel %vm299, %v5357, 0.0
    %v5386 = vsel %vm300, %v5358, 0.0
    %v5387 = vsel %vm299, %v5359, 0.0
    %v5388 = vsel %vm300, %v5360, 0.0
    %v5389 = vsel %vm299, %v5361, 0.0
    %v5390 = vsel %vm300, %v5362, 0.0
    %v5391 = vsel %vm299, %v5363, 0.0
    %v5392 = vsel %vm300, %v5364, 0.0
    %s5393 = scalar_lea.vmem [#allocation8], 192
    %v5394 = vld [vmem:[%s5393] sm:$0xff]
    %v5395 = vld [vmem:[%s5393 + $0x8] sm:$0xff]
    %v5396 = vld [vmem:[%s5393 + $0x10] sm:$0xff]
    %v5397 = vld [vmem:[%s5393 + $0x18] sm:$0xff]
    %v5399 = vsel %vm4323, %v5394, 0
    %v5402 = vsel %vm4323, %v5395, 0
    %v5405 = vsel %vm4323, %v5396, 0
    %v5408 = vsel %vm4323, %v5397, 0
    %v5411 = vsel %vm4336, %v5391, 0
    %v5414 = vsel %vm4336, %v5392, 0
    %5416 = vmatprep.subr.mxu0 %v5380
    %5417 = vmatpush1.msra.mxu0 %v5379
    %5418 = vmatprep.subr.mxu0 %v5382
    %5419 = vmatpush1.msra.mxu0 %v5381
    %5420 = vmatprep.subr.mxu0 %v5384
    %5421 = vmatpush1.msra.mxu0 %v5383
    %5422 = vmatprep.subr.mxu0 %v5386
    %5423 = vmatpush1.msra.mxu0 %v5385
    %5424 = vmatprep.subr.mxu0 %v5388
    %5425 = vmatpush1.msra.mxu0 %v5387
    %5426 = vmatprep.subr.mxu0 %v5390
    %5427 = vmatpush1.msra.mxu0 %v5389
    %5428 = vmatprep.subr.mxu0 %v5414
    %5429 = vmatpush1.msra.mxu0 %v5411
    %5430 = vmatprep.subr.mxu0 0.0
    %5431 = vmatpush1.msra.mxu0 0.0
    %5432 = vmatprep.subr.mxu0 0.0
    %5433 = vmatpush1.msra.mxu0 0.0
    %5434 = vmatprep.subr.mxu0 0.0
    %5435 = vmatpush1.msra.mxu0 0.0
    %5436 = vmatprep.subr.mxu0 0.0
    %5437 = vmatpush1.msra.mxu0 0.0
    %5438 = vmatprep.subr.mxu0 0.0
    %5439 = vmatpush1.msra.mxu0 0.0
    %5440 = vmatprep.subr.mxu0 0.0
    %5441 = vmatpush1.msra.mxu0 0.0
    %5442 = vmatprep.subr.mxu0 0.0
    %5443 = vmatpush1.msra.mxu0 0.0
    %5444 = vmatprep.subr.mxu0 0.0
    %5445 = vmatpush1.msra.mxu0 0.0
    %5446 = vmatprep.subr.mxu0 0.0
    %5447 = vmatpush1.msra.mxu0 0.0
    %5448 = vmatprep.subr.mxu0 0.0
    %5449 = vmatpush1.msra.mxu0 0.0
    %5450 = vmatprep.subr.mxu0 0.0
    %5451 = vmatpush1.msra.mxu0 0.0
    %5452 = vmatprep.subr.mxu0 0.0
    %5453 = vmatpush1.msra.mxu0 0.0
    %5454 = vmatprep.subr.mxu0 0.0
    %5455 = vmatpush1.msra.mxu0 0.0
    %5456 = vmatprep.subr.mxu0 0.0
    %5457 = vmatpush1.msra.mxu0 0.0
    %5458 = vmatprep.subr.mxu0 0.0
    %5459 = vmatpush1.msra.mxu0 0.0
    %5460 = vmatprep.subr.mxu0 0.0
    %5461 = vmatpush1.msra.mxu0 0.0
    %5462 = vmatprep.subr.mxu0 0.0
    %5463 = vmatpush1.msra.mxu0 0.0
    %5464 = vmatprep.subr.mxu0 0.0
    %5465 = vmatpush1.msra.mxu0 0.0
    %5466 = vmatprep.subr.mxu0 0.0
    %5467 = vmatpush1.msra.mxu0 0.0
    %5468 = vmatprep.subr.mxu0 0.0
    %5469 = vmatpush1.msra.mxu0 0.0
    %5470 = vmatprep.subr.mxu0 0.0
    %5471 = vmatpush1.msra.mxu0 0.0
    %5472 = vmatprep.subr.mxu0 0.0
    %5473 = vmatpush1.msra.mxu0 0.0
    %5474 = vmatprep.subr.mxu0 0.0
    %5475 = vmatpush1.msra.mxu0 0.0
    %5476 = vmatprep.subr.mxu0 0.0
    %5477 = vmatpush1.msra.mxu0 0.0
    %5478 = vmatprep.subr.mxu0 0.0
    %5479 = vmatpush1.msra.mxu0 0.0
    %5480 = vmatprep.mubr.f32.mxu0 0.0
    %5481 = vmatmul.mubr.f32.gmra.mrb[0].mxu0 %v5399
    %v5482 = vpop.f32.mrb[0].mxu0
    %v5483 = vadd.f32 0.0, %v5482
    %v5484 = vpop.f32.mrb[0].mxu0
    %v5485 = vadd.f32 0.0, %v5484
    %5486 = vmatprep.mubr.f32.mxu0 0.0
    %5487 = vmatmul.mubr.f32.gmra.mrb[0].mxu0 %v5402
    %v5488 = vpop.f32.mrb[0].mxu0
    %v5489 = vadd.f32 0.0, %v5488
    %v5490 = vpop.f32.mrb[0].mxu0
    %v5491 = vadd.f32 0.0, %v5490
    %5492 = vmatprep.mubr.f32.mxu0 0.0
    %5493 = vmatmul.mubr.f32.gmra.mrb[0].mxu0 %v5405
    %v5494 = vpop.f32.mrb[0].mxu0
    %v5495 = vadd.f32 0.0, %v5494
    %v5496 = vpop.f32.mrb[0].mxu0
    %v5497 = vadd.f32 0.0, %v5496
    %5498 = vmatprep.mubr.f32.mxu0 0.0
    %5499 = vmatmul.mubr.f32.gmra.mrb[0].mxu0 %v5408
    %v5500 = vpop.f32.mrb[0].mxu0
    %v5501 = vadd.f32 0.0, %v5500
    %v5502 = vpop.f32.mrb[0].mxu0
    %v5503 = vadd.f32 0.0, %v5502
    %5504 = vdwg.mxu0
    %v5505 = vadd.f32 %v5301, %v5483
    %v5506 = vadd.f32 %v5302, %v5485
    %v5507 = vadd.f32 %v5303, %v5489
    %v5508 = vadd.f32 %v5304, %v5491
    %v5509 = vadd.f32 %v5305, %v5495
    %v5510 = vadd.f32 %v5306, %v5497
    %v5511 = vadd.f32 %v5307, %v5501
    %v5512 = vadd.f32 %v5308, %v5503
    %s5513 = scalar_lea.vmem [#allocation8], 224
    %v5514 = vld [vmem:[%s5513] sm:$0xff]
    %v5515 = vld [vmem:[%s5513 + $0x8] sm:$0xff]
    %v5516 = vld [vmem:[%s5513 + $0x10] sm:$0xff]
    %v5517 = vld [vmem:[%s5513 + $0x18] sm:$0xff]
    %5518 = vrot.lane.b32.xlu0 %v5063, 112
    %v5519 = vpop.permute.xlu0 %5518
    %5520 = vrot.lane.b32.xlu0 %v5064, 112
    %v5521 = vpop.permute.xlu0 %5520
    %5522 = vrot.lane.b32.xlu0 %v5065, 112
    %v5523 = vpop.permute.xlu0 %5522
    %5524 = vrot.lane.b32.xlu0 %v5066, 112
    %v5525 = vpop.permute.xlu0 %5524
    %5526 = vrot.lane.b32.xlu0 %v5067, 112
    %v5527 = vpop.permute.xlu0 %5526
    %5528 = vrot.lane.b32.xlu0 %v5068, 112
    %v5529 = vpop.permute.xlu0 %5528
    %5530 = vrot.lane.b32.xlu0 %v5069, 112
    %v5531 = vpop.permute.xlu0 %5530
    %5532 = vrot.lane.b32.xlu0 %v5070, 112
    %v5533 = vpop.permute.xlu0 %5532
    %5534 = vrot.lane.b32.xlu0 %v5071, 112
    %v5535 = vpop.permute.xlu0 %5534
    %5536 = vrot.lane.b32.xlu0 %v5072, 112
    %v5537 = vpop.permute.xlu0 %5536
    %5538 = vrot.lane.b32.xlu0 %v5073, 112
    %v5539 = vpop.permute.xlu0 %5538
    %5540 = vrot.lane.b32.xlu0 %v5074, 112
    %v5541 = vpop.permute.xlu0 %5540
    %5542 = vrot.lane.b32.xlu0 %v5075, 112
    %v5543 = vpop.permute.xlu0 %5542
    %5544 = vrot.lane.b32.xlu0 %v5076, 112
    %v5545 = vpop.permute.xlu0 %5544
    %5546 = vrot.lane.b32.xlu0 %v5077, 112
    %v5547 = vpop.permute.xlu0 %5546
    %5548 = vrot.lane.b32.xlu0 %v5078, 112
    %v5549 = vpop.permute.xlu0 %5548
    %5550 = vrot.lane.b32.xlu0 %v5079, 112
    %v5551 = vpop.permute.xlu0 %5550
    %5552 = vrot.lane.b32.xlu0 %v5080, 112
    %v5553 = vpop.permute.xlu0 %5552
    %5554 = vrot.lane.b32.xlu0 %v5081, 112
    %v5555 = vpop.permute.xlu0 %5554
    %5556 = vrot.lane.b32.xlu0 %v5082, 112
    %v5557 = vpop.permute.xlu0 %5556
    %5558 = vrot.lane.b32.xlu0 %v5083, 112
    %v5559 = vpop.permute.xlu0 %5558
    %v5560 = vsel %vm2835, %v5519, %v5521
    %v5561 = vsel %vm2835, %v5521, %v5523
    %v5562 = vsel %vm2835, %v5525, %v5527
    %v5563 = vsel %vm2835, %v5527, %v5529
    %v5564 = vsel %vm2835, %v5531, %v5533
    %v5565 = vsel %vm2835, %v5533, %v5535
    %v5566 = vsel %vm2835, %v5537, %v5539
    %v5567 = vsel %vm2835, %v5539, %v5541
    %v5568 = vsel %vm2835, %v5543, %v5545
    %v5569 = vsel %vm2835, %v5545, %v5547
    %v5570 = vsel %vm2835, %v5549, %v5551
    %v5571 = vsel %vm2835, %v5551, %v5553
    %v5572 = vsel %vm2835, %v5555, %v5557
    %v5573 = vsel %vm2835, %v5557, %v5559
    %v5587 = vsel %vm4323, %v5514, 0
    %v5590 = vsel %vm4323, %v5515, 0
    %v5593 = vsel %vm4323, %v5516, 0
    %v5596 = vsel %vm4323, %v5517, 0
    %v5598 = vsel %vm4336, %v5572, 0
    %v5600 = vsel %vm4336, %v5573, 0
    %5602 = vmatprep.subr.mxu0 %v5561
    %5603 = vmatpush1.msra.mxu0 %v5560
    %5604 = vmatprep.subr.mxu0 %v5563
    %5605 = vmatpush1.msra.mxu0 %v5562
    %5606 = vmatprep.subr.mxu0 %v5565
    %5607 = vmatpush1.msra.mxu0 %v5564
    %5608 = vmatprep.subr.mxu0 %v5567
    %5609 = vmatpush1.msra.mxu0 %v5566
    %5610 = vmatprep.subr.mxu0 %v5569
    %5611 = vmatpush1.msra.mxu0 %v5568
    %5612 = vmatprep.subr.mxu0 %v5571
    %5613 = vmatpush1.msra.mxu0 %v5570
    %5614 = vmatprep.subr.mxu0 %v5600
    %5615 = vmatpush1.msra.mxu0 %v5598
    %5616 = vmatprep.subr.mxu0 0.0
    %5617 = vmatpush1.msra.mxu0 0.0
    %5618 = vmatprep.subr.mxu0 0.0
    %5619 = vmatpush1.msra.mxu0 0.0
    %5620 = vmatprep.subr.mxu0 0.0
    %5621 = vmatpush1.msra.mxu0 0.0
    %5622 = vmatprep.subr.mxu0 0.0
    %5623 = vmatpush1.msra.mxu0 0.0
    %5624 = vmatprep.subr.mxu0 0.0
    %5625 = vmatpush1.msra.mxu0 0.0
    %5626 = vmatprep.subr.mxu0 0.0
    %5627 = vmatpush1.msra.mxu0 0.0
    %5628 = vmatprep.subr.mxu0 0.0
    %5629 = vmatpush1.msra.mxu0 0.0
    %5630 = vmatprep.subr.mxu0 0.0
    %5631 = vmatpush1.msra.mxu0 0.0
    %5632 = vmatprep.subr.mxu0 0.0
    %5633 = vmatpush1.msra.mxu0 0.0
    %5634 = vmatprep.subr.mxu0 0.0
    %5635 = vmatpush1.msra.mxu0 0.0
    %5636 = vmatprep.subr.mxu0 0.0
    %5637 = vmatpush1.msra.mxu0 0.0
    %5638 = vmatprep.subr.mxu0 0.0
    %5639 = vmatpush1.msra.mxu0 0.0
    %5640 = vmatprep.subr.mxu0 0.0
    %5641 = vmatpush1.msra.mxu0 0.0
    %5642 = vmatprep.subr.mxu0 0.0
    %5643 = vmatpush1.msra.mxu0 0.0
    %5644 = vmatprep.subr.mxu0 0.0
    %5645 = vmatpush1.msra.mxu0 0.0
    %5646 = vmatprep.subr.mxu0 0.0
    %5647 = vmatpush1.msra.mxu0 0.0
    %5648 = vmatprep.subr.mxu0 0.0
    %5649 = vmatpush1.msra.mxu0 0.0
    %5650 = vmatprep.subr.mxu0 0.0
    %5651 = vmatpush1.msra.mxu0 0.0
    %5652 = vmatprep.subr.mxu0 0.0
    %5653 = vmatpush1.msra.mxu0 0.0
    %5654 = vmatprep.subr.mxu0 0.0
    %5655 = vmatpush1.msra.mxu0 0.0
    %5656 = vmatprep.subr.mxu0 0.0
    %5657 = vmatpush1.msra.mxu0 0.0
    %5658 = vmatprep.subr.mxu0 0.0
    %5659 = vmatpush1.msra.mxu0 0.0
    %5660 = vmatprep.subr.mxu0 0.0
    %5661 = vmatpush1.msra.mxu0 0.0
    %5662 = vmatprep.subr.mxu0 0.0
    %5663 = vmatpush1.msra.mxu0 0.0
    %5664 = vmatprep.subr.mxu0 0.0
    %5665 = vmatpush1.msra.mxu0 0.0
    %5666 = vmatprep.mubr.f32.mxu0 0.0
    %5667 = vmatmul.mubr.f32.gmra.mrb[0].mxu0 %v5587
    %v5668 = vpop.f32.mrb[0].mxu0
    %v5669 = vadd.f32 0.0, %v5668
    %v5670 = vpop.f32.mrb[0].mxu0
    %v5671 = vadd.f32 0.0, %v5670
    %5672 = vmatprep.mubr.f32.mxu0 0.0
    %5673 = vmatmul.mubr.f32.gmra.mrb[0].mxu0 %v5590
    %v5674 = vpop.f32.mrb[0].mxu0
    %v5675 = vadd.f32 0.0, %v5674
    %v5676 = vpop.f32.mrb[0].mxu0
    %v5677 = vadd.f32 0.0, %v5676
    %5678 = vmatprep.mubr.f32.mxu0 0.0
    %5679 = vmatmul.mubr.f32.gmra.mrb[0].mxu0 %v5593
    %v5680 = vpop.f32.mrb[0].mxu0
    %v5681 = vadd.f32 0.0, %v5680
    %v5682 = vpop.f32.mrb[0].mxu0
    %v5683 = vadd.f32 0.0, %v5682
    %5684 = vmatprep.mubr.f32.mxu0 0.0
    %5685 = vmatmul.mubr.f32.gmra.mrb[0].mxu0 %v5596
    %v5686 = vpop.f32.mrb[0].mxu0
    %v5687 = vadd.f32 0.0, %v5686
    %v5688 = vpop.f32.mrb[0].mxu0
    %v5689 = vadd.f32 0.0, %v5688
    %5690 = vdwg.mxu0
    %v5691 = vadd.f32 %v5505, %v5669
    %v5692 = vadd.f32 %v5506, %v5671
    %v5693 = vadd.f32 %v5507, %v5675
    %v5694 = vadd.f32 %v5508, %v5677
    %v5695 = vadd.f32 %v5509, %v5681
    %v5696 = vadd.f32 %v5510, %v5683
    %v5697 = vadd.f32 %v5511, %v5687
    %v5698 = vadd.f32 %v5512, %v5689
    %5699 = vrot.lane.b32.xlu0 %v5063, 111
    %v5700 = vpop.permute.xlu0 %5699
    %5701 = vrot.lane.b32.xlu0 %v5064, 111
    %v5702 = vpop.permute.xlu0 %5701
    %5703 = vrot.lane.b32.xlu0 %v5065, 111
    %v5704 = vpop.permute.xlu0 %5703
    %5705 = vrot.lane.b32.xlu0 %v5066, 111
    %v5706 = vpop.permute.xlu0 %5705
    %5707 = vrot.lane.b32.xlu0 %v5067, 111
    %v5708 = vpop.permute.xlu0 %5707
    %5709 = vrot.lane.b32.xlu0 %v5068, 111
    %v5710 = vpop.permute.xlu0 %5709
    %5711 = vrot.lane.b32.xlu0 %v5069, 111
    %v5712 = vpop.permute.xlu0 %5711
    %5713 = vrot.lane.b32.xlu0 %v5070, 111
    %v5714 = vpop.permute.xlu0 %5713
    %5715 = vrot.lane.b32.xlu0 %v5071, 111
    %v5716 = vpop.permute.xlu0 %5715
    %5717 = vrot.lane.b32.xlu0 %v5072, 111
    %v5718 = vpop.permute.xlu0 %5717
    %5719 = vrot.lane.b32.xlu0 %v5073, 111
    %v5720 = vpop.permute.xlu0 %5719
    %5721 = vrot.lane.b32.xlu0 %v5074, 111
    %v5722 = vpop.permute.xlu0 %5721
    %5723 = vrot.lane.b32.xlu0 %v5075, 111
    %v5724 = vpop.permute.xlu0 %5723
    %5725 = vrot.lane.b32.xlu0 %v5076, 111
    %v5726 = vpop.permute.xlu0 %5725
    %5727 = vrot.lane.b32.xlu0 %v5077, 111
    %v5728 = vpop.permute.xlu0 %5727
    %5729 = vrot.lane.b32.xlu0 %v5078, 111
    %v5730 = vpop.permute.xlu0 %5729
    %5731 = vrot.lane.b32.xlu0 %v5079, 111
    %v5732 = vpop.permute.xlu0 %5731
    %5733 = vrot.lane.b32.xlu0 %v5080, 111
    %v5734 = vpop.permute.xlu0 %5733
    %5735 = vrot.lane.b32.xlu0 %v5081, 111
    %v5736 = vpop.permute.xlu0 %5735
    %5737 = vrot.lane.b32.xlu0 %v5082, 111
    %v5738 = vpop.permute.xlu0 %5737
    %5739 = vrot.lane.b32.xlu0 %v5083, 111
    %v5740 = vpop.permute.xlu0 %5739
    %v5741 = vsel %vm2977, %v5700, %v5702
    %v5742 = vsel %vm2977, %v5702, %v5704
    %v5743 = vsel %vm2977, %v5706, %v5708
    %v5744 = vsel %vm2977, %v5708, %v5710
    %v5745 = vsel %vm2977, %v5712, %v5714
    %v5746 = vsel %vm2977, %v5714, %v5716
    %v5747 = vsel %vm2977, %v5718, %v5720
    %v5748 = vsel %vm2977, %v5720, %v5722
    %v5749 = vsel %vm2977, %v5724, %v5726
    %v5750 = vsel %vm2977, %v5726, %v5728
    %v5751 = vsel %vm2977, %v5730, %v5732
    %v5752 = vsel %vm2977, %v5732, %v5734
    %v5753 = vsel %vm2977, %v5736, %v5738
    %v5754 = vsel %vm2977, %v5738, %v5740
    %v5769 = vsel %vm711, %v5741, 0.0
    %v5770 = vsel %vm712, %v5742, 0.0
    %v5771 = vsel %vm711, %v5743, 0.0
    %v5772 = vsel %vm712, %v5744, 0.0
    %v5773 = vsel %vm711, %v5745, 0.0
    %v5774 = vsel %vm712, %v5746, 0.0
    %v5775 = vsel %vm711, %v5747, 0.0
    %v5776 = vsel %vm712, %v5748, 0.0
    %v5777 = vsel %vm711, %v5749, 0.0
    %v5778 = vsel %vm712, %v5750, 0.0
    %v5779 = vsel %vm711, %v5751, 0.0
    %v5780 = vsel %vm712, %v5752, 0.0
    %v5781 = vsel %vm711, %v5753, 0.0
    %v5782 = vsel %vm712, %v5754, 0.0
    %s5783 = scalar_lea.vmem [#allocation8], 256
    %v5784 = vld [vmem:[%s5783] sm:$0xff]
    %v5785 = vld [vmem:[%s5783 + $0x8] sm:$0xff]
    %v5786 = vld [vmem:[%s5783 + $0x10] sm:$0xff]
    %v5787 = vld [vmem:[%s5783 + $0x18] sm:$0xff]
    %v5789 = vsel %vm4323, %v5784, 0
    %v5792 = vsel %vm4323, %v5785, 0
    %v5795 = vsel %vm4323, %v5786, 0
    %v5798 = vsel %vm4323, %v5787, 0
    %v5801 = vsel %vm4336, %v5781, 0
    %v5804 = vsel %vm4336, %v5782, 0
    %5806 = vmatprep.subr.mxu0 %v5770
    %5807 = vmatpush1.msra.mxu0 %v5769
    %5808 = vmatprep.subr.mxu0 %v5772
    %5809 = vmatpush1.msra.mxu0 %v5771
    %5810 = vmatprep.subr.mxu0 %v5774
    %5811 = vmatpush1.msra.mxu0 %v5773
    %5812 = vmatprep.subr.mxu0 %v5776
    %5813 = vmatpush1.msra.mxu0 %v5775
    %5814 = vmatprep.subr.mxu0 %v5778
    %5815 = vmatpush1.msra.mxu0 %v5777
    %5816 = vmatprep.subr.mxu0 %v5780
    %5817 = vmatpush1.msra.mxu0 %v5779
    %5818 = vmatprep.subr.mxu0 %v5804
    %5819 = vmatpush1.msra.mxu0 %v5801
    %5820 = vmatprep.subr.mxu0 0.0
    %5821 = vmatpush1.msra.mxu0 0.0
    %5822 = vmatprep.subr.mxu0 0.0
    %5823 = vmatpush1.msra.mxu0 0.0
    %5824 = vmatprep.subr.mxu0 0.0
    %5825 = vmatpush1.msra.mxu0 0.0
    %5826 = vmatprep.subr.mxu0 0.0
    %5827 = vmatpush1.msra.mxu0 0.0
    %5828 = vmatprep.subr.mxu0 0.0
    %5829 = vmatpush1.msra.mxu0 0.0
    %5830 = vmatprep.subr.mxu0 0.0
    %5831 = vmatpush1.msra.mxu0 0.0
    %5832 = vmatprep.subr.mxu0 0.0
    %5833 = vmatpush1.msra.mxu0 0.0
    %5834 = vmatprep.subr.mxu0 0.0
    %5835 = vmatpush1.msra.mxu0 0.0
    %5836 = vmatprep.subr.mxu0 0.0
    %5837 = vmatpush1.msra.mxu0 0.0
    %5838 = vmatprep.subr.mxu0 0.0
    %5839 = vmatpush1.msra.mxu0 0.0
    %5840 = vmatprep.subr.mxu0 0.0
    %5841 = vmatpush1.msra.mxu0 0.0
    %5842 = vmatprep.subr.mxu0 0.0
    %5843 = vmatpush1.msra.mxu0 0.0
    %5844 = vmatprep.subr.mxu0 0.0
    %5845 = vmatpush1.msra.mxu0 0.0
    %5846 = vmatprep.subr.mxu0 0.0
    %5847 = vmatpush1.msra.mxu0 0.0
    %5848 = vmatprep.subr.mxu0 0.0
    %5849 = vmatpush1.msra.mxu0 0.0
    %5850 = vmatprep.subr.mxu0 0.0
    %5851 = vmatpush1.msra.mxu0 0.0
    %5852 = vmatprep.subr.mxu0 0.0
    %5853 = vmatpush1.msra.mxu0 0.0
    %5854 = vmatprep.subr.mxu0 0.0
    %5855 = vmatpush1.msra.mxu0 0.0
    %5856 = vmatprep.subr.mxu0 0.0
    %5857 = vmatpush1.msra.mxu0 0.0
    %5858 = vmatprep.subr.mxu0 0.0
    %5859 = vmatpush1.msra.mxu0 0.0
    %5860 = vmatprep.subr.mxu0 0.0
    %5861 = vmatpush1.msra.mxu0 0.0
    %5862 = vmatprep.subr.mxu0 0.0
    %5863 = vmatpush1.msra.mxu0 0.0
    %5864 = vmatprep.subr.mxu0 0.0
    %5865 = vmatpush1.msra.mxu0 0.0
    %5866 = vmatprep.subr.mxu0 0.0
    %5867 = vmatpush1.msra.mxu0 0.0
    %5868 = vmatprep.subr.mxu0 0.0
    %5869 = vmatpush1.msra.mxu0 0.0
    %5870 = vmatprep.mubr.f32.mxu0 0.0
    %5871 = vmatmul.mubr.f32.gmra.mrb[0].mxu0 %v5789
    %v5872 = vpop.f32.mrb[0].mxu0
    %v5873 = vadd.f32 0.0, %v5872
    %v5874 = vpop.f32.mrb[0].mxu0
    %v5875 = vadd.f32 0.0, %v5874
    %5876 = vmatprep.mubr.f32.mxu0 0.0
    %5877 = vmatmul.mubr.f32.gmra.mrb[0].mxu0 %v5792
    %v5878 = vpop.f32.mrb[0].mxu0
    %v5879 = vadd.f32 0.0, %v5878
    %v5880 = vpop.f32.mrb[0].mxu0
    %v5881 = vadd.f32 0.0, %v5880
    %5882 = vmatprep.mubr.f32.mxu0 0.0
    %5883 = vmatmul.mubr.f32.gmra.mrb[0].mxu0 %v5795
    %v5884 = vpop.f32.mrb[0].mxu0
    %v5885 = vadd.f32 0.0, %v5884
    %v5886 = vpop.f32.mrb[0].mxu0
    %v5887 = vadd.f32 0.0, %v5886
    %5888 = vmatprep.mubr.f32.mxu0 0.0
    %5889 = vmatmul.mubr.f32.gmra.mrb[0].mxu0 %v5798
    %v5890 = vpop.f32.mrb[0].mxu0
    %v5891 = vadd.f32 0.0, %v5890
    %v5892 = vpop.f32.mrb[0].mxu0
    %v5893 = vadd.f32 0.0, %v5892
    %5894 = vdwg.mxu0
    %v5895 = vadd.f32 %v5691, %v5873
    %v5896 = vadd.f32 %v5692, %v5875
    %v5897 = vadd.f32 %v5693, %v5879
    %v5898 = vadd.f32 %v5694, %v5881
    %v5899 = vadd.f32 %v5695, %v5885
    %v5900 = vadd.f32 %v5696, %v5887
    %v5901 = vadd.f32 %v5697, %v5891
    %v5902 = vadd.f32 %v5698, %v5893
    %v5903 = vld [vmem:[%s5] sm:$0xff]
    %v5904 = vld [vmem:[%s5 + $0x8] sm:$0xff]
    %v5905 = vld [vmem:[%s5 + $0x10] sm:$0xff]
    %v5906 = vld [vmem:[%s5 + $0x18] sm:$0xff]
    %5908 = vset.pattern.permute.xlu0 0
    %5909 = vperm.xlu0 %5908, %v5903
    %v5910 = vpop.permute.xlu0 %5909
    %5913 = vset.pattern.permute.xlu0 0
    %5914 = vperm.xlu0 %5913, %v5904
    %v5915 = vpop.permute.xlu0 %5914
    %5918 = vset.pattern.permute.xlu0 0
    %5919 = vperm.xlu0 %5918, %v5905
    %v5920 = vpop.permute.xlu0 %5919
    %5923 = vset.pattern.permute.xlu0 0
    %5924 = vperm.xlu0 %5923, %v5906
    %v5925 = vpop.permute.xlu0 %5924
    %v5927 = vadd.f32 %v5895, %v5910
    %v5928 = vadd.f32 %v5896, %v5910
    %v5929 = vadd.f32 %v5897, %v5915
    %v5930 = vadd.f32 %v5898, %v5915
    %v5931 = vadd.f32 %v5899, %v5920
    %v5932 = vadd.f32 %v5900, %v5920
    %v5933 = vadd.f32 %v5901, %v5925
    %v5934 = vadd.f32 %v5902, %v5925
    %v5935 = vmax.f32 %v5927, 0.0
    %v5936 = vmax.f32 %v5928, 0.0
    %v5937 = vmax.f32 %v5929, 0.0
    %v5938 = vmax.f32 %v5930, 0.0
    %v5939 = vmax.f32 %v5931, 0.0
    %v5940 = vmax.f32 %v5932, 0.0
    %v5941 = vmax.f32 %v5933, 0.0
    %v5942 = vmax.f32 %v5934, 0.0
    %v5943 = vld [vmem:[#allocation10] sm:$0x1]
    %v5944 = vld [vmem:[#allocation7] sm:$0x1]
    %5946 = vset.pattern.permute.xlu0 0
    %5947 = vperm.xlu0 %5946, %v5944
    %v5948 = vpop.permute.xlu0 %5947
    %v5950 = vlaneseq
    %v5951 = vshrl.u32 %v5950, 7
    %v5952 = vsub.s32 0, %v5951
    %v5953 = vrot.slane %v5948, %v5952
    %v5955 = vsel %vm573, %v5943, 0
    %5957 = vmatprep.subr.mxu0 %v5936
    %5958 = vmatpush1.msra.mxu0 %v5935
    %5959 = vmatprep.subr.mxu0 %v5938
    %5960 = vmatpush1.msra.mxu0 %v5937
    %5961 = vmatprep.subr.mxu0 %v5940
    %5962 = vmatpush1.msra.mxu0 %v5939
    %5963 = vmatprep.subr.mxu0 %v5942
    %5964 = vmatpush1.msra.mxu0 %v5941
    %5965 = vmatprep.subr.mxu0 0.0
    %5966 = vmatpush1.msra.mxu0 0.0
    %5967 = vmatprep.subr.mxu0 0.0
    %5968 = vmatpush1.msra.mxu0 0.0
    %5969 = vmatprep.subr.mxu0 0.0
    %5970 = vmatpush1.msra.mxu0 0.0
    %5971 = vmatprep.subr.mxu0 0.0
    %5972 = vmatpush1.msra.mxu0 0.0
    %5973 = vmatprep.subr.mxu0 0.0
    %5974 = vmatpush1.msra.mxu0 0.0
    %5975 = vmatprep.subr.mxu0 0.0
    %5976 = vmatpush1.msra.mxu0 0.0
    %5977 = vmatprep.subr.mxu0 0.0
    %5978 = vmatpush1.msra.mxu0 0.0
    %5979 = vmatprep.subr.mxu0 0.0
    %5980 = vmatpush1.msra.mxu0 0.0
    %5981 = vmatprep.subr.mxu0 0.0
    %5982 = vmatpush1.msra.mxu0 0.0
    %5983 = vmatprep.subr.mxu0 0.0
    %5984 = vmatpush1.msra.mxu0 0.0
    %5985 = vmatprep.subr.mxu0 0.0
    %5986 = vmatpush1.msra.mxu0 0.0
    %5987 = vmatprep.subr.mxu0 0.0
    %5988 = vmatpush1.msra.mxu0 0.0
    %5989 = vmatprep.subr.mxu0 0.0
    %5990 = vmatpush1.msra.mxu0 0.0
    %5991 = vmatprep.subr.mxu0 0.0
    %5992 = vmatpush1.msra.mxu0 0.0
    %5993 = vmatprep.subr.mxu0 0.0
    %5994 = vmatpush1.msra.mxu0 0.0
    %5995 = vmatprep.subr.mxu0 0.0
    %5996 = vmatpush1.msra.mxu0 0.0
    %5997 = vmatprep.subr.mxu0 0.0
    %5998 = vmatpush1.msra.mxu0 0.0
    %5999 = vmatprep.subr.mxu0 0.0
    %6000 = vmatpush1.msra.mxu0 0.0
    %6001 = vmatprep.subr.mxu0 0.0
    %6002 = vmatpush1.msra.mxu0 0.0
    %6003 = vmatprep.subr.mxu0 0.0
    %6004 = vmatpush1.msra.mxu0 0.0
    %6005 = vmatprep.subr.mxu0 0.0
    %6006 = vmatpush1.msra.mxu0 0.0
    %6007 = vmatprep.subr.mxu0 0.0
    %6008 = vmatpush1.msra.mxu0 0.0
    %6009 = vmatprep.subr.mxu0 0.0
    %6010 = vmatpush1.msra.mxu0 0.0
    %6011 = vmatprep.subr.mxu0 0.0
    %6012 = vmatpush1.msra.mxu0 0.0
    %6013 = vmatprep.subr.mxu0 0.0
    %6014 = vmatpush1.msra.mxu0 0.0
    %6015 = vmatprep.subr.mxu0 0.0
    %6016 = vmatpush1.msra.mxu0 0.0
    %6017 = vmatprep.subr.mxu0 0.0
    %6018 = vmatpush1.msra.mxu0 0.0
    %6019 = vmatprep.subr.mxu0 0.0
    %6020 = vmatpush1.msra.mxu0 0.0
    %6021 = vmatprep.mubr.f32.mxu0 0.0
    %6022 = vmatmul.mubr.f32.gmra.mrb[0].mxu0 %v5955
    %v6023 = vpop.f32.mrb[0].mxu0
    %v6024 = vadd.f32 %v5953, %v6023
    %v6025 = vpop.f32.mrb[0].mxu0
    %v6026 = vadd.f32 %v5953, %v6025
    %6027 = vdwg.mxu0
    %v6028 = vsel %vm4336, %v6024, -inf
    %v6029 = vsel %vm4336, %v6026, -inf
    %v6030 = vmax.f32 %v6028, %v6029
    %6031 = vmax.xlane.f32.xlu0 %v6030
    %v6032 = vpop.xlane.xlu0 %6031
    %v6033 = vsub.f32 %v6024, %v6032
    %v6034 = vsub.f32 %v6026, %v6032
    %v6035 = vmul.f32 %v6033, 1.442695
    %v6036 = vpow.pop %v6035
    %v6037 = vmul.f32 %v6034, 1.442695
    %v6038 = vpow.pop %v6037
    %v6039 = vsel %vm4336, %v6036, 0.0
    %v6040 = vsel %vm4336, %v6038, 0.0
    %v6041 = vadd.f32 %v6039, %v6040
    %6042 = vadd.xlane.f32.xlu0 %v6041
    %v6043 = vpop.xlane.xlu0 %6042
    %v6044 = vrcp.pop %v6043
    %v6045 = vmul.f32 %v6036, %v6044
    %v6046 = vmul.f32 %v6038, %v6044
    %v6049 = vcombine.low %v6045, %v6046
    %v6051 = vunpack.c.l.s4 1966171168
    %v6052 = vunpack.c.0.s8 %v6051
    %v6053 = vlaneseq
    %v6054 = vshrl.u32 %v6053, 7
    %v6055 = vsub.s32 %v6052, %v6054
    %v6056 = vrot.slane %v6049, %v6055
    %v6058 = vunpack.c.l.s4 1966171168
    %v6059 = vunpack.c.0.s8 %v6058
    %v6060 = vlaneseq
    %v6061 = vshrl.u32 %v6060, 7
    %v6062 = vsub.s32 %v6059, %v6061
    %v6063 = vrot.slane %v6056, %v6062
    %6065 = vst.msk [vmem:[%s12] sm:$0x3] %vm4116, %v6063
    %v6068 = vcombine.low %v5935, %v5936
    %v6070 = vunpack.c.l.s4 1966171168
    %v6071 = vunpack.c.0.s8 %v6070
    %v6072 = vlaneseq
    %v6073 = vshrl.u32 %v6072, 7
    %v6074 = vsub.s32 %v6071, %v6073
    %v6075 = vrot.slane %v6068, %v6074
    %v6077 = vunpack.c.l.s4 1966171168
    %v6078 = vunpack.c.0.s8 %v6077
    %v6079 = vlaneseq
    %v6080 = vshrl.u32 %v6079, 7
    %v6081 = vsub.s32 %v6078, %v6080
    %v6082 = vrot.slane %v6075, %v6081
    %6084 = vst.msk [vmem:[#allocation4] sm:$0x3] %vm4116, %v6082
    %v6085 = vcombine.high %v6075, %v6075
    %v6087 = vunpack.c.l.s4 1966171168
    %v6088 = vunpack.c.0.s8 %v6087
    %v6089 = vlaneseq
    %v6090 = vshrl.u32 %v6089, 7
    %v6091 = vsub.s32 %v6088, %v6090
    %v6092 = vrot.slane %v6085, %v6091
    %6094 = vst.msk [vmem:[#allocation4 + $0x2] sm:$0x3] %vm4116, %v6092
    %v6095 = vcombine.high %v6082, %v6082
    %6097 = vst.msk [vmem:[#allocation4 + $0x4] sm:$0x3] %vm4116, %v6095
    %v6098 = vcombine.high %v6092, %v6092
    %6100 = vst.msk [vmem:[#allocation4 + $0x6] sm:$0x3] %vm4116, %v6098
    %v6101 = vcombine.high %v5935, %v5936
    %v6103 = vunpack.c.l.s4 1966171168
    %v6104 = vunpack.c.0.s8 %v6103
    %v6105 = vlaneseq
    %v6106 = vshrl.u32 %v6105, 7
    %v6107 = vsub.s32 %v6104, %v6106
    %v6108 = vrot.slane %v6101, %v6107
    %v6110 = vunpack.c.l.s4 1966171168
    %v6111 = vunpack.c.0.s8 %v6110
    %v6112 = vlaneseq
    %v6113 = vshrl.u32 %v6112, 7
    %v6114 = vsub.s32 %v6111, %v6113
    %v6115 = vrot.slane %v6108, %v6114
    %6117 = vst.msk [vmem:[#allocation4 + $0x8] sm:$0x3] %vm4116, %v6115
    %v6118 = vcombine.high %v6108, %v6108
    %v6120 = vunpack.c.l.s4 1966171168
    %v6121 = vunpack.c.0.s8 %v6120
    %v6122 = vlaneseq
    %v6123 = vshrl.u32 %v6122, 7
    %v6124 = vsub.s32 %v6121, %v6123
    %v6125 = vrot.slane %v6118, %v6124
    %6127 = vst.msk [vmem:[#allocation4 + $0xa] sm:$0x3] %vm4116, %v6125
    %v6128 = vcombine.high %v6115, %v6115
    %6130 = vst.msk [vmem:[#allocation4 + $0xc] sm:$0x3] %vm4116, %v6128
    %v6131 = vcombine.high %v6125, %v6125
    %6133 = vst.msk [vmem:[#allocation4 + $0xe] sm:$0x3] %vm4116, %v6131
    %v6136 = vcombine.low %v5937, %v5938
    %v6138 = vunpack.c.l.s4 1966171168
    %v6139 = vunpack.c.0.s8 %v6138
    %v6140 = vlaneseq
    %v6141 = vshrl.u32 %v6140, 7
    %v6142 = vsub.s32 %v6139, %v6141
    %v6143 = vrot.slane %v6136, %v6142
    %v6145 = vunpack.c.l.s4 1966171168
    %v6146 = vunpack.c.0.s8 %v6145
    %v6147 = vlaneseq
    %v6148 = vshrl.u32 %v6147, 7
    %v6149 = vsub.s32 %v6146, %v6148
    %v6150 = vrot.slane %v6143, %v6149
    %6152 = vst.msk [vmem:[#allocation4 + $0x10] sm:$0x3] %vm4116, %v6150
    %v6153 = vcombine.high %v6143, %v6143
    %v6155 = vunpack.c.l.s4 1966171168
    %v6156 = vunpack.c.0.s8 %v6155
    %v6157 = vlaneseq
    %v6158 = vshrl.u32 %v6157, 7
    %v6159 = vsub.s32 %v6156, %v6158
    %v6160 = vrot.slane %v6153, %v6159
    %6162 = vst.msk [vmem:[#allocation4 + $0x12] sm:$0x3] %vm4116, %v6160
    %v6163 = vcombine.high %v6150, %v6150
    %6165 = vst.msk [vmem:[#allocation4 + $0x14] sm:$0x3] %vm4116, %v6163
    %v6166 = vcombine.high %v6160, %v6160
    %6168 = vst.msk [vmem:[#allocation4 + $0x16] sm:$0x3] %vm4116, %v6166
    %v6169 = vcombine.high %v5937, %v5938
    %v6171 = vunpack.c.l.s4 1966171168
    %v6172 = vunpack.c.0.s8 %v6171
    %v6173 = vlaneseq
    %v6174 = vshrl.u32 %v6173, 7
    %v6175 = vsub.s32 %v6172, %v6174
    %v6176 = vrot.slane %v6169, %v6175
    %v6178 = vunpack.c.l.s4 1966171168
    %v6179 = vunpack.c.0.s8 %v6178
    %v6180 = vlaneseq
    %v6181 = vshrl.u32 %v6180, 7
    %v6182 = vsub.s32 %v6179, %v6181
    %v6183 = vrot.slane %v6176, %v6182
    %6185 = vst.msk [vmem:[#allocation4 + $0x18] sm:$0x3] %vm4116, %v6183
    %v6186 = vcombine.high %v6176, %v6176
    %v6188 = vunpack.c.l.s4 1966171168
    %v6189 = vunpack.c.0.s8 %v6188
    %v6190 = vlaneseq
    %v6191 = vshrl.u32 %v6190, 7
    %v6192 = vsub.s32 %v6189, %v6191
    %v6193 = vrot.slane %v6186, %v6192
    %6195 = vst.msk [vmem:[#allocation4 + $0x1a] sm:$0x3] %vm4116, %v6193
    %v6196 = vcombine.high %v6183, %v6183
    %6198 = vst.msk [vmem:[#allocation4 + $0x1c] sm:$0x3] %vm4116, %v6196
    %v6199 = vcombine.high %v6193, %v6193
    %6201 = vst.msk [vmem:[#allocation4 + $0x1e] sm:$0x3] %vm4116, %v6199
    %v6204 = vcombine.low %v5939, %v5940
    %v6206 = vunpack.c.l.s4 1966171168
    %v6207 = vunpack.c.0.s8 %v6206
    %v6208 = vlaneseq
    %v6209 = vshrl.u32 %v6208, 7
    %v6210 = vsub.s32 %v6207, %v6209
    %v6211 = vrot.slane %v6204, %v6210
    %v6213 = vunpack.c.l.s4 1966171168
    %v6214 = vunpack.c.0.s8 %v6213
    %v6215 = vlaneseq
    %v6216 = vshrl.u32 %v6215, 7
    %v6217 = vsub.s32 %v6214, %v6216
    %v6218 = vrot.slane %v6211, %v6217
    %6220 = vst.msk [vmem:[#allocation4 + $0x20] sm:$0x3] %vm4116, %v6218
    %v6221 = vcombine.high %v6211, %v6211
    %v6223 = vunpack.c.l.s4 1966171168
    %v6224 = vunpack.c.0.s8 %v6223
    %v6225 = vlaneseq
    %v6226 = vshrl.u32 %v6225, 7
    %v6227 = vsub.s32 %v6224, %v6226
    %v6228 = vrot.slane %v6221, %v6227
    %6230 = vst.msk [vmem:[#allocation4 + $0x22] sm:$0x3] %vm4116, %v6228
    %v6231 = vcombine.high %v6218, %v6218
    %6233 = vst.msk [vmem:[#allocation4 + $0x24] sm:$0x3] %vm4116, %v6231
    %v6234 = vcombine.high %v6228, %v6228
    %6236 = vst.msk [vmem:[#allocation4 + $0x26] sm:$0x3] %vm4116, %v6234
    %v6237 = vcombine.high %v5939, %v5940
    %v6239 = vunpack.c.l.s4 1966171168
    %v6240 = vunpack.c.0.s8 %v6239
    %v6241 = vlaneseq
    %v6242 = vshrl.u32 %v6241, 7
    %v6243 = vsub.s32 %v6240, %v6242
    %v6244 = vrot.slane %v6237, %v6243
    %v6246 = vunpack.c.l.s4 1966171168
    %v6247 = vunpack.c.0.s8 %v6246
    %v6248 = vlaneseq
    %v6249 = vshrl.u32 %v6248, 7
    %v6250 = vsub.s32 %v6247, %v6249
    %v6251 = vrot.slane %v6244, %v6250
    %6253 = vst.msk [vmem:[#allocation4 + $0x28] sm:$0x3] %vm4116, %v6251
    %v6254 = vcombine.high %v6244, %v6244
    %v6256 = vunpack.c.l.s4 1966171168
    %v6257 = vunpack.c.0.s8 %v6256
    %v6258 = vlaneseq
    %v6259 = vshrl.u32 %v6258, 7
    %v6260 = vsub.s32 %v6257, %v6259
    %v6261 = vrot.slane %v6254, %v6260
    %6263 = vst.msk [vmem:[#allocation4 + $0x2a] sm:$0x3] %vm4116, %v6261
    %v6264 = vcombine.high %v6251, %v6251
    %6266 = vst.msk [vmem:[#allocation4 + $0x2c] sm:$0x3] %vm4116, %v6264
    %v6267 = vcombine.high %v6261, %v6261
    %6269 = vst.msk [vmem:[#allocation4 + $0x2e] sm:$0x3] %vm4116, %v6267
    %v6272 = vcombine.low %v5941, %v5942
    %v6274 = vunpack.c.l.s4 1966171168
    %v6275 = vunpack.c.0.s8 %v6274
    %v6276 = vlaneseq
    %v6277 = vshrl.u32 %v6276, 7
    %v6278 = vsub.s32 %v6275, %v6277
    %v6279 = vrot.slane %v6272, %v6278
    %v6281 = vunpack.c.l.s4 1966171168
    %v6282 = vunpack.c.0.s8 %v6281
    %v6283 = vlaneseq
    %v6284 = vshrl.u32 %v6283, 7
    %v6285 = vsub.s32 %v6282, %v6284
    %v6286 = vrot.slane %v6279, %v6285
    %6288 = vst.msk [vmem:[#allocation4 + $0x30] sm:$0x3] %vm4116, %v6286
    %v6289 = vcombine.high %v6279, %v6279
    %v6291 = vunpack.c.l.s4 1966171168
    %v6292 = vunpack.c.0.s8 %v6291
    %v6293 = vlaneseq
    %v6294 = vshrl.u32 %v6293, 7
    %v6295 = vsub.s32 %v6292, %v6294
    %v6296 = vrot.slane %v6289, %v6295
    %6298 = vst.msk [vmem:[#allocation4 + $0x32] sm:$0x3] %vm4116, %v6296
    %v6299 = vcombine.high %v6286, %v6286
    %6301 = vst.msk [vmem:[#allocation4 + $0x34] sm:$0x3] %vm4116, %v6299
    %v6302 = vcombine.high %v6296, %v6296
    %6304 = vst.msk [vmem:[#allocation4 + $0x36] sm:$0x3] %vm4116, %v6302
    %v6305 = vcombine.high %v5941, %v5942
    %v6307 = vunpack.c.l.s4 1966171168
    %v6308 = vunpack.c.0.s8 %v6307
    %v6309 = vlaneseq
    %v6310 = vshrl.u32 %v6309, 7
    %v6311 = vsub.s32 %v6308, %v6310
    %v6312 = vrot.slane %v6305, %v6311
    %v6314 = vunpack.c.l.s4 1966171168
    %v6315 = vunpack.c.0.s8 %v6314
    %v6316 = vlaneseq
    %v6317 = vshrl.u32 %v6316, 7
    %v6318 = vsub.s32 %v6315, %v6317
    %v6319 = vrot.slane %v6312, %v6318
    %6321 = vst.msk [vmem:[#allocation4 + $0x38] sm:$0x3] %vm4116, %v6319
    %v6322 = vcombine.high %v6312, %v6312
    %v6324 = vunpack.c.l.s4 1966171168
    %v6325 = vunpack.c.0.s8 %v6324
    %v6326 = vlaneseq
    %v6327 = vshrl.u32 %v6326, 7
    %v6328 = vsub.s32 %v6325, %v6327
    %v6329 = vrot.slane %v6322, %v6328
    %6331 = vst.msk [vmem:[#allocation4 + $0x3a] sm:$0x3] %vm4116, %v6329
    %v6332 = vcombine.high %v6319, %v6319
    %6334 = vst.msk [vmem:[#allocation4 + $0x3c] sm:$0x3] %vm4116, %v6332
    %v6335 = vcombine.high %v6329, %v6329
    %6337 = vst.msk [vmem:[#allocation4 + $0x3e] sm:$0x3] %vm4116, %v6335
    %s6338 = smul.u32 4, 128
    %s6339 = smul.u32 %s6338, 2
    %s6340 = sshll.u32 %s6339, 4
    %6341 = dma.done [#allocation6], %s6340
    %s6342 = scalar_lea.hbm %s11, 49152
    %s6343 = scalar_lea.vmem [#allocation5], 3072
    %s6344 = scalar_lea.sflag [#allocation6], 3
    %s6346 = sshll.u32 1, 14
    %s6347 = sxor.u32 4294967295, %s6346
    %s6349 = sadd.s32 2, %s94
    %s6351 = sshll.u32 7, 26
    %s6352 = sxor.u32 4294967295, %s6351
    %s6353 = sand.u32 0, %s6352
    %s6354 = sshll.u32 %s6349, 26
    %s6355 = sor.u32 %s6353, %s6354
    %s6356 = sshll.u32 %s6343, 4
    %s6357 = int_to_ptr.vmem [resolvable:$true] %s6356
    %6360 = sst [smem:[#allocation22]] 256
    %s6361 = scalar_lea.smem [#allocation22], 1
    %6362 = sst [smem:[%s6361]] 256
    %s6363 = scalar_lea.smem [#allocation22], 2
    %6364 = sst [smem:[%s6363]] 2
    %s6365 = scalar_lea.smem [#allocation22], 3
    %6366 = sst [smem:[%s6365]] 64
    %s6367 = scalar_lea.smem [#allocation22], 4
    %6368 = sst [smem:[%s6367]] 128
    %s6369 = scalar_lea.smem [#allocation22], 5
    %6370 = sst [smem:[%s6369]] 2
    %s6371 = scalar_lea.smem [#allocation22], 6
    %6372 = sst [smem:[%s6371]] 128
    %s6373 = scalar_lea.smem [#allocation22], 7
    %6374 = sst [smem:[%s6373]] 64
    %s6375 = scalar_lea.smem [#allocation22], 8
    %6376 = sst [smem:[%s6375]] 4
    %6378 = dma.general %s6342, 16384, %s6357, %s6344, [#allocation21], [#allocation22], %s6355, 0
    %v6379 = vld [vmem:[#allocation4] sm:$0xff]
    %v6381 = vlaneseq
    %v6382 = vshrl.u32 %v6381, 7
    %v6383 = vsub.s32 0, %v6382
    %v6384 = vrot.slane %v6379, %v6383
    %v6385 = vlaneseq
    %v6386 = vshrl.u32 %v6385, 7
    %v6387 = vsub.s32 1, %v6386
    %v6388 = vrot.slane %v6379, %v6387
    %v6389 = vlaneseq
    %v6390 = vshrl.u32 %v6389, 7
    %v6391 = vsub.s32 2, %v6390
    %v6392 = vrot.slane %v6379, %v6391
    %v6393 = vlaneseq
    %v6394 = vshrl.u32 %v6393, 7
    %v6395 = vsub.s32 3, %v6394
    %v6396 = vrot.slane %v6379, %v6395
    %v6397 = vlaneseq
    %v6398 = vshrl.u32 %v6397, 7
    %v6399 = vsub.s32 4, %v6398
    %v6400 = vrot.slane %v6379, %v6399
    %v6401 = vlaneseq
    %v6402 = vshrl.u32 %v6401, 7
    %v6403 = vsub.s32 5, %v6402
    %v6404 = vrot.slane %v6379, %v6403
    %v6405 = vlaneseq
    %v6406 = vshrl.u32 %v6405, 7
    %v6407 = vsub.s32 6, %v6406
    %v6408 = vrot.slane %v6379, %v6407
    %v6409 = vlaneseq
    %v6410 = vshrl.u32 %v6409, 7
    %v6411 = vsub.s32 7, %v6410
    %v6412 = vrot.slane %v6379, %v6411
    %v6421 = vpack.c.bf16 %v6384, %v6384
    %v6422 = vpack.c.bf16 %v6388, %v6388
    %v6423 = vpack.c.bf16 %v6392, %v6392
    %v6424 = vpack.c.bf16 %v6396, %v6396
    %v6425 = vpack.c.bf16 %v6400, %v6400
    %v6426 = vpack.c.bf16 %v6404, %v6404
    %v6427 = vpack.c.bf16 %v6408, %v6408
    %v6428 = vpack.c.bf16 %v6412, %v6412
    %v6429 = vld [vmem:[#allocation5] sm:$0xff]
    %v6430 = vld [vmem:[#allocation5 + $0x8] sm:$0xff]
    %v6431 = vld [vmem:[#allocation5 + $0x10] sm:$0xff]
    %v6432 = vld [vmem:[#allocation5 + $0x18] sm:$0xff]
    %v6433 = vld [vmem:[#allocation5 + $0x20] sm:$0xff]
    %v6434 = vld [vmem:[#allocation5 + $0x28] sm:$0xff]
    %v6435 = vld [vmem:[#allocation5 + $0x30] sm:$0xff]
    %v6436 = vld [vmem:[#allocation5 + $0x38] sm:$0xff]
    %v6437 = vld [vmem:[#allocation5 + $0x40] sm:$0xff]
    %v6438 = vld [vmem:[#allocation5 + $0x48] sm:$0xff]
    %v6439 = vld [vmem:[#allocation5 + $0x50] sm:$0xff]
    %v6440 = vld [vmem:[#allocation5 + $0x58] sm:$0xff]
    %v6441 = vld [vmem:[#allocation5 + $0x60] sm:$0xff]
    %v6442 = vld [vmem:[#allocation5 + $0x68] sm:$0xff]
    %v6443 = vld [vmem:[#allocation5 + $0x70] sm:$0xff]
    %v6444 = vld [vmem:[#allocation5 + $0x78] sm:$0xff]
    %v6445 = vld [vmem:[#allocation5 + $0x80] sm:$0xff]
    %v6446 = vld [vmem:[#allocation5 + $0x88] sm:$0xff]
    %v6447 = vld [vmem:[#allocation5 + $0x90] sm:$0xff]
    %v6448 = vld [vmem:[#allocation5 + $0x98] sm:$0xff]
    %v6449 = vld [vmem:[#allocation5 + $0xa0] sm:$0xff]
    %v6450 = vld [vmem:[#allocation5 + $0xa8] sm:$0xff]
    %v6451 = vld [vmem:[#allocation5 + $0xb0] sm:$0xff]
    %v6452 = vld [vmem:[#allocation5 + $0xb8] sm:$0xff]
    %v6453 = vld [vmem:[#allocation5 + $0xc0] sm:$0xff]
    %v6454 = vld [vmem:[#allocation5 + $0xc8] sm:$0xff]
    %v6455 = vld [vmem:[#allocation5 + $0xd0] sm:$0xff]
    %v6456 = vld [vmem:[#allocation5 + $0xd8] sm:$0xff]
    %v6457 = vld [vmem:[#allocation5 + $0xe0] sm:$0xff]
    %v6458 = vld [vmem:[#allocation5 + $0xe8] sm:$0xff]
    %v6459 = vld [vmem:[#allocation5 + $0xf0] sm:$0xff]
    %v6460 = vld [vmem:[#allocation5 + $0xf8] sm:$0xff]
    %v6461 = vld [vmem:[#allocation5 + $0x100] sm:$0xff]
    %v6462 = vld [vmem:[#allocation5 + $0x108] sm:$0xff]
    %v6463 = vld [vmem:[#allocation5 + $0x110] sm:$0xff]
    %v6464 = vld [vmem:[#allocation5 + $0x118] sm:$0xff]
    %v6465 = vld [vmem:[#allocation5 + $0x120] sm:$0xff]
    %v6466 = vld [vmem:[#allocation5 + $0x128] sm:$0xff]
    %v6467 = vld [vmem:[#allocation5 + $0x130] sm:$0xff]
    %v6468 = vld [vmem:[#allocation5 + $0x138] sm:$0xff]
    %v6469 = vld [vmem:[#allocation5 + $0x140] sm:$0xff]
    %v6470 = vld [vmem:[#allocation5 + $0x148] sm:$0xff]
    %v6471 = vld [vmem:[#allocation5 + $0x150] sm:$0xff]
    %v6472 = vld [vmem:[#allocation5 + $0x158] sm:$0xff]
    %v6473 = vld [vmem:[#allocation5 + $0x160] sm:$0xff]
    %v6474 = vld [vmem:[#allocation5 + $0x168] sm:$0xff]
    %v6475 = vld [vmem:[#allocation5 + $0x170] sm:$0xff]
    %v6476 = vld [vmem:[#allocation5 + $0x178] sm:$0xff]
    %v6477 = vld [vmem:[#allocation5 + $0x180] sm:$0xff]
    %v6478 = vld [vmem:[#allocation5 + $0x188] sm:$0xff]
    %v6479 = vld [vmem:[#allocation5 + $0x190] sm:$0xff]
    %v6480 = vld [vmem:[#allocation5 + $0x198] sm:$0xff]
    %v6481 = vld [vmem:[#allocation5 + $0x1a0] sm:$0xff]
    %v6482 = vld [vmem:[#allocation5 + $0x1a8] sm:$0xff]
    %v6483 = vld [vmem:[#allocation5 + $0x1b0] sm:$0xff]
    %v6484 = vld [vmem:[#allocation5 + $0x1b8] sm:$0xff]
    %v6485 = vld [vmem:[#allocation5 + $0x1c0] sm:$0xff]
    %v6486 = vld [vmem:[#allocation5 + $0x1c8] sm:$0xff]
    %v6487 = vld [vmem:[#allocation5 + $0x1d0] sm:$0xff]
    %v6488 = vld [vmem:[#allocation5 + $0x1d8] sm:$0xff]
    %v6489 = vld [vmem:[#allocation5 + $0x1e0] sm:$0xff]
    %v6490 = vld [vmem:[#allocation5 + $0x1e8] sm:$0xff]
    %v6491 = vld [vmem:[#allocation5 + $0x1f0] sm:$0xff]
    %v6492 = vld [vmem:[#allocation5 + $0x1f8] sm:$0xff]
    %v6493 = vld [vmem:[#allocation5 + $0x200] sm:$0xff]
    %v6494 = vld [vmem:[#allocation5 + $0x208] sm:$0xff]
    %v6495 = vld [vmem:[#allocation5 + $0x210] sm:$0xff]
    %v6496 = vld [vmem:[#allocation5 + $0x218] sm:$0xff]
    %v6497 = vld [vmem:[#allocation5 + $0x220] sm:$0xff]
    %v6498 = vld [vmem:[#allocation5 + $0x228] sm:$0xff]
    %v6499 = vld [vmem:[#allocation5 + $0x230] sm:$0xff]
    %v6500 = vld [vmem:[#allocation5 + $0x238] sm:$0xff]
    %v6501 = vld [vmem:[#allocation5 + $0x240] sm:$0xff]
    %v6502 = vld [vmem:[#allocation5 + $0x248] sm:$0xff]
    %v6503 = vld [vmem:[#allocation5 + $0x250] sm:$0xff]
    %v6504 = vld [vmem:[#allocation5 + $0x258] sm:$0xff]
    %v6505 = vld [vmem:[#allocation5 + $0x260] sm:$0xff]
    %v6506 = vld [vmem:[#allocation5 + $0x268] sm:$0xff]
    %v6507 = vld [vmem:[#allocation5 + $0x270] sm:$0xff]
    %v6508 = vld [vmem:[#allocation5 + $0x278] sm:$0xff]
    %v6509 = vld [vmem:[#allocation5 + $0x280] sm:$0xff]
    %v6510 = vld [vmem:[#allocation5 + $0x288] sm:$0xff]
    %v6511 = vld [vmem:[#allocation5 + $0x290] sm:$0xff]
    %v6512 = vld [vmem:[#allocation5 + $0x298] sm:$0xff]
    %v6513 = vld [vmem:[#allocation5 + $0x2a0] sm:$0xff]
    %v6514 = vld [vmem:[#allocation5 + $0x2a8] sm:$0xff]
    %v6515 = vld [vmem:[#allocation5 + $0x2b0] sm:$0xff]
    %v6516 = vld [vmem:[#allocation5 + $0x2b8] sm:$0xff]
    %v6517 = vld [vmem:[#allocation5 + $0x2c0] sm:$0xff]
    %v6518 = vld [vmem:[#allocation5 + $0x2c8] sm:$0xff]
    %v6519 = vld [vmem:[#allocation5 + $0x2d0] sm:$0xff]
    %v6520 = vld [vmem:[#allocation5 + $0x2d8] sm:$0xff]
    %v6521 = vld [vmem:[#allocation5 + $0x2e0] sm:$0xff]
    %v6522 = vld [vmem:[#allocation5 + $0x2e8] sm:$0xff]
    %v6523 = vld [vmem:[#allocation5 + $0x2f0] sm:$0xff]
    %v6524 = vld [vmem:[#allocation5 + $0x2f8] sm:$0xff]
    %v6525 = vld [vmem:[#allocation5 + $0x300] sm:$0xff]
    %v6526 = vld [vmem:[#allocation5 + $0x308] sm:$0xff]
    %v6527 = vld [vmem:[#allocation5 + $0x310] sm:$0xff]
    %v6528 = vld [vmem:[#allocation5 + $0x318] sm:$0xff]
    %v6529 = vld [vmem:[#allocation5 + $0x320] sm:$0xff]
    %v6530 = vld [vmem:[#allocation5 + $0x328] sm:$0xff]
    %v6531 = vld [vmem:[#allocation5 + $0x330] sm:$0xff]
    %v6532 = vld [vmem:[#allocation5 + $0x338] sm:$0xff]
    %v6533 = vld [vmem:[#allocation5 + $0x340] sm:$0xff]
    %v6534 = vld [vmem:[#allocation5 + $0x348] sm:$0xff]
    %v6535 = vld [vmem:[#allocation5 + $0x350] sm:$0xff]
    %v6536 = vld [vmem:[#allocation5 + $0x358] sm:$0xff]
    %v6537 = vld [vmem:[#allocation5 + $0x360] sm:$0xff]
    %v6538 = vld [vmem:[#allocation5 + $0x368] sm:$0xff]
    %v6539 = vld [vmem:[#allocation5 + $0x370] sm:$0xff]
    %v6540 = vld [vmem:[#allocation5 + $0x378] sm:$0xff]
    %v6541 = vld [vmem:[#allocation5 + $0x380] sm:$0xff]
    %v6542 = vld [vmem:[#allocation5 + $0x388] sm:$0xff]
    %v6543 = vld [vmem:[#allocation5 + $0x390] sm:$0xff]
    %v6544 = vld [vmem:[#allocation5 + $0x398] sm:$0xff]
    %v6545 = vld [vmem:[#allocation5 + $0x3a0] sm:$0xff]
    %v6546 = vld [vmem:[#allocation5 + $0x3a8] sm:$0xff]
    %v6547 = vld [vmem:[#allocation5 + $0x3b0] sm:$0xff]
    %v6548 = vld [vmem:[#allocation5 + $0x3b8] sm:$0xff]
    %v6549 = vld [vmem:[#allocation5 + $0x3c0] sm:$0xff]
    %v6550 = vld [vmem:[#allocation5 + $0x3c8] sm:$0xff]
    %v6551 = vld [vmem:[#allocation5 + $0x3d0] sm:$0xff]
    %v6552 = vld [vmem:[#allocation5 + $0x3d8] sm:$0xff]
    %v6553 = vld [vmem:[#allocation5 + $0x3e0] sm:$0xff]
    %v6554 = vld [vmem:[#allocation5 + $0x3e8] sm:$0xff]
    %v6555 = vld [vmem:[#allocation5 + $0x3f0] sm:$0xff]
    %v6556 = vld [vmem:[#allocation5 + $0x3f8] sm:$0xff]
    %s6557 = sshll.u32 %s6339, 4
    %6558 = dma.done %s127, %s6557
    %s6559 = scalar_lea.hbm %s11, 65536
    %s6561 = sshll.u32 1, 14
    %s6562 = sxor.u32 4294967295, %s6561
    %s6564 = sadd.s32 2, %s94
    %s6566 = sshll.u32 7, 26
    %s6567 = sxor.u32 4294967295, %s6566
    %s6568 = sand.u32 0, %s6567
    %s6569 = sshll.u32 %s6564, 26
    %s6570 = sor.u32 %s6568, %s6569
    %s6571 = sshll.u32 [#allocation5], 4
    %s6572 = int_to_ptr.vmem [resolvable:$true] %s6571
    %6575 = sst [smem:[#allocation24]] 256
    %s6576 = scalar_lea.smem [#allocation24], 1
    %6577 = sst [smem:[%s6576]] 256
    %s6578 = scalar_lea.smem [#allocation24], 2
    %6579 = sst [smem:[%s6578]] 2
    %s6580 = scalar_lea.smem [#allocation24], 3
    %6581 = sst [smem:[%s6580]] 64
    %s6582 = scalar_lea.smem [#allocation24], 4
    %6583 = sst [smem:[%s6582]] 128
    %s6584 = scalar_lea.smem [#allocation24], 5
    %6585 = sst [smem:[%s6584]] 2
    %s6586 = scalar_lea.smem [#allocation24], 6
    %6587 = sst [smem:[%s6586]] 128
    %s6588 = scalar_lea.smem [#allocation24], 7
    %6589 = sst [smem:[%s6588]] 64
    %s6590 = scalar_lea.smem [#allocation24], 8
    %6591 = sst [smem:[%s6590]] 4
    %6593 = dma.general %s6559, 16384, %s6572, [#allocation6], [#allocation23], [#allocation24], %s6570, 0
    %v6594 = vld [vmem:[#allocation4 + $0x8] sm:$0xff]
    %v6596 = vlaneseq
    %v6597 = vshrl.u32 %v6596, 7
    %v6598 = vsub.s32 0, %v6597
    %v6599 = vrot.slane %v6594, %v6598
    %v6600 = vlaneseq
    %v6601 = vshrl.u32 %v6600, 7
    %v6602 = vsub.s32 1, %v6601
    %v6603 = vrot.slane %v6594, %v6602
    %v6604 = vlaneseq
    %v6605 = vshrl.u32 %v6604, 7
    %v6606 = vsub.s32 2, %v6605
    %v6607 = vrot.slane %v6594, %v6606
    %v6608 = vlaneseq
    %v6609 = vshrl.u32 %v6608, 7
    %v6610 = vsub.s32 3, %v6609
    %v6611 = vrot.slane %v6594, %v6610
    %v6612 = vlaneseq
    %v6613 = vshrl.u32 %v6612, 7
    %v6614 = vsub.s32 4, %v6613
    %v6615 = vrot.slane %v6594, %v6614
    %v6616 = vlaneseq
    %v6617 = vshrl.u32 %v6616, 7
    %v6618 = vsub.s32 5, %v6617
    %v6619 = vrot.slane %v6594, %v6618
    %v6620 = vlaneseq
    %v6621 = vshrl.u32 %v6620, 7
    %v6622 = vsub.s32 6, %v6621
    %v6623 = vrot.slane %v6594, %v6622
    %v6624 = vlaneseq
    %v6625 = vshrl.u32 %v6624, 7
    %v6626 = vsub.s32 7, %v6625
    %v6627 = vrot.slane %v6594, %v6626
    %v6636 = vpack.c.bf16 %v6599, %v6599
    %v6637 = vpack.c.bf16 %v6603, %v6603
    %v6638 = vpack.c.bf16 %v6607, %v6607
    %v6639 = vpack.c.bf16 %v6611, %v6611
    %v6640 = vpack.c.bf16 %v6615, %v6615
    %v6641 = vpack.c.bf16 %v6619, %v6619
    %v6642 = vpack.c.bf16 %v6623, %v6623
    %v6643 = vpack.c.bf16 %v6627, %v6627
    %v6644 = vld [vmem:[%s126] sm:$0xff]
    %v6645 = vld [vmem:[%s126 + $0x8] sm:$0xff]
    %v6646 = vld [vmem:[%s126 + $0x10] sm:$0xff]
    %v6647 = vld [vmem:[%s126 + $0x18] sm:$0xff]
    %v6648 = vld [vmem:[%s126 + $0x20] sm:$0xff]
    %v6649 = vld [vmem:[%s126 + $0x28] sm:$0xff]
    %v6650 = vld [vmem:[%s126 + $0x30] sm:$0xff]
    %v6651 = vld [vmem:[%s126 + $0x38] sm:$0xff]
    %v6652 = vld [vmem:[%s126 + $0x40] sm:$0xff]
    %v6653 = vld [vmem:[%s126 + $0x48] sm:$0xff]
    %v6654 = vld [vmem:[%s126 + $0x50] sm:$0xff]
    %v6655 = vld [vmem:[%s126 + $0x58] sm:$0xff]
    %v6656 = vld [vmem:[%s126 + $0x60] sm:$0xff]
    %v6657 = vld [vmem:[%s126 + $0x68] sm:$0xff]
    %v6658 = vld [vmem:[%s126 + $0x70] sm:$0xff]
    %v6659 = vld [vmem:[%s126 + $0x78] sm:$0xff]
    %v6660 = vld [vmem:[%s126 + $0x80] sm:$0xff]
    %v6661 = vld [vmem:[%s126 + $0x88] sm:$0xff]
    %v6662 = vld [vmem:[%s126 + $0x90] sm:$0xff]
    %v6663 = vld [vmem:[%s126 + $0x98] sm:$0xff]
    %v6664 = vld [vmem:[%s126 + $0xa0] sm:$0xff]
    %v6665 = vld [vmem:[%s126 + $0xa8] sm:$0xff]
    %v6666 = vld [vmem:[%s126 + $0xb0] sm:$0xff]
    %v6667 = vld [vmem:[%s126 + $0xb8] sm:$0xff]
    %v6668 = vld [vmem:[%s126 + $0xc0] sm:$0xff]
    %v6669 = vld [vmem:[%s126 + $0xc8] sm:$0xff]
    %v6670 = vld [vmem:[%s126 + $0xd0] sm:$0xff]
    %v6671 = vld [vmem:[%s126 + $0xd8] sm:$0xff]
    %v6672 = vld [vmem:[%s126 + $0xe0] sm:$0xff]
    %v6673 = vld [vmem:[%s126 + $0xe8] sm:$0xff]
    %v6674 = vld [vmem:[%s126 + $0xf0] sm:$0xff]
    %v6675 = vld [vmem:[%s126 + $0xf8] sm:$0xff]
    %v6676 = vld [vmem:[%s126 + $0x100] sm:$0xff]
    %v6677 = vld [vmem:[%s126 + $0x108] sm:$0xff]
    %v6678 = vld [vmem:[%s126 + $0x110] sm:$0xff]
    %v6679 = vld [vmem:[%s126 + $0x118] sm:$0xff]
    %v6680 = vld [vmem:[%s126 + $0x120] sm:$0xff]
    %v6681 = vld [vmem:[%s126 + $0x128] sm:$0xff]
    %v6682 = vld [vmem:[%s126 + $0x130] sm:$0xff]
    %v6683 = vld [vmem:[%s126 + $0x138] sm:$0xff]
    %v6684 = vld [vmem:[%s126 + $0x140] sm:$0xff]
    %v6685 = vld [vmem:[%s126 + $0x148] sm:$0xff]
    %v6686 = vld [vmem:[%s126 + $0x150] sm:$0xff]
    %v6687 = vld [vmem:[%s126 + $0x158] sm:$0xff]
    %v6688 = vld [vmem:[%s126 + $0x160] sm:$0xff]
    %v6689 = vld [vmem:[%s126 + $0x168] sm:$0xff]
    %v6690 = vld [vmem:[%s126 + $0x170] sm:$0xff]
    %v6691 = vld [vmem:[%s126 + $0x178] sm:$0xff]
    %v6692 = vld [vmem:[%s126 + $0x180] sm:$0xff]
    %v6693 = vld [vmem:[%s126 + $0x188] sm:$0xff]
    %v6694 = vld [vmem:[%s126 + $0x190] sm:$0xff]
    %v6695 = vld [vmem:[%s126 + $0x198] sm:$0xff]
    %v6696 = vld [vmem:[%s126 + $0x1a0] sm:$0xff]
    %v6697 = vld [vmem:[%s126 + $0x1a8] sm:$0xff]
    %v6698 = vld [vmem:[%s126 + $0x1b0] sm:$0xff]
    %v6699 = vld [vmem:[%s126 + $0x1b8] sm:$0xff]
    %v6700 = vld [vmem:[%s126 + $0x1c0] sm:$0xff]
    %v6701 = vld [vmem:[%s126 + $0x1c8] sm:$0xff]
    %v6702 = vld [vmem:[%s126 + $0x1d0] sm:$0xff]
    %v6703 = vld [vmem:[%s126 + $0x1d8] sm:$0xff]
    %v6704 = vld [vmem:[%s126 + $0x1e0] sm:$0xff]
    %v6705 = vld [vmem:[%s126 + $0x1e8] sm:$0xff]
    %v6706 = vld [vmem:[%s126 + $0x1f0] sm:$0xff]
    %v6707 = vld [vmem:[%s126 + $0x1f8] sm:$0xff]
    %v6708 = vld [vmem:[%s126 + $0x200] sm:$0xff]
    %v6709 = vld [vmem:[%s126 + $0x208] sm:$0xff]
    %v6710 = vld [vmem:[%s126 + $0x210] sm:$0xff]
    %v6711 = vld [vmem:[%s126 + $0x218] sm:$0xff]
    %v6712 = vld [vmem:[%s126 + $0x220] sm:$0xff]
    %v6713 = vld [vmem:[%s126 + $0x228] sm:$0xff]
    %v6714 = vld [vmem:[%s126 + $0x230] sm:$0xff]
    %v6715 = vld [vmem:[%s126 + $0x238] sm:$0xff]
    %v6716 = vld [vmem:[%s126 + $0x240] sm:$0xff]
    %v6717 = vld [vmem:[%s126 + $0x248] sm:$0xff]
    %v6718 = vld [vmem:[%s126 + $0x250] sm:$0xff]
    %v6719 = vld [vmem:[%s126 + $0x258] sm:$0xff]
    %v6720 = vld [vmem:[%s126 + $0x260] sm:$0xff]
    %v6721 = vld [vmem:[%s126 + $0x268] sm:$0xff]
    %v6722 = vld [vmem:[%s126 + $0x270] sm:$0xff]
    %v6723 = vld [vmem:[%s126 + $0x278] sm:$0xff]
    %v6724 = vld [vmem:[%s126 + $0x280] sm:$0xff]
    %v6725 = vld [vmem:[%s126 + $0x288] sm:$0xff]
    %v6726 = vld [vmem:[%s126 + $0x290] sm:$0xff]
    %v6727 = vld [vmem:[%s126 + $0x298] sm:$0xff]
    %v6728 = vld [vmem:[%s126 + $0x2a0] sm:$0xff]
    %v6729 = vld [vmem:[%s126 + $0x2a8] sm:$0xff]
    %v6730 = vld [vmem:[%s126 + $0x2b0] sm:$0xff]
    %v6731 = vld [vmem:[%s126 + $0x2b8] sm:$0xff]
    %v6732 = vld [vmem:[%s126 + $0x2c0] sm:$0xff]
    %v6733 = vld [vmem:[%s126 + $0x2c8] sm:$0xff]
    %v6734 = vld [vmem:[%s126 + $0x2d0] sm:$0xff]
    %v6735 = vld [vmem:[%s126 + $0x2d8] sm:$0xff]
    %v6736 = vld [vmem:[%s126 + $0x2e0] sm:$0xff]
    %v6737 = vld [vmem:[%s126 + $0x2e8] sm:$0xff]
    %v6738 = vld [vmem:[%s126 + $0x2f0] sm:$0xff]
    %v6739 = vld [vmem:[%s126 + $0x2f8] sm:$0xff]
    %v6740 = vld [vmem:[%s126 + $0x300] sm:$0xff]
    %v6741 = vld [vmem:[%s126 + $0x308] sm:$0xff]
    %v6742 = vld [vmem:[%s126 + $0x310] sm:$0xff]
    %v6743 = vld [vmem:[%s126 + $0x318] sm:$0xff]
    %v6744 = vld [vmem:[%s126 + $0x320] sm:$0xff]
    %v6745 = vld [vmem:[%s126 + $0x328] sm:$0xff]
    %v6746 = vld [vmem:[%s126 + $0x330] sm:$0xff]
    %v6747 = vld [vmem:[%s126 + $0x338] sm:$0xff]
    %v6748 = vld [vmem:[%s126 + $0x340] sm:$0xff]
    %v6749 = vld [vmem:[%s126 + $0x348] sm:$0xff]
    %v6750 = vld [vmem:[%s126 + $0x350] sm:$0xff]
    %v6751 = vld [vmem:[%s126 + $0x358] sm:$0xff]
    %v6752 = vld [vmem:[%s126 + $0x360] sm:$0xff]
    %v6753 = vld [vmem:[%s126 + $0x368] sm:$0xff]
    %v6754 = vld [vmem:[%s126 + $0x370] sm:$0xff]
    %v6755 = vld [vmem:[%s126 + $0x378] sm:$0xff]
    %v6756 = vld [vmem:[%s126 + $0x380] sm:$0xff]
    %v6757 = vld [vmem:[%s126 + $0x388] sm:$0xff]
    %v6758 = vld [vmem:[%s126 + $0x390] sm:$0xff]
    %v6759 = vld [vmem:[%s126 + $0x398] sm:$0xff]
    %v6760 = vld [vmem:[%s126 + $0x3a0] sm:$0xff]
    %v6761 = vld [vmem:[%s126 + $0x3a8] sm:$0xff]
    %v6762 = vld [vmem:[%s126 + $0x3b0] sm:$0xff]
    %v6763 = vld [vmem:[%s126 + $0x3b8] sm:$0xff]
    %v6764 = vld [vmem:[%s126 + $0x3c0] sm:$0xff]
    %v6765 = vld [vmem:[%s126 + $0x3c8] sm:$0xff]
    %v6766 = vld [vmem:[%s126 + $0x3d0] sm:$0xff]
    %v6767 = vld [vmem:[%s126 + $0x3d8] sm:$0xff]
    %v6768 = vld [vmem:[%s126 + $0x3e0] sm:$0xff]
    %v6769 = vld [vmem:[%s126 + $0x3e8] sm:$0xff]
    %v6770 = vld [vmem:[%s126 + $0x3f0] sm:$0xff]
    %v6771 = vld [vmem:[%s126 + $0x3f8] sm:$0xff]
    %6772 = vmatprep.subr.bf16.mxu0 %v6645
    %6773 = vmatpush1.bf16.msra.mxu0 %v6644
    %6774 = vmatprep.subr.bf16.mxu0 %v6647
    %6775 = vmatpush1.bf16.msra.mxu0 %v6646
    %6776 = vmatprep.subr.bf16.mxu0 %v6649
    %6777 = vmatpush1.bf16.msra.mxu0 %v6648
    %6778 = vmatprep.subr.bf16.mxu0 %v6651
    %6779 = vmatpush1.bf16.msra.mxu0 %v6650
    %6780 = vmatprep.subr.bf16.mxu0 %v6653
    %6781 = vmatpush1.bf16.msra.mxu0 %v6652
    %6782 = vmatprep.subr.bf16.mxu0 %v6655
    %6783 = vmatpush1.bf16.msra.mxu0 %v6654
    %6784 = vmatprep.subr.bf16.mxu0 %v6657
    %6785 = vmatpush1.bf16.msra.mxu0 %v6656
    %6786 = vmatprep.subr.bf16.mxu0 %v6659
    %6787 = vmatpush1.bf16.msra.mxu0 %v6658
    %6788 = vmatprep.subr.bf16.mxu0 %v6661
    %6789 = vmatpush1.bf16.msra.mxu0 %v6660
    %6790 = vmatprep.subr.bf16.mxu0 %v6663
    %6791 = vmatpush1.bf16.msra.mxu0 %v6662
    %6792 = vmatprep.subr.bf16.mxu0 %v6665
    %6793 = vmatpush1.bf16.msra.mxu0 %v6664
    %6794 = vmatprep.subr.bf16.mxu0 %v6667
    %6795 = vmatpush1.bf16.msra.mxu0 %v6666
    %6796 = vmatprep.subr.bf16.mxu0 %v6669
    %6797 = vmatpush1.bf16.msra.mxu0 %v6668
    %6798 = vmatprep.subr.bf16.mxu0 %v6671
    %6799 = vmatpush1.bf16.msra.mxu0 %v6670
    %6800 = vmatprep.subr.bf16.mxu0 %v6673
    %6801 = vmatpush1.bf16.msra.mxu0 %v6672
    %6802 = vmatprep.subr.bf16.mxu0 %v6675
    %6803 = vmatpush1.bf16.msra.mxu0 %v6674
    %6804 = vmatprep.mubr.bf16.mxu0 %v6637
    %6805 = vmatmul.mubr.bf16.gmra.mrb[0].mxu0 %v6636
    %v6806 = vpop.f32.mrb[0].mxu0
    %v6807 = vadd.f32 0.0, %v6806
    %v6808 = vpop.f32.mrb[0].mxu0
    %v6809 = vadd.f32 0.0, %v6808
    %v6810 = vpop.f32.mrb[0].mxu0
    %v6811 = vpop.f32.mrb[0].mxu0
    %6812 = vdwg.mxu0
    %6813 = vmatprep.subr.bf16.mxu0 %v6677
    %6814 = vmatpush1.bf16.msra.mxu0 %v6676
    %6815 = vmatprep.subr.bf16.mxu0 %v6679
    %6816 = vmatpush1.bf16.msra.mxu0 %v6678
    %6817 = vmatprep.subr.bf16.mxu0 %v6681
    %6818 = vmatpush1.bf16.msra.mxu0 %v6680
    %6819 = vmatprep.subr.bf16.mxu0 %v6683
    %6820 = vmatpush1.bf16.msra.mxu0 %v6682
    %6821 = vmatprep.subr.bf16.mxu0 %v6685
    %6822 = vmatpush1.bf16.msra.mxu0 %v6684
    %6823 = vmatprep.subr.bf16.mxu0 %v6687
    %6824 = vmatpush1.bf16.msra.mxu0 %v6686
    %6825 = vmatprep.subr.bf16.mxu0 %v6689
    %6826 = vmatpush1.bf16.msra.mxu0 %v6688
    %6827 = vmatprep.subr.bf16.mxu0 %v6691
    %6828 = vmatpush1.bf16.msra.mxu0 %v6690
    %6829 = vmatprep.subr.bf16.mxu0 %v6693
    %6830 = vmatpush1.bf16.msra.mxu0 %v6692
    %6831 = vmatprep.subr.bf16.mxu0 %v6695
    %6832 = vmatpush1.bf16.msra.mxu0 %v6694
    %6833 = vmatprep.subr.bf16.mxu0 %v6697
    %6834 = vmatpush1.bf16.msra.mxu0 %v6696
    %6835 = vmatprep.subr.bf16.mxu0 %v6699
    %6836 = vmatpush1.bf16.msra.mxu0 %v6698
    %6837 = vmatprep.subr.bf16.mxu0 %v6701
    %6838 = vmatpush1.bf16.msra.mxu0 %v6700
    %6839 = vmatprep.subr.bf16.mxu0 %v6703
    %6840 = vmatpush1.bf16.msra.mxu0 %v6702
    %6841 = vmatprep.subr.bf16.mxu0 %v6705
    %6842 = vmatpush1.bf16.msra.mxu0 %v6704
    %6843 = vmatprep.subr.bf16.mxu0 %v6707
    %6844 = vmatpush1.bf16.msra.mxu0 %v6706
    %6845 = vmatprep.mubr.bf16.mxu0 %v6639
    %6846 = vmatmul.mubr.bf16.gmra.mrb[0].mxu0 %v6638
    %v6847 = vpop.f32.mrb[0].mxu0
    %v6848 = vadd.f32 %v6807, %v6847
    %v6849 = vpop.f32.mrb[0].mxu0
    %v6850 = vadd.f32 %v6809, %v6849
    %v6851 = vpop.f32.mrb[0].mxu0
    %v6852 = vpop.f32.mrb[0].mxu0
    %6853 = vdwg.mxu0
    %6854 = vmatprep.subr.bf16.mxu0 %v6709
    %6855 = vmatpush1.bf16.msra.mxu0 %v6708
    %6856 = vmatprep.subr.bf16.mxu0 %v6711
    %6857 = vmatpush1.bf16.msra.mxu0 %v6710
    %6858 = vmatprep.subr.bf16.mxu0 %v6713
    %6859 = vmatpush1.bf16.msra.mxu0 %v6712
    %6860 = vmatprep.subr.bf16.mxu0 %v6715
    %6861 = vmatpush1.bf16.msra.mxu0 %v6714
    %6862 = vmatprep.subr.bf16.mxu0 %v6717
    %6863 = vmatpush1.bf16.msra.mxu0 %v6716
    %6864 = vmatprep.subr.bf16.mxu0 %v6719
    %6865 = vmatpush1.bf16.msra.mxu0 %v6718
    %6866 = vmatprep.subr.bf16.mxu0 %v6721
    %6867 = vmatpush1.bf16.msra.mxu0 %v6720
    %6868 = vmatprep.subr.bf16.mxu0 %v6723
    %6869 = vmatpush1.bf16.msra.mxu0 %v6722
    %6870 = vmatprep.subr.bf16.mxu0 %v6725
    %6871 = vmatpush1.bf16.msra.mxu0 %v6724
    %6872 = vmatprep.subr.bf16.mxu0 %v6727
    %6873 = vmatpush1.bf16.msra.mxu0 %v6726
    %6874 = vmatprep.subr.bf16.mxu0 %v6729
    %6875 = vmatpush1.bf16.msra.mxu0 %v6728
    %6876 = vmatprep.subr.bf16.mxu0 %v6731
    %6877 = vmatpush1.bf16.msra.mxu0 %v6730
    %6878 = vmatprep.subr.bf16.mxu0 %v6733
    %6879 = vmatpush1.bf16.msra.mxu0 %v6732
    %6880 = vmatprep.subr.bf16.mxu0 %v6735
    %6881 = vmatpush1.bf16.msra.mxu0 %v6734
    %6882 = vmatprep.subr.bf16.mxu0 %v6737
    %6883 = vmatpush1.bf16.msra.mxu0 %v6736
    %6884 = vmatprep.subr.bf16.mxu0 %v6739
    %6885 = vmatpush1.bf16.msra.mxu0 %v6738
    %6886 = vmatprep.mubr.bf16.mxu0 %v6641
    %6887 = vmatmul.mubr.bf16.gmra.mrb[0].mxu0 %v6640
    %v6888 = vpop.f32.mrb[0].mxu0
    %v6889 = vadd.f32 %v6848, %v6888
    %v6890 = vpop.f32.mrb[0].mxu0
    %v6891 = vadd.f32 %v6850, %v6890
    %v6892 = vpop.f32.mrb[0].mxu0
    %v6893 = vpop.f32.mrb[0].mxu0
    %6894 = vdwg.mxu0
    %6895 = vmatprep.subr.bf16.mxu0 %v6741
    %6896 = vmatpush1.bf16.msra.mxu0 %v6740
    %6897 = vmatprep.subr.bf16.mxu0 %v6743
    %6898 = vmatpush1.bf16.msra.mxu0 %v6742
    %6899 = vmatprep.subr.bf16.mxu0 %v6745
    %6900 = vmatpush1.bf16.msra.mxu0 %v6744
    %6901 = vmatprep.subr.bf16.mxu0 %v6747
    %6902 = vmatpush1.bf16.msra.mxu0 %v6746
    %6903 = vmatprep.subr.bf16.mxu0 %v6749
    %6904 = vmatpush1.bf16.msra.mxu0 %v6748
    %6905 = vmatprep.subr.bf16.mxu0 %v6751
    %6906 = vmatpush1.bf16.msra.mxu0 %v6750
    %6907 = vmatprep.subr.bf16.mxu0 %v6753
    %6908 = vmatpush1.bf16.msra.mxu0 %v6752
    %6909 = vmatprep.subr.bf16.mxu0 %v6755
    %6910 = vmatpush1.bf16.msra.mxu0 %v6754
    %6911 = vmatprep.subr.bf16.mxu0 %v6757
    %6912 = vmatpush1.bf16.msra.mxu0 %v6756
    %6913 = vmatprep.subr.bf16.mxu0 %v6759
    %6914 = vmatpush1.bf16.msra.mxu0 %v6758
    %6915 = vmatprep.subr.bf16.mxu0 %v6761
    %6916 = vmatpush1.bf16.msra.mxu0 %v6760
    %6917 = vmatprep.subr.bf16.mxu0 %v6763
    %6918 = vmatpush1.bf16.msra.mxu0 %v6762
    %6919 = vmatprep.subr.bf16.mxu0 %v6765
    %6920 = vmatpush1.bf16.msra.mxu0 %v6764
    %6921 = vmatprep.subr.bf16.mxu0 %v6767
    %6922 = vmatpush1.bf16.msra.mxu0 %v6766
    %6923 = vmatprep.subr.bf16.mxu0 %v6769
    %6924 = vmatpush1.bf16.msra.mxu0 %v6768
    %6925 = vmatprep.subr.bf16.mxu0 %v6771
    %6926 = vmatpush1.bf16.msra.mxu0 %v6770
    %6927 = vmatprep.mubr.bf16.mxu0 %v6643
    %6928 = vmatmul.mubr.bf16.gmra.mrb[0].mxu0 %v6642
    %v6929 = vpop.f32.mrb[0].mxu0
    %v6930 = vadd.f32 %v6889, %v6929
    %v6931 = vpop.f32.mrb[0].mxu0
    %v6932 = vadd.f32 %v6891, %v6931
    %v6933 = vpop.f32.mrb[0].mxu0
    %v6934 = vpop.f32.mrb[0].mxu0
    %6935 = vdwg.mxu0
    %6936 = vmatprep.subr.bf16.mxu0 %v6430
    %6937 = vmatpush1.bf16.msra.mxu0 %v6429
    %6938 = vmatprep.subr.bf16.mxu0 %v6432
    %6939 = vmatpush1.bf16.msra.mxu0 %v6431
    %6940 = vmatprep.subr.bf16.mxu0 %v6434
    %6941 = vmatpush1.bf16.msra.mxu0 %v6433
    %6942 = vmatprep.subr.bf16.mxu0 %v6436
    %6943 = vmatpush1.bf16.msra.mxu0 %v6435
    %6944 = vmatprep.subr.bf16.mxu0 %v6438
    %6945 = vmatpush1.bf16.msra.mxu0 %v6437
    %6946 = vmatprep.subr.bf16.mxu0 %v6440
    %6947 = vmatpush1.bf16.msra.mxu0 %v6439
    %6948 = vmatprep.subr.bf16.mxu0 %v6442
    %6949 = vmatpush1.bf16.msra.mxu0 %v6441
    %6950 = vmatprep.subr.bf16.mxu0 %v6444
    %6951 = vmatpush1.bf16.msra.mxu0 %v6443
    %6952 = vmatprep.subr.bf16.mxu0 %v6446
    %6953 = vmatpush1.bf16.msra.mxu0 %v6445
    %6954 = vmatprep.subr.bf16.mxu0 %v6448
    %6955 = vmatpush1.bf16.msra.mxu0 %v6447
    %6956 = vmatprep.subr.bf16.mxu0 %v6450
    %6957 = vmatpush1.bf16.msra.mxu0 %v6449
    %6958 = vmatprep.subr.bf16.mxu0 %v6452
    %6959 = vmatpush1.bf16.msra.mxu0 %v6451
    %6960 = vmatprep.subr.bf16.mxu0 %v6454
    %6961 = vmatpush1.bf16.msra.mxu0 %v6453
    %6962 = vmatprep.subr.bf16.mxu0 %v6456
    %6963 = vmatpush1.bf16.msra.mxu0 %v6455
    %6964 = vmatprep.subr.bf16.mxu0 %v6458
    %6965 = vmatpush1.bf16.msra.mxu0 %v6457
    %6966 = vmatprep.subr.bf16.mxu0 %v6460
    %6967 = vmatpush1.bf16.msra.mxu0 %v6459
    %6968 = vmatprep.mubr.bf16.mxu0 %v6422
    %6969 = vmatmul.mubr.bf16.gmra.mrb[0].mxu0 %v6421
    %v6970 = vpop.f32.mrb[0].mxu0
    %v6971 = vadd.f32 %v6930, %v6970
    %v6972 = vpop.f32.mrb[0].mxu0
    %v6973 = vadd.f32 %v6932, %v6972
    %v6974 = vpop.f32.mrb[0].mxu0
    %v6975 = vpop.f32.mrb[0].mxu0
    %6976 = vdwg.mxu0
    %6977 = vmatprep.subr.bf16.mxu0 %v6462
    %6978 = vmatpush1.bf16.msra.mxu0 %v6461
    %6979 = vmatprep.subr.bf16.mxu0 %v6464
    %6980 = vmatpush1.bf16.msra.mxu0 %v6463
    %6981 = vmatprep.subr.bf16.mxu0 %v6466
    %6982 = vmatpush1.bf16.msra.mxu0 %v6465
    %6983 = vmatprep.subr.bf16.mxu0 %v6468
    %6984 = vmatpush1.bf16.msra.mxu0 %v6467
    %6985 = vmatprep.subr.bf16.mxu0 %v6470
    %6986 = vmatpush1.bf16.msra.mxu0 %v6469
    %6987 = vmatprep.subr.bf16.mxu0 %v6472
    %6988 = vmatpush1.bf16.msra.mxu0 %v6471
    %6989 = vmatprep.subr.bf16.mxu0 %v6474
    %6990 = vmatpush1.bf16.msra.mxu0 %v6473
    %6991 = vmatprep.subr.bf16.mxu0 %v6476
    %6992 = vmatpush1.bf16.msra.mxu0 %v6475
    %6993 = vmatprep.subr.bf16.mxu0 %v6478
    %6994 = vmatpush1.bf16.msra.mxu0 %v6477
    %6995 = vmatprep.subr.bf16.mxu0 %v6480
    %6996 = vmatpush1.bf16.msra.mxu0 %v6479
    %6997 = vmatprep.subr.bf16.mxu0 %v6482
    %6998 = vmatpush1.bf16.msra.mxu0 %v6481
    %6999 = vmatprep.subr.bf16.mxu0 %v6484
    %7000 = vmatpush1.bf16.msra.mxu0 %v6483
    %7001 = vmatprep.subr.bf16.mxu0 %v6486
    %7002 = vmatpush1.bf16.msra.mxu0 %v6485
    %7003 = vmatprep.subr.bf16.mxu0 %v6488
    %7004 = vmatpush1.bf16.msra.mxu0 %v6487
    %7005 = vmatprep.subr.bf16.mxu0 %v6490
    %7006 = vmatpush1.bf16.msra.mxu0 %v6489
    %7007 = vmatprep.subr.bf16.mxu0 %v6492
    %7008 = vmatpush1.bf16.msra.mxu0 %v6491
    %7009 = vmatprep.mubr.bf16.mxu0 %v6424
    %7010 = vmatmul.mubr.bf16.gmra.mrb[0].mxu0 %v6423
    %v7011 = vpop.f32.mrb[0].mxu0
    %v7012 = vadd.f32 %v6971, %v7011
    %v7013 = vpop.f32.mrb[0].mxu0
    %v7014 = vadd.f32 %v6973, %v7013
    %v7015 = vpop.f32.mrb[0].mxu0
    %v7016 = vpop.f32.mrb[0].mxu0
    %7017 = vdwg.mxu0
    %7018 = vmatprep.subr.bf16.mxu0 %v6494
    %7019 = vmatpush1.bf16.msra.mxu0 %v6493
    %7020 = vmatprep.subr.bf16.mxu0 %v6496
    %7021 = vmatpush1.bf16.msra.mxu0 %v6495
    %7022 = vmatprep.subr.bf16.mxu0 %v6498
    %7023 = vmatpush1.bf16.msra.mxu0 %v6497
    %7024 = vmatprep.subr.bf16.mxu0 %v6500
    %7025 = vmatpush1.bf16.msra.mxu0 %v6499
    %7026 = vmatprep.subr.bf16.mxu0 %v6502
    %7027 = vmatpush1.bf16.msra.mxu0 %v6501
    %7028 = vmatprep.subr.bf16.mxu0 %v6504
    %7029 = vmatpush1.bf16.msra.mxu0 %v6503
    %7030 = vmatprep.subr.bf16.mxu0 %v6506
    %7031 = vmatpush1.bf16.msra.mxu0 %v6505
    %7032 = vmatprep.subr.bf16.mxu0 %v6508
    %7033 = vmatpush1.bf16.msra.mxu0 %v6507
    %7034 = vmatprep.subr.bf16.mxu0 %v6510
    %7035 = vmatpush1.bf16.msra.mxu0 %v6509
    %7036 = vmatprep.subr.bf16.mxu0 %v6512
    %7037 = vmatpush1.bf16.msra.mxu0 %v6511
    %7038 = vmatprep.subr.bf16.mxu0 %v6514
    %7039 = vmatpush1.bf16.msra.mxu0 %v6513
    %7040 = vmatprep.subr.bf16.mxu0 %v6516
    %7041 = vmatpush1.bf16.msra.mxu0 %v6515
    %7042 = vmatprep.subr.bf16.mxu0 %v6518
    %7043 = vmatpush1.bf16.msra.mxu0 %v6517
    %7044 = vmatprep.subr.bf16.mxu0 %v6520
    %7045 = vmatpush1.bf16.msra.mxu0 %v6519
    %7046 = vmatprep.subr.bf16.mxu0 %v6522
    %7047 = vmatpush1.bf16.msra.mxu0 %v6521
    %7048 = vmatprep.subr.bf16.mxu0 %v6524
    %7049 = vmatpush1.bf16.msra.mxu0 %v6523
    %7050 = vmatprep.mubr.bf16.mxu0 %v6426
    %7051 = vmatmul.mubr.bf16.gmra.mrb[0].mxu0 %v6425
    %v7052 = vpop.f32.mrb[0].mxu0
    %v7053 = vadd.f32 %v7012, %v7052
    %v7054 = vpop.f32.mrb[0].mxu0
    %v7055 = vadd.f32 %v7014, %v7054
    %v7056 = vpop.f32.mrb[0].mxu0
    %v7057 = vpop.f32.mrb[0].mxu0
    %7058 = vdwg.mxu0
    %7059 = vmatprep.subr.bf16.mxu0 %v6526
    %7060 = vmatpush1.bf16.msra.mxu0 %v6525
    %7061 = vmatprep.subr.bf16.mxu0 %v6528
    %7062 = vmatpush1.bf16.msra.mxu0 %v6527
    %7063 = vmatprep.subr.bf16.mxu0 %v6530
    %7064 = vmatpush1.bf16.msra.mxu0 %v6529
    %7065 = vmatprep.subr.bf16.mxu0 %v6532
    %7066 = vmatpush1.bf16.msra.mxu0 %v6531
    %7067 = vmatprep.subr.bf16.mxu0 %v6534
    %7068 = vmatpush1.bf16.msra.mxu0 %v6533
    %7069 = vmatprep.subr.bf16.mxu0 %v6536
    %7070 = vmatpush1.bf16.msra.mxu0 %v6535
    %7071 = vmatprep.subr.bf16.mxu0 %v6538
    %7072 = vmatpush1.bf16.msra.mxu0 %v6537
    %7073 = vmatprep.subr.bf16.mxu0 %v6540
    %7074 = vmatpush1.bf16.msra.mxu0 %v6539
    %7075 = vmatprep.subr.bf16.mxu0 %v6542
    %7076 = vmatpush1.bf16.msra.mxu0 %v6541
    %7077 = vmatprep.subr.bf16.mxu0 %v6544
    %7078 = vmatpush1.bf16.msra.mxu0 %v6543
    %7079 = vmatprep.subr.bf16.mxu0 %v6546
    %7080 = vmatpush1.bf16.msra.mxu0 %v6545
    %7081 = vmatprep.subr.bf16.mxu0 %v6548
    %7082 = vmatpush1.bf16.msra.mxu0 %v6547
    %7083 = vmatprep.subr.bf16.mxu0 %v6550
    %7084 = vmatpush1.bf16.msra.mxu0 %v6549
    %7085 = vmatprep.subr.bf16.mxu0 %v6552
    %7086 = vmatpush1.bf16.msra.mxu0 %v6551
    %7087 = vmatprep.subr.bf16.mxu0 %v6554
    %7088 = vmatpush1.bf16.msra.mxu0 %v6553
    %7089 = vmatprep.subr.bf16.mxu0 %v6556
    %7090 = vmatpush1.bf16.msra.mxu0 %v6555
    %7091 = vmatprep.mubr.bf16.mxu0 %v6428
    %7092 = vmatmul.mubr.bf16.gmra.mrb[0].mxu0 %v6427
    %v7093 = vpop.f32.mrb[0].mxu0
    %v7094 = vadd.f32 %v7053, %v7093
    %v7095 = vpop.f32.mrb[0].mxu0
    %v7096 = vadd.f32 %v7055, %v7095
    %v7097 = vpop.f32.mrb[0].mxu0
    %v7098 = vpop.f32.mrb[0].mxu0
    %7099 = vdwg.mxu0
    %s7100 = sshll.u32 %s6339, 4
    %7101 = dma.done %s164, %s7100
    %s7102 = scalar_lea.hbm %s11, 81920
    %s7104 = sshll.u32 1, 14
    %s7105 = sxor.u32 4294967295, %s7104
    %s7107 = sadd.s32 2, %s94
    %s7109 = sshll.u32 7, 26
    %s7110 = sxor.u32 4294967295, %s7109
    %s7111 = sand.u32 0, %s7110
    %s7112 = sshll.u32 %s7107, 26
    %s7113 = sor.u32 %s7111, %s7112
    %s7114 = sshll.u32 %s126, 4
    %s7115 = int_to_ptr.vmem [resolvable:$true] %s7114
    %7118 = sst [smem:[#allocation26]] 256
    %s7119 = scalar_lea.smem [#allocation26], 1
    %7120 = sst [smem:[%s7119]] 256
    %s7121 = scalar_lea.smem [#allocation26], 2
    %7122 = sst [smem:[%s7121]] 2
    %s7123 = scalar_lea.smem [#allocation26], 3
    %7124 = sst [smem:[%s7123]] 64
    %s7125 = scalar_lea.smem [#allocation26], 4
    %7126 = sst [smem:[%s7125]] 128
    %s7127 = scalar_lea.smem [#allocation26], 5
    %7128 = sst [smem:[%s7127]] 2
    %s7129 = scalar_lea.smem [#allocation26], 6
    %7130 = sst [smem:[%s7129]] 128
    %s7131 = scalar_lea.smem [#allocation26], 7
    %7132 = sst [smem:[%s7131]] 64
    %s7133 = scalar_lea.smem [#allocation26], 8
    %7134 = sst [smem:[%s7133]] 4
    %7136 = dma.general %s7102, 16384, %s7115, %s127, [#allocation25], [#allocation26], %s7113, 0
    %v7137 = vld [vmem:[#allocation4 + $0x10] sm:$0xff]
    %v7139 = vlaneseq
    %v7140 = vshrl.u32 %v7139, 7
    %v7141 = vsub.s32 0, %v7140
    %v7142 = vrot.slane %v7137, %v7141
    %v7143 = vlaneseq
    %v7144 = vshrl.u32 %v7143, 7
    %v7145 = vsub.s32 1, %v7144
    %v7146 = vrot.slane %v7137, %v7145
    %v7147 = vlaneseq
    %v7148 = vshrl.u32 %v7147, 7
    %v7149 = vsub.s32 2, %v7148
    %v7150 = vrot.slane %v7137, %v7149
    %v7151 = vlaneseq
    %v7152 = vshrl.u32 %v7151, 7
    %v7153 = vsub.s32 3, %v7152
    %v7154 = vrot.slane %v7137, %v7153
    %v7155 = vlaneseq
    %v7156 = vshrl.u32 %v7155, 7
    %v7157 = vsub.s32 4, %v7156
    %v7158 = vrot.slane %v7137, %v7157
    %v7159 = vlaneseq
    %v7160 = vshrl.u32 %v7159, 7
    %v7161 = vsub.s32 5, %v7160
    %v7162 = vrot.slane %v7137, %v7161
    %v7163 = vlaneseq
    %v7164 = vshrl.u32 %v7163, 7
    %v7165 = vsub.s32 6, %v7164
    %v7166 = vrot.slane %v7137, %v7165
    %v7167 = vlaneseq
    %v7168 = vshrl.u32 %v7167, 7
    %v7169 = vsub.s32 7, %v7168
    %v7170 = vrot.slane %v7137, %v7169
    %v7179 = vpack.c.bf16 %v7142, %v7142
    %v7180 = vpack.c.bf16 %v7146, %v7146
    %v7181 = vpack.c.bf16 %v7150, %v7150
    %v7182 = vpack.c.bf16 %v7154, %v7154
    %v7183 = vpack.c.bf16 %v7158, %v7158
    %v7184 = vpack.c.bf16 %v7162, %v7162
    %v7185 = vpack.c.bf16 %v7166, %v7166
    %v7186 = vpack.c.bf16 %v7170, %v7170
    %v7187 = vld [vmem:[%s163] sm:$0xff]
    %v7188 = vld [vmem:[%s163 + $0x8] sm:$0xff]
    %v7189 = vld [vmem:[%s163 + $0x10] sm:$0xff]
    %v7190 = vld [vmem:[%s163 + $0x18] sm:$0xff]
    %v7191 = vld [vmem:[%s163 + $0x20] sm:$0xff]
    %v7192 = vld [vmem:[%s163 + $0x28] sm:$0xff]
    %v7193 = vld [vmem:[%s163 + $0x30] sm:$0xff]
    %v7194 = vld [vmem:[%s163 + $0x38] sm:$0xff]
    %v7195 = vld [vmem:[%s163 + $0x40] sm:$0xff]
    %v7196 = vld [vmem:[%s163 + $0x48] sm:$0xff]
    %v7197 = vld [vmem:[%s163 + $0x50] sm:$0xff]
    %v7198 = vld [vmem:[%s163 + $0x58] sm:$0xff]
    %v7199 = vld [vmem:[%s163 + $0x60] sm:$0xff]
    %v7200 = vld [vmem:[%s163 + $0x68] sm:$0xff]
    %v7201 = vld [vmem:[%s163 + $0x70] sm:$0xff]
    %v7202 = vld [vmem:[%s163 + $0x78] sm:$0xff]
    %v7203 = vld [vmem:[%s163 + $0x80] sm:$0xff]
    %v7204 = vld [vmem:[%s163 + $0x88] sm:$0xff]
    %v7205 = vld [vmem:[%s163 + $0x90] sm:$0xff]
    %v7206 = vld [vmem:[%s163 + $0x98] sm:$0xff]
    %v7207 = vld [vmem:[%s163 + $0xa0] sm:$0xff]
    %v7208 = vld [vmem:[%s163 + $0xa8] sm:$0xff]
    %v7209 = vld [vmem:[%s163 + $0xb0] sm:$0xff]
    %v7210 = vld [vmem:[%s163 + $0xb8] sm:$0xff]
    %v7211 = vld [vmem:[%s163 + $0xc0] sm:$0xff]
    %v7212 = vld [vmem:[%s163 + $0xc8] sm:$0xff]
    %v7213 = vld [vmem:[%s163 + $0xd0] sm:$0xff]
    %v7214 = vld [vmem:[%s163 + $0xd8] sm:$0xff]
    %v7215 = vld [vmem:[%s163 + $0xe0] sm:$0xff]
    %v7216 = vld [vmem:[%s163 + $0xe8] sm:$0xff]
    %v7217 = vld [vmem:[%s163 + $0xf0] sm:$0xff]
    %v7218 = vld [vmem:[%s163 + $0xf8] sm:$0xff]
    %v7219 = vld [vmem:[%s163 + $0x100] sm:$0xff]
    %v7220 = vld [vmem:[%s163 + $0x108] sm:$0xff]
    %v7221 = vld [vmem:[%s163 + $0x110] sm:$0xff]
    %v7222 = vld [vmem:[%s163 + $0x118] sm:$0xff]
    %v7223 = vld [vmem:[%s163 + $0x120] sm:$0xff]
    %v7224 = vld [vmem:[%s163 + $0x128] sm:$0xff]
    %v7225 = vld [vmem:[%s163 + $0x130] sm:$0xff]
    %v7226 = vld [vmem:[%s163 + $0x138] sm:$0xff]
    %v7227 = vld [vmem:[%s163 + $0x140] sm:$0xff]
    %v7228 = vld [vmem:[%s163 + $0x148] sm:$0xff]
    %v7229 = vld [vmem:[%s163 + $0x150] sm:$0xff]
    %v7230 = vld [vmem:[%s163 + $0x158] sm:$0xff]
    %v7231 = vld [vmem:[%s163 + $0x160] sm:$0xff]
    %v7232 = vld [vmem:[%s163 + $0x168] sm:$0xff]
    %v7233 = vld [vmem:[%s163 + $0x170] sm:$0xff]
    %v7234 = vld [vmem:[%s163 + $0x178] sm:$0xff]
    %v7235 = vld [vmem:[%s163 + $0x180] sm:$0xff]
    %v7236 = vld [vmem:[%s163 + $0x188] sm:$0xff]
    %v7237 = vld [vmem:[%s163 + $0x190] sm:$0xff]
    %v7238 = vld [vmem:[%s163 + $0x198] sm:$0xff]
    %v7239 = vld [vmem:[%s163 + $0x1a0] sm:$0xff]
    %v7240 = vld [vmem:[%s163 + $0x1a8] sm:$0xff]
    %v7241 = vld [vmem:[%s163 + $0x1b0] sm:$0xff]
    %v7242 = vld [vmem:[%s163 + $0x1b8] sm:$0xff]
    %v7243 = vld [vmem:[%s163 + $0x1c0] sm:$0xff]
    %v7244 = vld [vmem:[%s163 + $0x1c8] sm:$0xff]
    %v7245 = vld [vmem:[%s163 + $0x1d0] sm:$0xff]
    %v7246 = vld [vmem:[%s163 + $0x1d8] sm:$0xff]
    %v7247 = vld [vmem:[%s163 + $0x1e0] sm:$0xff]
    %v7248 = vld [vmem:[%s163 + $0x1e8] sm:$0xff]
    %v7249 = vld [vmem:[%s163 + $0x1f0] sm:$0xff]
    %v7250 = vld [vmem:[%s163 + $0x1f8] sm:$0xff]
    %v7251 = vld [vmem:[%s163 + $0x200] sm:$0xff]
    %v7252 = vld [vmem:[%s163 + $0x208] sm:$0xff]
    %v7253 = vld [vmem:[%s163 + $0x210] sm:$0xff]
    %v7254 = vld [vmem:[%s163 + $0x218] sm:$0xff]
    %v7255 = vld [vmem:[%s163 + $0x220] sm:$0xff]
    %v7256 = vld [vmem:[%s163 + $0x228] sm:$0xff]
    %v7257 = vld [vmem:[%s163 + $0x230] sm:$0xff]
    %v7258 = vld [vmem:[%s163 + $0x238] sm:$0xff]
    %v7259 = vld [vmem:[%s163 + $0x240] sm:$0xff]
    %v7260 = vld [vmem:[%s163 + $0x248] sm:$0xff]
    %v7261 = vld [vmem:[%s163 + $0x250] sm:$0xff]
    %v7262 = vld [vmem:[%s163 + $0x258] sm:$0xff]
    %v7263 = vld [vmem:[%s163 + $0x260] sm:$0xff]
    %v7264 = vld [vmem:[%s163 + $0x268] sm:$0xff]
    %v7265 = vld [vmem:[%s163 + $0x270] sm:$0xff]
    %v7266 = vld [vmem:[%s163 + $0x278] sm:$0xff]
    %v7267 = vld [vmem:[%s163 + $0x280] sm:$0xff]
    %v7268 = vld [vmem:[%s163 + $0x288] sm:$0xff]
    %v7269 = vld [vmem:[%s163 + $0x290] sm:$0xff]
    %v7270 = vld [vmem:[%s163 + $0x298] sm:$0xff]
    %v7271 = vld [vmem:[%s163 + $0x2a0] sm:$0xff]
    %v7272 = vld [vmem:[%s163 + $0x2a8] sm:$0xff]
    %v7273 = vld [vmem:[%s163 + $0x2b0] sm:$0xff]
    %v7274 = vld [vmem:[%s163 + $0x2b8] sm:$0xff]
    %v7275 = vld [vmem:[%s163 + $0x2c0] sm:$0xff]
    %v7276 = vld [vmem:[%s163 + $0x2c8] sm:$0xff]
    %v7277 = vld [vmem:[%s163 + $0x2d0] sm:$0xff]
    %v7278 = vld [vmem:[%s163 + $0x2d8] sm:$0xff]
    %v7279 = vld [vmem:[%s163 + $0x2e0] sm:$0xff]
    %v7280 = vld [vmem:[%s163 + $0x2e8] sm:$0xff]
    %v7281 = vld [vmem:[%s163 + $0x2f0] sm:$0xff]
    %v7282 = vld [vmem:[%s163 + $0x2f8] sm:$0xff]
    %v7283 = vld [vmem:[%s163 + $0x300] sm:$0xff]
    %v7284 = vld [vmem:[%s163 + $0x308] sm:$0xff]
    %v7285 = vld [vmem:[%s163 + $0x310] sm:$0xff]
    %v7286 = vld [vmem:[%s163 + $0x318] sm:$0xff]
    %v7287 = vld [vmem:[%s163 + $0x320] sm:$0xff]
    %v7288 = vld [vmem:[%s163 + $0x328] sm:$0xff]
    %v7289 = vld [vmem:[%s163 + $0x330] sm:$0xff]
    %v7290 = vld [vmem:[%s163 + $0x338] sm:$0xff]
    %v7291 = vld [vmem:[%s163 + $0x340] sm:$0xff]
    %v7292 = vld [vmem:[%s163 + $0x348] sm:$0xff]
    %v7293 = vld [vmem:[%s163 + $0x350] sm:$0xff]
    %v7294 = vld [vmem:[%s163 + $0x358] sm:$0xff]
    %v7295 = vld [vmem:[%s163 + $0x360] sm:$0xff]
    %v7296 = vld [vmem:[%s163 + $0x368] sm:$0xff]
    %v7297 = vld [vmem:[%s163 + $0x370] sm:$0xff]
    %v7298 = vld [vmem:[%s163 + $0x378] sm:$0xff]
    %v7299 = vld [vmem:[%s163 + $0x380] sm:$0xff]
    %v7300 = vld [vmem:[%s163 + $0x388] sm:$0xff]
    %v7301 = vld [vmem:[%s163 + $0x390] sm:$0xff]
    %v7302 = vld [vmem:[%s163 + $0x398] sm:$0xff]
    %v7303 = vld [vmem:[%s163 + $0x3a0] sm:$0xff]
    %v7304 = vld [vmem:[%s163 + $0x3a8] sm:$0xff]
    %v7305 = vld [vmem:[%s163 + $0x3b0] sm:$0xff]
    %v7306 = vld [vmem:[%s163 + $0x3b8] sm:$0xff]
    %v7307 = vld [vmem:[%s163 + $0x3c0] sm:$0xff]
    %v7308 = vld [vmem:[%s163 + $0x3c8] sm:$0xff]
    %v7309 = vld [vmem:[%s163 + $0x3d0] sm:$0xff]
    %v7310 = vld [vmem:[%s163 + $0x3d8] sm:$0xff]
    %v7311 = vld [vmem:[%s163 + $0x3e0] sm:$0xff]
    %v7312 = vld [vmem:[%s163 + $0x3e8] sm:$0xff]
    %v7313 = vld [vmem:[%s163 + $0x3f0] sm:$0xff]
    %v7314 = vld [vmem:[%s163 + $0x3f8] sm:$0xff]
    %7315 = vmatprep.subr.bf16.mxu0 %v7188
    %7316 = vmatpush1.bf16.msra.mxu0 %v7187
    %7317 = vmatprep.subr.bf16.mxu0 %v7190
    %7318 = vmatpush1.bf16.msra.mxu0 %v7189
    %7319 = vmatprep.subr.bf16.mxu0 %v7192
    %7320 = vmatpush1.bf16.msra.mxu0 %v7191
    %7321 = vmatprep.subr.bf16.mxu0 %v7194
    %7322 = vmatpush1.bf16.msra.mxu0 %v7193
    %7323 = vmatprep.subr.bf16.mxu0 %v7196
    %7324 = vmatpush1.bf16.msra.mxu0 %v7195
    %7325 = vmatprep.subr.bf16.mxu0 %v7198
    %7326 = vmatpush1.bf16.msra.mxu0 %v7197
    %7327 = vmatprep.subr.bf16.mxu0 %v7200
    %7328 = vmatpush1.bf16.msra.mxu0 %v7199
    %7329 = vmatprep.subr.bf16.mxu0 %v7202
    %7330 = vmatpush1.bf16.msra.mxu0 %v7201
    %7331 = vmatprep.subr.bf16.mxu0 %v7204
    %7332 = vmatpush1.bf16.msra.mxu0 %v7203
    %7333 = vmatprep.subr.bf16.mxu0 %v7206
    %7334 = vmatpush1.bf16.msra.mxu0 %v7205
    %7335 = vmatprep.subr.bf16.mxu0 %v7208
    %7336 = vmatpush1.bf16.msra.mxu0 %v7207
    %7337 = vmatprep.subr.bf16.mxu0 %v7210
    %7338 = vmatpush1.bf16.msra.mxu0 %v7209
    %7339 = vmatprep.subr.bf16.mxu0 %v7212
    %7340 = vmatpush1.bf16.msra.mxu0 %v7211
    %7341 = vmatprep.subr.bf16.mxu0 %v7214
    %7342 = vmatpush1.bf16.msra.mxu0 %v7213
    %7343 = vmatprep.subr.bf16.mxu0 %v7216
    %7344 = vmatpush1.bf16.msra.mxu0 %v7215
    %7345 = vmatprep.subr.bf16.mxu0 %v7218
    %7346 = vmatpush1.bf16.msra.mxu0 %v7217
    %7347 = vmatprep.mubr.bf16.mxu0 %v7180
    %7348 = vmatmul.mubr.bf16.gmra.mrb[0].mxu0 %v7179
    %v7349 = vpop.f32.mrb[0].mxu0
    %v7350 = vadd.f32 0.0, %v7349
    %v7351 = vpop.f32.mrb[0].mxu0
    %v7352 = vadd.f32 0.0, %v7351
    %v7353 = vpop.f32.mrb[0].mxu0
    %v7354 = vpop.f32.mrb[0].mxu0
    %7355 = vdwg.mxu0
    %7356 = vmatprep.subr.bf16.mxu0 %v7220
    %7357 = vmatpush1.bf16.msra.mxu0 %v7219
    %7358 = vmatprep.subr.bf16.mxu0 %v7222
    %7359 = vmatpush1.bf16.msra.mxu0 %v7221
    %7360 = vmatprep.subr.bf16.mxu0 %v7224
    %7361 = vmatpush1.bf16.msra.mxu0 %v7223
    %7362 = vmatprep.subr.bf16.mxu0 %v7226
    %7363 = vmatpush1.bf16.msra.mxu0 %v7225
    %7364 = vmatprep.subr.bf16.mxu0 %v7228
    %7365 = vmatpush1.bf16.msra.mxu0 %v7227
    %7366 = vmatprep.subr.bf16.mxu0 %v7230
    %7367 = vmatpush1.bf16.msra.mxu0 %v7229
    %7368 = vmatprep.subr.bf16.mxu0 %v7232
    %7369 = vmatpush1.bf16.msra.mxu0 %v7231
    %7370 = vmatprep.subr.bf16.mxu0 %v7234
    %7371 = vmatpush1.bf16.msra.mxu0 %v7233
    %7372 = vmatprep.subr.bf16.mxu0 %v7236
    %7373 = vmatpush1.bf16.msra.mxu0 %v7235
    %7374 = vmatprep.subr.bf16.mxu0 %v7238
    %7375 = vmatpush1.bf16.msra.mxu0 %v7237
    %7376 = vmatprep.subr.bf16.mxu0 %v7240
    %7377 = vmatpush1.bf16.msra.mxu0 %v7239
    %7378 = vmatprep.subr.bf16.mxu0 %v7242
    %7379 = vmatpush1.bf16.msra.mxu0 %v7241
    %7380 = vmatprep.subr.bf16.mxu0 %v7244
    %7381 = vmatpush1.bf16.msra.mxu0 %v7243
    %7382 = vmatprep.subr.bf16.mxu0 %v7246
    %7383 = vmatpush1.bf16.msra.mxu0 %v7245
    %7384 = vmatprep.subr.bf16.mxu0 %v7248
    %7385 = vmatpush1.bf16.msra.mxu0 %v7247
    %7386 = vmatprep.subr.bf16.mxu0 %v7250
    %7387 = vmatpush1.bf16.msra.mxu0 %v7249
    %7388 = vmatprep.mubr.bf16.mxu0 %v7182
    %7389 = vmatmul.mubr.bf16.gmra.mrb[0].mxu0 %v7181
    %v7390 = vpop.f32.mrb[0].mxu0
    %v7391 = vadd.f32 %v7350, %v7390
    %v7392 = vpop.f32.mrb[0].mxu0
    %v7393 = vadd.f32 %v7352, %v7392
    %v7394 = vpop.f32.mrb[0].mxu0
    %v7395 = vpop.f32.mrb[0].mxu0
    %7396 = vdwg.mxu0
    %7397 = vmatprep.subr.bf16.mxu0 %v7252
    %7398 = vmatpush1.bf16.msra.mxu0 %v7251
    %7399 = vmatprep.subr.bf16.mxu0 %v7254
    %7400 = vmatpush1.bf16.msra.mxu0 %v7253
    %7401 = vmatprep.subr.bf16.mxu0 %v7256
    %7402 = vmatpush1.bf16.msra.mxu0 %v7255
    %7403 = vmatprep.subr.bf16.mxu0 %v7258
    %7404 = vmatpush1.bf16.msra.mxu0 %v7257
    %7405 = vmatprep.subr.bf16.mxu0 %v7260
    %7406 = vmatpush1.bf16.msra.mxu0 %v7259
    %7407 = vmatprep.subr.bf16.mxu0 %v7262
    %7408 = vmatpush1.bf16.msra.mxu0 %v7261
    %7409 = vmatprep.subr.bf16.mxu0 %v7264
    %7410 = vmatpush1.bf16.msra.mxu0 %v7263
    %7411 = vmatprep.subr.bf16.mxu0 %v7266
    %7412 = vmatpush1.bf16.msra.mxu0 %v7265
    %7413 = vmatprep.subr.bf16.mxu0 %v7268
    %7414 = vmatpush1.bf16.msra.mxu0 %v7267
    %7415 = vmatprep.subr.bf16.mxu0 %v7270
    %7416 = vmatpush1.bf16.msra.mxu0 %v7269
    %7417 = vmatprep.subr.bf16.mxu0 %v7272
    %7418 = vmatpush1.bf16.msra.mxu0 %v7271
    %7419 = vmatprep.subr.bf16.mxu0 %v7274
    %7420 = vmatpush1.bf16.msra.mxu0 %v7273
    %7421 = vmatprep.subr.bf16.mxu0 %v7276
    %7422 = vmatpush1.bf16.msra.mxu0 %v7275
    %7423 = vmatprep.subr.bf16.mxu0 %v7278
    %7424 = vmatpush1.bf16.msra.mxu0 %v7277
    %7425 = vmatprep.subr.bf16.mxu0 %v7280
    %7426 = vmatpush1.bf16.msra.mxu0 %v7279
    %7427 = vmatprep.subr.bf16.mxu0 %v7282
    %7428 = vmatpush1.bf16.msra.mxu0 %v7281
    %7429 = vmatprep.mubr.bf16.mxu0 %v7184
    %7430 = vmatmul.mubr.bf16.gmra.mrb[0].mxu0 %v7183
    %v7431 = vpop.f32.mrb[0].mxu0
    %v7432 = vadd.f32 %v7391, %v7431
    %v7433 = vpop.f32.mrb[0].mxu0
    %v7434 = vadd.f32 %v7393, %v7433
    %v7435 = vpop.f32.mrb[0].mxu0
    %v7436 = vpop.f32.mrb[0].mxu0
    %7437 = vdwg.mxu0
    %7438 = vmatprep.subr.bf16.mxu0 %v7284
    %7439 = vmatpush1.bf16.msra.mxu0 %v7283
    %7440 = vmatprep.subr.bf16.mxu0 %v7286
    %7441 = vmatpush1.bf16.msra.mxu0 %v7285
    %7442 = vmatprep.subr.bf16.mxu0 %v7288
    %7443 = vmatpush1.bf16.msra.mxu0 %v7287
    %7444 = vmatprep.subr.bf16.mxu0 %v7290
    %7445 = vmatpush1.bf16.msra.mxu0 %v7289
    %7446 = vmatprep.subr.bf16.mxu0 %v7292
    %7447 = vmatpush1.bf16.msra.mxu0 %v7291
    %7448 = vmatprep.subr.bf16.mxu0 %v7294
    %7449 = vmatpush1.bf16.msra.mxu0 %v7293
    %7450 = vmatprep.subr.bf16.mxu0 %v7296
    %7451 = vmatpush1.bf16.msra.mxu0 %v7295
    %7452 = vmatprep.subr.bf16.mxu0 %v7298
    %7453 = vmatpush1.bf16.msra.mxu0 %v7297
    %7454 = vmatprep.subr.bf16.mxu0 %v7300
    %7455 = vmatpush1.bf16.msra.mxu0 %v7299
    %7456 = vmatprep.subr.bf16.mxu0 %v7302
    %7457 = vmatpush1.bf16.msra.mxu0 %v7301
    %7458 = vmatprep.subr.bf16.mxu0 %v7304
    %7459 = vmatpush1.bf16.msra.mxu0 %v7303
    %7460 = vmatprep.subr.bf16.mxu0 %v7306
    %7461 = vmatpush1.bf16.msra.mxu0 %v7305
    %7462 = vmatprep.subr.bf16.mxu0 %v7308
    %7463 = vmatpush1.bf16.msra.mxu0 %v7307
    %7464 = vmatprep.subr.bf16.mxu0 %v7310
    %7465 = vmatpush1.bf16.msra.mxu0 %v7309
    %7466 = vmatprep.subr.bf16.mxu0 %v7312
    %7467 = vmatpush1.bf16.msra.mxu0 %v7311
    %7468 = vmatprep.subr.bf16.mxu0 %v7314
    %7469 = vmatpush1.bf16.msra.mxu0 %v7313
    %7470 = vmatprep.mubr.bf16.mxu0 %v7186
    %7471 = vmatmul.mubr.bf16.gmra.mrb[0].mxu0 %v7185
    %v7472 = vpop.f32.mrb[0].mxu0
    %v7473 = vadd.f32 %v7432, %v7472
    %v7474 = vpop.f32.mrb[0].mxu0
    %v7475 = vadd.f32 %v7434, %v7474
    %v7476 = vpop.f32.mrb[0].mxu0
    %v7477 = vpop.f32.mrb[0].mxu0
    %7478 = vdwg.mxu0
    %v7479 = vadd.f32 %v7094, %v7473
    %v7480 = vadd.f32 %v7096, %v7475
    %s7481 = sshll.u32 %s6339, 4
    %7482 = dma.done %s6344, %s7481
    %s7483 = scalar_lea.hbm %s11, 98304
    %s7485 = sshll.u32 1, 14
    %s7486 = sxor.u32 4294967295, %s7485
    %s7488 = sadd.s32 2, %s94
    %s7490 = sshll.u32 7, 26
    %s7491 = sxor.u32 4294967295, %s7490
    %s7492 = sand.u32 0, %s7491
    %s7493 = sshll.u32 %s7488, 26
    %s7494 = sor.u32 %s7492, %s7493
    %s7495 = sshll.u32 %s163, 4
    %s7496 = int_to_ptr.vmem [resolvable:$true] %s7495
    %7499 = sst [smem:[#allocation28]] 256
    %s7500 = scalar_lea.smem [#allocation28], 1
    %7501 = sst [smem:[%s7500]] 256
    %s7502 = scalar_lea.smem [#allocation28], 2
    %7503 = sst [smem:[%s7502]] 2
    %s7504 = scalar_lea.smem [#allocation28], 3
    %7505 = sst [smem:[%s7504]] 64
    %s7506 = scalar_lea.smem [#allocation28], 4
    %7507 = sst [smem:[%s7506]] 128
    %s7508 = scalar_lea.smem [#allocation28], 5
    %7509 = sst [smem:[%s7508]] 2
    %s7510 = scalar_lea.smem [#allocation28], 6
    %7511 = sst [smem:[%s7510]] 128
    %s7512 = scalar_lea.smem [#allocation28], 7
    %7513 = sst [smem:[%s7512]] 64
    %s7514 = scalar_lea.smem [#allocation28], 8
    %7515 = sst [smem:[%s7514]] 4
    %7517 = dma.general %s7483, 16384, %s7496, %s164, [#allocation27], [#allocation28], %s7494, 0
    %v7518 = vld [vmem:[#allocation4 + $0x18] sm:$0xff]
    %v7520 = vlaneseq
    %v7521 = vshrl.u32 %v7520, 7
    %v7522 = vsub.s32 0, %v7521
    %v7523 = vrot.slane %v7518, %v7522
    %v7524 = vlaneseq
    %v7525 = vshrl.u32 %v7524, 7
    %v7526 = vsub.s32 1, %v7525
    %v7527 = vrot.slane %v7518, %v7526
    %v7528 = vlaneseq
    %v7529 = vshrl.u32 %v7528, 7
    %v7530 = vsub.s32 2, %v7529
    %v7531 = vrot.slane %v7518, %v7530
    %v7532 = vlaneseq
    %v7533 = vshrl.u32 %v7532, 7
    %v7534 = vsub.s32 3, %v7533
    %v7535 = vrot.slane %v7518, %v7534
    %v7536 = vlaneseq
    %v7537 = vshrl.u32 %v7536, 7
    %v7538 = vsub.s32 4, %v7537
    %v7539 = vrot.slane %v7518, %v7538
    %v7540 = vlaneseq
    %v7541 = vshrl.u32 %v7540, 7
    %v7542 = vsub.s32 5, %v7541
    %v7543 = vrot.slane %v7518, %v7542
    %v7544 = vlaneseq
    %v7545 = vshrl.u32 %v7544, 7
    %v7546 = vsub.s32 6, %v7545
    %v7547 = vrot.slane %v7518, %v7546
    %v7548 = vlaneseq
    %v7549 = vshrl.u32 %v7548, 7
    %v7550 = vsub.s32 7, %v7549
    %v7551 = vrot.slane %v7518, %v7550
    %v7560 = vpack.c.bf16 %v7523, %v7523
    %v7561 = vpack.c.bf16 %v7527, %v7527
    %v7562 = vpack.c.bf16 %v7531, %v7531
    %v7563 = vpack.c.bf16 %v7535, %v7535
    %v7564 = vpack.c.bf16 %v7539, %v7539
    %v7565 = vpack.c.bf16 %v7543, %v7543
    %v7566 = vpack.c.bf16 %v7547, %v7547
    %v7567 = vpack.c.bf16 %v7551, %v7551
    %v7568 = vld [vmem:[%s6343] sm:$0xff]
    %v7569 = vld [vmem:[%s6343 + $0x8] sm:$0xff]
    %v7570 = vld [vmem:[%s6343 + $0x10] sm:$0xff]
    %v7571 = vld [vmem:[%s6343 + $0x18] sm:$0xff]
    %v7572 = vld [vmem:[%s6343 + $0x20] sm:$0xff]
    %v7573 = vld [vmem:[%s6343 + $0x28] sm:$0xff]
    %v7574 = vld [vmem:[%s6343 + $0x30] sm:$0xff]
    %v7575 = vld [vmem:[%s6343 + $0x38] sm:$0xff]
    %v7576 = vld [vmem:[%s6343 + $0x40] sm:$0xff]
    %v7577 = vld [vmem:[%s6343 + $0x48] sm:$0xff]
    %v7578 = vld [vmem:[%s6343 + $0x50] sm:$0xff]
    %v7579 = vld [vmem:[%s6343 + $0x58] sm:$0xff]
    %v7580 = vld [vmem:[%s6343 + $0x60] sm:$0xff]
    %v7581 = vld [vmem:[%s6343 + $0x68] sm:$0xff]
    %v7582 = vld [vmem:[%s6343 + $0x70] sm:$0xff]
    %v7583 = vld [vmem:[%s6343 + $0x78] sm:$0xff]
    %v7584 = vld [vmem:[%s6343 + $0x80] sm:$0xff]
    %v7585 = vld [vmem:[%s6343 + $0x88] sm:$0xff]
    %v7586 = vld [vmem:[%s6343 + $0x90] sm:$0xff]
    %v7587 = vld [vmem:[%s6343 + $0x98] sm:$0xff]
    %v7588 = vld [vmem:[%s6343 + $0xa0] sm:$0xff]
    %v7589 = vld [vmem:[%s6343 + $0xa8] sm:$0xff]
    %v7590 = vld [vmem:[%s6343 + $0xb0] sm:$0xff]
    %v7591 = vld [vmem:[%s6343 + $0xb8] sm:$0xff]
    %v7592 = vld [vmem:[%s6343 + $0xc0] sm:$0xff]
    %v7593 = vld [vmem:[%s6343 + $0xc8] sm:$0xff]
    %v7594 = vld [vmem:[%s6343 + $0xd0] sm:$0xff]
    %v7595 = vld [vmem:[%s6343 + $0xd8] sm:$0xff]
    %v7596 = vld [vmem:[%s6343 + $0xe0] sm:$0xff]
    %v7597 = vld [vmem:[%s6343 + $0xe8] sm:$0xff]
    %v7598 = vld [vmem:[%s6343 + $0xf0] sm:$0xff]
    %v7599 = vld [vmem:[%s6343 + $0xf8] sm:$0xff]
    %v7600 = vld [vmem:[%s6343 + $0x100] sm:$0xff]
    %v7601 = vld [vmem:[%s6343 + $0x108] sm:$0xff]
    %v7602 = vld [vmem:[%s6343 + $0x110] sm:$0xff]
    %v7603 = vld [vmem:[%s6343 + $0x118] sm:$0xff]
    %v7604 = vld [vmem:[%s6343 + $0x120] sm:$0xff]
    %v7605 = vld [vmem:[%s6343 + $0x128] sm:$0xff]
    %v7606 = vld [vmem:[%s6343 + $0x130] sm:$0xff]
    %v7607 = vld [vmem:[%s6343 + $0x138] sm:$0xff]
    %v7608 = vld [vmem:[%s6343 + $0x140] sm:$0xff]
    %v7609 = vld [vmem:[%s6343 + $0x148] sm:$0xff]
    %v7610 = vld [vmem:[%s6343 + $0x150] sm:$0xff]
    %v7611 = vld [vmem:[%s6343 + $0x158] sm:$0xff]
    %v7612 = vld [vmem:[%s6343 + $0x160] sm:$0xff]
    %v7613 = vld [vmem:[%s6343 + $0x168] sm:$0xff]
    %v7614 = vld [vmem:[%s6343 + $0x170] sm:$0xff]
    %v7615 = vld [vmem:[%s6343 + $0x178] sm:$0xff]
    %v7616 = vld [vmem:[%s6343 + $0x180] sm:$0xff]
    %v7617 = vld [vmem:[%s6343 + $0x188] sm:$0xff]
    %v7618 = vld [vmem:[%s6343 + $0x190] sm:$0xff]
    %v7619 = vld [vmem:[%s6343 + $0x198] sm:$0xff]
    %v7620 = vld [vmem:[%s6343 + $0x1a0] sm:$0xff]
    %v7621 = vld [vmem:[%s6343 + $0x1a8] sm:$0xff]
    %v7622 = vld [vmem:[%s6343 + $0x1b0] sm:$0xff]
    %v7623 = vld [vmem:[%s6343 + $0x1b8] sm:$0xff]
    %v7624 = vld [vmem:[%s6343 + $0x1c0] sm:$0xff]
    %v7625 = vld [vmem:[%s6343 + $0x1c8] sm:$0xff]
    %v7626 = vld [vmem:[%s6343 + $0x1d0] sm:$0xff]
    %v7627 = vld [vmem:[%s6343 + $0x1d8] sm:$0xff]
    %v7628 = vld [vmem:[%s6343 + $0x1e0] sm:$0xff]
    %v7629 = vld [vmem:[%s6343 + $0x1e8] sm:$0xff]
    %v7630 = vld [vmem:[%s6343 + $0x1f0] sm:$0xff]
    %v7631 = vld [vmem:[%s6343 + $0x1f8] sm:$0xff]
    %v7632 = vld [vmem:[%s6343 + $0x200] sm:$0xff]
    %v7633 = vld [vmem:[%s6343 + $0x208] sm:$0xff]
    %v7634 = vld [vmem:[%s6343 + $0x210] sm:$0xff]
    %v7635 = vld [vmem:[%s6343 + $0x218] sm:$0xff]
    %v7636 = vld [vmem:[%s6343 + $0x220] sm:$0xff]
    %v7637 = vld [vmem:[%s6343 + $0x228] sm:$0xff]
    %v7638 = vld [vmem:[%s6343 + $0x230] sm:$0xff]
    %v7639 = vld [vmem:[%s6343 + $0x238] sm:$0xff]
    %v7640 = vld [vmem:[%s6343 + $0x240] sm:$0xff]
    %v7641 = vld [vmem:[%s6343 + $0x248] sm:$0xff]
    %v7642 = vld [vmem:[%s6343 + $0x250] sm:$0xff]
    %v7643 = vld [vmem:[%s6343 + $0x258] sm:$0xff]
    %v7644 = vld [vmem:[%s6343 + $0x260] sm:$0xff]
    %v7645 = vld [vmem:[%s6343 + $0x268] sm:$0xff]
    %v7646 = vld [vmem:[%s6343 + $0x270] sm:$0xff]
    %v7647 = vld [vmem:[%s6343 + $0x278] sm:$0xff]
    %v7648 = vld [vmem:[%s6343 + $0x280] sm:$0xff]
    %v7649 = vld [vmem:[%s6343 + $0x288] sm:$0xff]
    %v7650 = vld [vmem:[%s6343 + $0x290] sm:$0xff]
    %v7651 = vld [vmem:[%s6343 + $0x298] sm:$0xff]
    %v7652 = vld [vmem:[%s6343 + $0x2a0] sm:$0xff]
    %v7653 = vld [vmem:[%s6343 + $0x2a8] sm:$0xff]
    %v7654 = vld [vmem:[%s6343 + $0x2b0] sm:$0xff]
    %v7655 = vld [vmem:[%s6343 + $0x2b8] sm:$0xff]
    %v7656 = vld [vmem:[%s6343 + $0x2c0] sm:$0xff]
    %v7657 = vld [vmem:[%s6343 + $0x2c8] sm:$0xff]
    %v7658 = vld [vmem:[%s6343 + $0x2d0] sm:$0xff]
    %v7659 = vld [vmem:[%s6343 + $0x2d8] sm:$0xff]
    %v7660 = vld [vmem:[%s6343 + $0x2e0] sm:$0xff]
    %v7661 = vld [vmem:[%s6343 + $0x2e8] sm:$0xff]
    %v7662 = vld [vmem:[%s6343 + $0x2f0] sm:$0xff]
    %v7663 = vld [vmem:[%s6343 + $0x2f8] sm:$0xff]
    %v7664 = vld [vmem:[%s6343 + $0x300] sm:$0xff]
    %v7665 = vld [vmem:[%s6343 + $0x308] sm:$0xff]
    %v7666 = vld [vmem:[%s6343 + $0x310] sm:$0xff]
    %v7667 = vld [vmem:[%s6343 + $0x318] sm:$0xff]
    %v7668 = vld [vmem:[%s6343 + $0x320] sm:$0xff]
    %v7669 = vld [vmem:[%s6343 + $0x328] sm:$0xff]
    %v7670 = vld [vmem:[%s6343 + $0x330] sm:$0xff]
    %v7671 = vld [vmem:[%s6343 + $0x338] sm:$0xff]
    %v7672 = vld [vmem:[%s6343 + $0x340] sm:$0xff]
    %v7673 = vld [vmem:[%s6343 + $0x348] sm:$0xff]
    %v7674 = vld [vmem:[%s6343 + $0x350] sm:$0xff]
    %v7675 = vld [vmem:[%s6343 + $0x358] sm:$0xff]
    %v7676 = vld [vmem:[%s6343 + $0x360] sm:$0xff]
    %v7677 = vld [vmem:[%s6343 + $0x368] sm:$0xff]
    %v7678 = vld [vmem:[%s6343 + $0x370] sm:$0xff]
    %v7679 = vld [vmem:[%s6343 + $0x378] sm:$0xff]
    %v7680 = vld [vmem:[%s6343 + $0x380] sm:$0xff]
    %v7681 = vld [vmem:[%s6343 + $0x388] sm:$0xff]
    %v7682 = vld [vmem:[%s6343 + $0x390] sm:$0xff]
    %v7683 = vld [vmem:[%s6343 + $0x398] sm:$0xff]
    %v7684 = vld [vmem:[%s6343 + $0x3a0] sm:$0xff]
    %v7685 = vld [vmem:[%s6343 + $0x3a8] sm:$0xff]
    %v7686 = vld [vmem:[%s6343 + $0x3b0] sm:$0xff]
    %v7687 = vld [vmem:[%s6343 + $0x3b8] sm:$0xff]
    %v7688 = vld [vmem:[%s6343 + $0x3c0] sm:$0xff]
    %v7689 = vld [vmem:[%s6343 + $0x3c8] sm:$0xff]
    %v7690 = vld [vmem:[%s6343 + $0x3d0] sm:$0xff]
    %v7691 = vld [vmem:[%s6343 + $0x3d8] sm:$0xff]
    %v7692 = vld [vmem:[%s6343 + $0x3e0] sm:$0xff]
    %v7693 = vld [vmem:[%s6343 + $0x3e8] sm:$0xff]
    %v7694 = vld [vmem:[%s6343 + $0x3f0] sm:$0xff]
    %v7695 = vld [vmem:[%s6343 + $0x3f8] sm:$0xff]
    %7696 = vmatprep.subr.bf16.mxu0 %v7569
    %7697 = vmatpush1.bf16.msra.mxu0 %v7568
    %7698 = vmatprep.subr.bf16.mxu0 %v7571
    %7699 = vmatpush1.bf16.msra.mxu0 %v7570
    %7700 = vmatprep.subr.bf16.mxu0 %v7573
    %7701 = vmatpush1.bf16.msra.mxu0 %v7572
    %7702 = vmatprep.subr.bf16.mxu0 %v7575
    %7703 = vmatpush1.bf16.msra.mxu0 %v7574
    %7704 = vmatprep.subr.bf16.mxu0 %v7577
    %7705 = vmatpush1.bf16.msra.mxu0 %v7576
    %7706 = vmatprep.subr.bf16.mxu0 %v7579
    %7707 = vmatpush1.bf16.msra.mxu0 %v7578
    %7708 = vmatprep.subr.bf16.mxu0 %v7581
    %7709 = vmatpush1.bf16.msra.mxu0 %v7580
    %7710 = vmatprep.subr.bf16.mxu0 %v7583
    %7711 = vmatpush1.bf16.msra.mxu0 %v7582
    %7712 = vmatprep.subr.bf16.mxu0 %v7585
    %7713 = vmatpush1.bf16.msra.mxu0 %v7584
    %7714 = vmatprep.subr.bf16.mxu0 %v7587
    %7715 = vmatpush1.bf16.msra.mxu0 %v7586
    %7716 = vmatprep.subr.bf16.mxu0 %v7589
    %7717 = vmatpush1.bf16.msra.mxu0 %v7588
    %7718 = vmatprep.subr.bf16.mxu0 %v7591
    %7719 = vmatpush1.bf16.msra.mxu0 %v7590
    %7720 = vmatprep.subr.bf16.mxu0 %v7593
    %7721 = vmatpush1.bf16.msra.mxu0 %v7592
    %7722 = vmatprep.subr.bf16.mxu0 %v7595
    %7723 = vmatpush1.bf16.msra.mxu0 %v7594
    %7724 = vmatprep.subr.bf16.mxu0 %v7597
    %7725 = vmatpush1.bf16.msra.mxu0 %v7596
    %7726 = vmatprep.subr.bf16.mxu0 %v7599
    %7727 = vmatpush1.bf16.msra.mxu0 %v7598
    %7728 = vmatprep.mubr.bf16.mxu0 %v7561
    %7729 = vmatmul.mubr.bf16.gmra.mrb[0].mxu0 %v7560
    %v7730 = vpop.f32.mrb[0].mxu0
    %v7731 = vadd.f32 0.0, %v7730
    %v7732 = vpop.f32.mrb[0].mxu0
    %v7733 = vadd.f32 0.0, %v7732
    %v7734 = vpop.f32.mrb[0].mxu0
    %v7735 = vpop.f32.mrb[0].mxu0
    %7736 = vdwg.mxu0
    %7737 = vmatprep.subr.bf16.mxu0 %v7601
    %7738 = vmatpush1.bf16.msra.mxu0 %v7600
    %7739 = vmatprep.subr.bf16.mxu0 %v7603
    %7740 = vmatpush1.bf16.msra.mxu0 %v7602
    %7741 = vmatprep.subr.bf16.mxu0 %v7605
    %7742 = vmatpush1.bf16.msra.mxu0 %v7604
    %7743 = vmatprep.subr.bf16.mxu0 %v7607
    %7744 = vmatpush1.bf16.msra.mxu0 %v7606
    %7745 = vmatprep.subr.bf16.mxu0 %v7609
    %7746 = vmatpush1.bf16.msra.mxu0 %v7608
    %7747 = vmatprep.subr.bf16.mxu0 %v7611
    %7748 = vmatpush1.bf16.msra.mxu0 %v7610
    %7749 = vmatprep.subr.bf16.mxu0 %v7613
    %7750 = vmatpush1.bf16.msra.mxu0 %v7612
    %7751 = vmatprep.subr.bf16.mxu0 %v7615
    %7752 = vmatpush1.bf16.msra.mxu0 %v7614
    %7753 = vmatprep.subr.bf16.mxu0 %v7617
    %7754 = vmatpush1.bf16.msra.mxu0 %v7616
    %7755 = vmatprep.subr.bf16.mxu0 %v7619
    %7756 = vmatpush1.bf16.msra.mxu0 %v7618
    %7757 = vmatprep.subr.bf16.mxu0 %v7621
    %7758 = vmatpush1.bf16.msra.mxu0 %v7620
    %7759 = vmatprep.subr.bf16.mxu0 %v7623
    %7760 = vmatpush1.bf16.msra.mxu0 %v7622
    %7761 = vmatprep.subr.bf16.mxu0 %v7625
    %7762 = vmatpush1.bf16.msra.mxu0 %v7624
    %7763 = vmatprep.subr.bf16.mxu0 %v7627
    %7764 = vmatpush1.bf16.msra.mxu0 %v7626
    %7765 = vmatprep.subr.bf16.mxu0 %v7629
    %7766 = vmatpush1.bf16.msra.mxu0 %v7628
    %7767 = vmatprep.subr.bf16.mxu0 %v7631
    %7768 = vmatpush1.bf16.msra.mxu0 %v7630
    %7769 = vmatprep.mubr.bf16.mxu0 %v7563
    %7770 = vmatmul.mubr.bf16.gmra.mrb[0].mxu0 %v7562
    %v7771 = vpop.f32.mrb[0].mxu0
    %v7772 = vadd.f32 %v7731, %v7771
    %v7773 = vpop.f32.mrb[0].mxu0
    %v7774 = vadd.f32 %v7733, %v7773
    %v7775 = vpop.f32.mrb[0].mxu0
    %v7776 = vpop.f32.mrb[0].mxu0
    %7777 = vdwg.mxu0
    %7778 = vmatprep.subr.bf16.mxu0 %v7633
    %7779 = vmatpush1.bf16.msra.mxu0 %v7632
    %7780 = vmatprep.subr.bf16.mxu0 %v7635
    %7781 = vmatpush1.bf16.msra.mxu0 %v7634
    %7782 = vmatprep.subr.bf16.mxu0 %v7637
    %7783 = vmatpush1.bf16.msra.mxu0 %v7636
    %7784 = vmatprep.subr.bf16.mxu0 %v7639
    %7785 = vmatpush1.bf16.msra.mxu0 %v7638
    %7786 = vmatprep.subr.bf16.mxu0 %v7641
    %7787 = vmatpush1.bf16.msra.mxu0 %v7640
    %7788 = vmatprep.subr.bf16.mxu0 %v7643
    %7789 = vmatpush1.bf16.msra.mxu0 %v7642
    %7790 = vmatprep.subr.bf16.mxu0 %v7645
    %7791 = vmatpush1.bf16.msra.mxu0 %v7644
    %7792 = vmatprep.subr.bf16.mxu0 %v7647
    %7793 = vmatpush1.bf16.msra.mxu0 %v7646
    %7794 = vmatprep.subr.bf16.mxu0 %v7649
    %7795 = vmatpush1.bf16.msra.mxu0 %v7648
    %7796 = vmatprep.subr.bf16.mxu0 %v7651
    %7797 = vmatpush1.bf16.msra.mxu0 %v7650
    %7798 = vmatprep.subr.bf16.mxu0 %v7653
    %7799 = vmatpush1.bf16.msra.mxu0 %v7652
    %7800 = vmatprep.subr.bf16.mxu0 %v7655
    %7801 = vmatpush1.bf16.msra.mxu0 %v7654
    %7802 = vmatprep.subr.bf16.mxu0 %v7657
    %7803 = vmatpush1.bf16.msra.mxu0 %v7656
    %7804 = vmatprep.subr.bf16.mxu0 %v7659
    %7805 = vmatpush1.bf16.msra.mxu0 %v7658
    %7806 = vmatprep.subr.bf16.mxu0 %v7661
    %7807 = vmatpush1.bf16.msra.mxu0 %v7660
    %7808 = vmatprep.subr.bf16.mxu0 %v7663
    %7809 = vmatpush1.bf16.msra.mxu0 %v7662
    %7810 = vmatprep.mubr.bf16.mxu0 %v7565
    %7811 = vmatmul.mubr.bf16.gmra.mrb[0].mxu0 %v7564
    %v7812 = vpop.f32.mrb[0].mxu0
    %v7813 = vadd.f32 %v7772, %v7812
    %v7814 = vpop.f32.mrb[0].mxu0
    %v7815 = vadd.f32 %v7774, %v7814
    %v7816 = vpop.f32.mrb[0].mxu0
    %v7817 = vpop.f32.mrb[0].mxu0
    %7818 = vdwg.mxu0
    %7819 = vmatprep.subr.bf16.mxu0 %v7665
    %7820 = vmatpush1.bf16.msra.mxu0 %v7664
    %7821 = vmatprep.subr.bf16.mxu0 %v7667
    %7822 = vmatpush1.bf16.msra.mxu0 %v7666
    %7823 = vmatprep.subr.bf16.mxu0 %v7669
    %7824 = vmatpush1.bf16.msra.mxu0 %v7668
    %7825 = vmatprep.subr.bf16.mxu0 %v7671
    %7826 = vmatpush1.bf16.msra.mxu0 %v7670
    %7827 = vmatprep.subr.bf16.mxu0 %v7673
    %7828 = vmatpush1.bf16.msra.mxu0 %v7672
    %7829 = vmatprep.subr.bf16.mxu0 %v7675
    %7830 = vmatpush1.bf16.msra.mxu0 %v7674
    %7831 = vmatprep.subr.bf16.mxu0 %v7677
    %7832 = vmatpush1.bf16.msra.mxu0 %v7676
    %7833 = vmatprep.subr.bf16.mxu0 %v7679
    %7834 = vmatpush1.bf16.msra.mxu0 %v7678
    %7835 = vmatprep.subr.bf16.mxu0 %v7681
    %7836 = vmatpush1.bf16.msra.mxu0 %v7680
    %7837 = vmatprep.subr.bf16.mxu0 %v7683
    %7838 = vmatpush1.bf16.msra.mxu0 %v7682
    %7839 = vmatprep.subr.bf16.mxu0 %v7685
    %7840 = vmatpush1.bf16.msra.mxu0 %v7684
    %7841 = vmatprep.subr.bf16.mxu0 %v7687
    %7842 = vmatpush1.bf16.msra.mxu0 %v7686
    %7843 = vmatprep.subr.bf16.mxu0 %v7689
    %7844 = vmatpush1.bf16.msra.mxu0 %v7688
    %7845 = vmatprep.subr.bf16.mxu0 %v7691
    %7846 = vmatpush1.bf16.msra.mxu0 %v7690
    %7847 = vmatprep.subr.bf16.mxu0 %v7693
    %7848 = vmatpush1.bf16.msra.mxu0 %v7692
    %7849 = vmatprep.subr.bf16.mxu0 %v7695
    %7850 = vmatpush1.bf16.msra.mxu0 %v7694
    %7851 = vmatprep.mubr.bf16.mxu0 %v7567
    %7852 = vmatmul.mubr.bf16.gmra.mrb[0].mxu0 %v7566
    %v7853 = vpop.f32.mrb[0].mxu0
    %v7854 = vadd.f32 %v7813, %v7853
    %v7855 = vpop.f32.mrb[0].mxu0
    %v7856 = vadd.f32 %v7815, %v7855
    %v7857 = vpop.f32.mrb[0].mxu0
    %v7858 = vpop.f32.mrb[0].mxu0
    %7859 = vdwg.mxu0
    %v7860 = vadd.f32 %v7479, %v7854
    %v7861 = vadd.f32 %v7480, %v7856
    %s7862 = sshll.u32 %s6339, 4
    %7863 = dma.done [#allocation6], %s7862
    %s7864 = scalar_lea.hbm %s11, 114688
    %s7866 = sshll.u32 1, 14
    %s7867 = sxor.u32 4294967295, %s7866
    %s7869 = sadd.s32 2, %s94
    %s7871 = sshll.u32 7, 26
    %s7872 = sxor.u32 4294967295, %s7871
    %s7873 = sand.u32 0, %s7872
    %s7874 = sshll.u32 %s7869, 26
    %s7875 = sor.u32 %s7873, %s7874
    %s7876 = sshll.u32 %s6343, 4
    %s7877 = int_to_ptr.vmem [resolvable:$true] %s7876
    %7880 = sst [smem:[#allocation30]] 256
    %s7881 = scalar_lea.smem [#allocation30], 1
    %7882 = sst [smem:[%s7881]] 256
    %s7883 = scalar_lea.smem [#allocation30], 2
    %7884 = sst [smem:[%s7883]] 2
    %s7885 = scalar_lea.smem [#allocation30], 3
    %7886 = sst [smem:[%s7885]] 64
    %s7887 = scalar_lea.smem [#allocation30], 4
    %7888 = sst [smem:[%s7887]] 128
    %s7889 = scalar_lea.smem [#allocation30], 5
    %7890 = sst [smem:[%s7889]] 2
    %s7891 = scalar_lea.smem [#allocation30], 6
    %7892 = sst [smem:[%s7891]] 128
    %s7893 = scalar_lea.smem [#allocation30], 7
    %7894 = sst [smem:[%s7893]] 64
    %s7895 = scalar_lea.smem [#allocation30], 8
    %7896 = sst [smem:[%s7895]] 4
    %7898 = dma.general %s7864, 16384, %s7877, %s6344, [#allocation29], [#allocation30], %s7875, 0
    %v7899 = vld [vmem:[#allocation4 + $0x20] sm:$0xff]
    %v7901 = vlaneseq
    %v7902 = vshrl.u32 %v7901, 7
    %v7903 = vsub.s32 0, %v7902
    %v7904 = vrot.slane %v7899, %v7903
    %v7905 = vlaneseq
    %v7906 = vshrl.u32 %v7905, 7
    %v7907 = vsub.s32 1, %v7906
    %v7908 = vrot.slane %v7899, %v7907
    %v7909 = vlaneseq
    %v7910 = vshrl.u32 %v7909, 7
    %v7911 = vsub.s32 2, %v7910
    %v7912 = vrot.slane %v7899, %v7911
    %v7913 = vlaneseq
    %v7914 = vshrl.u32 %v7913, 7
    %v7915 = vsub.s32 3, %v7914
    %v7916 = vrot.slane %v7899, %v7915
    %v7917 = vlaneseq
    %v7918 = vshrl.u32 %v7917, 7
    %v7919 = vsub.s32 4, %v7918
    %v7920 = vrot.slane %v7899, %v7919
    %v7921 = vlaneseq
    %v7922 = vshrl.u32 %v7921, 7
    %v7923 = vsub.s32 5, %v7922
    %v7924 = vrot.slane %v7899, %v7923
    %v7925 = vlaneseq
    %v7926 = vshrl.u32 %v7925, 7
    %v7927 = vsub.s32 6, %v7926
    %v7928 = vrot.slane %v7899, %v7927
    %v7929 = vlaneseq
    %v7930 = vshrl.u32 %v7929, 7
    %v7931 = vsub.s32 7, %v7930
    %v7932 = vrot.slane %v7899, %v7931
    %v7941 = vpack.c.bf16 %v7904, %v7904
    %v7942 = vpack.c.bf16 %v7908, %v7908
    %v7943 = vpack.c.bf16 %v7912, %v7912
    %v7944 = vpack.c.bf16 %v7916, %v7916
    %v7945 = vpack.c.bf16 %v7920, %v7920
    %v7946 = vpack.c.bf16 %v7924, %v7924
    %v7947 = vpack.c.bf16 %v7928, %v7928
    %v7948 = vpack.c.bf16 %v7932, %v7932
    %v7949 = vld [vmem:[#allocation5] sm:$0xff]
    %v7950 = vld [vmem:[#allocation5 + $0x8] sm:$0xff]
    %v7951 = vld [vmem:[#allocation5 + $0x10] sm:$0xff]
    %v7952 = vld [vmem:[#allocation5 + $0x18] sm:$0xff]
    %v7953 = vld [vmem:[#allocation5 + $0x20] sm:$0xff]
    %v7954 = vld [vmem:[#allocation5 + $0x28] sm:$0xff]
    %v7955 = vld [vmem:[#allocation5 + $0x30] sm:$0xff]
    %v7956 = vld [vmem:[#allocation5 + $0x38] sm:$0xff]
    %v7957 = vld [vmem:[#allocation5 + $0x40] sm:$0xff]
    %v7958 = vld [vmem:[#allocation5 + $0x48] sm:$0xff]
    %v7959 = vld [vmem:[#allocation5 + $0x50] sm:$0xff]
    %v7960 = vld [vmem:[#allocation5 + $0x58] sm:$0xff]
    %v7961 = vld [vmem:[#allocation5 + $0x60] sm:$0xff]
    %v7962 = vld [vmem:[#allocation5 + $0x68] sm:$0xff]
    %v7963 = vld [vmem:[#allocation5 + $0x70] sm:$0xff]
    %v7964 = vld [vmem:[#allocation5 + $0x78] sm:$0xff]
    %v7965 = vld [vmem:[#allocation5 + $0x80] sm:$0xff]
    %v7966 = vld [vmem:[#allocation5 + $0x88] sm:$0xff]
    %v7967 = vld [vmem:[#allocation5 + $0x90] sm:$0xff]
    %v7968 = vld [vmem:[#allocation5 + $0x98] sm:$0xff]
    %v7969 = vld [vmem:[#allocation5 + $0xa0] sm:$0xff]
    %v7970 = vld [vmem:[#allocation5 + $0xa8] sm:$0xff]
    %v7971 = vld [vmem:[#allocation5 + $0xb0] sm:$0xff]
    %v7972 = vld [vmem:[#allocation5 + $0xb8] sm:$0xff]
    %v7973 = vld [vmem:[#allocation5 + $0xc0] sm:$0xff]
    %v7974 = vld [vmem:[#allocation5 + $0xc8] sm:$0xff]
    %v7975 = vld [vmem:[#allocation5 + $0xd0] sm:$0xff]
    %v7976 = vld [vmem:[#allocation5 + $0xd8] sm:$0xff]
    %v7977 = vld [vmem:[#allocation5 + $0xe0] sm:$0xff]
    %v7978 = vld [vmem:[#allocation5 + $0xe8] sm:$0xff]
    %v7979 = vld [vmem:[#allocation5 + $0xf0] sm:$0xff]
    %v7980 = vld [vmem:[#allocation5 + $0xf8] sm:$0xff]
    %v7981 = vld [vmem:[#allocation5 + $0x100] sm:$0xff]
    %v7982 = vld [vmem:[#allocation5 + $0x108] sm:$0xff]
    %v7983 = vld [vmem:[#allocation5 + $0x110] sm:$0xff]
    %v7984 = vld [vmem:[#allocation5 + $0x118] sm:$0xff]
    %v7985 = vld [vmem:[#allocation5 + $0x120] sm:$0xff]
    %v7986 = vld [vmem:[#allocation5 + $0x128] sm:$0xff]
    %v7987 = vld [vmem:[#allocation5 + $0x130] sm:$0xff]
    %v7988 = vld [vmem:[#allocation5 + $0x138] sm:$0xff]
    %v7989 = vld [vmem:[#allocation5 + $0x140] sm:$0xff]
    %v7990 = vld [vmem:[#allocation5 + $0x148] sm:$0xff]
    %v7991 = vld [vmem:[#allocation5 + $0x150] sm:$0xff]
    %v7992 = vld [vmem:[#allocation5 + $0x158] sm:$0xff]
    %v7993 = vld [vmem:[#allocation5 + $0x160] sm:$0xff]
    %v7994 = vld [vmem:[#allocation5 + $0x168] sm:$0xff]
    %v7995 = vld [vmem:[#allocation5 + $0x170] sm:$0xff]
    %v7996 = vld [vmem:[#allocation5 + $0x178] sm:$0xff]
    %v7997 = vld [vmem:[#allocation5 + $0x180] sm:$0xff]
    %v7998 = vld [vmem:[#allocation5 + $0x188] sm:$0xff]
    %v7999 = vld [vmem:[#allocation5 + $0x190] sm:$0xff]
    %v8000 = vld [vmem:[#allocation5 + $0x198] sm:$0xff]
    %v8001 = vld [vmem:[#allocation5 + $0x1a0] sm:$0xff]
    %v8002 = vld [vmem:[#allocation5 + $0x1a8] sm:$0xff]
    %v8003 = vld [vmem:[#allocation5 + $0x1b0] sm:$0xff]
    %v8004 = vld [vmem:[#allocation5 + $0x1b8] sm:$0xff]
    %v8005 = vld [vmem:[#allocation5 + $0x1c0] sm:$0xff]
    %v8006 = vld [vmem:[#allocation5 + $0x1c8] sm:$0xff]
    %v8007 = vld [vmem:[#allocation5 + $0x1d0] sm:$0xff]
    %v8008 = vld [vmem:[#allocation5 + $0x1d8] sm:$0xff]
    %v8009 = vld [vmem:[#allocation5 + $0x1e0] sm:$0xff]
    %v8010 = vld [vmem:[#allocation5 + $0x1e8] sm:$0xff]
    %v8011 = vld [vmem:[#allocation5 + $0x1f0] sm:$0xff]
    %v8012 = vld [vmem:[#allocation5 + $0x1f8] sm:$0xff]
    %v8013 = vld [vmem:[#allocation5 + $0x200] sm:$0xff]
    %v8014 = vld [vmem:[#allocation5 + $0x208] sm:$0xff]
    %v8015 = vld [vmem:[#allocation5 + $0x210] sm:$0xff]
    %v8016 = vld [vmem:[#allocation5 + $0x218] sm:$0xff]
    %v8017 = vld [vmem:[#allocation5 + $0x220] sm:$0xff]
    %v8018 = vld [vmem:[#allocation5 + $0x228] sm:$0xff]
    %v8019 = vld [vmem:[#allocation5 + $0x230] sm:$0xff]
    %v8020 = vld [vmem:[#allocation5 + $0x238] sm:$0xff]
    %v8021 = vld [vmem:[#allocation5 + $0x240] sm:$0xff]
    %v8022 = vld [vmem:[#allocation5 + $0x248] sm:$0xff]
    %v8023 = vld [vmem:[#allocation5 + $0x250] sm:$0xff]
    %v8024 = vld [vmem:[#allocation5 + $0x258] sm:$0xff]
    %v8025 = vld [vmem:[#allocation5 + $0x260] sm:$0xff]
    %v8026 = vld [vmem:[#allocation5 + $0x268] sm:$0xff]
    %v8027 = vld [vmem:[#allocation5 + $0x270] sm:$0xff]
    %v8028 = vld [vmem:[#allocation5 + $0x278] sm:$0xff]
    %v8029 = vld [vmem:[#allocation5 + $0x280] sm:$0xff]
    %v8030 = vld [vmem:[#allocation5 + $0x288] sm:$0xff]
    %v8031 = vld [vmem:[#allocation5 + $0x290] sm:$0xff]
    %v8032 = vld [vmem:[#allocation5 + $0x298] sm:$0xff]
    %v8033 = vld [vmem:[#allocation5 + $0x2a0] sm:$0xff]
    %v8034 = vld [vmem:[#allocation5 + $0x2a8] sm:$0xff]
    %v8035 = vld [vmem:[#allocation5 + $0x2b0] sm:$0xff]
    %v8036 = vld [vmem:[#allocation5 + $0x2b8] sm:$0xff]
    %v8037 = vld [vmem:[#allocation5 + $0x2c0] sm:$0xff]
    %v8038 = vld [vmem:[#allocation5 + $0x2c8] sm:$0xff]
    %v8039 = vld [vmem:[#allocation5 + $0x2d0] sm:$0xff]
    %v8040 = vld [vmem:[#allocation5 + $0x2d8] sm:$0xff]
    %v8041 = vld [vmem:[#allocation5 + $0x2e0] sm:$0xff]
    %v8042 = vld [vmem:[#allocation5 + $0x2e8] sm:$0xff]
    %v8043 = vld [vmem:[#allocation5 + $0x2f0] sm:$0xff]
    %v8044 = vld [vmem:[#allocation5 + $0x2f8] sm:$0xff]
    %v8045 = vld [vmem:[#allocation5 + $0x300] sm:$0xff]
    %v8046 = vld [vmem:[#allocation5 + $0x308] sm:$0xff]
    %v8047 = vld [vmem:[#allocation5 + $0x310] sm:$0xff]
    %v8048 = vld [vmem:[#allocation5 + $0x318] sm:$0xff]
    %v8049 = vld [vmem:[#allocation5 + $0x320] sm:$0xff]
    %v8050 = vld [vmem:[#allocation5 + $0x328] sm:$0xff]
    %v8051 = vld [vmem:[#allocation5 + $0x330] sm:$0xff]
    %v8052 = vld [vmem:[#allocation5 + $0x338] sm:$0xff]
    %v8053 = vld [vmem:[#allocation5 + $0x340] sm:$0xff]
    %v8054 = vld [vmem:[#allocation5 + $0x348] sm:$0xff]
    %v8055 = vld [vmem:[#allocation5 + $0x350] sm:$0xff]
    %v8056 = vld [vmem:[#allocation5 + $0x358] sm:$0xff]
    %v8057 = vld [vmem:[#allocation5 + $0x360] sm:$0xff]
    %v8058 = vld [vmem:[#allocation5 + $0x368] sm:$0xff]
    %v8059 = vld [vmem:[#allocation5 + $0x370] sm:$0xff]
    %v8060 = vld [vmem:[#allocation5 + $0x378] sm:$0xff]
    %v8061 = vld [vmem:[#allocation5 + $0x380] sm:$0xff]
    %v8062 = vld [vmem:[#allocation5 + $0x388] sm:$0xff]
    %v8063 = vld [vmem:[#allocation5 + $0x390] sm:$0xff]
    %v8064 = vld [vmem:[#allocation5 + $0x398] sm:$0xff]
    %v8065 = vld [vmem:[#allocation5 + $0x3a0] sm:$0xff]
    %v8066 = vld [vmem:[#allocation5 + $0x3a8] sm:$0xff]
    %v8067 = vld [vmem:[#allocation5 + $0x3b0] sm:$0xff]
    %v8068 = vld [vmem:[#allocation5 + $0x3b8] sm:$0xff]
    %v8069 = vld [vmem:[#allocation5 + $0x3c0] sm:$0xff]
    %v8070 = vld [vmem:[#allocation5 + $0x3c8] sm:$0xff]
    %v8071 = vld [vmem:[#allocation5 + $0x3d0] sm:$0xff]
    %v8072 = vld [vmem:[#allocation5 + $0x3d8] sm:$0xff]
    %v8073 = vld [vmem:[#allocation5 + $0x3e0] sm:$0xff]
    %v8074 = vld [vmem:[#allocation5 + $0x3e8] sm:$0xff]
    %v8075 = vld [vmem:[#allocation5 + $0x3f0] sm:$0xff]
    %v8076 = vld [vmem:[#allocation5 + $0x3f8] sm:$0xff]
    %8077 = vmatprep.subr.bf16.mxu0 %v7950
    %8078 = vmatpush1.bf16.msra.mxu0 %v7949
    %8079 = vmatprep.subr.bf16.mxu0 %v7952
    %8080 = vmatpush1.bf16.msra.mxu0 %v7951
    %8081 = vmatprep.subr.bf16.mxu0 %v7954
    %8082 = vmatpush1.bf16.msra.mxu0 %v7953
    %8083 = vmatprep.subr.bf16.mxu0 %v7956
    %8084 = vmatpush1.bf16.msra.mxu0 %v7955
    %8085 = vmatprep.subr.bf16.mxu0 %v7958
    %8086 = vmatpush1.bf16.msra.mxu0 %v7957
    %8087 = vmatprep.subr.bf16.mxu0 %v7960
    %8088 = vmatpush1.bf16.msra.mxu0 %v7959
    %8089 = vmatprep.subr.bf16.mxu0 %v7962
    %8090 = vmatpush1.bf16.msra.mxu0 %v7961
    %8091 = vmatprep.subr.bf16.mxu0 %v7964
    %8092 = vmatpush1.bf16.msra.mxu0 %v7963
    %8093 = vmatprep.subr.bf16.mxu0 %v7966
    %8094 = vmatpush1.bf16.msra.mxu0 %v7965
    %8095 = vmatprep.subr.bf16.mxu0 %v7968
    %8096 = vmatpush1.bf16.msra.mxu0 %v7967
    %8097 = vmatprep.subr.bf16.mxu0 %v7970
    %8098 = vmatpush1.bf16.msra.mxu0 %v7969
    %8099 = vmatprep.subr.bf16.mxu0 %v7972
    %8100 = vmatpush1.bf16.msra.mxu0 %v7971
    %8101 = vmatprep.subr.bf16.mxu0 %v7974
    %8102 = vmatpush1.bf16.msra.mxu0 %v7973
    %8103 = vmatprep.subr.bf16.mxu0 %v7976
    %8104 = vmatpush1.bf16.msra.mxu0 %v7975
    %8105 = vmatprep.subr.bf16.mxu0 %v7978
    %8106 = vmatpush1.bf16.msra.mxu0 %v7977
    %8107 = vmatprep.subr.bf16.mxu0 %v7980
    %8108 = vmatpush1.bf16.msra.mxu0 %v7979
    %8109 = vmatprep.mubr.bf16.mxu0 %v7942
    %8110 = vmatmul.mubr.bf16.gmra.mrb[0].mxu0 %v7941
    %v8111 = vpop.f32.mrb[0].mxu0
    %v8112 = vadd.f32 0.0, %v8111
    %v8113 = vpop.f32.mrb[0].mxu0
    %v8114 = vadd.f32 0.0, %v8113
    %v8115 = vpop.f32.mrb[0].mxu0
    %v8116 = vpop.f32.mrb[0].mxu0
    %8117 = vdwg.mxu0
    %8118 = vmatprep.subr.bf16.mxu0 %v7982
    %8119 = vmatpush1.bf16.msra.mxu0 %v7981
    %8120 = vmatprep.subr.bf16.mxu0 %v7984
    %8121 = vmatpush1.bf16.msra.mxu0 %v7983
    %8122 = vmatprep.subr.bf16.mxu0 %v7986
    %8123 = vmatpush1.bf16.msra.mxu0 %v7985
    %8124 = vmatprep.subr.bf16.mxu0 %v7988
    %8125 = vmatpush1.bf16.msra.mxu0 %v7987
    %8126 = vmatprep.subr.bf16.mxu0 %v7990
    %8127 = vmatpush1.bf16.msra.mxu0 %v7989
    %8128 = vmatprep.subr.bf16.mxu0 %v7992
    %8129 = vmatpush1.bf16.msra.mxu0 %v7991
    %8130 = vmatprep.subr.bf16.mxu0 %v7994
    %8131 = vmatpush1.bf16.msra.mxu0 %v7993
    %8132 = vmatprep.subr.bf16.mxu0 %v7996
    %8133 = vmatpush1.bf16.msra.mxu0 %v7995
    %8134 = vmatprep.subr.bf16.mxu0 %v7998
    %8135 = vmatpush1.bf16.msra.mxu0 %v7997
    %8136 = vmatprep.subr.bf16.mxu0 %v8000
    %8137 = vmatpush1.bf16.msra.mxu0 %v7999
    %8138 = vmatprep.subr.bf16.mxu0 %v8002
    %8139 = vmatpush1.bf16.msra.mxu0 %v8001
    %8140 = vmatprep.subr.bf16.mxu0 %v8004
    %8141 = vmatpush1.bf16.msra.mxu0 %v8003
    %8142 = vmatprep.subr.bf16.mxu0 %v8006
    %8143 = vmatpush1.bf16.msra.mxu0 %v8005
    %8144 = vmatprep.subr.bf16.mxu0 %v8008
    %8145 = vmatpush1.bf16.msra.mxu0 %v8007
    %8146 = vmatprep.subr.bf16.mxu0 %v8010
    %8147 = vmatpush1.bf16.msra.mxu0 %v8009
    %8148 = vmatprep.subr.bf16.mxu0 %v8012
    %8149 = vmatpush1.bf16.msra.mxu0 %v8011
    %8150 = vmatprep.mubr.bf16.mxu0 %v7944
    %8151 = vmatmul.mubr.bf16.gmra.mrb[0].mxu0 %v7943
    %v8152 = vpop.f32.mrb[0].mxu0
    %v8153 = vadd.f32 %v8112, %v8152
    %v8154 = vpop.f32.mrb[0].mxu0
    %v8155 = vadd.f32 %v8114, %v8154
    %v8156 = vpop.f32.mrb[0].mxu0
    %v8157 = vpop.f32.mrb[0].mxu0
    %8158 = vdwg.mxu0
    %8159 = vmatprep.subr.bf16.mxu0 %v8014
    %8160 = vmatpush1.bf16.msra.mxu0 %v8013
    %8161 = vmatprep.subr.bf16.mxu0 %v8016
    %8162 = vmatpush1.bf16.msra.mxu0 %v8015
    %8163 = vmatprep.subr.bf16.mxu0 %v8018
    %8164 = vmatpush1.bf16.msra.mxu0 %v8017
    %8165 = vmatprep.subr.bf16.mxu0 %v8020
    %8166 = vmatpush1.bf16.msra.mxu0 %v8019
    %8167 = vmatprep.subr.bf16.mxu0 %v8022
    %8168 = vmatpush1.bf16.msra.mxu0 %v8021
    %8169 = vmatprep.subr.bf16.mxu0 %v8024
    %8170 = vmatpush1.bf16.msra.mxu0 %v8023
    %8171 = vmatprep.subr.bf16.mxu0 %v8026
    %8172 = vmatpush1.bf16.msra.mxu0 %v8025
    %8173 = vmatprep.subr.bf16.mxu0 %v8028
    %8174 = vmatpush1.bf16.msra.mxu0 %v8027
    %8175 = vmatprep.subr.bf16.mxu0 %v8030
    %8176 = vmatpush1.bf16.msra.mxu0 %v8029
    %8177 = vmatprep.subr.bf16.mxu0 %v8032
    %8178 = vmatpush1.bf16.msra.mxu0 %v8031
    %8179 = vmatprep.subr.bf16.mxu0 %v8034
    %8180 = vmatpush1.bf16.msra.mxu0 %v8033
    %8181 = vmatprep.subr.bf16.mxu0 %v8036
    %8182 = vmatpush1.bf16.msra.mxu0 %v8035
    %8183 = vmatprep.subr.bf16.mxu0 %v8038
    %8184 = vmatpush1.bf16.msra.mxu0 %v8037
    %8185 = vmatprep.subr.bf16.mxu0 %v8040
    %8186 = vmatpush1.bf16.msra.mxu0 %v8039
    %8187 = vmatprep.subr.bf16.mxu0 %v8042
    %8188 = vmatpush1.bf16.msra.mxu0 %v8041
    %8189 = vmatprep.subr.bf16.mxu0 %v8044
    %8190 = vmatpush1.bf16.msra.mxu0 %v8043
    %8191 = vmatprep.mubr.bf16.mxu0 %v7946
    %8192 = vmatmul.mubr.bf16.gmra.mrb[0].mxu0 %v7945
    %v8193 = vpop.f32.mrb[0].mxu0
    %v8194 = vadd.f32 %v8153, %v8193
    %v8195 = vpop.f32.mrb[0].mxu0
    %v8196 = vadd.f32 %v8155, %v8195
    %v8197 = vpop.f32.mrb[0].mxu0
    %v8198 = vpop.f32.mrb[0].mxu0
    %8199 = vdwg.mxu0
    %8200 = vmatprep.subr.bf16.mxu0 %v8046
    %8201 = vmatpush1.bf16.msra.mxu0 %v8045
    %8202 = vmatprep.subr.bf16.mxu0 %v8048
    %8203 = vmatpush1.bf16.msra.mxu0 %v8047
    %8204 = vmatprep.subr.bf16.mxu0 %v8050
    %8205 = vmatpush1.bf16.msra.mxu0 %v8049
    %8206 = vmatprep.subr.bf16.mxu0 %v8052
    %8207 = vmatpush1.bf16.msra.mxu0 %v8051
    %8208 = vmatprep.subr.bf16.mxu0 %v8054
    %8209 = vmatpush1.bf16.msra.mxu0 %v8053
    %8210 = vmatprep.subr.bf16.mxu0 %v8056
    %8211 = vmatpush1.bf16.msra.mxu0 %v8055
    %8212 = vmatprep.subr.bf16.mxu0 %v8058
    %8213 = vmatpush1.bf16.msra.mxu0 %v8057
    %8214 = vmatprep.subr.bf16.mxu0 %v8060
    %8215 = vmatpush1.bf16.msra.mxu0 %v8059
    %8216 = vmatprep.subr.bf16.mxu0 %v8062
    %8217 = vmatpush1.bf16.msra.mxu0 %v8061
    %8218 = vmatprep.subr.bf16.mxu0 %v8064
    %8219 = vmatpush1.bf16.msra.mxu0 %v8063
    %8220 = vmatprep.subr.bf16.mxu0 %v8066
    %8221 = vmatpush1.bf16.msra.mxu0 %v8065
    %8222 = vmatprep.subr.bf16.mxu0 %v8068
    %8223 = vmatpush1.bf16.msra.mxu0 %v8067
    %8224 = vmatprep.subr.bf16.mxu0 %v8070
    %8225 = vmatpush1.bf16.msra.mxu0 %v8069
    %8226 = vmatprep.subr.bf16.mxu0 %v8072
    %8227 = vmatpush1.bf16.msra.mxu0 %v8071
    %8228 = vmatprep.subr.bf16.mxu0 %v8074
    %8229 = vmatpush1.bf16.msra.mxu0 %v8073
    %8230 = vmatprep.subr.bf16.mxu0 %v8076
    %8231 = vmatpush1.bf16.msra.mxu0 %v8075
    %8232 = vmatprep.mubr.bf16.mxu0 %v7948
    %8233 = vmatmul.mubr.bf16.gmra.mrb[0].mxu0 %v7947
    %v8234 = vpop.f32.mrb[0].mxu0
    %v8235 = vadd.f32 %v8194, %v8234
    %v8236 = vpop.f32.mrb[0].mxu0
    %v8237 = vadd.f32 %v8196, %v8236
    %v8238 = vpop.f32.mrb[0].mxu0
    %v8239 = vpop.f32.mrb[0].mxu0
    %8240 = vdwg.mxu0
    %v8241 = vadd.f32 %v7860, %v8235
    %v8242 = vadd.f32 %v7861, %v8237
    %s8243 = sshll.u32 %s6339, 4
    %8244 = dma.done %s127, %s8243
    %v8245 = vld [vmem:[#allocation4 + $0x28] sm:$0xff]
    %v8247 = vlaneseq
    %v8248 = vshrl.u32 %v8247, 7
    %v8249 = vsub.s32 0, %v8248
    %v8250 = vrot.slane %v8245, %v8249
    %v8251 = vlaneseq
    %v8252 = vshrl.u32 %v8251, 7
    %v8253 = vsub.s32 1, %v8252
    %v8254 = vrot.slane %v8245, %v8253
    %v8255 = vlaneseq
    %v8256 = vshrl.u32 %v8255, 7
    %v8257 = vsub.s32 2, %v8256
    %v8258 = vrot.slane %v8245, %v8257
    %v8259 = vlaneseq
    %v8260 = vshrl.u32 %v8259, 7
    %v8261 = vsub.s32 3, %v8260
    %v8262 = vrot.slane %v8245, %v8261
    %v8263 = vlaneseq
    %v8264 = vshrl.u32 %v8263, 7
    %v8265 = vsub.s32 4, %v8264
    %v8266 = vrot.slane %v8245, %v8265
    %v8267 = vlaneseq
    %v8268 = vshrl.u32 %v8267, 7
    %v8269 = vsub.s32 5, %v8268
    %v8270 = vrot.slane %v8245, %v8269
    %v8271 = vlaneseq
    %v8272 = vshrl.u32 %v8271, 7
    %v8273 = vsub.s32 6, %v8272
    %v8274 = vrot.slane %v8245, %v8273
    %v8275 = vlaneseq
    %v8276 = vshrl.u32 %v8275, 7
    %v8277 = vsub.s32 7, %v8276
    %v8278 = vrot.slane %v8245, %v8277
    %v8287 = vpack.c.bf16 %v8250, %v8250
    %v8288 = vpack.c.bf16 %v8254, %v8254
    %v8289 = vpack.c.bf16 %v8258, %v8258
    %v8290 = vpack.c.bf16 %v8262, %v8262
    %v8291 = vpack.c.bf16 %v8266, %v8266
    %v8292 = vpack.c.bf16 %v8270, %v8270
    %v8293 = vpack.c.bf16 %v8274, %v8274
    %v8294 = vpack.c.bf16 %v8278, %v8278
    %v8295 = vld [vmem:[%s126] sm:$0xff]
    %v8296 = vld [vmem:[%s126 + $0x8] sm:$0xff]
    %v8297 = vld [vmem:[%s126 + $0x10] sm:$0xff]
    %v8298 = vld [vmem:[%s126 + $0x18] sm:$0xff]
    %v8299 = vld [vmem:[%s126 + $0x20] sm:$0xff]
    %v8300 = vld [vmem:[%s126 + $0x28] sm:$0xff]
    %v8301 = vld [vmem:[%s126 + $0x30] sm:$0xff]
    %v8302 = vld [vmem:[%s126 + $0x38] sm:$0xff]
    %v8303 = vld [vmem:[%s126 + $0x40] sm:$0xff]
    %v8304 = vld [vmem:[%s126 + $0x48] sm:$0xff]
    %v8305 = vld [vmem:[%s126 + $0x50] sm:$0xff]
    %v8306 = vld [vmem:[%s126 + $0x58] sm:$0xff]
    %v8307 = vld [vmem:[%s126 + $0x60] sm:$0xff]
    %v8308 = vld [vmem:[%s126 + $0x68] sm:$0xff]
    %v8309 = vld [vmem:[%s126 + $0x70] sm:$0xff]
    %v8310 = vld [vmem:[%s126 + $0x78] sm:$0xff]
    %v8311 = vld [vmem:[%s126 + $0x80] sm:$0xff]
    %v8312 = vld [vmem:[%s126 + $0x88] sm:$0xff]
    %v8313 = vld [vmem:[%s126 + $0x90] sm:$0xff]
    %v8314 = vld [vmem:[%s126 + $0x98] sm:$0xff]
    %v8315 = vld [vmem:[%s126 + $0xa0] sm:$0xff]
    %v8316 = vld [vmem:[%s126 + $0xa8] sm:$0xff]
    %v8317 = vld [vmem:[%s126 + $0xb0] sm:$0xff]
    %v8318 = vld [vmem:[%s126 + $0xb8] sm:$0xff]
    %v8319 = vld [vmem:[%s126 + $0xc0] sm:$0xff]
    %v8320 = vld [vmem:[%s126 + $0xc8] sm:$0xff]
    %v8321 = vld [vmem:[%s126 + $0xd0] sm:$0xff]
    %v8322 = vld [vmem:[%s126 + $0xd8] sm:$0xff]
    %v8323 = vld [vmem:[%s126 + $0xe0] sm:$0xff]
    %v8324 = vld [vmem:[%s126 + $0xe8] sm:$0xff]
    %v8325 = vld [vmem:[%s126 + $0xf0] sm:$0xff]
    %v8326 = vld [vmem:[%s126 + $0xf8] sm:$0xff]
    %v8327 = vld [vmem:[%s126 + $0x100] sm:$0xff]
    %v8328 = vld [vmem:[%s126 + $0x108] sm:$0xff]
    %v8329 = vld [vmem:[%s126 + $0x110] sm:$0xff]
    %v8330 = vld [vmem:[%s126 + $0x118] sm:$0xff]
    %v8331 = vld [vmem:[%s126 + $0x120] sm:$0xff]
    %v8332 = vld [vmem:[%s126 + $0x128] sm:$0xff]
    %v8333 = vld [vmem:[%s126 + $0x130] sm:$0xff]
    %v8334 = vld [vmem:[%s126 + $0x138] sm:$0xff]
    %v8335 = vld [vmem:[%s126 + $0x140] sm:$0xff]
    %v8336 = vld [vmem:[%s126 + $0x148] sm:$0xff]
    %v8337 = vld [vmem:[%s126 + $0x150] sm:$0xff]
    %v8338 = vld [vmem:[%s126 + $0x158] sm:$0xff]
    %v8339 = vld [vmem:[%s126 + $0x160] sm:$0xff]
    %v8340 = vld [vmem:[%s126 + $0x168] sm:$0xff]
    %v8341 = vld [vmem:[%s126 + $0x170] sm:$0xff]
    %v8342 = vld [vmem:[%s126 + $0x178] sm:$0xff]
    %v8343 = vld [vmem:[%s126 + $0x180] sm:$0xff]
    %v8344 = vld [vmem:[%s126 + $0x188] sm:$0xff]
    %v8345 = vld [vmem:[%s126 + $0x190] sm:$0xff]
    %v8346 = vld [vmem:[%s126 + $0x198] sm:$0xff]
    %v8347 = vld [vmem:[%s126 + $0x1a0] sm:$0xff]
    %v8348 = vld [vmem:[%s126 + $0x1a8] sm:$0xff]
    %v8349 = vld [vmem:[%s126 + $0x1b0] sm:$0xff]
    %v8350 = vld [vmem:[%s126 + $0x1b8] sm:$0xff]
    %v8351 = vld [vmem:[%s126 + $0x1c0] sm:$0xff]
    %v8352 = vld [vmem:[%s126 + $0x1c8] sm:$0xff]
    %v8353 = vld [vmem:[%s126 + $0x1d0] sm:$0xff]
    %v8354 = vld [vmem:[%s126 + $0x1d8] sm:$0xff]
    %v8355 = vld [vmem:[%s126 + $0x1e0] sm:$0xff]
    %v8356 = vld [vmem:[%s126 + $0x1e8] sm:$0xff]
    %v8357 = vld [vmem:[%s126 + $0x1f0] sm:$0xff]
    %v8358 = vld [vmem:[%s126 + $0x1f8] sm:$0xff]
    %v8359 = vld [vmem:[%s126 + $0x200] sm:$0xff]
    %v8360 = vld [vmem:[%s126 + $0x208] sm:$0xff]
    %v8361 = vld [vmem:[%s126 + $0x210] sm:$0xff]
    %v8362 = vld [vmem:[%s126 + $0x218] sm:$0xff]
    %v8363 = vld [vmem:[%s126 + $0x220] sm:$0xff]
    %v8364 = vld [vmem:[%s126 + $0x228] sm:$0xff]
    %v8365 = vld [vmem:[%s126 + $0x230] sm:$0xff]
    %v8366 = vld [vmem:[%s126 + $0x238] sm:$0xff]
    %v8367 = vld [vmem:[%s126 + $0x240] sm:$0xff]
    %v8368 = vld [vmem:[%s126 + $0x248] sm:$0xff]
    %v8369 = vld [vmem:[%s126 + $0x250] sm:$0xff]
    %v8370 = vld [vmem:[%s126 + $0x258] sm:$0xff]
    %v8371 = vld [vmem:[%s126 + $0x260] sm:$0xff]
    %v8372 = vld [vmem:[%s126 + $0x268] sm:$0xff]
    %v8373 = vld [vmem:[%s126 + $0x270] sm:$0xff]
    %v8374 = vld [vmem:[%s126 + $0x278] sm:$0xff]
    %v8375 = vld [vmem:[%s126 + $0x280] sm:$0xff]
    %v8376 = vld [vmem:[%s126 + $0x288] sm:$0xff]
    %v8377 = vld [vmem:[%s126 + $0x290] sm:$0xff]
    %v8378 = vld [vmem:[%s126 + $0x298] sm:$0xff]
    %v8379 = vld [vmem:[%s126 + $0x2a0] sm:$0xff]
    %v8380 = vld [vmem:[%s126 + $0x2a8] sm:$0xff]
    %v8381 = vld [vmem:[%s126 + $0x2b0] sm:$0xff]
    %v8382 = vld [vmem:[%s126 + $0x2b8] sm:$0xff]
    %v8383 = vld [vmem:[%s126 + $0x2c0] sm:$0xff]
    %v8384 = vld [vmem:[%s126 + $0x2c8] sm:$0xff]
    %v8385 = vld [vmem:[%s126 + $0x2d0] sm:$0xff]
    %v8386 = vld [vmem:[%s126 + $0x2d8] sm:$0xff]
    %v8387 = vld [vmem:[%s126 + $0x2e0] sm:$0xff]
    %v8388 = vld [vmem:[%s126 + $0x2e8] sm:$0xff]
    %v8389 = vld [vmem:[%s126 + $0x2f0] sm:$0xff]
    %v8390 = vld [vmem:[%s126 + $0x2f8] sm:$0xff]
    %v8391 = vld [vmem:[%s126 + $0x300] sm:$0xff]
    %v8392 = vld [vmem:[%s126 + $0x308] sm:$0xff]
    %v8393 = vld [vmem:[%s126 + $0x310] sm:$0xff]
    %v8394 = vld [vmem:[%s126 + $0x318] sm:$0xff]
    %v8395 = vld [vmem:[%s126 + $0x320] sm:$0xff]
    %v8396 = vld [vmem:[%s126 + $0x328] sm:$0xff]
    %v8397 = vld [vmem:[%s126 + $0x330] sm:$0xff]
    %v8398 = vld [vmem:[%s126 + $0x338] sm:$0xff]
    %v8399 = vld [vmem:[%s126 + $0x340] sm:$0xff]
    %v8400 = vld [vmem:[%s126 + $0x348] sm:$0xff]
    %v8401 = vld [vmem:[%s126 + $0x350] sm:$0xff]
    %v8402 = vld [vmem:[%s126 + $0x358] sm:$0xff]
    %v8403 = vld [vmem:[%s126 + $0x360] sm:$0xff]
    %v8404 = vld [vmem:[%s126 + $0x368] sm:$0xff]
    %v8405 = vld [vmem:[%s126 + $0x370] sm:$0xff]
    %v8406 = vld [vmem:[%s126 + $0x378] sm:$0xff]
    %v8407 = vld [vmem:[%s126 + $0x380] sm:$0xff]
    %v8408 = vld [vmem:[%s126 + $0x388] sm:$0xff]
    %v8409 = vld [vmem:[%s126 + $0x390] sm:$0xff]
    %v8410 = vld [vmem:[%s126 + $0x398] sm:$0xff]
    %v8411 = vld [vmem:[%s126 + $0x3a0] sm:$0xff]
    %v8412 = vld [vmem:[%s126 + $0x3a8] sm:$0xff]
    %v8413 = vld [vmem:[%s126 + $0x3b0] sm:$0xff]
    %v8414 = vld [vmem:[%s126 + $0x3b8] sm:$0xff]
    %v8415 = vld [vmem:[%s126 + $0x3c0] sm:$0xff]
    %v8416 = vld [vmem:[%s126 + $0x3c8] sm:$0xff]
    %v8417 = vld [vmem:[%s126 + $0x3d0] sm:$0xff]
    %v8418 = vld [vmem:[%s126 + $0x3d8] sm:$0xff]
    %v8419 = vld [vmem:[%s126 + $0x3e0] sm:$0xff]
    %v8420 = vld [vmem:[%s126 + $0x3e8] sm:$0xff]
    %v8421 = vld [vmem:[%s126 + $0x3f0] sm:$0xff]
    %v8422 = vld [vmem:[%s126 + $0x3f8] sm:$0xff]
    %8423 = vmatprep.subr.bf16.mxu0 %v8296
    %8424 = vmatpush1.bf16.msra.mxu0 %v8295
    %8425 = vmatprep.subr.bf16.mxu0 %v8298
    %8426 = vmatpush1.bf16.msra.mxu0 %v8297
    %8427 = vmatprep.subr.bf16.mxu0 %v8300
    %8428 = vmatpush1.bf16.msra.mxu0 %v8299
    %8429 = vmatprep.subr.bf16.mxu0 %v8302
    %8430 = vmatpush1.bf16.msra.mxu0 %v8301
    %8431 = vmatprep.subr.bf16.mxu0 %v8304
    %8432 = vmatpush1.bf16.msra.mxu0 %v8303
    %8433 = vmatprep.subr.bf16.mxu0 %v8306
    %8434 = vmatpush1.bf16.msra.mxu0 %v8305
    %8435 = vmatprep.subr.bf16.mxu0 %v8308
    %8436 = vmatpush1.bf16.msra.mxu0 %v8307
    %8437 = vmatprep.subr.bf16.mxu0 %v8310
    %8438 = vmatpush1.bf16.msra.mxu0 %v8309
    %8439 = vmatprep.subr.bf16.mxu0 %v8312
    %8440 = vmatpush1.bf16.msra.mxu0 %v8311
    %8441 = vmatprep.subr.bf16.mxu0 %v8314
    %8442 = vmatpush1.bf16.msra.mxu0 %v8313
    %8443 = vmatprep.subr.bf16.mxu0 %v8316
    %8444 = vmatpush1.bf16.msra.mxu0 %v8315
    %8445 = vmatprep.subr.bf16.mxu0 %v8318
    %8446 = vmatpush1.bf16.msra.mxu0 %v8317
    %8447 = vmatprep.subr.bf16.mxu0 %v8320
    %8448 = vmatpush1.bf16.msra.mxu0 %v8319
    %8449 = vmatprep.subr.bf16.mxu0 %v8322
    %8450 = vmatpush1.bf16.msra.mxu0 %v8321
    %8451 = vmatprep.subr.bf16.mxu0 %v8324
    %8452 = vmatpush1.bf16.msra.mxu0 %v8323
    %8453 = vmatprep.subr.bf16.mxu0 %v8326
    %8454 = vmatpush1.bf16.msra.mxu0 %v8325
    %8455 = vmatprep.mubr.bf16.mxu0 %v8288
    %8456 = vmatmul.mubr.bf16.gmra.mrb[0].mxu0 %v8287
    %v8457 = vpop.f32.mrb[0].mxu0
    %v8458 = vadd.f32 0.0, %v8457
    %v8459 = vpop.f32.mrb[0].mxu0
    %v8460 = vadd.f32 0.0, %v8459
    %v8461 = vpop.f32.mrb[0].mxu0
    %v8462 = vpop.f32.mrb[0].mxu0
    %8463 = vdwg.mxu0
    %8464 = vmatprep.subr.bf16.mxu0 %v8328
    %8465 = vmatpush1.bf16.msra.mxu0 %v8327
    %8466 = vmatprep.subr.bf16.mxu0 %v8330
    %8467 = vmatpush1.bf16.msra.mxu0 %v8329
    %8468 = vmatprep.subr.bf16.mxu0 %v8332
    %8469 = vmatpush1.bf16.msra.mxu0 %v8331
    %8470 = vmatprep.subr.bf16.mxu0 %v8334
    %8471 = vmatpush1.bf16.msra.mxu0 %v8333
    %8472 = vmatprep.subr.bf16.mxu0 %v8336
    %8473 = vmatpush1.bf16.msra.mxu0 %v8335
    %8474 = vmatprep.subr.bf16.mxu0 %v8338
    %8475 = vmatpush1.bf16.msra.mxu0 %v8337
    %8476 = vmatprep.subr.bf16.mxu0 %v8340
    %8477 = vmatpush1.bf16.msra.mxu0 %v8339
    %8478 = vmatprep.subr.bf16.mxu0 %v8342
    %8479 = vmatpush1.bf16.msra.mxu0 %v8341
    %8480 = vmatprep.subr.bf16.mxu0 %v8344
    %8481 = vmatpush1.bf16.msra.mxu0 %v8343
    %8482 = vmatprep.subr.bf16.mxu0 %v8346
    %8483 = vmatpush1.bf16.msra.mxu0 %v8345
    %8484 = vmatprep.subr.bf16.mxu0 %v8348
    %8485 = vmatpush1.bf16.msra.mxu0 %v8347
    %8486 = vmatprep.subr.bf16.mxu0 %v8350
    %8487 = vmatpush1.bf16.msra.mxu0 %v8349
    %8488 = vmatprep.subr.bf16.mxu0 %v8352
    %8489 = vmatpush1.bf16.msra.mxu0 %v8351
    %8490 = vmatprep.subr.bf16.mxu0 %v8354
    %8491 = vmatpush1.bf16.msra.mxu0 %v8353
    %8492 = vmatprep.subr.bf16.mxu0 %v8356
    %8493 = vmatpush1.bf16.msra.mxu0 %v8355
    %8494 = vmatprep.subr.bf16.mxu0 %v8358
    %8495 = vmatpush1.bf16.msra.mxu0 %v8357
    %8496 = vmatprep.mubr.bf16.mxu0 %v8290
    %8497 = vmatmul.mubr.bf16.gmra.mrb[0].mxu0 %v8289
    %v8498 = vpop.f32.mrb[0].mxu0
    %v8499 = vadd.f32 %v8458, %v8498
    %v8500 = vpop.f32.mrb[0].mxu0
    %v8501 = vadd.f32 %v8460, %v8500
    %v8502 = vpop.f32.mrb[0].mxu0
    %v8503 = vpop.f32.mrb[0].mxu0
    %8504 = vdwg.mxu0
    %8505 = vmatprep.subr.bf16.mxu0 %v8360
    %8506 = vmatpush1.bf16.msra.mxu0 %v8359
    %8507 = vmatprep.subr.bf16.mxu0 %v8362
    %8508 = vmatpush1.bf16.msra.mxu0 %v8361
    %8509 = vmatprep.subr.bf16.mxu0 %v8364
    %8510 = vmatpush1.bf16.msra.mxu0 %v8363
    %8511 = vmatprep.subr.bf16.mxu0 %v8366
    %8512 = vmatpush1.bf16.msra.mxu0 %v8365
    %8513 = vmatprep.subr.bf16.mxu0 %v8368
    %8514 = vmatpush1.bf16.msra.mxu0 %v8367
    %8515 = vmatprep.subr.bf16.mxu0 %v8370
    %8516 = vmatpush1.bf16.msra.mxu0 %v8369
    %8517 = vmatprep.subr.bf16.mxu0 %v8372
    %8518 = vmatpush1.bf16.msra.mxu0 %v8371
    %8519 = vmatprep.subr.bf16.mxu0 %v8374
    %8520 = vmatpush1.bf16.msra.mxu0 %v8373
    %8521 = vmatprep.subr.bf16.mxu0 %v8376
    %8522 = vmatpush1.bf16.msra.mxu0 %v8375
    %8523 = vmatprep.subr.bf16.mxu0 %v8378
    %8524 = vmatpush1.bf16.msra.mxu0 %v8377
    %8525 = vmatprep.subr.bf16.mxu0 %v8380
    %8526 = vmatpush1.bf16.msra.mxu0 %v8379
    %8527 = vmatprep.subr.bf16.mxu0 %v8382
    %8528 = vmatpush1.bf16.msra.mxu0 %v8381
    %8529 = vmatprep.subr.bf16.mxu0 %v8384
    %8530 = vmatpush1.bf16.msra.mxu0 %v8383
    %8531 = vmatprep.subr.bf16.mxu0 %v8386
    %8532 = vmatpush1.bf16.msra.mxu0 %v8385
    %8533 = vmatprep.subr.bf16.mxu0 %v8388
    %8534 = vmatpush1.bf16.msra.mxu0 %v8387
    %8535 = vmatprep.subr.bf16.mxu0 %v8390
    %8536 = vmatpush1.bf16.msra.mxu0 %v8389
    %8537 = vmatprep.mubr.bf16.mxu0 %v8292
    %8538 = vmatmul.mubr.bf16.gmra.mrb[0].mxu0 %v8291
    %v8539 = vpop.f32.mrb[0].mxu0
    %v8540 = vadd.f32 %v8499, %v8539
    %v8541 = vpop.f32.mrb[0].mxu0
    %v8542 = vadd.f32 %v8501, %v8541
    %v8543 = vpop.f32.mrb[0].mxu0
    %v8544 = vpop.f32.mrb[0].mxu0
    %8545 = vdwg.mxu0
    %8546 = vmatprep.subr.bf16.mxu0 %v8392
    %8547 = vmatpush1.bf16.msra.mxu0 %v8391
    %8548 = vmatprep.subr.bf16.mxu0 %v8394
    %8549 = vmatpush1.bf16.msra.mxu0 %v8393
    %8550 = vmatprep.subr.bf16.mxu0 %v8396
    %8551 = vmatpush1.bf16.msra.mxu0 %v8395
    %8552 = vmatprep.subr.bf16.mxu0 %v8398
    %8553 = vmatpush1.bf16.msra.mxu0 %v8397
    %8554 = vmatprep.subr.bf16.mxu0 %v8400
    %8555 = vmatpush1.bf16.msra.mxu0 %v8399
    %8556 = vmatprep.subr.bf16.mxu0 %v8402
    %8557 = vmatpush1.bf16.msra.mxu0 %v8401
    %8558 = vmatprep.subr.bf16.mxu0 %v8404
    %8559 = vmatpush1.bf16.msra.mxu0 %v8403
    %8560 = vmatprep.subr.bf16.mxu0 %v8406
    %8561 = vmatpush1.bf16.msra.mxu0 %v8405
    %8562 = vmatprep.subr.bf16.mxu0 %v8408
    %8563 = vmatpush1.bf16.msra.mxu0 %v8407
    %8564 = vmatprep.subr.bf16.mxu0 %v8410
    %8565 = vmatpush1.bf16.msra.mxu0 %v8409
    %8566 = vmatprep.subr.bf16.mxu0 %v8412
    %8567 = vmatpush1.bf16.msra.mxu0 %v8411
    %8568 = vmatprep.subr.bf16.mxu0 %v8414
    %8569 = vmatpush1.bf16.msra.mxu0 %v8413
    %8570 = vmatprep.subr.bf16.mxu0 %v8416
    %8571 = vmatpush1.bf16.msra.mxu0 %v8415
    %8572 = vmatprep.subr.bf16.mxu0 %v8418
    %8573 = vmatpush1.bf16.msra.mxu0 %v8417
    %8574 = vmatprep.subr.bf16.mxu0 %v8420
    %8575 = vmatpush1.bf16.msra.mxu0 %v8419
    %8576 = vmatprep.subr.bf16.mxu0 %v8422
    %8577 = vmatpush1.bf16.msra.mxu0 %v8421
    %8578 = vmatprep.mubr.bf16.mxu0 %v8294
    %8579 = vmatmul.mubr.bf16.gmra.mrb[0].mxu0 %v8293
    %v8580 = vpop.f32.mrb[0].mxu0
    %v8581 = vadd.f32 %v8540, %v8580
    %v8582 = vpop.f32.mrb[0].mxu0
    %v8583 = vadd.f32 %v8542, %v8582
    %v8584 = vpop.f32.mrb[0].mxu0
    %v8585 = vpop.f32.mrb[0].mxu0
    %8586 = vdwg.mxu0
    %v8587 = vadd.f32 %v8241, %v8581
    %v8588 = vadd.f32 %v8242, %v8583
    %s8589 = sshll.u32 %s6339, 4
    %8590 = dma.done %s164, %s8589
    %v8591 = vld [vmem:[#allocation4 + $0x30] sm:$0xff]
    %v8593 = vlaneseq
    %v8594 = vshrl.u32 %v8593, 7
    %v8595 = vsub.s32 0, %v8594
    %v8596 = vrot.slane %v8591, %v8595
    %v8597 = vlaneseq
    %v8598 = vshrl.u32 %v8597, 7
    %v8599 = vsub.s32 1, %v8598
    %v8600 = vrot.slane %v8591, %v8599
    %v8601 = vlaneseq
    %v8602 = vshrl.u32 %v8601, 7
    %v8603 = vsub.s32 2, %v8602
    %v8604 = vrot.slane %v8591, %v8603
    %v8605 = vlaneseq
    %v8606 = vshrl.u32 %v8605, 7
    %v8607 = vsub.s32 3, %v8606
    %v8608 = vrot.slane %v8591, %v8607
    %v8609 = vlaneseq
    %v8610 = vshrl.u32 %v8609, 7
    %v8611 = vsub.s32 4, %v8610
    %v8612 = vrot.slane %v8591, %v8611
    %v8613 = vlaneseq
    %v8614 = vshrl.u32 %v8613, 7
    %v8615 = vsub.s32 5, %v8614
    %v8616 = vrot.slane %v8591, %v8615
    %v8617 = vlaneseq
    %v8618 = vshrl.u32 %v8617, 7
    %v8619 = vsub.s32 6, %v8618
    %v8620 = vrot.slane %v8591, %v8619
    %v8621 = vlaneseq
    %v8622 = vshrl.u32 %v8621, 7
    %v8623 = vsub.s32 7, %v8622
    %v8624 = vrot.slane %v8591, %v8623
    %v8633 = vpack.c.bf16 %v8596, %v8596
    %v8634 = vpack.c.bf16 %v8600, %v8600
    %v8635 = vpack.c.bf16 %v8604, %v8604
    %v8636 = vpack.c.bf16 %v8608, %v8608
    %v8637 = vpack.c.bf16 %v8612, %v8612
    %v8638 = vpack.c.bf16 %v8616, %v8616
    %v8639 = vpack.c.bf16 %v8620, %v8620
    %v8640 = vpack.c.bf16 %v8624, %v8624
    %v8641 = vld [vmem:[%s163] sm:$0xff]
    %v8642 = vld [vmem:[%s163 + $0x8] sm:$0xff]
    %v8643 = vld [vmem:[%s163 + $0x10] sm:$0xff]
    %v8644 = vld [vmem:[%s163 + $0x18] sm:$0xff]
    %v8645 = vld [vmem:[%s163 + $0x20] sm:$0xff]
    %v8646 = vld [vmem:[%s163 + $0x28] sm:$0xff]
    %v8647 = vld [vmem:[%s163 + $0x30] sm:$0xff]
    %v8648 = vld [vmem:[%s163 + $0x38] sm:$0xff]
    %v8649 = vld [vmem:[%s163 + $0x40] sm:$0xff]
    %v8650 = vld [vmem:[%s163 + $0x48] sm:$0xff]
    %v8651 = vld [vmem:[%s163 + $0x50] sm:$0xff]
    %v8652 = vld [vmem:[%s163 + $0x58] sm:$0xff]
    %v8653 = vld [vmem:[%s163 + $0x60] sm:$0xff]
    %v8654 = vld [vmem:[%s163 + $0x68] sm:$0xff]
    %v8655 = vld [vmem:[%s163 + $0x70] sm:$0xff]
    %v8656 = vld [vmem:[%s163 + $0x78] sm:$0xff]
    %v8657 = vld [vmem:[%s163 + $0x80] sm:$0xff]
    %v8658 = vld [vmem:[%s163 + $0x88] sm:$0xff]
    %v8659 = vld [vmem:[%s163 + $0x90] sm:$0xff]
    %v8660 = vld [vmem:[%s163 + $0x98] sm:$0xff]
    %v8661 = vld [vmem:[%s163 + $0xa0] sm:$0xff]
    %v8662 = vld [vmem:[%s163 + $0xa8] sm:$0xff]
    %v8663 = vld [vmem:[%s163 + $0xb0] sm:$0xff]
    %v8664 = vld [vmem:[%s163 + $0xb8] sm:$0xff]
    %v8665 = vld [vmem:[%s163 + $0xc0] sm:$0xff]
    %v8666 = vld [vmem:[%s163 + $0xc8] sm:$0xff]
    %v8667 = vld [vmem:[%s163 + $0xd0] sm:$0xff]
    %v8668 = vld [vmem:[%s163 + $0xd8] sm:$0xff]
    %v8669 = vld [vmem:[%s163 + $0xe0] sm:$0xff]
    %v8670 = vld [vmem:[%s163 + $0xe8] sm:$0xff]
    %v8671 = vld [vmem:[%s163 + $0xf0] sm:$0xff]
    %v8672 = vld [vmem:[%s163 + $0xf8] sm:$0xff]
    %v8673 = vld [vmem:[%s163 + $0x100] sm:$0xff]
    %v8674 = vld [vmem:[%s163 + $0x108] sm:$0xff]
    %v8675 = vld [vmem:[%s163 + $0x110] sm:$0xff]
    %v8676 = vld [vmem:[%s163 + $0x118] sm:$0xff]
    %v8677 = vld [vmem:[%s163 + $0x120] sm:$0xff]
    %v8678 = vld [vmem:[%s163 + $0x128] sm:$0xff]
    %v8679 = vld [vmem:[%s163 + $0x130] sm:$0xff]
    %v8680 = vld [vmem:[%s163 + $0x138] sm:$0xff]
    %v8681 = vld [vmem:[%s163 + $0x140] sm:$0xff]
    %v8682 = vld [vmem:[%s163 + $0x148] sm:$0xff]
    %v8683 = vld [vmem:[%s163 + $0x150] sm:$0xff]
    %v8684 = vld [vmem:[%s163 + $0x158] sm:$0xff]
    %v8685 = vld [vmem:[%s163 + $0x160] sm:$0xff]
    %v8686 = vld [vmem:[%s163 + $0x168] sm:$0xff]
    %v8687 = vld [vmem:[%s163 + $0x170] sm:$0xff]
    %v8688 = vld [vmem:[%s163 + $0x178] sm:$0xff]
    %v8689 = vld [vmem:[%s163 + $0x180] sm:$0xff]
    %v8690 = vld [vmem:[%s163 + $0x188] sm:$0xff]
    %v8691 = vld [vmem:[%s163 + $0x190] sm:$0xff]
    %v8692 = vld [vmem:[%s163 + $0x198] sm:$0xff]
    %v8693 = vld [vmem:[%s163 + $0x1a0] sm:$0xff]
    %v8694 = vld [vmem:[%s163 + $0x1a8] sm:$0xff]
    %v8695 = vld [vmem:[%s163 + $0x1b0] sm:$0xff]
    %v8696 = vld [vmem:[%s163 + $0x1b8] sm:$0xff]
    %v8697 = vld [vmem:[%s163 + $0x1c0] sm:$0xff]
    %v8698 = vld [vmem:[%s163 + $0x1c8] sm:$0xff]
    %v8699 = vld [vmem:[%s163 + $0x1d0] sm:$0xff]
    %v8700 = vld [vmem:[%s163 + $0x1d8] sm:$0xff]
    %v8701 = vld [vmem:[%s163 + $0x1e0] sm:$0xff]
    %v8702 = vld [vmem:[%s163 + $0x1e8] sm:$0xff]
    %v8703 = vld [vmem:[%s163 + $0x1f0] sm:$0xff]
    %v8704 = vld [vmem:[%s163 + $0x1f8] sm:$0xff]
    %v8705 = vld [vmem:[%s163 + $0x200] sm:$0xff]
    %v8706 = vld [vmem:[%s163 + $0x208] sm:$0xff]
    %v8707 = vld [vmem:[%s163 + $0x210] sm:$0xff]
    %v8708 = vld [vmem:[%s163 + $0x218] sm:$0xff]
    %v8709 = vld [vmem:[%s163 + $0x220] sm:$0xff]
    %v8710 = vld [vmem:[%s163 + $0x228] sm:$0xff]
    %v8711 = vld [vmem:[%s163 + $0x230] sm:$0xff]
    %v8712 = vld [vmem:[%s163 + $0x238] sm:$0xff]
    %v8713 = vld [vmem:[%s163 + $0x240] sm:$0xff]
    %v8714 = vld [vmem:[%s163 + $0x248] sm:$0xff]
    %v8715 = vld [vmem:[%s163 + $0x250] sm:$0xff]
    %v8716 = vld [vmem:[%s163 + $0x258] sm:$0xff]
    %v8717 = vld [vmem:[%s163 + $0x260] sm:$0xff]
    %v8718 = vld [vmem:[%s163 + $0x268] sm:$0xff]
    %v8719 = vld [vmem:[%s163 + $0x270] sm:$0xff]
    %v8720 = vld [vmem:[%s163 + $0x278] sm:$0xff]
    %v8721 = vld [vmem:[%s163 + $0x280] sm:$0xff]
    %v8722 = vld [vmem:[%s163 + $0x288] sm:$0xff]
    %v8723 = vld [vmem:[%s163 + $0x290] sm:$0xff]
    %v8724 = vld [vmem:[%s163 + $0x298] sm:$0xff]
    %v8725 = vld [vmem:[%s163 + $0x2a0] sm:$0xff]
    %v8726 = vld [vmem:[%s163 + $0x2a8] sm:$0xff]
    %v8727 = vld [vmem:[%s163 + $0x2b0] sm:$0xff]
    %v8728 = vld [vmem:[%s163 + $0x2b8] sm:$0xff]
    %v8729 = vld [vmem:[%s163 + $0x2c0] sm:$0xff]
    %v8730 = vld [vmem:[%s163 + $0x2c8] sm:$0xff]
    %v8731 = vld [vmem:[%s163 + $0x2d0] sm:$0xff]
    %v8732 = vld [vmem:[%s163 + $0x2d8] sm:$0xff]
    %v8733 = vld [vmem:[%s163 + $0x2e0] sm:$0xff]
    %v8734 = vld [vmem:[%s163 + $0x2e8] sm:$0xff]
    %v8735 = vld [vmem:[%s163 + $0x2f0] sm:$0xff]
    %v8736 = vld [vmem:[%s163 + $0x2f8] sm:$0xff]
    %v8737 = vld [vmem:[%s163 + $0x300] sm:$0xff]
    %v8738 = vld [vmem:[%s163 + $0x308] sm:$0xff]
    %v8739 = vld [vmem:[%s163 + $0x310] sm:$0xff]
    %v8740 = vld [vmem:[%s163 + $0x318] sm:$0xff]
    %v8741 = vld [vmem:[%s163 + $0x320] sm:$0xff]
    %v8742 = vld [vmem:[%s163 + $0x328] sm:$0xff]
    %v8743 = vld [vmem:[%s163 + $0x330] sm:$0xff]
    %v8744 = vld [vmem:[%s163 + $0x338] sm:$0xff]
    %v8745 = vld [vmem:[%s163 + $0x340] sm:$0xff]
    %v8746 = vld [vmem:[%s163 + $0x348] sm:$0xff]
    %v8747 = vld [vmem:[%s163 + $0x350] sm:$0xff]
    %v8748 = vld [vmem:[%s163 + $0x358] sm:$0xff]
    %v8749 = vld [vmem:[%s163 + $0x360] sm:$0xff]
    %v8750 = vld [vmem:[%s163 + $0x368] sm:$0xff]
    %v8751 = vld [vmem:[%s163 + $0x370] sm:$0xff]
    %v8752 = vld [vmem:[%s163 + $0x378] sm:$0xff]
    %v8753 = vld [vmem:[%s163 + $0x380] sm:$0xff]
    %v8754 = vld [vmem:[%s163 + $0x388] sm:$0xff]
    %v8755 = vld [vmem:[%s163 + $0x390] sm:$0xff]
    %v8756 = vld [vmem:[%s163 + $0x398] sm:$0xff]
    %v8757 = vld [vmem:[%s163 + $0x3a0] sm:$0xff]
    %v8758 = vld [vmem:[%s163 + $0x3a8] sm:$0xff]
    %v8759 = vld [vmem:[%s163 + $0x3b0] sm:$0xff]
    %v8760 = vld [vmem:[%s163 + $0x3b8] sm:$0xff]
    %v8761 = vld [vmem:[%s163 + $0x3c0] sm:$0xff]
    %v8762 = vld [vmem:[%s163 + $0x3c8] sm:$0xff]
    %v8763 = vld [vmem:[%s163 + $0x3d0] sm:$0xff]
    %v8764 = vld [vmem:[%s163 + $0x3d8] sm:$0xff]
    %v8765 = vld [vmem:[%s163 + $0x3e0] sm:$0xff]
    %v8766 = vld [vmem:[%s163 + $0x3e8] sm:$0xff]
    %v8767 = vld [vmem:[%s163 + $0x3f0] sm:$0xff]
    %v8768 = vld [vmem:[%s163 + $0x3f8] sm:$0xff]
    %8769 = vmatprep.subr.bf16.mxu0 %v8642
    %8770 = vmatpush1.bf16.msra.mxu0 %v8641
    %8771 = vmatprep.subr.bf16.mxu0 %v8644
    %8772 = vmatpush1.bf16.msra.mxu0 %v8643
    %8773 = vmatprep.subr.bf16.mxu0 %v8646
    %8774 = vmatpush1.bf16.msra.mxu0 %v8645
    %8775 = vmatprep.subr.bf16.mxu0 %v8648
    %8776 = vmatpush1.bf16.msra.mxu0 %v8647
    %8777 = vmatprep.subr.bf16.mxu0 %v8650
    %8778 = vmatpush1.bf16.msra.mxu0 %v8649
    %8779 = vmatprep.subr.bf16.mxu0 %v8652
    %8780 = vmatpush1.bf16.msra.mxu0 %v8651
    %8781 = vmatprep.subr.bf16.mxu0 %v8654
    %8782 = vmatpush1.bf16.msra.mxu0 %v8653
    %8783 = vmatprep.subr.bf16.mxu0 %v8656
    %8784 = vmatpush1.bf16.msra.mxu0 %v8655
    %8785 = vmatprep.subr.bf16.mxu0 %v8658
    %8786 = vmatpush1.bf16.msra.mxu0 %v8657
    %8787 = vmatprep.subr.bf16.mxu0 %v8660
    %8788 = vmatpush1.bf16.msra.mxu0 %v8659
    %8789 = vmatprep.subr.bf16.mxu0 %v8662
    %8790 = vmatpush1.bf16.msra.mxu0 %v8661
    %8791 = vmatprep.subr.bf16.mxu0 %v8664
    %8792 = vmatpush1.bf16.msra.mxu0 %v8663
    %8793 = vmatprep.subr.bf16.mxu0 %v8666
    %8794 = vmatpush1.bf16.msra.mxu0 %v8665
    %8795 = vmatprep.subr.bf16.mxu0 %v8668
    %8796 = vmatpush1.bf16.msra.mxu0 %v8667
    %8797 = vmatprep.subr.bf16.mxu0 %v8670
    %8798 = vmatpush1.bf16.msra.mxu0 %v8669
    %8799 = vmatprep.subr.bf16.mxu0 %v8672
    %8800 = vmatpush1.bf16.msra.mxu0 %v8671
    %8801 = vmatprep.mubr.bf16.mxu0 %v8634
    %8802 = vmatmul.mubr.bf16.gmra.mrb[0].mxu0 %v8633
    %v8803 = vpop.f32.mrb[0].mxu0
    %v8804 = vadd.f32 0.0, %v8803
    %v8805 = vpop.f32.mrb[0].mxu0
    %v8806 = vadd.f32 0.0, %v8805
    %v8807 = vpop.f32.mrb[0].mxu0
    %v8808 = vpop.f32.mrb[0].mxu0
    %8809 = vdwg.mxu0
    %8810 = vmatprep.subr.bf16.mxu0 %v8674
    %8811 = vmatpush1.bf16.msra.mxu0 %v8673
    %8812 = vmatprep.subr.bf16.mxu0 %v8676
    %8813 = vmatpush1.bf16.msra.mxu0 %v8675
    %8814 = vmatprep.subr.bf16.mxu0 %v8678
    %8815 = vmatpush1.bf16.msra.mxu0 %v8677
    %8816 = vmatprep.subr.bf16.mxu0 %v8680
    %8817 = vmatpush1.bf16.msra.mxu0 %v8679
    %8818 = vmatprep.subr.bf16.mxu0 %v8682
    %8819 = vmatpush1.bf16.msra.mxu0 %v8681
    %8820 = vmatprep.subr.bf16.mxu0 %v8684
    %8821 = vmatpush1.bf16.msra.mxu0 %v8683
    %8822 = vmatprep.subr.bf16.mxu0 %v8686
    %8823 = vmatpush1.bf16.msra.mxu0 %v8685
    %8824 = vmatprep.subr.bf16.mxu0 %v8688
    %8825 = vmatpush1.bf16.msra.mxu0 %v8687
    %8826 = vmatprep.subr.bf16.mxu0 %v8690
    %8827 = vmatpush1.bf16.msra.mxu0 %v8689
    %8828 = vmatprep.subr.bf16.mxu0 %v8692
    %8829 = vmatpush1.bf16.msra.mxu0 %v8691
    %8830 = vmatprep.subr.bf16.mxu0 %v8694
    %8831 = vmatpush1.bf16.msra.mxu0 %v8693
    %8832 = vmatprep.subr.bf16.mxu0 %v8696
    %8833 = vmatpush1.bf16.msra.mxu0 %v8695
    %8834 = vmatprep.subr.bf16.mxu0 %v8698
    %8835 = vmatpush1.bf16.msra.mxu0 %v8697
    %8836 = vmatprep.subr.bf16.mxu0 %v8700
    %8837 = vmatpush1.bf16.msra.mxu0 %v8699
    %8838 = vmatprep.subr.bf16.mxu0 %v8702
    %8839 = vmatpush1.bf16.msra.mxu0 %v8701
    %8840 = vmatprep.subr.bf16.mxu0 %v8704
    %8841 = vmatpush1.bf16.msra.mxu0 %v8703
    %8842 = vmatprep.mubr.bf16.mxu0 %v8636
    %8843 = vmatmul.mubr.bf16.gmra.mrb[0].mxu0 %v8635
    %v8844 = vpop.f32.mrb[0].mxu0
    %v8845 = vadd.f32 %v8804, %v8844
    %v8846 = vpop.f32.mrb[0].mxu0
    %v8847 = vadd.f32 %v8806, %v8846
    %v8848 = vpop.f32.mrb[0].mxu0
    %v8849 = vpop.f32.mrb[0].mxu0
    %8850 = vdwg.mxu0
    %8851 = vmatprep.subr.bf16.mxu0 %v8706
    %8852 = vmatpush1.bf16.msra.mxu0 %v8705
    %8853 = vmatprep.subr.bf16.mxu0 %v8708
    %8854 = vmatpush1.bf16.msra.mxu0 %v8707
    %8855 = vmatprep.subr.bf16.mxu0 %v8710
    %8856 = vmatpush1.bf16.msra.mxu0 %v8709
    %8857 = vmatprep.subr.bf16.mxu0 %v8712
    %8858 = vmatpush1.bf16.msra.mxu0 %v8711
    %8859 = vmatprep.subr.bf16.mxu0 %v8714
    %8860 = vmatpush1.bf16.msra.mxu0 %v8713
    %8861 = vmatprep.subr.bf16.mxu0 %v8716
    %8862 = vmatpush1.bf16.msra.mxu0 %v8715
    %8863 = vmatprep.subr.bf16.mxu0 %v8718
    %8864 = vmatpush1.bf16.msra.mxu0 %v8717
    %8865 = vmatprep.subr.bf16.mxu0 %v8720
    %8866 = vmatpush1.bf16.msra.mxu0 %v8719
    %8867 = vmatprep.subr.bf16.mxu0 %v8722
    %8868 = vmatpush1.bf16.msra.mxu0 %v8721
    %8869 = vmatprep.subr.bf16.mxu0 %v8724
    %8870 = vmatpush1.bf16.msra.mxu0 %v8723
    %8871 = vmatprep.subr.bf16.mxu0 %v8726
    %8872 = vmatpush1.bf16.msra.mxu0 %v8725
    %8873 = vmatprep.subr.bf16.mxu0 %v8728
    %8874 = vmatpush1.bf16.msra.mxu0 %v8727
    %8875 = vmatprep.subr.bf16.mxu0 %v8730
    %8876 = vmatpush1.bf16.msra.mxu0 %v8729
    %8877 = vmatprep.subr.bf16.mxu0 %v8732
    %8878 = vmatpush1.bf16.msra.mxu0 %v8731
    %8879 = vmatprep.subr.bf16.mxu0 %v8734
    %8880 = vmatpush1.bf16.msra.mxu0 %v8733
    %8881 = vmatprep.subr.bf16.mxu0 %v8736
    %8882 = vmatpush1.bf16.msra.mxu0 %v8735
    %8883 = vmatprep.mubr.bf16.mxu0 %v8638
    %8884 = vmatmul.mubr.bf16.gmra.mrb[0].mxu0 %v8637
    %v8885 = vpop.f32.mrb[0].mxu0
    %v8886 = vadd.f32 %v8845, %v8885
    %v8887 = vpop.f32.mrb[0].mxu0
    %v8888 = vadd.f32 %v8847, %v8887
    %v8889 = vpop.f32.mrb[0].mxu0
    %v8890 = vpop.f32.mrb[0].mxu0
    %8891 = vdwg.mxu0
    %8892 = vmatprep.subr.bf16.mxu0 %v8738
    %8893 = vmatpush1.bf16.msra.mxu0 %v8737
    %8894 = vmatprep.subr.bf16.mxu0 %v8740
    %8895 = vmatpush1.bf16.msra.mxu0 %v8739
    %8896 = vmatprep.subr.bf16.mxu0 %v8742
    %8897 = vmatpush1.bf16.msra.mxu0 %v8741
    %8898 = vmatprep.subr.bf16.mxu0 %v8744
    %8899 = vmatpush1.bf16.msra.mxu0 %v8743
    %8900 = vmatprep.subr.bf16.mxu0 %v8746
    %8901 = vmatpush1.bf16.msra.mxu0 %v8745
    %8902 = vmatprep.subr.bf16.mxu0 %v8748
    %8903 = vmatpush1.bf16.msra.mxu0 %v8747
    %8904 = vmatprep.subr.bf16.mxu0 %v8750
    %8905 = vmatpush1.bf16.msra.mxu0 %v8749
    %8906 = vmatprep.subr.bf16.mxu0 %v8752
    %8907 = vmatpush1.bf16.msra.mxu0 %v8751
    %8908 = vmatprep.subr.bf16.mxu0 %v8754
    %8909 = vmatpush1.bf16.msra.mxu0 %v8753
    %8910 = vmatprep.subr.bf16.mxu0 %v8756
    %8911 = vmatpush1.bf16.msra.mxu0 %v8755
    %8912 = vmatprep.subr.bf16.mxu0 %v8758
    %8913 = vmatpush1.bf16.msra.mxu0 %v8757
    %8914 = vmatprep.subr.bf16.mxu0 %v8760
    %8915 = vmatpush1.bf16.msra.mxu0 %v8759
    %8916 = vmatprep.subr.bf16.mxu0 %v8762
    %8917 = vmatpush1.bf16.msra.mxu0 %v8761
    %8918 = vmatprep.subr.bf16.mxu0 %v8764
    %8919 = vmatpush1.bf16.msra.mxu0 %v8763
    %8920 = vmatprep.subr.bf16.mxu0 %v8766
    %8921 = vmatpush1.bf16.msra.mxu0 %v8765
    %8922 = vmatprep.subr.bf16.mxu0 %v8768
    %8923 = vmatpush1.bf16.msra.mxu0 %v8767
    %8924 = vmatprep.mubr.bf16.mxu0 %v8640
    %8925 = vmatmul.mubr.bf16.gmra.mrb[0].mxu0 %v8639
    %v8926 = vpop.f32.mrb[0].mxu0
    %v8927 = vadd.f32 %v8886, %v8926
    %v8928 = vpop.f32.mrb[0].mxu0
    %v8929 = vadd.f32 %v8888, %v8928
    %v8930 = vpop.f32.mrb[0].mxu0
    %v8931 = vpop.f32.mrb[0].mxu0
    %8932 = vdwg.mxu0
    %v8933 = vadd.f32 %v8587, %v8927
    %v8934 = vadd.f32 %v8588, %v8929
    %s8935 = sshll.u32 %s6339, 4
    %8936 = dma.done %s6344, %s8935
    %v8937 = vld [vmem:[#allocation4 + $0x38] sm:$0xff]
    %v8939 = vlaneseq
    %v8940 = vshrl.u32 %v8939, 7
    %v8941 = vsub.s32 0, %v8940
    %v8942 = vrot.slane %v8937, %v8941
    %v8943 = vlaneseq
    %v8944 = vshrl.u32 %v8943, 7
    %v8945 = vsub.s32 1, %v8944
    %v8946 = vrot.slane %v8937, %v8945
    %v8947 = vlaneseq
    %v8948 = vshrl.u32 %v8947, 7
    %v8949 = vsub.s32 2, %v8948
    %v8950 = vrot.slane %v8937, %v8949
    %v8951 = vlaneseq
    %v8952 = vshrl.u32 %v8951, 7
    %v8953 = vsub.s32 3, %v8952
    %v8954 = vrot.slane %v8937, %v8953
    %v8955 = vlaneseq
    %v8956 = vshrl.u32 %v8955, 7
    %v8957 = vsub.s32 4, %v8956
    %v8958 = vrot.slane %v8937, %v8957
    %v8959 = vlaneseq
    %v8960 = vshrl.u32 %v8959, 7
    %v8961 = vsub.s32 5, %v8960
    %v8962 = vrot.slane %v8937, %v8961
    %v8963 = vlaneseq
    %v8964 = vshrl.u32 %v8963, 7
    %v8965 = vsub.s32 6, %v8964
    %v8966 = vrot.slane %v8937, %v8965
    %v8967 = vlaneseq
    %v8968 = vshrl.u32 %v8967, 7
    %v8969 = vsub.s32 7, %v8968
    %v8970 = vrot.slane %v8937, %v8969
    %v8979 = vpack.c.bf16 %v8942, %v8942
    %v8980 = vpack.c.bf16 %v8946, %v8946
    %v8981 = vpack.c.bf16 %v8950, %v8950
    %v8982 = vpack.c.bf16 %v8954, %v8954
    %v8983 = vpack.c.bf16 %v8958, %v8958
    %v8984 = vpack.c.bf16 %v8962, %v8962
    %v8985 = vpack.c.bf16 %v8966, %v8966
    %v8986 = vpack.c.bf16 %v8970, %v8970
    %v8987 = vld [vmem:[%s6343] sm:$0xff]
    %v8988 = vld [vmem:[%s6343 + $0x8] sm:$0xff]
    %v8989 = vld [vmem:[%s6343 + $0x10] sm:$0xff]
    %v8990 = vld [vmem:[%s6343 + $0x18] sm:$0xff]
    %v8991 = vld [vmem:[%s6343 + $0x20] sm:$0xff]
    %v8992 = vld [vmem:[%s6343 + $0x28] sm:$0xff]
    %v8993 = vld [vmem:[%s6343 + $0x30] sm:$0xff]
    %v8994 = vld [vmem:[%s6343 + $0x38] sm:$0xff]
    %v8995 = vld [vmem:[%s6343 + $0x40] sm:$0xff]
    %v8996 = vld [vmem:[%s6343 + $0x48] sm:$0xff]
    %v8997 = vld [vmem:[%s6343 + $0x50] sm:$0xff]
    %v8998 = vld [vmem:[%s6343 + $0x58] sm:$0xff]
    %v8999 = vld [vmem:[%s6343 + $0x60] sm:$0xff]
    %v9000 = vld [vmem:[%s6343 + $0x68] sm:$0xff]
    %v9001 = vld [vmem:[%s6343 + $0x70] sm:$0xff]
    %v9002 = vld [vmem:[%s6343 + $0x78] sm:$0xff]
    %v9003 = vld [vmem:[%s6343 + $0x80] sm:$0xff]
    %v9004 = vld [vmem:[%s6343 + $0x88] sm:$0xff]
    %v9005 = vld [vmem:[%s6343 + $0x90] sm:$0xff]
    %v9006 = vld [vmem:[%s6343 + $0x98] sm:$0xff]
    %v9007 = vld [vmem:[%s6343 + $0xa0] sm:$0xff]
    %v9008 = vld [vmem:[%s6343 + $0xa8] sm:$0xff]
    %v9009 = vld [vmem:[%s6343 + $0xb0] sm:$0xff]
    %v9010 = vld [vmem:[%s6343 + $0xb8] sm:$0xff]
    %v9011 = vld [vmem:[%s6343 + $0xc0] sm:$0xff]
    %v9012 = vld [vmem:[%s6343 + $0xc8] sm:$0xff]
    %v9013 = vld [vmem:[%s6343 + $0xd0] sm:$0xff]
    %v9014 = vld [vmem:[%s6343 + $0xd8] sm:$0xff]
    %v9015 = vld [vmem:[%s6343 + $0xe0] sm:$0xff]
    %v9016 = vld [vmem:[%s6343 + $0xe8] sm:$0xff]
    %v9017 = vld [vmem:[%s6343 + $0xf0] sm:$0xff]
    %v9018 = vld [vmem:[%s6343 + $0xf8] sm:$0xff]
    %v9019 = vld [vmem:[%s6343 + $0x100] sm:$0xff]
    %v9020 = vld [vmem:[%s6343 + $0x108] sm:$0xff]
    %v9021 = vld [vmem:[%s6343 + $0x110] sm:$0xff]
    %v9022 = vld [vmem:[%s6343 + $0x118] sm:$0xff]
    %v9023 = vld [vmem:[%s6343 + $0x120] sm:$0xff]
    %v9024 = vld [vmem:[%s6343 + $0x128] sm:$0xff]
    %v9025 = vld [vmem:[%s6343 + $0x130] sm:$0xff]
    %v9026 = vld [vmem:[%s6343 + $0x138] sm:$0xff]
    %v9027 = vld [vmem:[%s6343 + $0x140] sm:$0xff]
    %v9028 = vld [vmem:[%s6343 + $0x148] sm:$0xff]
    %v9029 = vld [vmem:[%s6343 + $0x150] sm:$0xff]
    %v9030 = vld [vmem:[%s6343 + $0x158] sm:$0xff]
    %v9031 = vld [vmem:[%s6343 + $0x160] sm:$0xff]
    %v9032 = vld [vmem:[%s6343 + $0x168] sm:$0xff]
    %v9033 = vld [vmem:[%s6343 + $0x170] sm:$0xff]
    %v9034 = vld [vmem:[%s6343 + $0x178] sm:$0xff]
    %v9035 = vld [vmem:[%s6343 + $0x180] sm:$0xff]
    %v9036 = vld [vmem:[%s6343 + $0x188] sm:$0xff]
    %v9037 = vld [vmem:[%s6343 + $0x190] sm:$0xff]
    %v9038 = vld [vmem:[%s6343 + $0x198] sm:$0xff]
    %v9039 = vld [vmem:[%s6343 + $0x1a0] sm:$0xff]
    %v9040 = vld [vmem:[%s6343 + $0x1a8] sm:$0xff]
    %v9041 = vld [vmem:[%s6343 + $0x1b0] sm:$0xff]
    %v9042 = vld [vmem:[%s6343 + $0x1b8] sm:$0xff]
    %v9043 = vld [vmem:[%s6343 + $0x1c0] sm:$0xff]
    %v9044 = vld [vmem:[%s6343 + $0x1c8] sm:$0xff]
    %v9045 = vld [vmem:[%s6343 + $0x1d0] sm:$0xff]
    %v9046 = vld [vmem:[%s6343 + $0x1d8] sm:$0xff]
    %v9047 = vld [vmem:[%s6343 + $0x1e0] sm:$0xff]
    %v9048 = vld [vmem:[%s6343 + $0x1e8] sm:$0xff]
    %v9049 = vld [vmem:[%s6343 + $0x1f0] sm:$0xff]
    %v9050 = vld [vmem:[%s6343 + $0x1f8] sm:$0xff]
    %v9051 = vld [vmem:[%s6343 + $0x200] sm:$0xff]
    %v9052 = vld [vmem:[%s6343 + $0x208] sm:$0xff]
    %v9053 = vld [vmem:[%s6343 + $0x210] sm:$0xff]
    %v9054 = vld [vmem:[%s6343 + $0x218] sm:$0xff]
    %v9055 = vld [vmem:[%s6343 + $0x220] sm:$0xff]
    %v9056 = vld [vmem:[%s6343 + $0x228] sm:$0xff]
    %v9057 = vld [vmem:[%s6343 + $0x230] sm:$0xff]
    %v9058 = vld [vmem:[%s6343 + $0x238] sm:$0xff]
    %v9059 = vld [vmem:[%s6343 + $0x240] sm:$0xff]
    %v9060 = vld [vmem:[%s6343 + $0x248] sm:$0xff]
    %v9061 = vld [vmem:[%s6343 + $0x250] sm:$0xff]
    %v9062 = vld [vmem:[%s6343 + $0x258] sm:$0xff]
    %v9063 = vld [vmem:[%s6343 + $0x260] sm:$0xff]
    %v9064 = vld [vmem:[%s6343 + $0x268] sm:$0xff]
    %v9065 = vld [vmem:[%s6343 + $0x270] sm:$0xff]
    %v9066 = vld [vmem:[%s6343 + $0x278] sm:$0xff]
    %v9067 = vld [vmem:[%s6343 + $0x280] sm:$0xff]
    %v9068 = vld [vmem:[%s6343 + $0x288] sm:$0xff]
    %v9069 = vld [vmem:[%s6343 + $0x290] sm:$0xff]
    %v9070 = vld [vmem:[%s6343 + $0x298] sm:$0xff]
    %v9071 = vld [vmem:[%s6343 + $0x2a0] sm:$0xff]
    %v9072 = vld [vmem:[%s6343 + $0x2a8] sm:$0xff]
    %v9073 = vld [vmem:[%s6343 + $0x2b0] sm:$0xff]
    %v9074 = vld [vmem:[%s6343 + $0x2b8] sm:$0xff]
    %v9075 = vld [vmem:[%s6343 + $0x2c0] sm:$0xff]
    %v9076 = vld [vmem:[%s6343 + $0x2c8] sm:$0xff]
    %v9077 = vld [vmem:[%s6343 + $0x2d0] sm:$0xff]
    %v9078 = vld [vmem:[%s6343 + $0x2d8] sm:$0xff]
    %v9079 = vld [vmem:[%s6343 + $0x2e0] sm:$0xff]
    %v9080 = vld [vmem:[%s6343 + $0x2e8] sm:$0xff]
    %v9081 = vld [vmem:[%s6343 + $0x2f0] sm:$0xff]
    %v9082 = vld [vmem:[%s6343 + $0x2f8] sm:$0xff]
    %v9083 = vld [vmem:[%s6343 + $0x300] sm:$0xff]
    %v9084 = vld [vmem:[%s6343 + $0x308] sm:$0xff]
    %v9085 = vld [vmem:[%s6343 + $0x310] sm:$0xff]
    %v9086 = vld [vmem:[%s6343 + $0x318] sm:$0xff]
    %v9087 = vld [vmem:[%s6343 + $0x320] sm:$0xff]
    %v9088 = vld [vmem:[%s6343 + $0x328] sm:$0xff]
    %v9089 = vld [vmem:[%s6343 + $0x330] sm:$0xff]
    %v9090 = vld [vmem:[%s6343 + $0x338] sm:$0xff]
    %v9091 = vld [vmem:[%s6343 + $0x340] sm:$0xff]
    %v9092 = vld [vmem:[%s6343 + $0x348] sm:$0xff]
    %v9093 = vld [vmem:[%s6343 + $0x350] sm:$0xff]
    %v9094 = vld [vmem:[%s6343 + $0x358] sm:$0xff]
    %v9095 = vld [vmem:[%s6343 + $0x360] sm:$0xff]
    %v9096 = vld [vmem:[%s6343 + $0x368] sm:$0xff]
    %v9097 = vld [vmem:[%s6343 + $0x370] sm:$0xff]
    %v9098 = vld [vmem:[%s6343 + $0x378] sm:$0xff]
    %v9099 = vld [vmem:[%s6343 + $0x380] sm:$0xff]
    %v9100 = vld [vmem:[%s6343 + $0x388] sm:$0xff]
    %v9101 = vld [vmem:[%s6343 + $0x390] sm:$0xff]
    %v9102 = vld [vmem:[%s6343 + $0x398] sm:$0xff]
    %v9103 = vld [vmem:[%s6343 + $0x3a0] sm:$0xff]
    %v9104 = vld [vmem:[%s6343 + $0x3a8] sm:$0xff]
    %v9105 = vld [vmem:[%s6343 + $0x3b0] sm:$0xff]
    %v9106 = vld [vmem:[%s6343 + $0x3b8] sm:$0xff]
    %v9107 = vld [vmem:[%s6343 + $0x3c0] sm:$0xff]
    %v9108 = vld [vmem:[%s6343 + $0x3c8] sm:$0xff]
    %v9109 = vld [vmem:[%s6343 + $0x3d0] sm:$0xff]
    %v9110 = vld [vmem:[%s6343 + $0x3d8] sm:$0xff]
    %v9111 = vld [vmem:[%s6343 + $0x3e0] sm:$0xff]
    %v9112 = vld [vmem:[%s6343 + $0x3e8] sm:$0xff]
    %v9113 = vld [vmem:[%s6343 + $0x3f0] sm:$0xff]
    %v9114 = vld [vmem:[%s6343 + $0x3f8] sm:$0xff]
    %9115 = vmatprep.subr.bf16.mxu0 %v8988
    %9116 = vmatpush1.bf16.msra.mxu0 %v8987
    %9117 = vmatprep.subr.bf16.mxu0 %v8990
    %9118 = vmatpush1.bf16.msra.mxu0 %v8989
    %9119 = vmatprep.subr.bf16.mxu0 %v8992
    %9120 = vmatpush1.bf16.msra.mxu0 %v8991
    %9121 = vmatprep.subr.bf16.mxu0 %v8994
    %9122 = vmatpush1.bf16.msra.mxu0 %v8993
    %9123 = vmatprep.subr.bf16.mxu0 %v8996
    %9124 = vmatpush1.bf16.msra.mxu0 %v8995
    %9125 = vmatprep.subr.bf16.mxu0 %v8998
    %9126 = vmatpush1.bf16.msra.mxu0 %v8997
    %9127 = vmatprep.subr.bf16.mxu0 %v9000
    %9128 = vmatpush1.bf16.msra.mxu0 %v8999
    %9129 = vmatprep.subr.bf16.mxu0 %v9002
    %9130 = vmatpush1.bf16.msra.mxu0 %v9001
    %9131 = vmatprep.subr.bf16.mxu0 %v9004
    %9132 = vmatpush1.bf16.msra.mxu0 %v9003
    %9133 = vmatprep.subr.bf16.mxu0 %v9006
    %9134 = vmatpush1.bf16.msra.mxu0 %v9005
    %9135 = vmatprep.subr.bf16.mxu0 %v9008
    %9136 = vmatpush1.bf16.msra.mxu0 %v9007
    %9137 = vmatprep.subr.bf16.mxu0 %v9010
    %9138 = vmatpush1.bf16.msra.mxu0 %v9009
    %9139 = vmatprep.subr.bf16.mxu0 %v9012
    %9140 = vmatpush1.bf16.msra.mxu0 %v9011
    %9141 = vmatprep.subr.bf16.mxu0 %v9014
    %9142 = vmatpush1.bf16.msra.mxu0 %v9013
    %9143 = vmatprep.subr.bf16.mxu0 %v9016
    %9144 = vmatpush1.bf16.msra.mxu0 %v9015
    %9145 = vmatprep.subr.bf16.mxu0 %v9018
    %9146 = vmatpush1.bf16.msra.mxu0 %v9017
    %9147 = vmatprep.mubr.bf16.mxu0 %v8980
    %9148 = vmatmul.mubr.bf16.gmra.mrb[0].mxu0 %v8979
    %v9149 = vpop.f32.mrb[0].mxu0
    %v9150 = vadd.f32 0.0, %v9149
    %v9151 = vpop.f32.mrb[0].mxu0
    %v9152 = vadd.f32 0.0, %v9151
    %v9153 = vpop.f32.mrb[0].mxu0
    %v9154 = vpop.f32.mrb[0].mxu0
    %9155 = vdwg.mxu0
    %9156 = vmatprep.subr.bf16.mxu0 %v9020
    %9157 = vmatpush1.bf16.msra.mxu0 %v9019
    %9158 = vmatprep.subr.bf16.mxu0 %v9022
    %9159 = vmatpush1.bf16.msra.mxu0 %v9021
    %9160 = vmatprep.subr.bf16.mxu0 %v9024
    %9161 = vmatpush1.bf16.msra.mxu0 %v9023
    %9162 = vmatprep.subr.bf16.mxu0 %v9026
    %9163 = vmatpush1.bf16.msra.mxu0 %v9025
    %9164 = vmatprep.subr.bf16.mxu0 %v9028
    %9165 = vmatpush1.bf16.msra.mxu0 %v9027
    %9166 = vmatprep.subr.bf16.mxu0 %v9030
    %9167 = vmatpush1.bf16.msra.mxu0 %v9029
    %9168 = vmatprep.subr.bf16.mxu0 %v9032
    %9169 = vmatpush1.bf16.msra.mxu0 %v9031
    %9170 = vmatprep.subr.bf16.mxu0 %v9034
    %9171 = vmatpush1.bf16.msra.mxu0 %v9033
    %9172 = vmatprep.subr.bf16.mxu0 %v9036
    %9173 = vmatpush1.bf16.msra.mxu0 %v9035
    %9174 = vmatprep.subr.bf16.mxu0 %v9038
    %9175 = vmatpush1.bf16.msra.mxu0 %v9037
    %9176 = vmatprep.subr.bf16.mxu0 %v9040
    %9177 = vmatpush1.bf16.msra.mxu0 %v9039
    %9178 = vmatprep.subr.bf16.mxu0 %v9042
    %9179 = vmatpush1.bf16.msra.mxu0 %v9041
    %9180 = vmatprep.subr.bf16.mxu0 %v9044
    %9181 = vmatpush1.bf16.msra.mxu0 %v9043
    %9182 = vmatprep.subr.bf16.mxu0 %v9046
    %9183 = vmatpush1.bf16.msra.mxu0 %v9045
    %9184 = vmatprep.subr.bf16.mxu0 %v9048
    %9185 = vmatpush1.bf16.msra.mxu0 %v9047
    %9186 = vmatprep.subr.bf16.mxu0 %v9050
    %9187 = vmatpush1.bf16.msra.mxu0 %v9049
    %9188 = vmatprep.mubr.bf16.mxu0 %v8982
    %9189 = vmatmul.mubr.bf16.gmra.mrb[0].mxu0 %v8981
    %v9190 = vpop.f32.mrb[0].mxu0
    %v9191 = vadd.f32 %v9150, %v9190
    %v9192 = vpop.f32.mrb[0].mxu0
    %v9193 = vadd.f32 %v9152, %v9192
    %v9194 = vpop.f32.mrb[0].mxu0
    %v9195 = vpop.f32.mrb[0].mxu0
    %9196 = vdwg.mxu0
    %9197 = vmatprep.subr.bf16.mxu0 %v9052
    %9198 = vmatpush1.bf16.msra.mxu0 %v9051
    %9199 = vmatprep.subr.bf16.mxu0 %v9054
    %9200 = vmatpush1.bf16.msra.mxu0 %v9053
    %9201 = vmatprep.subr.bf16.mxu0 %v9056
    %9202 = vmatpush1.bf16.msra.mxu0 %v9055
    %9203 = vmatprep.subr.bf16.mxu0 %v9058
    %9204 = vmatpush1.bf16.msra.mxu0 %v9057
    %9205 = vmatprep.subr.bf16.mxu0 %v9060
    %9206 = vmatpush1.bf16.msra.mxu0 %v9059
    %9207 = vmatprep.subr.bf16.mxu0 %v9062
    %9208 = vmatpush1.bf16.msra.mxu0 %v9061
    %9209 = vmatprep.subr.bf16.mxu0 %v9064
    %9210 = vmatpush1.bf16.msra.mxu0 %v9063
    %9211 = vmatprep.subr.bf16.mxu0 %v9066
    %9212 = vmatpush1.bf16.msra.mxu0 %v9065
    %9213 = vmatprep.subr.bf16.mxu0 %v9068
    %9214 = vmatpush1.bf16.msra.mxu0 %v9067
    %9215 = vmatprep.subr.bf16.mxu0 %v9070
    %9216 = vmatpush1.bf16.msra.mxu0 %v9069
    %9217 = vmatprep.subr.bf16.mxu0 %v9072
    %9218 = vmatpush1.bf16.msra.mxu0 %v9071
    %9219 = vmatprep.subr.bf16.mxu0 %v9074
    %9220 = vmatpush1.bf16.msra.mxu0 %v9073
    %9221 = vmatprep.subr.bf16.mxu0 %v9076
    %9222 = vmatpush1.bf16.msra.mxu0 %v9075
    %9223 = vmatprep.subr.bf16.mxu0 %v9078
    %9224 = vmatpush1.bf16.msra.mxu0 %v9077
    %9225 = vmatprep.subr.bf16.mxu0 %v9080
    %9226 = vmatpush1.bf16.msra.mxu0 %v9079
    %9227 = vmatprep.subr.bf16.mxu0 %v9082
    %9228 = vmatpush1.bf16.msra.mxu0 %v9081
    %9229 = vmatprep.mubr.bf16.mxu0 %v8984
    %9230 = vmatmul.mubr.bf16.gmra.mrb[0].mxu0 %v8983
    %v9231 = vpop.f32.mrb[0].mxu0
    %v9232 = vadd.f32 %v9191, %v9231
    %v9233 = vpop.f32.mrb[0].mxu0
    %v9234 = vadd.f32 %v9193, %v9233
    %v9235 = vpop.f32.mrb[0].mxu0
    %v9236 = vpop.f32.mrb[0].mxu0
    %9237 = vdwg.mxu0
    %9238 = vmatprep.subr.bf16.mxu0 %v9084
    %9239 = vmatpush1.bf16.msra.mxu0 %v9083
    %9240 = vmatprep.subr.bf16.mxu0 %v9086
    %9241 = vmatpush1.bf16.msra.mxu0 %v9085
    %9242 = vmatprep.subr.bf16.mxu0 %v9088
    %9243 = vmatpush1.bf16.msra.mxu0 %v9087
    %9244 = vmatprep.subr.bf16.mxu0 %v9090
    %9245 = vmatpush1.bf16.msra.mxu0 %v9089
    %9246 = vmatprep.subr.bf16.mxu0 %v9092
    %9247 = vmatpush1.bf16.msra.mxu0 %v9091
    %9248 = vmatprep.subr.bf16.mxu0 %v9094
    %9249 = vmatpush1.bf16.msra.mxu0 %v9093
    %9250 = vmatprep.subr.bf16.mxu0 %v9096
    %9251 = vmatpush1.bf16.msra.mxu0 %v9095
    %9252 = vmatprep.subr.bf16.mxu0 %v9098
    %9253 = vmatpush1.bf16.msra.mxu0 %v9097
    %9254 = vmatprep.subr.bf16.mxu0 %v9100
    %9255 = vmatpush1.bf16.msra.mxu0 %v9099
    %9256 = vmatprep.subr.bf16.mxu0 %v9102
    %9257 = vmatpush1.bf16.msra.mxu0 %v9101
    %9258 = vmatprep.subr.bf16.mxu0 %v9104
    %9259 = vmatpush1.bf16.msra.mxu0 %v9103
    %9260 = vmatprep.subr.bf16.mxu0 %v9106
    %9261 = vmatpush1.bf16.msra.mxu0 %v9105
    %9262 = vmatprep.subr.bf16.mxu0 %v9108
    %9263 = vmatpush1.bf16.msra.mxu0 %v9107
    %9264 = vmatprep.subr.bf16.mxu0 %v9110
    %9265 = vmatpush1.bf16.msra.mxu0 %v9109
    %9266 = vmatprep.subr.bf16.mxu0 %v9112
    %9267 = vmatpush1.bf16.msra.mxu0 %v9111
    %9268 = vmatprep.subr.bf16.mxu0 %v9114
    %9269 = vmatpush1.bf16.msra.mxu0 %v9113
    %9270 = vmatprep.mubr.bf16.mxu0 %v8986
    %9271 = vmatmul.mubr.bf16.gmra.mrb[0].mxu0 %v8985
    %v9272 = vpop.f32.mrb[0].mxu0
    %v9273 = vadd.f32 %v9232, %v9272
    %v9274 = vpop.f32.mrb[0].mxu0
    %v9275 = vadd.f32 %v9234, %v9274
    %v9276 = vpop.f32.mrb[0].mxu0
    %v9277 = vpop.f32.mrb[0].mxu0
    %9278 = vdwg.mxu0
    %v9279 = vadd.f32 %v8933, %v9273
    %v9280 = vadd.f32 %v8934, %v9275
    %v9281 = vld [vmem:[#allocation12] sm:$0x3]
    %v9283 = vlaneseq
    %v9284 = vshrl.u32 %v9283, 7
    %v9285 = vsub.s32 0, %v9284
    %v9286 = vrot.slane %v9281, %v9285
    %v9287 = vlaneseq
    %v9288 = vshrl.u32 %v9287, 7
    %v9289 = vsub.s32 1, %v9288
    %v9290 = vrot.slane %v9281, %v9289
    %v9293 = vadd.f32 %v9279, %v9286
    %v9294 = vadd.f32 %v9280, %v9290
    %v9295 = vmax.f32 %v9293, 0.0
    %v9296 = vmax.f32 %v9294, 0.0
    %v9297 = vld [vmem:[%s9] sm:$0xff]
    %v9298 = vld [vmem:[%s9 + $0x8] sm:$0xff]
    %v9299 = vld [vmem:[%s9 + $0x10] sm:$0xff]
    %v9300 = vld [vmem:[%s9 + $0x18] sm:$0xff]
    %v9301 = vld [vmem:[%s9 + $0x20] sm:$0xff]
    %v9302 = vld [vmem:[%s9 + $0x28] sm:$0xff]
    %v9303 = vld [vmem:[%s9 + $0x30] sm:$0xff]
    %v9304 = vld [vmem:[%s9 + $0x38] sm:$0xff]
    %v9305 = vld [vmem:[%s9 + $0x40] sm:$0xff]
    %v9306 = vld [vmem:[%s9 + $0x48] sm:$0xff]
    %v9307 = vld [vmem:[%s9 + $0x50] sm:$0xff]
    %v9308 = vld [vmem:[%s9 + $0x58] sm:$0xff]
    %v9309 = vld [vmem:[%s9 + $0x60] sm:$0xff]
    %v9310 = vld [vmem:[%s9 + $0x68] sm:$0xff]
    %v9311 = vld [vmem:[%s9 + $0x70] sm:$0xff]
    %v9312 = vld [vmem:[%s9 + $0x78] sm:$0xff]
    %v9313 = vld [vmem:[%s9 + $0x80] sm:$0xff]
    %v9314 = vld [vmem:[%s9 + $0x88] sm:$0xff]
    %v9315 = vld [vmem:[%s9 + $0x90] sm:$0xff]
    %v9316 = vld [vmem:[%s9 + $0x98] sm:$0xff]
    %v9317 = vld [vmem:[%s9 + $0xa0] sm:$0xff]
    %v9318 = vld [vmem:[%s9 + $0xa8] sm:$0xff]
    %v9319 = vld [vmem:[%s9 + $0xb0] sm:$0xff]
    %v9320 = vld [vmem:[%s9 + $0xb8] sm:$0xff]
    %v9321 = vld [vmem:[%s9 + $0xc0] sm:$0xff]
    %v9322 = vld [vmem:[%s9 + $0xc8] sm:$0xff]
    %v9323 = vld [vmem:[%s9 + $0xd0] sm:$0xff]
    %v9324 = vld [vmem:[%s9 + $0xd8] sm:$0xff]
    %v9325 = vld [vmem:[%s9 + $0xe0] sm:$0xff]
    %v9326 = vld [vmem:[%s9 + $0xe8] sm:$0xff]
    %v9327 = vld [vmem:[%s9 + $0xf0] sm:$0xff]
    %v9328 = vld [vmem:[%s9 + $0xf8] sm:$0xff]
    %v9329 = vld [vmem:[#allocation13] sm:$0x1]
    %9330 = vmatprep.subr.mxu0 0.0
    %9331 = vmatpush1.msra.mxu0 %v9297
    %9332 = vmatprep.subr.mxu0 0.0
    %9333 = vmatpush1.msra.mxu0 %v9298
    %9334 = vmatprep.subr.mxu0 0.0
    %9335 = vmatpush1.msra.mxu0 %v9299
    %9336 = vmatprep.subr.mxu0 0.0
    %9337 = vmatpush1.msra.mxu0 %v9300
    %9338 = vmatprep.subr.mxu0 0.0
    %9339 = vmatpush1.msra.mxu0 %v9301
    %9340 = vmatprep.subr.mxu0 0.0
    %9341 = vmatpush1.msra.mxu0 %v9302
    %9342 = vmatprep.subr.mxu0 0.0
    %9343 = vmatpush1.msra.mxu0 %v9303
    %9344 = vmatprep.subr.mxu0 0.0
    %9345 = vmatpush1.msra.mxu0 %v9304
    %9346 = vmatprep.subr.mxu0 0.0
    %9347 = vmatpush1.msra.mxu0 %v9305
    %9348 = vmatprep.subr.mxu0 0.0
    %9349 = vmatpush1.msra.mxu0 %v9306
    %9350 = vmatprep.subr.mxu0 0.0
    %9351 = vmatpush1.msra.mxu0 %v9307
    %9352 = vmatprep.subr.mxu0 0.0
    %9353 = vmatpush1.msra.mxu0 %v9308
    %9354 = vmatprep.subr.mxu0 0.0
    %9355 = vmatpush1.msra.mxu0 %v9309
    %9356 = vmatprep.subr.mxu0 0.0
    %9357 = vmatpush1.msra.mxu0 %v9310
    %9358 = vmatprep.subr.mxu0 0.0
    %9359 = vmatpush1.msra.mxu0 %v9311
    %9360 = vmatprep.subr.mxu0 0.0
    %9361 = vmatpush1.msra.mxu0 %v9312
    %9362 = vmatprep.subr.mxu0 0.0
    %9363 = vmatpush1.msra.mxu0 %v9313
    %9364 = vmatprep.subr.mxu0 0.0
    %9365 = vmatpush1.msra.mxu0 %v9314
    %9366 = vmatprep.subr.mxu0 0.0
    %9367 = vmatpush1.msra.mxu0 %v9315
    %9368 = vmatprep.subr.mxu0 0.0
    %9369 = vmatpush1.msra.mxu0 %v9316
    %9370 = vmatprep.subr.mxu0 0.0
    %9371 = vmatpush1.msra.mxu0 %v9317
    %9372 = vmatprep.subr.mxu0 0.0
    %9373 = vmatpush1.msra.mxu0 %v9318
    %9374 = vmatprep.subr.mxu0 0.0
    %9375 = vmatpush1.msra.mxu0 %v9319
    %9376 = vmatprep.subr.mxu0 0.0
    %9377 = vmatpush1.msra.mxu0 %v9320
    %9378 = vmatprep.subr.mxu0 0.0
    %9379 = vmatpush1.msra.mxu0 %v9321
    %9380 = vmatprep.subr.mxu0 0.0
    %9381 = vmatpush1.msra.mxu0 %v9322
    %9382 = vmatprep.subr.mxu0 0.0
    %9383 = vmatpush1.msra.mxu0 %v9323
    %9384 = vmatprep.subr.mxu0 0.0
    %9385 = vmatpush1.msra.mxu0 %v9324
    %9386 = vmatprep.subr.mxu0 0.0
    %9387 = vmatpush1.msra.mxu0 %v9325
    %9388 = vmatprep.subr.mxu0 0.0
    %9389 = vmatpush1.msra.mxu0 %v9326
    %9390 = vmatprep.subr.mxu0 0.0
    %9391 = vmatpush1.msra.mxu0 %v9327
    %9392 = vmatprep.subr.mxu0 0.0
    %9393 = vmatpush1.msra.mxu0 %v9328
    %9394 = vmatprep.mubr.f32.mxu0 %v9296
    %9395 = vmatmul.mubr.f32.gmra.mrb[0].mxu0 %v9295
    %v9396 = vpop.f32.mrb[0].mxu0
    %v9397 = vadd.f32 %v9329, %v9396
    %v9398 = vpop.f32.mrb[0].mxu0
    %9399 = vdwg.mxu0
    %vm9400 = vcmask 16392
    %v9401 = vsel %vm9400, %v9397, -inf
    %9402 = vmax.xlane.f32.xlu0 %v9401
    %v9403 = vpop.xlane.xlu0 %9402
    %v9404 = vsub.f32 %v9397, %v9403
    %v9405 = vmul.f32 %v9404, 1.442695
    %v9406 = vpow.pop %v9405
    %9408 = vrot.lane.b32.xlu0 %v9406, 127
    %v9409 = vpop.permute.xlu0 %9408
    %vm9411 = vcmask 8192
    %v9412 = vsel %vm9411, %v9409, 0.0
    %9413 = vadd.xlane.f32.xlu0 %v9412
    %v9414 = vpop.xlane.xlu0 %9413
    %v9415 = vrcp.pop %v9414
    %v9416 = vmul.f32 %v9406, %v9415
    %vm9417 = vcmp.lt.s32.totalorder %v4113, 128
    %vm9418 = vmand %vm4114, %vm9417
    %9419 = vst.msk [vmem:[%s12 + $0x2] sm:$0x1] %vm9418, 0.0
    %vm9420 = vcmp.lt.s32.totalorder %v4113, 1
    %vm9421 = vmand %vm4114, %vm9420
    %9422 = vst.msk [vmem:[%s12 + $0x2] sm:$0x1] %vm9421, %v9397
    %vm9423 = vcmp.ge.s32.totalorder %v4113, 1
    %vm9424 = vcmp.lt.s32.totalorder %v4113, 3
    %vm9425 = vmand %vm9423, %vm9424
    %9426 = vst.msk [vmem:[%s12 + $0x2] sm:$0x1] %vm9425, %v9416
    // Predicated region
    $region62: #{grafting_net_forward.1} parent=1 // pred_check
      _
    $region63: #{grafting_net_forward.1} parent=1 // pred_check_branch
      %9428 = sbr.rel (0) target = $region65
    $region64: #{grafting_net_forward.1} parent=1 // pred_region
      _
    $region65: #{grafting_net_forward.1} parent=1 // pred_fallthru
      _
    // Predicated region
    $region66: #{grafting_net_forward.1} parent=1 // pred_check
      _
    $region67: #{grafting_net_forward.1} parent=1 // pred_check_branch
      %9430 = sbr.rel (0) target = $region69
    $region68: #{grafting_net_forward.1} parent=1 // pred_region
      _
    $region69: #{grafting_net_forward.1} parent=1 // pred_fallthru
      _
    %9431 = vsyncpa [#allocation9], 1
    %9432 = vsyncpa [#allocation11], 1
    %9433 = vsyncpa [#allocation14], 1
  %9434 = vsyncmov [#allocation6]
  %s9435 = vpop.sfrf %9434
  %p9436 = scmp.eq.s32.totalorder %s9435, 0
  %p9437 = pneg %p9436
  %9439 = shalt.err (%p9437)
  %s9440 = scalar_lea.sflag [#allocation6], 1
  %9441 = vsyncmov %s9440
  %s9442 = vpop.sfrf %9441
  %p9443 = scmp.eq.s32.totalorder %s9442, 0
  %p9444 = pneg %p9443
  %9446 = shalt.err (%p9444)
  %s9447 = scalar_lea.sflag [#allocation6], 2
  %9448 = vsyncmov %s9447
  %s9449 = vpop.sfrf %9448
  %p9450 = scmp.eq.s32.totalorder %s9449, 0
  %p9451 = pneg %p9450
  %9453 = shalt.err (%p9451)
  %s9454 = scalar_lea.sflag [#allocation6], 3
  %9455 = vsyncmov %s9454
  %s9456 = vpop.sfrf %9455
  %p9457 = scmp.eq.s32.totalorder %s9456, 0
  %p9458 = pneg %p9457
  %9460 = shalt.err (%p9458)

</llo_original>
